<compile_context>
chip_gen: v7x
topology: tpu7x:2x2x1
jax: 0.10.0
libtpu: 0.0.40
codegen_flags: <defaults>
</compile_context>

<pallas_src>
import numpy as np
import jax
import jax.numpy as jnp
from jax.experimental import pallas as pl
from jax.experimental.pallas import tpu as pltpu


# ----------------------------- Pallas kernels ---------------------------------------


def _row_neighbor_concat(rows):
    """(H, K) -> (H, 3K): lanes = [row h-1 | row h | row h+1], zero rows at H boundary."""
    H, K = rows.shape
    z = jnp.zeros((1, K), rows.dtype)
    up = jnp.concatenate([z, rows[:H - 1, :]], axis=0)   # row h -> rows[h-1]
    dn = jnp.concatenate([rows[1:, :], z], axis=0)       # row h -> rows[h+1]
    return jnp.concatenate([up, rows, dn], axis=1)


def fused_conv_kernel(x_ref, m1_ref, b1_ref, s1e_ref, s1o_ref,
                      m2_ref, b2_ref, s2e_ref, s2o_ref, o_ref):
    # x_ref : (1, H, W*Cin) bf16   flattened NHWC rows
    # m*    : (3*W*Cin, W*Cout) bf16 band conv-as-matmul matrices (W padding folded in)
    # b*    : (1, W*Cout) f32       bias tiled along W
    # s*e/o : (W*Cout, (W//2)*Cout) bf16 even/odd 0/1 lane-selection (W max-pool)
    # o_ref : (1, H//4, (W//4)*32) f32
    f32, bf16 = jnp.float32, jnp.bfloat16
    H = x_ref.shape[1]
    H2 = H // 2

    # ---- stage 1: conv1 as ONE MXU matmul + bias + relu + 2x2 max-pool ----
    x1 = _row_neighbor_concat(x_ref[0])                            # (H, 3*W*Cin)
    a1 = jnp.dot(x1, m1_ref[...], preferred_element_type=f32)
    a1 = jnp.maximum(a1 + b1_ref[...], 0.0)                        # (H, W*16)
    a1b = a1.astype(bf16)
    pw1 = jnp.maximum(jnp.dot(a1b, s1e_ref[...], preferred_element_type=f32),
                      jnp.dot(a1b, s1o_ref[...], preferred_element_type=f32))
    p1 = pw1.reshape(H2, 2, pw1.shape[1]).max(axis=1)              # (H2, W2*16)

    # ---- stage 2: conv2 + relu + pool, intermediate stays in VMEM ----
    x2 = _row_neighbor_concat(p1.astype(bf16))                     # (H2, 3*W2*16)
    a2 = jnp.dot(x2, m2_ref[...], preferred_element_type=f32)
    a2 = jnp.maximum(a2 + b2_ref[...], 0.0)                        # (H2, W2*32)
    a2b = a2.astype(bf16)
    pw2 = jnp.maximum(jnp.dot(a2b, s2e_ref[...], preferred_element_type=f32),
                      jnp.dot(a2b, s2o_ref[...], preferred_element_type=f32))
    o_ref[0] = pw2.reshape(H2 // 2, 2, pw2.shape[1]).max(axis=1)   # (H4, W4*32)


def mlp_kernel(x_ref, w1_ref, b1_ref, w2_ref, b2_ref, o_ref):
    # x: (B, F) bf16; w1: (F, 512) bf16; b1: (1, 512) f32;
    # w2: (512, 128) bf16 (fc2 padded to 128 lanes); b2: (1, 128) f32; o: (B, 128) f32
    h = jnp.maximum(
        jnp.dot(x_ref[...], w1_ref[...], preferred_element_type=jnp.float32)
        + b1_ref[...], 0.0)
    o_ref[...] = (jnp.dot(h.astype(jnp.bfloat16), w2_ref[...],
                          preferred_element_type=jnp.float32) + b2_ref[...])


# ----------------------------- pallas_call wrappers ----------------------------------


def fused_conv(xr, m1, b1r, s1e, s1o, m2, b2r, s2e, s2o):
    B, H, Kin = xr.shape
    H4 = H // 4
    Ko = s2e.shape[1]
    return pl.pallas_call(
        fused_conv_kernel,
        out_shape=jax.ShapeDtypeStruct((B, H4, Ko), jnp.float32),
        grid=(B,),
        in_specs=[
            pl.BlockSpec((1, H, Kin), lambda b: (b, 0, 0)),
            pl.BlockSpec(m1.shape, lambda b: (0, 0)),
            pl.BlockSpec(b1r.shape, lambda b: (0, 0)),
            pl.BlockSpec(s1e.shape, lambda b: (0, 0)),
            pl.BlockSpec(s1o.shape, lambda b: (0, 0)),
            pl.BlockSpec(m2.shape, lambda b: (0, 0)),
            pl.BlockSpec(b2r.shape, lambda b: (0, 0)),
            pl.BlockSpec(s2e.shape, lambda b: (0, 0)),
            pl.BlockSpec(s2o.shape, lambda b: (0, 0)),
        ],
        out_specs=pl.BlockSpec((1, H4, Ko), lambda b: (b, 0, 0)),
        compiler_params=pltpu.CompilerParams(dimension_semantics=("parallel",)),
    )(xr, m1, b1r, s1e, s1o, m2, b2r, s2e, s2o)


def mlp(x_flat, w1, b1, w2, b2):
    B = x_flat.shape[0]
    return pl.pallas_call(
        mlp_kernel,
        out_shape=jax.ShapeDtypeStruct((B, w2.shape[1]), jnp.float32),
    )(x_flat, w1, b1, w2, b2)


# ----------------------------- one-time parameter packing ----------------------------


def _band_conv_matrix(w_oihw, width):
    """(3*width*Cin, width*Cout) band matrix with W zero-padding folded in:
    out[h, w*Cout+co] = sum_{dh,dw,ci} xcat[h, dh*width*Cin + (w+dw-1)*Cin + ci]
                                        * W[co, ci, dh, dw]  (taps outside [0,W) drop)."""
    w_np = np.asarray(w_oihw, np.float32)
    c_out, c_in = w_np.shape[0], w_np.shape[1]
    m = np.zeros((3 * width * c_in, width * c_out), np.float32)
    for dh in range(3):
        for dw in range(3):
            blk = w_np[:, :, dh, dw].T                 # (c_in, c_out)
            for wo in range(width):
                wi = wo + dw - 1
                if 0 <= wi < width:
                    r = dh * width * c_in + wi * c_in
                    c = wo * c_out
                    m[r:r + c_in, c:c + c_out] = blk
    return jnp.asarray(m, jnp.bfloat16)


def _wpool_selection(width, channels):
    """Even/odd 0/1 lane-selection matrices for the W half of the 2x2 max-pool."""
    k, ko = width * channels, (width // 2) * channels
    se = np.zeros((k, ko), np.float32)
    so = np.zeros((k, ko), np.float32)
    eye = np.eye(channels, dtype=np.float32)
    for j in range(width // 2):
        se[(2 * j) * channels:(2 * j + 1) * channels, j * channels:(j + 1) * channels] = eye
        so[(2 * j + 1) * channels:(2 * j + 2) * channels, j * channels:(j + 1) * channels] = eye
    return jnp.asarray(se, jnp.bfloat16), jnp.asarray(so, jnp.bfloat16)


def pack_params(params, h, w):
    """Pack PyTorch-layout parameters into kernel operands. Call ONCE, reuse per step."""
    assert h % 4 == 0 and w % 4 == 0, "spatial dims must be divisible by 4"
    conv1_w, conv1_b, conv2_w, conv2_b, fc1_w, fc1_b, fc2_w, fc2_b = params
    w2_, h4, w4 = w // 2, h // 4, w // 4

    m1 = _band_conv_matrix(conv1_w, w)                                      # (3*w*3, w*16)
    b1r = jnp.asarray(np.tile(np.asarray(conv1_b, np.float32), w).reshape(1, w * 16))
    s1e, s1o = _wpool_selection(w, 16)

    m2 = _band_conv_matrix(conv2_w, w2_)                                    # (3*w2*16, w2*32)
    b2r = jnp.asarray(np.tile(np.asarray(conv2_b, np.float32), w2_).reshape(1, w2_ * 32))
    s2e, s2o = _wpool_selection(w2_, 32)

    # fc1: permute rows so it consumes the kernel's NHWC-flat features directly (bf16)
    fc1_w_np = np.asarray(fc1_w, np.float32)                                # (512, 32*h4*w4)
    idx = np.arange(32 * h4 * w4).reshape(32, h4, w4)                       # torch (c,h4,w4)
    idx_nhwc = np.transpose(idx, (1, 2, 0)).reshape(-1)                     # (h4,w4,c) order
    w1p = jnp.asarray(fc1_w_np[:, idx_nhwc].T, jnp.bfloat16)                # (F, 512)
    b1f = jnp.asarray(np.asarray(fc1_b, np.float32).reshape(1, -1))

    # fc2: pad 2 logits -> 128 lanes for a lane-dense store (sliced back outside)
    w2p = np.zeros((512, 128), np.float32)
    w2p[:, :2] = np.asarray(fc2_w, np.float32).T
    b2p = np.zeros((1, 128), np.float32)
    b2p[0, :2] = np.asarray(fc2_b, np.float32)
    return (m1, b1r, s1e, s1o, m2, b2r, s2e, s2o,
            w1p, b1f, jnp.asarray(w2p, jnp.bfloat16), jnp.asarray(b2p))


# ----------------------------- forward pass -------------------------------------------


def pose_classifier_forward(x_nchw, packed):
    (m1, b1r, s1e, s1o, m2, b2r, s2e, s2o, w1p, b1f, w2p, b2p) = packed
    B, C, H, W = x_nchw.shape

    # NCHW -> flattened-NHWC rows (the (h-1,h,h+1) row-window concat is built in-kernel;
    # W zero-padding is folded into the band matrices).
    xr = jnp.transpose(x_nchw, (0, 2, 3, 1)).reshape(B, H, W * C).astype(jnp.bfloat16)

    p2 = fused_conv(xr, m1, b1r, s1e, s1o, m2, b2r, s2e, s2o)      # (B, H/4, (W/4)*32)

    # NHWC-flat features; fc1 rows are pre-permuted, so no transpose is needed here.
    feat = p2.reshape(B, -1).astype(jnp.bfloat16)
    logits = mlp(feat, w1p, b1f, w2p, b2p)                         # (B, 128) lane-dense
    return logits[:, :2]


# ----------------------------- deterministic params + reference -----------------------


def init_params(key, h, w):
    feat = 32 * (h // 4) * (w // 4)  # == 32*56*56 when h=w=224, as in the module
    ks = jax.random.split(key, 8)

    def u(k, shape, fan_in):
        bound = 1.0 / np.sqrt(fan_in)
        return jax.random.uniform(k, shape, jnp.float32, -bound, bound)

    return (u(ks[0], (16, 3, 3, 3), 3 * 9), u(ks[1], (16,), 3 * 9),
            u(ks[2], (32, 16, 3, 3), 16 * 9), u(ks[3], (32,), 16 * 9),
            u(ks[4], (512, feat), feat), u(ks[5], (512,), feat),
            u(ks[6], (2, 512), 512), u(ks[7], (2,), 512))


def reference_forward(x, params):
    conv1_w, conv1_b, conv2_w, conv2_b, fc1_w, fc1_b, fc2_w, fc2_b = params

    def conv(z, w, b):
        z = jax.lax.conv_general_dilated(z, w, (1, 1), ((1, 1), (1, 1)),
                                         dimension_numbers=("NCHW", "OIHW", "NCHW"))
        return jax.nn.relu(z + b[None, :, None, None])

    def pool(z):
        return jax.lax.reduce_window(z, -jnp.inf, jax.lax.max,
                                     (1, 1, 2, 2), (1, 1, 2, 2), "VALID")

    z = pool(conv(x, conv1_w, conv1_b))
    z = pool(conv(z, conv2_w, conv2_b))
    z = z.reshape(z.shape[0], -1)
    z = jax.nn.relu(z @ fc1_w.T + fc1_b)
    return z @ fc2_w.T + fc2_b


if __name__ == "__main__":
    B, H, W = 2, 32, 32  # small instance; fc1 in_features derived as 32*(H/4)*(W/4)
    key = jax.random.PRNGKey(0)
    pkey, xkey = jax.random.split(key)
    params = init_params(pkey, H, W)
    x = jax.random.normal(xkey, (B, 3, H, W), jnp.float32)

    packed = pack_params(params, H, W)          # one-time packing (hoisted out of fwd)
    fwd = jax.jit(pose_classifier_forward)

    out = jax.block_until_ready(fwd(x, packed))
    assert out.shape == (B, 2) and out.dtype == jnp.float32

    ref = jax.block_until_ready(reference_forward(x, params))
    np.testing.assert_allclose(np.asarray(out), np.asarray(ref), rtol=2e-2, atol=2e-2)
    print("KERNEL_OK")
</pallas_src>

<mosaic_0001>
module attributes {stable_mosaic.version = 11 : i64} {
  func.func @fused_conv_kernel(%arg0: i32, %arg1: memref<1x32x96xbf16, #tpu.memory_space<vmem>>, %arg2: memref<288x512xbf16, #tpu.memory_space<vmem>>, %arg3: memref<1x512xf32, #tpu.memory_space<vmem>>, %arg4: memref<512x256xbf16, #tpu.memory_space<vmem>>, %arg5: memref<512x256xbf16, #tpu.memory_space<vmem>>, %arg6: memref<768x512xbf16, #tpu.memory_space<vmem>>, %arg7: memref<1x512xf32, #tpu.memory_space<vmem>>, %arg8: memref<512x256xbf16, #tpu.memory_space<vmem>>, %arg9: memref<512x256xbf16, #tpu.memory_space<vmem>>, %arg10: memref<1x8x256xf32, #tpu.memory_space<vmem>>) attributes {dimension_semantics = [#tpu.dimension_semantics<parallel>], iteration_bounds = array<i64: 2>, scalar_prefetch = 0 : i64, scratch_operands = 0 : i64, tpu.core_type = #tpu.core_type<tc>, window_params = [{transform_indices = @transform_0, window_bounds = array<i64: 1, 32, 96>}, {pipeline_mode = #tpu.pipeline_mode<synchronous>, transform_indices = @transform_1, window_bounds = array<i64: 288, 512>}, {pipeline_mode = #tpu.pipeline_mode<synchronous>, transform_indices = @transform_2, window_bounds = array<i64: 1, 512>}, {pipeline_mode = #tpu.pipeline_mode<synchronous>, transform_indices = @transform_3, window_bounds = array<i64: 512, 256>}, {pipeline_mode = #tpu.pipeline_mode<synchronous>, transform_indices = @transform_4, window_bounds = array<i64: 512, 256>}, {pipeline_mode = #tpu.pipeline_mode<synchronous>, transform_indices = @transform_5, window_bounds = array<i64: 768, 512>}, {pipeline_mode = #tpu.pipeline_mode<synchronous>, transform_indices = @transform_6, window_bounds = array<i64: 1, 512>}, {pipeline_mode = #tpu.pipeline_mode<synchronous>, transform_indices = @transform_7, window_bounds = array<i64: 512, 256>}, {pipeline_mode = #tpu.pipeline_mode<synchronous>, transform_indices = @transform_8, window_bounds = array<i64: 512, 256>}, {transform_indices = @transform_9, window_bounds = array<i64: 1, 8, 256>}]} {
    %c0 = arith.constant 0 : index
    %c0_0 = arith.constant 0 : index
    %c0_1 = arith.constant 0 : index
    %0 = vector.load %arg1[%c0, %c0_0, %c0_1] : memref<1x32x96xbf16, #tpu.memory_space<vmem>>, vector<1x32x96xbf16>
    %1 = vector.shape_cast %0 : vector<1x32x96xbf16> to vector<32x96xbf16>
    %cst = arith.constant 0.000000e+00 : bf16
    %2 = vector.broadcast %cst : bf16 to vector<1x96xbf16>
    %3 = vector.extract_strided_slice %1 {offsets = [0, 0], sizes = [31, 96], strides = [1, 1]} : vector<32x96xbf16> to vector<31x96xbf16>
    %4 = tpu.concatenate %2, %3 in 0 : vector<1x96xbf16>, vector<31x96xbf16> -> vector<32x96xbf16>
    %5 = vector.extract_strided_slice %1 {offsets = [1, 0], sizes = [31, 96], strides = [1, 1]} : vector<32x96xbf16> to vector<31x96xbf16>
    %6 = tpu.concatenate %5, %2 in 0 : vector<31x96xbf16>, vector<1x96xbf16> -> vector<32x96xbf16>
    %7 = tpu.concatenate %4, %1, %6 in 1 : vector<32x96xbf16>, vector<32x96xbf16>, vector<32x96xbf16> -> vector<32x288xbf16>
    %c0_2 = arith.constant 0 : index
    %c0_3 = arith.constant 0 : index
    %8 = vector.load %arg2[%c0_2, %c0_3] : memref<288x512xbf16, #tpu.memory_space<vmem>>, vector<288x512xbf16>
    %cst_4 = arith.constant dense<0.000000e+00> : vector<32x512xf32>
    %9 = tpu.matmul %7, %8, %cst_4 {dimension_numbers = #tpu.dot_dimension_numbers<[1], [0], [0], [1], [0, 0, 1, 1], [], []>} : vector<32x288xbf16>, vector<288x512xbf16>, vector<32x512xf32> -> vector<32x512xf32>
    %c0_5 = arith.constant 0 : index
    %c0_6 = arith.constant 0 : index
    %10 = vector.load %arg3[%c0_5, %c0_6] : memref<1x512xf32, #tpu.memory_space<vmem>>, vector<1x512xf32>
    %11 = vector.broadcast %10 : vector<1x512xf32> to vector<32x512xf32>
    %12 = arith.addf %9, %11 : vector<32x512xf32>
    %cst_7 = arith.constant 0.000000e+00 : f32
    %13 = vector.broadcast %cst_7 : f32 to vector<32x512xf32>
    %14 = arith.maximumf %12, %13 : vector<32x512xf32>
    %15 = arith.truncf %14 : vector<32x512xf32> to vector<32x512xbf16>
    %c0_8 = arith.constant 0 : index
    %c0_9 = arith.constant 0 : index
    %16 = vector.load %arg4[%c0_8, %c0_9] : memref<512x256xbf16, #tpu.memory_space<vmem>>, vector<512x256xbf16>
    %cst_10 = arith.constant dense<0.000000e+00> : vector<32x256xf32>
    %17 = tpu.matmul %15, %16, %cst_10 {dimension_numbers = #tpu.dot_dimension_numbers<[1], [0], [0], [1], [0, 0, 1, 1], [], []>} : vector<32x512xbf16>, vector<512x256xbf16>, vector<32x256xf32> -> vector<32x256xf32>
    %c0_11 = arith.constant 0 : index
    %c0_12 = arith.constant 0 : index
    %18 = vector.load %arg5[%c0_11, %c0_12] : memref<512x256xbf16, #tpu.memory_space<vmem>>, vector<512x256xbf16>
    %cst_13 = arith.constant dense<0.000000e+00> : vector<32x256xf32>
    %19 = tpu.matmul %15, %18, %cst_13 {dimension_numbers = #tpu.dot_dimension_numbers<[1], [0], [0], [1], [0, 0, 1, 1], [], []>} : vector<32x512xbf16>, vector<512x256xbf16>, vector<32x256xf32> -> vector<32x256xf32>
    %20 = arith.maximumf %17, %19 : vector<32x256xf32>
    %21 = vector.shape_cast %20 : vector<32x256xf32> to vector<16x2x256xf32>
    %cst_14 = arith.constant dense<0xFF800000> : vector<16x256xf32>
    %22 = vector.multi_reduction <maximumf>, %21, %cst_14 [1] : vector<16x2x256xf32> to vector<16x256xf32>
    %23 = arith.truncf %22 : vector<16x256xf32> to vector<16x256xbf16>
    %cst_15 = arith.constant 0.000000e+00 : bf16
    %24 = vector.broadcast %cst_15 : bf16 to vector<1x256xbf16>
    %25 = vector.extract_strided_slice %23 {offsets = [0, 0], sizes = [15, 256], strides = [1, 1]} : vector<16x256xbf16> to vector<15x256xbf16>
    %26 = tpu.concatenate %24, %25 in 0 : vector<1x256xbf16>, vector<15x256xbf16> -> vector<16x256xbf16>
    %27 = vector.extract_strided_slice %23 {offsets = [1, 0], sizes = [15, 256], strides = [1, 1]} : vector<16x256xbf16> to vector<15x256xbf16>
    %28 = tpu.concatenate %27, %24 in 0 : vector<15x256xbf16>, vector<1x256xbf16> -> vector<16x256xbf16>
    %29 = tpu.concatenate %26, %23, %28 in 1 : vector<16x256xbf16>, vector<16x256xbf16>, vector<16x256xbf16> -> vector<16x768xbf16>
    %c0_16 = arith.constant 0 : index
    %c0_17 = arith.constant 0 : index
    %30 = vector.load %arg6[%c0_16, %c0_17] : memref<768x512xbf16, #tpu.memory_space<vmem>>, vector<768x512xbf16>
    %cst_18 = arith.constant dense<0.000000e+00> : vector<16x512xf32>
    %31 = tpu.matmul %29, %30, %cst_18 {dimension_numbers = #tpu.dot_dimension_numbers<[1], [0], [0], [1], [0, 0, 1, 1], [], []>} : vector<16x768xbf16>, vector<768x512xbf16>, vector<16x512xf32> -> vector<16x512xf32>
    %c0_19 = arith.constant 0 : index
    %c0_20 = arith.constant 0 : index
    %32 = vector.load %arg7[%c0_19, %c0_20] : memref<1x512xf32, #tpu.memory_space<vmem>>, vector<1x512xf32>
    %33 = vector.broadcast %32 : vector<1x512xf32> to vector<16x512xf32>
    %34 = arith.addf %31, %33 : vector<16x512xf32>
    %cst_21 = arith.constant 0.000000e+00 : f32
    %35 = vector.broadcast %cst_21 : f32 to vector<16x512xf32>
    %36 = arith.maximumf %34, %35 : vector<16x512xf32>
    %37 = arith.truncf %36 : vector<16x512xf32> to vector<16x512xbf16>
    %c0_22 = arith.constant 0 : index
    %c0_23 = arith.constant 0 : index
    %38 = vector.load %arg8[%c0_22, %c0_23] : memref<512x256xbf16, #tpu.memory_space<vmem>>, vector<512x256xbf16>
    %cst_24 = arith.constant dense<0.000000e+00> : vector<16x256xf32>
    %39 = tpu.matmul %37, %38, %cst_24 {dimension_numbers = #tpu.dot_dimension_numbers<[1], [0], [0], [1], [0, 0, 1, 1], [], []>} : vector<16x512xbf16>, vector<512x256xbf16>, vector<16x256xf32> -> vector<16x256xf32>
    %c0_25 = arith.constant 0 : index
    %c0_26 = arith.constant 0 : index
    %40 = vector.load %arg9[%c0_25, %c0_26] : memref<512x256xbf16, #tpu.memory_space<vmem>>, vector<512x256xbf16>
    %cst_27 = arith.constant dense<0.000000e+00> : vector<16x256xf32>
    %41 = tpu.matmul %37, %40, %cst_27 {dimension_numbers = #tpu.dot_dimension_numbers<[1], [0], [0], [1], [0, 0, 1, 1], [], []>} : vector<16x512xbf16>, vector<512x256xbf16>, vector<16x256xf32> -> vector<16x256xf32>
    %42 = arith.maximumf %39, %41 : vector<16x256xf32>
    %43 = vector.shape_cast %42 : vector<16x256xf32> to vector<8x2x256xf32>
    %cst_28 = arith.constant dense<0xFF800000> : vector<8x256xf32>
    %44 = vector.multi_reduction <maximumf>, %43, %cst_28 [1] : vector<8x2x256xf32> to vector<8x256xf32>
    %c0_29 = arith.constant 0 : index
    %c0_30 = arith.constant 0 : index
    %c0_31 = arith.constant 0 : index
    %45 = vector.load %arg10[%c0_29, %c0_30, %c0_31] : memref<1x8x256xf32, #tpu.memory_space<vmem>>, vector<1x8x256xf32>
    %46 = vector.shape_cast %45 : vector<1x8x256xf32> to vector<8x256xf32>
    %47 = vector.shape_cast %44 : vector<8x256xf32> to vector<1x8x256xf32>
    tpu.vector_store %arg10[%c0_29, %c0_30, %c0_31], %47 {strides = array<i32>} : memref<1x8x256xf32, #tpu.memory_space<vmem>>, vector<1x8x256xf32>,
    return
  }
  func.func @transform_0(%arg0: i32) -> (i32, i32, i32) {
    %c0_i32 = arith.constant 0 : i32
    %c0_i32_0 = arith.constant 0 : i32
    %c0_i32_1 = arith.constant 0 : i32
    return %arg0, %c0_i32, %c0_i32_0 : i32, i32, i32
  }
  func.func @transform_1(%arg0: i32) -> (i32, i32) {
    %c0_i32 = arith.constant 0 : i32
    %c0_i32_0 = arith.constant 0 : i32
    %c0_i32_1 = arith.constant 0 : i32
    return %c0_i32, %c0_i32_0 : i32, i32
  }
  func.func @transform_2(%arg0: i32) -> (i32, i32) {
    %c0_i32 = arith.constant 0 : i32
    %c0_i32_0 = arith.constant 0 : i32
    %c0_i32_1 = arith.constant 0 : i32
    return %c0_i32, %c0_i32_0 : i32, i32
  }
  func.func @transform_3(%arg0: i32) -> (i32, i32) {
    %c0_i32 = arith.constant 0 : i32
    %c0_i32_0 = arith.constant 0 : i32
    %c0_i32_1 = arith.constant 0 : i32
    return %c0_i32, %c0_i32_0 : i32, i32
  }
  func.func @transform_4(%arg0: i32) -> (i32, i32) {
    %c0_i32 = arith.constant 0 : i32
    %c0_i32_0 = arith.constant 0 : i32
    %c0_i32_1 = arith.constant 0 : i32
    return %c0_i32, %c0_i32_0 : i32, i32
  }
  func.func @transform_5(%arg0: i32) -> (i32, i32) {
    %c0_i32 = arith.constant 0 : i32
    %c0_i32_0 = arith.constant 0 : i32
    %c0_i32_1 = arith.constant 0 : i32
    return %c0_i32, %c0_i32_0 : i32, i32
  }
  func.func @transform_6(%arg0: i32) -> (i32, i32) {
    %c0_i32 = arith.constant 0 : i32
    %c0_i32_0 = arith.constant 0 : i32
    %c0_i32_1 = arith.constant 0 : i32
    return %c0_i32, %c0_i32_0 : i32, i32
  }
  func.func @transform_7(%arg0: i32) -> (i32, i32) {
    %c0_i32 = arith.constant 0 : i32
    %c0_i32_0 = arith.constant 0 : i32
    %c0_i32_1 = arith.constant 0 : i32
    return %c0_i32, %c0_i32_0 : i32, i32
  }
  func.func @transform_8(%arg0: i32) -> (i32, i32) {
    %c0_i32 = arith.constant 0 : i32
    %c0_i32_0 = arith.constant 0 : i32
    %c0_i32_1 = arith.constant 0 : i32
    return %c0_i32, %c0_i32_0 : i32, i32
  }
  func.func @transform_9(%arg0: i32) -> (i32, i32, i32) {
    %c0_i32 = arith.constant 0 : i32
    %c0_i32_0 = arith.constant 0 : i32
    %c0_i32_1 = arith.constant 0 : i32
    return %arg0, %c0_i32, %c0_i32_0 : i32, i32, i32
  }
}

module attributes {stable_mosaic.version = 11 : i64} {
  func.func @mlp_kernel(%arg0: memref<2x2048xbf16, #tpu.memory_space<vmem>>, %arg1: memref<2048x512xbf16, #tpu.memory_space<vmem>>, %arg2: memref<1x512xf32, #tpu.memory_space<vmem>>, %arg3: memref<512x128xbf16, #tpu.memory_space<vmem>>, %arg4: memref<1x128xf32, #tpu.memory_space<vmem>>, %arg5: memref<2x128xf32, #tpu.memory_space<vmem>>) attributes {dimension_semantics = [], scalar_prefetch = 0 : i64, scratch_operands = 0 : i64, tpu.core_type = #tpu.core_type<tc>} {
    %c0 = arith.constant 0 : index
    %c0_0 = arith.constant 0 : index
    %0 = vector.load %arg0[%c0, %c0_0] : memref<2x2048xbf16, #tpu.memory_space<vmem>>, vector<2x2048xbf16>
    %c0_1 = arith.constant 0 : index
    %c0_2 = arith.constant 0 : index
    %1 = vector.load %arg1[%c0_1, %c0_2] : memref<2048x512xbf16, #tpu.memory_space<vmem>>, vector<2048x512xbf16>
    %cst = arith.constant dense<0.000000e+00> : vector<2x512xf32>
    %2 = tpu.matmul %0, %1, %cst {dimension_numbers = #tpu.dot_dimension_numbers<[1], [0], [0], [1], [0, 0, 1, 1], [], []>} : vector<2x2048xbf16>, vector<2048x512xbf16>, vector<2x512xf32> -> vector<2x512xf32>
    %c0_3 = arith.constant 0 : index
    %c0_4 = arith.constant 0 : index
    %3 = vector.load %arg2[%c0_3, %c0_4] : memref<1x512xf32, #tpu.memory_space<vmem>>, vector<1x512xf32>
    %4 = vector.broadcast %3 : vector<1x512xf32> to vector<2x512xf32>
    %5 = arith.addf %2, %4 : vector<2x512xf32>
    %cst_5 = arith.constant 0.000000e+00 : f32
    %6 = vector.broadcast %cst_5 : f32 to vector<2x512xf32>
    %7 = arith.maximumf %5, %6 : vector<2x512xf32>
    %8 = arith.truncf %7 : vector<2x512xf32> to vector<2x512xbf16>
    %c0_6 = arith.constant 0 : index
    %c0_7 = arith.constant 0 : index
    %9 = vector.load %arg3[%c0_6, %c0_7] : memref<512x128xbf16, #tpu.memory_space<vmem>>, vector<512x128xbf16>
    %cst_8 = arith.constant dense<0.000000e+00> : vector<2x128xf32>
    %10 = tpu.matmul %8, %9, %cst_8 {dimension_numbers = #tpu.dot_dimension_numbers<[1], [0], [0], [1], [0, 0, 1, 1], [], []>} : vector<2x512xbf16>, vector<512x128xbf16>, vector<2x128xf32> -> vector<2x128xf32>
    %c0_9 = arith.constant 0 : index
    %c0_10 = arith.constant 0 : index
    %11 = vector.load %arg4[%c0_9, %c0_10] : memref<1x128xf32, #tpu.memory_space<vmem>>, vector<1x128xf32>
    %12 = vector.broadcast %11 : vector<1x128xf32> to vector<2x128xf32>
    %13 = arith.addf %10, %12 : vector<2x128xf32>
    %c0_11 = arith.constant 0 : index
    %c0_12 = arith.constant 0 : index
    %14 = vector.load %arg5[%c0_11, %c0_12] : memref<2x128xf32, #tpu.memory_space<vmem>>, vector<2x128xf32>
    tpu.vector_store %arg5[%c0_11, %c0_12], %13 {strides = array<i32>} : memref<2x128xf32, #tpu.memory_space<vmem>>, vector<2x128xf32>,
    return
  }
}

</mosaic_0001>

<llo_original>
// kernel: pose_classifier_forward.3
$region0: #{pose_classifier_forward.3}
  #allocation0 [shape = 'u32[]', space=smem, size = 0x4, offset = 0x4, fixed_abs, tag = 'smem constant byte address 0x4 - core index']
  #allocation1 [shape = 'u32[144,128]{1,0:T(1,128)}', space=vmem, size = 0x12000, scoped, tag = 'internal scratch']
  %s0 = inlined_call_operand.vmem [shape: bf16[2,2048], index: 0, kind: input, shape index: {}]
  %s1 = inlined_call_operand.vmem [shape: bf16[2048,512], index: 1, kind: input, shape index: {}]
  %s2 = inlined_call_operand.vmem [shape: f32[1,512], index: 2, kind: input, shape index: {}]
  %s3 = inlined_call_operand.vmem [shape: bf16[512,128], index: 3, kind: input, shape index: {}]
  %s4 = inlined_call_operand.vmem [shape: f32[1,128], index: 4, kind: input, shape index: {}]
  %s5 = inlined_call_operand.hbm [shape: f32[2,128], index: 5, kind: output, shape index: {}]
  %s6 = sld [smem:[#allocation0]]
  $region30: #{pose_classifier_forward.3} parent=0
    _
  %s8 = ssub.s32 1, %s6
  %s9 = scalar_select 0, %s8, %s6
  $region1: #{pose_classifier_forward.3} parent=0
    #allocation2 [shape = 'u8[1024]{0}', space=vmem, size = 0x400, scoped, tag = 'output window, operand 0, single buffered']
    #allocation3 [shape = 's32[1]{0}', space=sflag, size = 0x4, scoped, tag = 'scoped memory for pose_classifier_forward.3']
    %10 = vsyncpa [#allocation3], 0
    // Predicated region
    $region2: #{pose_classifier_forward.3} parent=1 // pred_check
      _
    $region3: #{pose_classifier_forward.3} parent=1 // pred_check_branch
      %12 = sbr.rel (0) target = $region5
    $region4: #{pose_classifier_forward.3} parent=1 // pred_region
      _
    $region5: #{pose_classifier_forward.3} parent=1 // pred_fallthru
      _
    // Predicated region
    $region6: #{pose_classifier_forward.3} parent=1 // pred_check
      _
    $region7: #{pose_classifier_forward.3} parent=1 // pred_check_branch
      %14 = sbr.rel (0) target = $region9
    $region8: #{pose_classifier_forward.3} parent=1 // pred_region
      _
    $region9: #{pose_classifier_forward.3} parent=1 // pred_fallthru
      _
    // Predicated region
    $region10: #{pose_classifier_forward.3} parent=1 // pred_check
      _
    $region11: #{pose_classifier_forward.3} parent=1 // pred_check_branch
      %16 = sbr.rel (0) target = $region13
    $region12: #{pose_classifier_forward.3} parent=1 // pred_region
      _
    $region13: #{pose_classifier_forward.3} parent=1 // pred_fallthru
      _
    // Predicated region
    $region14: #{pose_classifier_forward.3} parent=1 // pred_check
      _
    $region15: #{pose_classifier_forward.3} parent=1 // pred_check_branch
      %18 = sbr.rel (0) target = $region17
    $region16: #{pose_classifier_forward.3} parent=1 // pred_region
      _
    $region17: #{pose_classifier_forward.3} parent=1 // pred_fallthru
      _
    // Predicated region
    $region18: #{pose_classifier_forward.3} parent=1 // pred_check
      _
    $region19: #{pose_classifier_forward.3} parent=1 // pred_check_branch
      %20 = sbr.rel (0) target = $region21
    $region20: #{pose_classifier_forward.3} parent=1 // pred_region
      _
    $region21: #{pose_classifier_forward.3} parent=1 // pred_fallthru
      _
    %v22 = vld [vmem:[%s0] sm:$0xff]
    %v23 = vld [vmem:[%s0 + $0x8] sm:$0xff]
    %v24 = vld [vmem:[%s1] sm:$0xff]
    %v25 = vld [vmem:[%s1 + $0x8] sm:$0xff]
    %v26 = vld [vmem:[%s1 + $0x10] sm:$0xff]
    %v27 = vld [vmem:[%s1 + $0x18] sm:$0xff]
    %v28 = vld [vmem:[%s1 + $0x20] sm:$0xff]
    %v29 = vld [vmem:[%s1 + $0x28] sm:$0xff]
    %v30 = vld [vmem:[%s1 + $0x30] sm:$0xff]
    %v31 = vld [vmem:[%s1 + $0x38] sm:$0xff]
    %v32 = vld [vmem:[%s1 + $0x40] sm:$0xff]
    %v33 = vld [vmem:[%s1 + $0x48] sm:$0xff]
    %v34 = vld [vmem:[%s1 + $0x50] sm:$0xff]
    %v35 = vld [vmem:[%s1 + $0x58] sm:$0xff]
    %v36 = vld [vmem:[%s1 + $0x60] sm:$0xff]
    %v37 = vld [vmem:[%s1 + $0x68] sm:$0xff]
    %v38 = vld [vmem:[%s1 + $0x70] sm:$0xff]
    %v39 = vld [vmem:[%s1 + $0x78] sm:$0xff]
    %v40 = vld [vmem:[%s1 + $0x80] sm:$0xff]
    %v41 = vld [vmem:[%s1 + $0x88] sm:$0xff]
    %v42 = vld [vmem:[%s1 + $0x90] sm:$0xff]
    %v43 = vld [vmem:[%s1 + $0x98] sm:$0xff]
    %v44 = vld [vmem:[%s1 + $0xa0] sm:$0xff]
    %v45 = vld [vmem:[%s1 + $0xa8] sm:$0xff]
    %v46 = vld [vmem:[%s1 + $0xb0] sm:$0xff]
    %v47 = vld [vmem:[%s1 + $0xb8] sm:$0xff]
    %v48 = vld [vmem:[%s1 + $0xc0] sm:$0xff]
    %v49 = vld [vmem:[%s1 + $0xc8] sm:$0xff]
    %v50 = vld [vmem:[%s1 + $0xd0] sm:$0xff]
    %v51 = vld [vmem:[%s1 + $0xd8] sm:$0xff]
    %v52 = vld [vmem:[%s1 + $0xe0] sm:$0xff]
    %v53 = vld [vmem:[%s1 + $0xe8] sm:$0xff]
    %v54 = vld [vmem:[%s1 + $0xf0] sm:$0xff]
    %v55 = vld [vmem:[%s1 + $0xf8] sm:$0xff]
    %v56 = vld [vmem:[%s1 + $0x100] sm:$0xff]
    %v57 = vld [vmem:[%s1 + $0x108] sm:$0xff]
    %v58 = vld [vmem:[%s1 + $0x110] sm:$0xff]
    %v59 = vld [vmem:[%s1 + $0x118] sm:$0xff]
    %v60 = vld [vmem:[%s1 + $0x120] sm:$0xff]
    %v61 = vld [vmem:[%s1 + $0x128] sm:$0xff]
    %v62 = vld [vmem:[%s1 + $0x130] sm:$0xff]
    %v63 = vld [vmem:[%s1 + $0x138] sm:$0xff]
    %v64 = vld [vmem:[%s1 + $0x140] sm:$0xff]
    %v65 = vld [vmem:[%s1 + $0x148] sm:$0xff]
    %v66 = vld [vmem:[%s1 + $0x150] sm:$0xff]
    %v67 = vld [vmem:[%s1 + $0x158] sm:$0xff]
    %v68 = vld [vmem:[%s1 + $0x160] sm:$0xff]
    %v69 = vld [vmem:[%s1 + $0x168] sm:$0xff]
    %v70 = vld [vmem:[%s1 + $0x170] sm:$0xff]
    %v71 = vld [vmem:[%s1 + $0x178] sm:$0xff]
    %v72 = vld [vmem:[%s1 + $0x180] sm:$0xff]
    %v73 = vld [vmem:[%s1 + $0x188] sm:$0xff]
    %v74 = vld [vmem:[%s1 + $0x190] sm:$0xff]
    %v75 = vld [vmem:[%s1 + $0x198] sm:$0xff]
    %v76 = vld [vmem:[%s1 + $0x1a0] sm:$0xff]
    %v77 = vld [vmem:[%s1 + $0x1a8] sm:$0xff]
    %v78 = vld [vmem:[%s1 + $0x1b0] sm:$0xff]
    %v79 = vld [vmem:[%s1 + $0x1b8] sm:$0xff]
    %v80 = vld [vmem:[%s1 + $0x1c0] sm:$0xff]
    %v81 = vld [vmem:[%s1 + $0x1c8] sm:$0xff]
    %v82 = vld [vmem:[%s1 + $0x1d0] sm:$0xff]
    %v83 = vld [vmem:[%s1 + $0x1d8] sm:$0xff]
    %v84 = vld [vmem:[%s1 + $0x1e0] sm:$0xff]
    %v85 = vld [vmem:[%s1 + $0x1e8] sm:$0xff]
    %v86 = vld [vmem:[%s1 + $0x1f0] sm:$0xff]
    %v87 = vld [vmem:[%s1 + $0x1f8] sm:$0xff]
    %v88 = vld [vmem:[%s1 + $0x200] sm:$0xff]
    %v89 = vld [vmem:[%s1 + $0x208] sm:$0xff]
    %v90 = vld [vmem:[%s1 + $0x210] sm:$0xff]
    %v91 = vld [vmem:[%s1 + $0x218] sm:$0xff]
    %v92 = vld [vmem:[%s1 + $0x220] sm:$0xff]
    %v93 = vld [vmem:[%s1 + $0x228] sm:$0xff]
    %v94 = vld [vmem:[%s1 + $0x230] sm:$0xff]
    %v95 = vld [vmem:[%s1 + $0x238] sm:$0xff]
    %v96 = vld [vmem:[%s1 + $0x240] sm:$0xff]
    %v97 = vld [vmem:[%s1 + $0x248] sm:$0xff]
    %v98 = vld [vmem:[%s1 + $0x250] sm:$0xff]
    %v99 = vld [vmem:[%s1 + $0x258] sm:$0xff]
    %v100 = vld [vmem:[%s1 + $0x260] sm:$0xff]
    %v101 = vld [vmem:[%s1 + $0x268] sm:$0xff]
    %v102 = vld [vmem:[%s1 + $0x270] sm:$0xff]
    %v103 = vld [vmem:[%s1 + $0x278] sm:$0xff]
    %v104 = vld [vmem:[%s1 + $0x280] sm:$0xff]
    %v105 = vld [vmem:[%s1 + $0x288] sm:$0xff]
    %v106 = vld [vmem:[%s1 + $0x290] sm:$0xff]
    %v107 = vld [vmem:[%s1 + $0x298] sm:$0xff]
    %v108 = vld [vmem:[%s1 + $0x2a0] sm:$0xff]
    %v109 = vld [vmem:[%s1 + $0x2a8] sm:$0xff]
    %v110 = vld [vmem:[%s1 + $0x2b0] sm:$0xff]
    %v111 = vld [vmem:[%s1 + $0x2b8] sm:$0xff]
    %v112 = vld [vmem:[%s1 + $0x2c0] sm:$0xff]
    %v113 = vld [vmem:[%s1 + $0x2c8] sm:$0xff]
    %v114 = vld [vmem:[%s1 + $0x2d0] sm:$0xff]
    %v115 = vld [vmem:[%s1 + $0x2d8] sm:$0xff]
    %v116 = vld [vmem:[%s1 + $0x2e0] sm:$0xff]
    %v117 = vld [vmem:[%s1 + $0x2e8] sm:$0xff]
    %v118 = vld [vmem:[%s1 + $0x2f0] sm:$0xff]
    %v119 = vld [vmem:[%s1 + $0x2f8] sm:$0xff]
    %v120 = vld [vmem:[%s1 + $0x300] sm:$0xff]
    %v121 = vld [vmem:[%s1 + $0x308] sm:$0xff]
    %v122 = vld [vmem:[%s1 + $0x310] sm:$0xff]
    %v123 = vld [vmem:[%s1 + $0x318] sm:$0xff]
    %v124 = vld [vmem:[%s1 + $0x320] sm:$0xff]
    %v125 = vld [vmem:[%s1 + $0x328] sm:$0xff]
    %v126 = vld [vmem:[%s1 + $0x330] sm:$0xff]
    %v127 = vld [vmem:[%s1 + $0x338] sm:$0xff]
    %v128 = vld [vmem:[%s1 + $0x340] sm:$0xff]
    %v129 = vld [vmem:[%s1 + $0x348] sm:$0xff]
    %v130 = vld [vmem:[%s1 + $0x350] sm:$0xff]
    %v131 = vld [vmem:[%s1 + $0x358] sm:$0xff]
    %v132 = vld [vmem:[%s1 + $0x360] sm:$0xff]
    %v133 = vld [vmem:[%s1 + $0x368] sm:$0xff]
    %v134 = vld [vmem:[%s1 + $0x370] sm:$0xff]
    %v135 = vld [vmem:[%s1 + $0x378] sm:$0xff]
    %v136 = vld [vmem:[%s1 + $0x380] sm:$0xff]
    %v137 = vld [vmem:[%s1 + $0x388] sm:$0xff]
    %v138 = vld [vmem:[%s1 + $0x390] sm:$0xff]
    %v139 = vld [vmem:[%s1 + $0x398] sm:$0xff]
    %v140 = vld [vmem:[%s1 + $0x3a0] sm:$0xff]
    %v141 = vld [vmem:[%s1 + $0x3a8] sm:$0xff]
    %v142 = vld [vmem:[%s1 + $0x3b0] sm:$0xff]
    %v143 = vld [vmem:[%s1 + $0x3b8] sm:$0xff]
    %v144 = vld [vmem:[%s1 + $0x3c0] sm:$0xff]
    %v145 = vld [vmem:[%s1 + $0x3c8] sm:$0xff]
    %v146 = vld [vmem:[%s1 + $0x3d0] sm:$0xff]
    %v147 = vld [vmem:[%s1 + $0x3d8] sm:$0xff]
    %v148 = vld [vmem:[%s1 + $0x3e0] sm:$0xff]
    %v149 = vld [vmem:[%s1 + $0x3e8] sm:$0xff]
    %v150 = vld [vmem:[%s1 + $0x3f0] sm:$0xff]
    %v151 = vld [vmem:[%s1 + $0x3f8] sm:$0xff]
    %v152 = vld [vmem:[%s1 + $0x400] sm:$0xff]
    %v153 = vld [vmem:[%s1 + $0x408] sm:$0xff]
    %v154 = vld [vmem:[%s1 + $0x410] sm:$0xff]
    %v155 = vld [vmem:[%s1 + $0x418] sm:$0xff]
    %v156 = vld [vmem:[%s1 + $0x420] sm:$0xff]
    %v157 = vld [vmem:[%s1 + $0x428] sm:$0xff]
    %v158 = vld [vmem:[%s1 + $0x430] sm:$0xff]
    %v159 = vld [vmem:[%s1 + $0x438] sm:$0xff]
    %v160 = vld [vmem:[%s1 + $0x440] sm:$0xff]
    %v161 = vld [vmem:[%s1 + $0x448] sm:$0xff]
    %v162 = vld [vmem:[%s1 + $0x450] sm:$0xff]
    %v163 = vld [vmem:[%s1 + $0x458] sm:$0xff]
    %v164 = vld [vmem:[%s1 + $0x460] sm:$0xff]
    %v165 = vld [vmem:[%s1 + $0x468] sm:$0xff]
    %v166 = vld [vmem:[%s1 + $0x470] sm:$0xff]
    %v167 = vld [vmem:[%s1 + $0x478] sm:$0xff]
    %v168 = vld [vmem:[%s1 + $0x480] sm:$0xff]
    %v169 = vld [vmem:[%s1 + $0x488] sm:$0xff]
    %v170 = vld [vmem:[%s1 + $0x490] sm:$0xff]
    %v171 = vld [vmem:[%s1 + $0x498] sm:$0xff]
    %v172 = vld [vmem:[%s1 + $0x4a0] sm:$0xff]
    %v173 = vld [vmem:[%s1 + $0x4a8] sm:$0xff]
    %v174 = vld [vmem:[%s1 + $0x4b0] sm:$0xff]
    %v175 = vld [vmem:[%s1 + $0x4b8] sm:$0xff]
    %v176 = vld [vmem:[%s1 + $0x4c0] sm:$0xff]
    %v177 = vld [vmem:[%s1 + $0x4c8] sm:$0xff]
    %v178 = vld [vmem:[%s1 + $0x4d0] sm:$0xff]
    %v179 = vld [vmem:[%s1 + $0x4d8] sm:$0xff]
    %v180 = vld [vmem:[%s1 + $0x4e0] sm:$0xff]
    %v181 = vld [vmem:[%s1 + $0x4e8] sm:$0xff]
    %v182 = vld [vmem:[%s1 + $0x4f0] sm:$0xff]
    %v183 = vld [vmem:[%s1 + $0x4f8] sm:$0xff]
    %v184 = vld [vmem:[%s1 + $0x500] sm:$0xff]
    %v185 = vld [vmem:[%s1 + $0x508] sm:$0xff]
    %v186 = vld [vmem:[%s1 + $0x510] sm:$0xff]
    %v187 = vld [vmem:[%s1 + $0x518] sm:$0xff]
    %v188 = vld [vmem:[%s1 + $0x520] sm:$0xff]
    %v189 = vld [vmem:[%s1 + $0x528] sm:$0xff]
    %v190 = vld [vmem:[%s1 + $0x530] sm:$0xff]
    %v191 = vld [vmem:[%s1 + $0x538] sm:$0xff]
    %v192 = vld [vmem:[%s1 + $0x540] sm:$0xff]
    %v193 = vld [vmem:[%s1 + $0x548] sm:$0xff]
    %v194 = vld [vmem:[%s1 + $0x550] sm:$0xff]
    %v195 = vld [vmem:[%s1 + $0x558] sm:$0xff]
    %v196 = vld [vmem:[%s1 + $0x560] sm:$0xff]
    %v197 = vld [vmem:[%s1 + $0x568] sm:$0xff]
    %v198 = vld [vmem:[%s1 + $0x570] sm:$0xff]
    %v199 = vld [vmem:[%s1 + $0x578] sm:$0xff]
    %v200 = vld [vmem:[%s1 + $0x580] sm:$0xff]
    %v201 = vld [vmem:[%s1 + $0x588] sm:$0xff]
    %v202 = vld [vmem:[%s1 + $0x590] sm:$0xff]
    %v203 = vld [vmem:[%s1 + $0x598] sm:$0xff]
    %v204 = vld [vmem:[%s1 + $0x5a0] sm:$0xff]
    %v205 = vld [vmem:[%s1 + $0x5a8] sm:$0xff]
    %v206 = vld [vmem:[%s1 + $0x5b0] sm:$0xff]
    %v207 = vld [vmem:[%s1 + $0x5b8] sm:$0xff]
    %v208 = vld [vmem:[%s1 + $0x5c0] sm:$0xff]
    %v209 = vld [vmem:[%s1 + $0x5c8] sm:$0xff]
    %v210 = vld [vmem:[%s1 + $0x5d0] sm:$0xff]
    %v211 = vld [vmem:[%s1 + $0x5d8] sm:$0xff]
    %v212 = vld [vmem:[%s1 + $0x5e0] sm:$0xff]
    %v213 = vld [vmem:[%s1 + $0x5e8] sm:$0xff]
    %v214 = vld [vmem:[%s1 + $0x5f0] sm:$0xff]
    %v215 = vld [vmem:[%s1 + $0x5f8] sm:$0xff]
    %v216 = vld [vmem:[%s1 + $0x600] sm:$0xff]
    %v217 = vld [vmem:[%s1 + $0x608] sm:$0xff]
    %v218 = vld [vmem:[%s1 + $0x610] sm:$0xff]
    %v219 = vld [vmem:[%s1 + $0x618] sm:$0xff]
    %v220 = vld [vmem:[%s1 + $0x620] sm:$0xff]
    %v221 = vld [vmem:[%s1 + $0x628] sm:$0xff]
    %v222 = vld [vmem:[%s1 + $0x630] sm:$0xff]
    %v223 = vld [vmem:[%s1 + $0x638] sm:$0xff]
    %v224 = vld [vmem:[%s1 + $0x640] sm:$0xff]
    %v225 = vld [vmem:[%s1 + $0x648] sm:$0xff]
    %v226 = vld [vmem:[%s1 + $0x650] sm:$0xff]
    %v227 = vld [vmem:[%s1 + $0x658] sm:$0xff]
    %v228 = vld [vmem:[%s1 + $0x660] sm:$0xff]
    %v229 = vld [vmem:[%s1 + $0x668] sm:$0xff]
    %v230 = vld [vmem:[%s1 + $0x670] sm:$0xff]
    %v231 = vld [vmem:[%s1 + $0x678] sm:$0xff]
    %v232 = vld [vmem:[%s1 + $0x680] sm:$0xff]
    %v233 = vld [vmem:[%s1 + $0x688] sm:$0xff]
    %v234 = vld [vmem:[%s1 + $0x690] sm:$0xff]
    %v235 = vld [vmem:[%s1 + $0x698] sm:$0xff]
    %v236 = vld [vmem:[%s1 + $0x6a0] sm:$0xff]
    %v237 = vld [vmem:[%s1 + $0x6a8] sm:$0xff]
    %v238 = vld [vmem:[%s1 + $0x6b0] sm:$0xff]
    %v239 = vld [vmem:[%s1 + $0x6b8] sm:$0xff]
    %v240 = vld [vmem:[%s1 + $0x6c0] sm:$0xff]
    %v241 = vld [vmem:[%s1 + $0x6c8] sm:$0xff]
    %v242 = vld [vmem:[%s1 + $0x6d0] sm:$0xff]
    %v243 = vld [vmem:[%s1 + $0x6d8] sm:$0xff]
    %v244 = vld [vmem:[%s1 + $0x6e0] sm:$0xff]
    %v245 = vld [vmem:[%s1 + $0x6e8] sm:$0xff]
    %v246 = vld [vmem:[%s1 + $0x6f0] sm:$0xff]
    %v247 = vld [vmem:[%s1 + $0x6f8] sm:$0xff]
    %v248 = vld [vmem:[%s1 + $0x700] sm:$0xff]
    %v249 = vld [vmem:[%s1 + $0x708] sm:$0xff]
    %v250 = vld [vmem:[%s1 + $0x710] sm:$0xff]
    %v251 = vld [vmem:[%s1 + $0x718] sm:$0xff]
    %v252 = vld [vmem:[%s1 + $0x720] sm:$0xff]
    %v253 = vld [vmem:[%s1 + $0x728] sm:$0xff]
    %v254 = vld [vmem:[%s1 + $0x730] sm:$0xff]
    %v255 = vld [vmem:[%s1 + $0x738] sm:$0xff]
    %v256 = vld [vmem:[%s1 + $0x740] sm:$0xff]
    %v257 = vld [vmem:[%s1 + $0x748] sm:$0xff]
    %v258 = vld [vmem:[%s1 + $0x750] sm:$0xff]
    %v259 = vld [vmem:[%s1 + $0x758] sm:$0xff]
    %v260 = vld [vmem:[%s1 + $0x760] sm:$0xff]
    %v261 = vld [vmem:[%s1 + $0x768] sm:$0xff]
    %v262 = vld [vmem:[%s1 + $0x770] sm:$0xff]
    %v263 = vld [vmem:[%s1 + $0x778] sm:$0xff]
    %v264 = vld [vmem:[%s1 + $0x780] sm:$0xff]
    %v265 = vld [vmem:[%s1 + $0x788] sm:$0xff]
    %v266 = vld [vmem:[%s1 + $0x790] sm:$0xff]
    %v267 = vld [vmem:[%s1 + $0x798] sm:$0xff]
    %v268 = vld [vmem:[%s1 + $0x7a0] sm:$0xff]
    %v269 = vld [vmem:[%s1 + $0x7a8] sm:$0xff]
    %v270 = vld [vmem:[%s1 + $0x7b0] sm:$0xff]
    %v271 = vld [vmem:[%s1 + $0x7b8] sm:$0xff]
    %v272 = vld [vmem:[%s1 + $0x7c0] sm:$0xff]
    %v273 = vld [vmem:[%s1 + $0x7c8] sm:$0xff]
    %v274 = vld [vmem:[%s1 + $0x7d0] sm:$0xff]
    %v275 = vld [vmem:[%s1 + $0x7d8] sm:$0xff]
    %v276 = vld [vmem:[%s1 + $0x7e0] sm:$0xff]
    %v277 = vld [vmem:[%s1 + $0x7e8] sm:$0xff]
    %v278 = vld [vmem:[%s1 + $0x7f0] sm:$0xff]
    %v279 = vld [vmem:[%s1 + $0x7f8] sm:$0xff]
    %v280 = vld [vmem:[%s1 + $0x800] sm:$0xff]
    %v281 = vld [vmem:[%s1 + $0x808] sm:$0xff]
    %v282 = vld [vmem:[%s1 + $0x810] sm:$0xff]
    %v283 = vld [vmem:[%s1 + $0x818] sm:$0xff]
    %v284 = vld [vmem:[%s1 + $0x820] sm:$0xff]
    %v285 = vld [vmem:[%s1 + $0x828] sm:$0xff]
    %v286 = vld [vmem:[%s1 + $0x830] sm:$0xff]
    %v287 = vld [vmem:[%s1 + $0x838] sm:$0xff]
    %v288 = vld [vmem:[%s1 + $0x840] sm:$0xff]
    %v289 = vld [vmem:[%s1 + $0x848] sm:$0xff]
    %v290 = vld [vmem:[%s1 + $0x850] sm:$0xff]
    %v291 = vld [vmem:[%s1 + $0x858] sm:$0xff]
    %v292 = vld [vmem:[%s1 + $0x860] sm:$0xff]
    %v293 = vld [vmem:[%s1 + $0x868] sm:$0xff]
    %v294 = vld [vmem:[%s1 + $0x870] sm:$0xff]
    %v295 = vld [vmem:[%s1 + $0x878] sm:$0xff]
    %v296 = vld [vmem:[%s1 + $0x880] sm:$0xff]
    %v297 = vld [vmem:[%s1 + $0x888] sm:$0xff]
    %v298 = vld [vmem:[%s1 + $0x890] sm:$0xff]
    %v299 = vld [vmem:[%s1 + $0x898] sm:$0xff]
    %v300 = vld [vmem:[%s1 + $0x8a0] sm:$0xff]
    %v301 = vld [vmem:[%s1 + $0x8a8] sm:$0xff]
    %v302 = vld [vmem:[%s1 + $0x8b0] sm:$0xff]
    %v303 = vld [vmem:[%s1 + $0x8b8] sm:$0xff]
    %v304 = vld [vmem:[%s1 + $0x8c0] sm:$0xff]
    %v305 = vld [vmem:[%s1 + $0x8c8] sm:$0xff]
    %v306 = vld [vmem:[%s1 + $0x8d0] sm:$0xff]
    %v307 = vld [vmem:[%s1 + $0x8d8] sm:$0xff]
    %v308 = vld [vmem:[%s1 + $0x8e0] sm:$0xff]
    %v309 = vld [vmem:[%s1 + $0x8e8] sm:$0xff]
    %v310 = vld [vmem:[%s1 + $0x8f0] sm:$0xff]
    %v311 = vld [vmem:[%s1 + $0x8f8] sm:$0xff]
    %v312 = vld [vmem:[%s1 + $0x900] sm:$0xff]
    %v313 = vld [vmem:[%s1 + $0x908] sm:$0xff]
    %v314 = vld [vmem:[%s1 + $0x910] sm:$0xff]
    %v315 = vld [vmem:[%s1 + $0x918] sm:$0xff]
    %v316 = vld [vmem:[%s1 + $0x920] sm:$0xff]
    %v317 = vld [vmem:[%s1 + $0x928] sm:$0xff]
    %v318 = vld [vmem:[%s1 + $0x930] sm:$0xff]
    %v319 = vld [vmem:[%s1 + $0x938] sm:$0xff]
    %v320 = vld [vmem:[%s1 + $0x940] sm:$0xff]
    %v321 = vld [vmem:[%s1 + $0x948] sm:$0xff]
    %v322 = vld [vmem:[%s1 + $0x950] sm:$0xff]
    %v323 = vld [vmem:[%s1 + $0x958] sm:$0xff]
    %v324 = vld [vmem:[%s1 + $0x960] sm:$0xff]
    %v325 = vld [vmem:[%s1 + $0x968] sm:$0xff]
    %v326 = vld [vmem:[%s1 + $0x970] sm:$0xff]
    %v327 = vld [vmem:[%s1 + $0x978] sm:$0xff]
    %v328 = vld [vmem:[%s1 + $0x980] sm:$0xff]
    %v329 = vld [vmem:[%s1 + $0x988] sm:$0xff]
    %v330 = vld [vmem:[%s1 + $0x990] sm:$0xff]
    %v331 = vld [vmem:[%s1 + $0x998] sm:$0xff]
    %v332 = vld [vmem:[%s1 + $0x9a0] sm:$0xff]
    %v333 = vld [vmem:[%s1 + $0x9a8] sm:$0xff]
    %v334 = vld [vmem:[%s1 + $0x9b0] sm:$0xff]
    %v335 = vld [vmem:[%s1 + $0x9b8] sm:$0xff]
    %v336 = vld [vmem:[%s1 + $0x9c0] sm:$0xff]
    %v337 = vld [vmem:[%s1 + $0x9c8] sm:$0xff]
    %v338 = vld [vmem:[%s1 + $0x9d0] sm:$0xff]
    %v339 = vld [vmem:[%s1 + $0x9d8] sm:$0xff]
    %v340 = vld [vmem:[%s1 + $0x9e0] sm:$0xff]
    %v341 = vld [vmem:[%s1 + $0x9e8] sm:$0xff]
    %v342 = vld [vmem:[%s1 + $0x9f0] sm:$0xff]
    %v343 = vld [vmem:[%s1 + $0x9f8] sm:$0xff]
    %v344 = vld [vmem:[%s1 + $0xa00] sm:$0xff]
    %v345 = vld [vmem:[%s1 + $0xa08] sm:$0xff]
    %v346 = vld [vmem:[%s1 + $0xa10] sm:$0xff]
    %v347 = vld [vmem:[%s1 + $0xa18] sm:$0xff]
    %v348 = vld [vmem:[%s1 + $0xa20] sm:$0xff]
    %v349 = vld [vmem:[%s1 + $0xa28] sm:$0xff]
    %v350 = vld [vmem:[%s1 + $0xa30] sm:$0xff]
    %v351 = vld [vmem:[%s1 + $0xa38] sm:$0xff]
    %v352 = vld [vmem:[%s1 + $0xa40] sm:$0xff]
    %v353 = vld [vmem:[%s1 + $0xa48] sm:$0xff]
    %v354 = vld [vmem:[%s1 + $0xa50] sm:$0xff]
    %v355 = vld [vmem:[%s1 + $0xa58] sm:$0xff]
    %v356 = vld [vmem:[%s1 + $0xa60] sm:$0xff]
    %v357 = vld [vmem:[%s1 + $0xa68] sm:$0xff]
    %v358 = vld [vmem:[%s1 + $0xa70] sm:$0xff]
    %v359 = vld [vmem:[%s1 + $0xa78] sm:$0xff]
    %v360 = vld [vmem:[%s1 + $0xa80] sm:$0xff]
    %v361 = vld [vmem:[%s1 + $0xa88] sm:$0xff]
    %v362 = vld [vmem:[%s1 + $0xa90] sm:$0xff]
    %v363 = vld [vmem:[%s1 + $0xa98] sm:$0xff]
    %v364 = vld [vmem:[%s1 + $0xaa0] sm:$0xff]
    %v365 = vld [vmem:[%s1 + $0xaa8] sm:$0xff]
    %v366 = vld [vmem:[%s1 + $0xab0] sm:$0xff]
    %v367 = vld [vmem:[%s1 + $0xab8] sm:$0xff]
    %v368 = vld [vmem:[%s1 + $0xac0] sm:$0xff]
    %v369 = vld [vmem:[%s1 + $0xac8] sm:$0xff]
    %v370 = vld [vmem:[%s1 + $0xad0] sm:$0xff]
    %v371 = vld [vmem:[%s1 + $0xad8] sm:$0xff]
    %v372 = vld [vmem:[%s1 + $0xae0] sm:$0xff]
    %v373 = vld [vmem:[%s1 + $0xae8] sm:$0xff]
    %v374 = vld [vmem:[%s1 + $0xaf0] sm:$0xff]
    %v375 = vld [vmem:[%s1 + $0xaf8] sm:$0xff]
    %v376 = vld [vmem:[%s1 + $0xb00] sm:$0xff]
    %v377 = vld [vmem:[%s1 + $0xb08] sm:$0xff]
    %v378 = vld [vmem:[%s1 + $0xb10] sm:$0xff]
    %v379 = vld [vmem:[%s1 + $0xb18] sm:$0xff]
    %v380 = vld [vmem:[%s1 + $0xb20] sm:$0xff]
    %v381 = vld [vmem:[%s1 + $0xb28] sm:$0xff]
    %v382 = vld [vmem:[%s1 + $0xb30] sm:$0xff]
    %v383 = vld [vmem:[%s1 + $0xb38] sm:$0xff]
    %v384 = vld [vmem:[%s1 + $0xb40] sm:$0xff]
    %v385 = vld [vmem:[%s1 + $0xb48] sm:$0xff]
    %v386 = vld [vmem:[%s1 + $0xb50] sm:$0xff]
    %v387 = vld [vmem:[%s1 + $0xb58] sm:$0xff]
    %v388 = vld [vmem:[%s1 + $0xb60] sm:$0xff]
    %v389 = vld [vmem:[%s1 + $0xb68] sm:$0xff]
    %v390 = vld [vmem:[%s1 + $0xb70] sm:$0xff]
    %v391 = vld [vmem:[%s1 + $0xb78] sm:$0xff]
    %v392 = vld [vmem:[%s1 + $0xb80] sm:$0xff]
    %v393 = vld [vmem:[%s1 + $0xb88] sm:$0xff]
    %v394 = vld [vmem:[%s1 + $0xb90] sm:$0xff]
    %v395 = vld [vmem:[%s1 + $0xb98] sm:$0xff]
    %v396 = vld [vmem:[%s1 + $0xba0] sm:$0xff]
    %v397 = vld [vmem:[%s1 + $0xba8] sm:$0xff]
    %v398 = vld [vmem:[%s1 + $0xbb0] sm:$0xff]
    %v399 = vld [vmem:[%s1 + $0xbb8] sm:$0xff]
    %v400 = vld [vmem:[%s1 + $0xbc0] sm:$0xff]
    %v401 = vld [vmem:[%s1 + $0xbc8] sm:$0xff]
    %v402 = vld [vmem:[%s1 + $0xbd0] sm:$0xff]
    %v403 = vld [vmem:[%s1 + $0xbd8] sm:$0xff]
    %v404 = vld [vmem:[%s1 + $0xbe0] sm:$0xff]
    %v405 = vld [vmem:[%s1 + $0xbe8] sm:$0xff]
    %v406 = vld [vmem:[%s1 + $0xbf0] sm:$0xff]
    %v407 = vld [vmem:[%s1 + $0xbf8] sm:$0xff]
    %v408 = vld [vmem:[%s1 + $0xc00] sm:$0xff]
    %v409 = vld [vmem:[%s1 + $0xc08] sm:$0xff]
    %v410 = vld [vmem:[%s1 + $0xc10] sm:$0xff]
    %v411 = vld [vmem:[%s1 + $0xc18] sm:$0xff]
    %v412 = vld [vmem:[%s1 + $0xc20] sm:$0xff]
    %v413 = vld [vmem:[%s1 + $0xc28] sm:$0xff]
    %v414 = vld [vmem:[%s1 + $0xc30] sm:$0xff]
    %v415 = vld [vmem:[%s1 + $0xc38] sm:$0xff]
    %v416 = vld [vmem:[%s1 + $0xc40] sm:$0xff]
    %v417 = vld [vmem:[%s1 + $0xc48] sm:$0xff]
    %v418 = vld [vmem:[%s1 + $0xc50] sm:$0xff]
    %v419 = vld [vmem:[%s1 + $0xc58] sm:$0xff]
    %v420 = vld [vmem:[%s1 + $0xc60] sm:$0xff]
    %v421 = vld [vmem:[%s1 + $0xc68] sm:$0xff]
    %v422 = vld [vmem:[%s1 + $0xc70] sm:$0xff]
    %v423 = vld [vmem:[%s1 + $0xc78] sm:$0xff]
    %v424 = vld [vmem:[%s1 + $0xc80] sm:$0xff]
    %v425 = vld [vmem:[%s1 + $0xc88] sm:$0xff]
    %v426 = vld [vmem:[%s1 + $0xc90] sm:$0xff]
    %v427 = vld [vmem:[%s1 + $0xc98] sm:$0xff]
    %v428 = vld [vmem:[%s1 + $0xca0] sm:$0xff]
    %v429 = vld [vmem:[%s1 + $0xca8] sm:$0xff]
    %v430 = vld [vmem:[%s1 + $0xcb0] sm:$0xff]
    %v431 = vld [vmem:[%s1 + $0xcb8] sm:$0xff]
    %v432 = vld [vmem:[%s1 + $0xcc0] sm:$0xff]
    %v433 = vld [vmem:[%s1 + $0xcc8] sm:$0xff]
    %v434 = vld [vmem:[%s1 + $0xcd0] sm:$0xff]
    %v435 = vld [vmem:[%s1 + $0xcd8] sm:$0xff]
    %v436 = vld [vmem:[%s1 + $0xce0] sm:$0xff]
    %v437 = vld [vmem:[%s1 + $0xce8] sm:$0xff]
    %v438 = vld [vmem:[%s1 + $0xcf0] sm:$0xff]
    %v439 = vld [vmem:[%s1 + $0xcf8] sm:$0xff]
    %v440 = vld [vmem:[%s1 + $0xd00] sm:$0xff]
    %v441 = vld [vmem:[%s1 + $0xd08] sm:$0xff]
    %v442 = vld [vmem:[%s1 + $0xd10] sm:$0xff]
    %v443 = vld [vmem:[%s1 + $0xd18] sm:$0xff]
    %v444 = vld [vmem:[%s1 + $0xd20] sm:$0xff]
    %v445 = vld [vmem:[%s1 + $0xd28] sm:$0xff]
    %v446 = vld [vmem:[%s1 + $0xd30] sm:$0xff]
    %v447 = vld [vmem:[%s1 + $0xd38] sm:$0xff]
    %v448 = vld [vmem:[%s1 + $0xd40] sm:$0xff]
    %v449 = vld [vmem:[%s1 + $0xd48] sm:$0xff]
    %v450 = vld [vmem:[%s1 + $0xd50] sm:$0xff]
    %v451 = vld [vmem:[%s1 + $0xd58] sm:$0xff]
    %v452 = vld [vmem:[%s1 + $0xd60] sm:$0xff]
    %v453 = vld [vmem:[%s1 + $0xd68] sm:$0xff]
    %v454 = vld [vmem:[%s1 + $0xd70] sm:$0xff]
    %v455 = vld [vmem:[%s1 + $0xd78] sm:$0xff]
    %v456 = vld [vmem:[%s1 + $0xd80] sm:$0xff]
    %v457 = vld [vmem:[%s1 + $0xd88] sm:$0xff]
    %v458 = vld [vmem:[%s1 + $0xd90] sm:$0xff]
    %v459 = vld [vmem:[%s1 + $0xd98] sm:$0xff]
    %v460 = vld [vmem:[%s1 + $0xda0] sm:$0xff]
    %v461 = vld [vmem:[%s1 + $0xda8] sm:$0xff]
    %v462 = vld [vmem:[%s1 + $0xdb0] sm:$0xff]
    %v463 = vld [vmem:[%s1 + $0xdb8] sm:$0xff]
    %v464 = vld [vmem:[%s1 + $0xdc0] sm:$0xff]
    %v465 = vld [vmem:[%s1 + $0xdc8] sm:$0xff]
    %v466 = vld [vmem:[%s1 + $0xdd0] sm:$0xff]
    %v467 = vld [vmem:[%s1 + $0xdd8] sm:$0xff]
    %v468 = vld [vmem:[%s1 + $0xde0] sm:$0xff]
    %v469 = vld [vmem:[%s1 + $0xde8] sm:$0xff]
    %v470 = vld [vmem:[%s1 + $0xdf0] sm:$0xff]
    %v471 = vld [vmem:[%s1 + $0xdf8] sm:$0xff]
    %v472 = vld [vmem:[%s1 + $0xe00] sm:$0xff]
    %v473 = vld [vmem:[%s1 + $0xe08] sm:$0xff]
    %v474 = vld [vmem:[%s1 + $0xe10] sm:$0xff]
    %v475 = vld [vmem:[%s1 + $0xe18] sm:$0xff]
    %v476 = vld [vmem:[%s1 + $0xe20] sm:$0xff]
    %v477 = vld [vmem:[%s1 + $0xe28] sm:$0xff]
    %v478 = vld [vmem:[%s1 + $0xe30] sm:$0xff]
    %v479 = vld [vmem:[%s1 + $0xe38] sm:$0xff]
    %v480 = vld [vmem:[%s1 + $0xe40] sm:$0xff]
    %v481 = vld [vmem:[%s1 + $0xe48] sm:$0xff]
    %v482 = vld [vmem:[%s1 + $0xe50] sm:$0xff]
    %v483 = vld [vmem:[%s1 + $0xe58] sm:$0xff]
    %v484 = vld [vmem:[%s1 + $0xe60] sm:$0xff]
    %v485 = vld [vmem:[%s1 + $0xe68] sm:$0xff]
    %v486 = vld [vmem:[%s1 + $0xe70] sm:$0xff]
    %v487 = vld [vmem:[%s1 + $0xe78] sm:$0xff]
    %v488 = vld [vmem:[%s1 + $0xe80] sm:$0xff]
    %v489 = vld [vmem:[%s1 + $0xe88] sm:$0xff]
    %v490 = vld [vmem:[%s1 + $0xe90] sm:$0xff]
    %v491 = vld [vmem:[%s1 + $0xe98] sm:$0xff]
    %v492 = vld [vmem:[%s1 + $0xea0] sm:$0xff]
    %v493 = vld [vmem:[%s1 + $0xea8] sm:$0xff]
    %v494 = vld [vmem:[%s1 + $0xeb0] sm:$0xff]
    %v495 = vld [vmem:[%s1 + $0xeb8] sm:$0xff]
    %v496 = vld [vmem:[%s1 + $0xec0] sm:$0xff]
    %v497 = vld [vmem:[%s1 + $0xec8] sm:$0xff]
    %v498 = vld [vmem:[%s1 + $0xed0] sm:$0xff]
    %v499 = vld [vmem:[%s1 + $0xed8] sm:$0xff]
    %v500 = vld [vmem:[%s1 + $0xee0] sm:$0xff]
    %v501 = vld [vmem:[%s1 + $0xee8] sm:$0xff]
    %v502 = vld [vmem:[%s1 + $0xef0] sm:$0xff]
    %v503 = vld [vmem:[%s1 + $0xef8] sm:$0xff]
    %v504 = vld [vmem:[%s1 + $0xf00] sm:$0xff]
    %v505 = vld [vmem:[%s1 + $0xf08] sm:$0xff]
    %v506 = vld [vmem:[%s1 + $0xf10] sm:$0xff]
    %v507 = vld [vmem:[%s1 + $0xf18] sm:$0xff]
    %v508 = vld [vmem:[%s1 + $0xf20] sm:$0xff]
    %v509 = vld [vmem:[%s1 + $0xf28] sm:$0xff]
    %v510 = vld [vmem:[%s1 + $0xf30] sm:$0xff]
    %v511 = vld [vmem:[%s1 + $0xf38] sm:$0xff]
    %v512 = vld [vmem:[%s1 + $0xf40] sm:$0xff]
    %v513 = vld [vmem:[%s1 + $0xf48] sm:$0xff]
    %v514 = vld [vmem:[%s1 + $0xf50] sm:$0xff]
    %v515 = vld [vmem:[%s1 + $0xf58] sm:$0xff]
    %v516 = vld [vmem:[%s1 + $0xf60] sm:$0xff]
    %v517 = vld [vmem:[%s1 + $0xf68] sm:$0xff]
    %v518 = vld [vmem:[%s1 + $0xf70] sm:$0xff]
    %v519 = vld [vmem:[%s1 + $0xf78] sm:$0xff]
    %v520 = vld [vmem:[%s1 + $0xf80] sm:$0xff]
    %v521 = vld [vmem:[%s1 + $0xf88] sm:$0xff]
    %v522 = vld [vmem:[%s1 + $0xf90] sm:$0xff]
    %v523 = vld [vmem:[%s1 + $0xf98] sm:$0xff]
    %v524 = vld [vmem:[%s1 + $0xfa0] sm:$0xff]
    %v525 = vld [vmem:[%s1 + $0xfa8] sm:$0xff]
    %v526 = vld [vmem:[%s1 + $0xfb0] sm:$0xff]
    %v527 = vld [vmem:[%s1 + $0xfb8] sm:$0xff]
    %v528 = vld [vmem:[%s1 + $0xfc0] sm:$0xff]
    %v529 = vld [vmem:[%s1 + $0xfc8] sm:$0xff]
    %v530 = vld [vmem:[%s1 + $0xfd0] sm:$0xff]
    %v531 = vld [vmem:[%s1 + $0xfd8] sm:$0xff]
    %v532 = vld [vmem:[%s1 + $0xfe0] sm:$0xff]
    %v533 = vld [vmem:[%s1 + $0xfe8] sm:$0xff]
    %v534 = vld [vmem:[%s1 + $0xff0] sm:$0xff]
    %v535 = vld [vmem:[%s1 + $0xff8] sm:$0xff]
    %v536 = vld [vmem:[%s2] sm:$0xf]
    %v538 = vlaneseq
    %v539 = vshrl.u32 %v538, 7
    %v540 = vsub.s32 0, %v539
    %v541 = vrot.slane %v536, %v540
    %v542 = vlaneseq
    %v543 = vshrl.u32 %v542, 7
    %v544 = vsub.s32 1, %v543
    %v545 = vrot.slane %v536, %v544
    %v546 = vlaneseq
    %v547 = vshrl.u32 %v546, 7
    %v548 = vsub.s32 2, %v547
    %v549 = vrot.slane %v536, %v548
    %v550 = vlaneseq
    %v551 = vshrl.u32 %v550, 7
    %v552 = vsub.s32 3, %v551
    %v553 = vrot.slane %v536, %v552
    %v560 = vcombine.high %v22, %v22
    %v562 = vunpack.c.l.s4 1966171168
    %v563 = vunpack.c.0.s8 %v562
    %v564 = vlaneseq
    %v565 = vshrl.u32 %v564, 7
    %v566 = vsub.s32 %v563, %v565
    %v567 = vrot.slane %v22, %v566
    %v569 = vunpack.c.l.s4 1966171168
    %v570 = vunpack.c.0.s8 %v569
    %v571 = vlaneseq
    %v572 = vshrl.u32 %v571, 7
    %v573 = vsub.s32 %v570, %v572
    %v574 = vrot.slane %v560, %v573
    %v575 = vcombine.high %v567, %v567
    %v576 = vcombine.high %v574, %v574
    %v578 = vunpack.c.l.s4 1966171168
    %v579 = vunpack.c.0.s8 %v578
    %v580 = vlaneseq
    %v581 = vshrl.u32 %v580, 7
    %v582 = vsub.s32 %v579, %v581
    %v583 = vrot.slane %v567, %v582
    %v585 = vunpack.c.l.s4 1966171168
    %v586 = vunpack.c.0.s8 %v585
    %v587 = vlaneseq
    %v588 = vshrl.u32 %v587, 7
    %v589 = vsub.s32 %v586, %v588
    %v590 = vrot.slane %v574, %v589
    %v592 = vunpack.c.l.s4 1966171168
    %v593 = vunpack.c.0.s8 %v592
    %v594 = vlaneseq
    %v595 = vshrl.u32 %v594, 7
    %v596 = vsub.s32 %v593, %v595
    %v597 = vrot.slane %v575, %v596
    %v599 = vunpack.c.l.s4 1966171168
    %v600 = vunpack.c.0.s8 %v599
    %v601 = vlaneseq
    %v602 = vshrl.u32 %v601, 7
    %v603 = vsub.s32 %v600, %v602
    %v604 = vrot.slane %v576, %v603
    %v605 = vcombine.high %v583, %v583
    %v606 = vcombine.high %v590, %v590
    %v607 = vcombine.high %v597, %v597
    %v608 = vcombine.high %v604, %v604
    %v609 = vcombine.high %v23, %v23
    %v611 = vunpack.c.l.s4 1966171168
    %v612 = vunpack.c.0.s8 %v611
    %v613 = vlaneseq
    %v614 = vshrl.u32 %v613, 7
    %v615 = vsub.s32 %v612, %v614
    %v616 = vrot.slane %v23, %v615
    %v618 = vunpack.c.l.s4 1966171168
    %v619 = vunpack.c.0.s8 %v618
    %v620 = vlaneseq
    %v621 = vshrl.u32 %v620, 7
    %v622 = vsub.s32 %v619, %v621
    %v623 = vrot.slane %v609, %v622
    %v624 = vcombine.high %v616, %v616
    %v625 = vcombine.high %v623, %v623
    %v627 = vunpack.c.l.s4 1966171168
    %v628 = vunpack.c.0.s8 %v627
    %v629 = vlaneseq
    %v630 = vshrl.u32 %v629, 7
    %v631 = vsub.s32 %v628, %v630
    %v632 = vrot.slane %v616, %v631
    %v634 = vunpack.c.l.s4 1966171168
    %v635 = vunpack.c.0.s8 %v634
    %v636 = vlaneseq
    %v637 = vshrl.u32 %v636, 7
    %v638 = vsub.s32 %v635, %v637
    %v639 = vrot.slane %v623, %v638
    %v641 = vunpack.c.l.s4 1966171168
    %v642 = vunpack.c.0.s8 %v641
    %v643 = vlaneseq
    %v644 = vshrl.u32 %v643, 7
    %v645 = vsub.s32 %v642, %v644
    %v646 = vrot.slane %v624, %v645
    %v648 = vunpack.c.l.s4 1966171168
    %v649 = vunpack.c.0.s8 %v648
    %v650 = vlaneseq
    %v651 = vshrl.u32 %v650, 7
    %v652 = vsub.s32 %v649, %v651
    %v653 = vrot.slane %v625, %v652
    %v654 = vcombine.high %v632, %v632
    %v655 = vcombine.high %v639, %v639
    %v656 = vcombine.high %v646, %v646
    %v657 = vcombine.high %v653, %v653
    %v1186 = vunpack.c.l.b16 %v24
    %v1187 = vunpack.c.h.b16 %v24
    %v1188 = vunpack.c.l.b16 %v25
    %v1189 = vunpack.c.h.b16 %v25
    %v1190 = vunpack.c.l.b16 %v26
    %v1191 = vunpack.c.h.b16 %v26
    %v1192 = vunpack.c.l.b16 %v27
    %v1193 = vunpack.c.h.b16 %v27
    %v1194 = vunpack.c.l.b16 %v28
    %v1195 = vunpack.c.h.b16 %v28
    %v1196 = vunpack.c.l.b16 %v29
    %v1197 = vunpack.c.h.b16 %v29
    %v1198 = vunpack.c.l.b16 %v30
    %v1199 = vunpack.c.h.b16 %v30
    %v1200 = vunpack.c.l.b16 %v31
    %v1201 = vunpack.c.h.b16 %v31
    %v1202 = vunpack.c.l.b16 %v32
    %v1203 = vunpack.c.h.b16 %v32
    %v1204 = vunpack.c.l.b16 %v33
    %v1205 = vunpack.c.h.b16 %v33
    %v1206 = vunpack.c.l.b16 %v34
    %v1207 = vunpack.c.h.b16 %v34
    %v1208 = vunpack.c.l.b16 %v35
    %v1209 = vunpack.c.h.b16 %v35
    %v1210 = vunpack.c.l.b16 %v36
    %v1211 = vunpack.c.h.b16 %v36
    %v1212 = vunpack.c.l.b16 %v37
    %v1213 = vunpack.c.h.b16 %v37
    %v1214 = vunpack.c.l.b16 %v38
    %v1215 = vunpack.c.h.b16 %v38
    %v1216 = vunpack.c.l.b16 %v39
    %v1217 = vunpack.c.h.b16 %v39
    %v1218 = vunpack.c.l.b16 %v40
    %v1219 = vunpack.c.h.b16 %v40
    %v1220 = vunpack.c.l.b16 %v41
    %v1221 = vunpack.c.h.b16 %v41
    %v1222 = vunpack.c.l.b16 %v42
    %v1223 = vunpack.c.h.b16 %v42
    %v1224 = vunpack.c.l.b16 %v43
    %v1225 = vunpack.c.h.b16 %v43
    %v1226 = vunpack.c.l.b16 %v44
    %v1227 = vunpack.c.h.b16 %v44
    %v1228 = vunpack.c.l.b16 %v45
    %v1229 = vunpack.c.h.b16 %v45
    %v1230 = vunpack.c.l.b16 %v46
    %v1231 = vunpack.c.h.b16 %v46
    %v1232 = vunpack.c.l.b16 %v47
    %v1233 = vunpack.c.h.b16 %v47
    %v1234 = vunpack.c.l.b16 %v48
    %v1235 = vunpack.c.h.b16 %v48
    %v1236 = vunpack.c.l.b16 %v49
    %v1237 = vunpack.c.h.b16 %v49
    %v1238 = vunpack.c.l.b16 %v50
    %v1239 = vunpack.c.h.b16 %v50
    %v1240 = vunpack.c.l.b16 %v51
    %v1241 = vunpack.c.h.b16 %v51
    %v1242 = vunpack.c.l.b16 %v52
    %v1243 = vunpack.c.h.b16 %v52
    %v1244 = vunpack.c.l.b16 %v53
    %v1245 = vunpack.c.h.b16 %v53
    %v1246 = vunpack.c.l.b16 %v54
    %v1247 = vunpack.c.h.b16 %v54
    %v1248 = vunpack.c.l.b16 %v55
    %v1249 = vunpack.c.h.b16 %v55
    %v1250 = vunpack.c.l.b16 %v56
    %v1251 = vunpack.c.h.b16 %v56
    %v1252 = vunpack.c.l.b16 %v57
    %v1253 = vunpack.c.h.b16 %v57
    %v1254 = vunpack.c.l.b16 %v58
    %v1255 = vunpack.c.h.b16 %v58
    %v1256 = vunpack.c.l.b16 %v59
    %v1257 = vunpack.c.h.b16 %v59
    %v1258 = vunpack.c.l.b16 %v60
    %v1259 = vunpack.c.h.b16 %v60
    %v1260 = vunpack.c.l.b16 %v61
    %v1261 = vunpack.c.h.b16 %v61
    %v1262 = vunpack.c.l.b16 %v62
    %v1263 = vunpack.c.h.b16 %v62
    %v1264 = vunpack.c.l.b16 %v63
    %v1265 = vunpack.c.h.b16 %v63
    %v1266 = vunpack.c.l.b16 %v64
    %v1267 = vunpack.c.h.b16 %v64
    %v1268 = vunpack.c.l.b16 %v65
    %v1269 = vunpack.c.h.b16 %v65
    %v1270 = vunpack.c.l.b16 %v66
    %v1271 = vunpack.c.h.b16 %v66
    %v1272 = vunpack.c.l.b16 %v67
    %v1273 = vunpack.c.h.b16 %v67
    %v1274 = vunpack.c.l.b16 %v68
    %v1275 = vunpack.c.h.b16 %v68
    %v1276 = vunpack.c.l.b16 %v69
    %v1277 = vunpack.c.h.b16 %v69
    %v1278 = vunpack.c.l.b16 %v70
    %v1279 = vunpack.c.h.b16 %v70
    %v1280 = vunpack.c.l.b16 %v71
    %v1281 = vunpack.c.h.b16 %v71
    %v1282 = vunpack.c.l.b16 %v72
    %v1283 = vunpack.c.h.b16 %v72
    %v1284 = vunpack.c.l.b16 %v73
    %v1285 = vunpack.c.h.b16 %v73
    %v1286 = vunpack.c.l.b16 %v74
    %v1287 = vunpack.c.h.b16 %v74
    %v1288 = vunpack.c.l.b16 %v75
    %v1289 = vunpack.c.h.b16 %v75
    %v1290 = vunpack.c.l.b16 %v76
    %v1291 = vunpack.c.h.b16 %v76
    %v1292 = vunpack.c.l.b16 %v77
    %v1293 = vunpack.c.h.b16 %v77
    %v1294 = vunpack.c.l.b16 %v78
    %v1295 = vunpack.c.h.b16 %v78
    %v1296 = vunpack.c.l.b16 %v79
    %v1297 = vunpack.c.h.b16 %v79
    %v1298 = vunpack.c.l.b16 %v80
    %v1299 = vunpack.c.h.b16 %v80
    %v1300 = vunpack.c.l.b16 %v81
    %v1301 = vunpack.c.h.b16 %v81
    %v1302 = vunpack.c.l.b16 %v82
    %v1303 = vunpack.c.h.b16 %v82
    %v1304 = vunpack.c.l.b16 %v83
    %v1305 = vunpack.c.h.b16 %v83
    %v1306 = vunpack.c.l.b16 %v84
    %v1307 = vunpack.c.h.b16 %v84
    %v1308 = vunpack.c.l.b16 %v85
    %v1309 = vunpack.c.h.b16 %v85
    %v1310 = vunpack.c.l.b16 %v86
    %v1311 = vunpack.c.h.b16 %v86
    %v1312 = vunpack.c.l.b16 %v87
    %v1313 = vunpack.c.h.b16 %v87
    %v1314 = vunpack.c.l.b16 %v88
    %v1315 = vunpack.c.h.b16 %v88
    %v1316 = vunpack.c.l.b16 %v89
    %v1317 = vunpack.c.h.b16 %v89
    %v1318 = vunpack.c.l.b16 %v90
    %v1319 = vunpack.c.h.b16 %v90
    %v1320 = vunpack.c.l.b16 %v91
    %v1321 = vunpack.c.h.b16 %v91
    %v1322 = vunpack.c.l.b16 %v92
    %v1323 = vunpack.c.h.b16 %v92
    %v1324 = vunpack.c.l.b16 %v93
    %v1325 = vunpack.c.h.b16 %v93
    %v1326 = vunpack.c.l.b16 %v94
    %v1327 = vunpack.c.h.b16 %v94
    %v1328 = vunpack.c.l.b16 %v95
    %v1329 = vunpack.c.h.b16 %v95
    %v1330 = vunpack.c.l.b16 %v96
    %v1331 = vunpack.c.h.b16 %v96
    %v1332 = vunpack.c.l.b16 %v97
    %v1333 = vunpack.c.h.b16 %v97
    %v1334 = vunpack.c.l.b16 %v98
    %v1335 = vunpack.c.h.b16 %v98
    %v1336 = vunpack.c.l.b16 %v99
    %v1337 = vunpack.c.h.b16 %v99
    %v1338 = vunpack.c.l.b16 %v100
    %v1339 = vunpack.c.h.b16 %v100
    %v1340 = vunpack.c.l.b16 %v101
    %v1341 = vunpack.c.h.b16 %v101
    %v1342 = vunpack.c.l.b16 %v102
    %v1343 = vunpack.c.h.b16 %v102
    %v1344 = vunpack.c.l.b16 %v103
    %v1345 = vunpack.c.h.b16 %v103
    %v1346 = vunpack.c.l.b16 %v104
    %v1347 = vunpack.c.h.b16 %v104
    %v1348 = vunpack.c.l.b16 %v105
    %v1349 = vunpack.c.h.b16 %v105
    %v1350 = vunpack.c.l.b16 %v106
    %v1351 = vunpack.c.h.b16 %v106
    %v1352 = vunpack.c.l.b16 %v107
    %v1353 = vunpack.c.h.b16 %v107
    %v1354 = vunpack.c.l.b16 %v108
    %v1355 = vunpack.c.h.b16 %v108
    %v1356 = vunpack.c.l.b16 %v109
    %v1357 = vunpack.c.h.b16 %v109
    %v1358 = vunpack.c.l.b16 %v110
    %v1359 = vunpack.c.h.b16 %v110
    %v1360 = vunpack.c.l.b16 %v111
    %v1361 = vunpack.c.h.b16 %v111
    %v1362 = vunpack.c.l.b16 %v112
    %v1363 = vunpack.c.h.b16 %v112
    %v1364 = vunpack.c.l.b16 %v113
    %v1365 = vunpack.c.h.b16 %v113
    %v1366 = vunpack.c.l.b16 %v114
    %v1367 = vunpack.c.h.b16 %v114
    %v1368 = vunpack.c.l.b16 %v115
    %v1369 = vunpack.c.h.b16 %v115
    %v1370 = vunpack.c.l.b16 %v116
    %v1371 = vunpack.c.h.b16 %v116
    %v1372 = vunpack.c.l.b16 %v117
    %v1373 = vunpack.c.h.b16 %v117
    %v1374 = vunpack.c.l.b16 %v118
    %v1375 = vunpack.c.h.b16 %v118
    %v1376 = vunpack.c.l.b16 %v119
    %v1377 = vunpack.c.h.b16 %v119
    %v1378 = vunpack.c.l.b16 %v120
    %v1379 = vunpack.c.h.b16 %v120
    %v1380 = vunpack.c.l.b16 %v121
    %v1381 = vunpack.c.h.b16 %v121
    %v1382 = vunpack.c.l.b16 %v122
    %v1383 = vunpack.c.h.b16 %v122
    %v1384 = vunpack.c.l.b16 %v123
    %v1385 = vunpack.c.h.b16 %v123
    %v1386 = vunpack.c.l.b16 %v124
    %v1387 = vunpack.c.h.b16 %v124
    %v1388 = vunpack.c.l.b16 %v125
    %v1389 = vunpack.c.h.b16 %v125
    %v1390 = vunpack.c.l.b16 %v126
    %v1391 = vunpack.c.h.b16 %v126
    %v1392 = vunpack.c.l.b16 %v127
    %v1393 = vunpack.c.h.b16 %v127
    %v1394 = vunpack.c.l.b16 %v128
    %v1395 = vunpack.c.h.b16 %v128
    %v1396 = vunpack.c.l.b16 %v129
    %v1397 = vunpack.c.h.b16 %v129
    %v1398 = vunpack.c.l.b16 %v130
    %v1399 = vunpack.c.h.b16 %v130
    %v1400 = vunpack.c.l.b16 %v131
    %v1401 = vunpack.c.h.b16 %v131
    %v1402 = vunpack.c.l.b16 %v132
    %v1403 = vunpack.c.h.b16 %v132
    %v1404 = vunpack.c.l.b16 %v133
    %v1405 = vunpack.c.h.b16 %v133
    %v1406 = vunpack.c.l.b16 %v134
    %v1407 = vunpack.c.h.b16 %v134
    %v1408 = vunpack.c.l.b16 %v135
    %v1409 = vunpack.c.h.b16 %v135
    %v1410 = vunpack.c.l.b16 %v136
    %v1411 = vunpack.c.h.b16 %v136
    %v1412 = vunpack.c.l.b16 %v137
    %v1413 = vunpack.c.h.b16 %v137
    %v1414 = vunpack.c.l.b16 %v138
    %v1415 = vunpack.c.h.b16 %v138
    %v1416 = vunpack.c.l.b16 %v139
    %v1417 = vunpack.c.h.b16 %v139
    %v1418 = vunpack.c.l.b16 %v140
    %v1419 = vunpack.c.h.b16 %v140
    %v1420 = vunpack.c.l.b16 %v141
    %v1421 = vunpack.c.h.b16 %v141
    %v1422 = vunpack.c.l.b16 %v142
    %v1423 = vunpack.c.h.b16 %v142
    %v1424 = vunpack.c.l.b16 %v143
    %v1425 = vunpack.c.h.b16 %v143
    %v1426 = vunpack.c.l.b16 %v144
    %v1427 = vunpack.c.h.b16 %v144
    %v1428 = vunpack.c.l.b16 %v145
    %v1429 = vunpack.c.h.b16 %v145
    %v1430 = vunpack.c.l.b16 %v146
    %v1431 = vunpack.c.h.b16 %v146
    %v1432 = vunpack.c.l.b16 %v147
    %v1433 = vunpack.c.h.b16 %v147
    %v1434 = vunpack.c.l.b16 %v148
    %v1435 = vunpack.c.h.b16 %v148
    %v1436 = vunpack.c.l.b16 %v149
    %v1437 = vunpack.c.h.b16 %v149
    %v1438 = vunpack.c.l.b16 %v150
    %v1439 = vunpack.c.h.b16 %v150
    %v1440 = vunpack.c.l.b16 %v151
    %v1441 = vunpack.c.h.b16 %v151
    %v1442 = vunpack.c.l.b16 %v152
    %v1443 = vunpack.c.h.b16 %v152
    %v1444 = vunpack.c.l.b16 %v153
    %v1445 = vunpack.c.h.b16 %v153
    %v1446 = vunpack.c.l.b16 %v154
    %v1447 = vunpack.c.h.b16 %v154
    %v1448 = vunpack.c.l.b16 %v155
    %v1449 = vunpack.c.h.b16 %v155
    %v1450 = vunpack.c.l.b16 %v156
    %v1451 = vunpack.c.h.b16 %v156
    %v1452 = vunpack.c.l.b16 %v157
    %v1453 = vunpack.c.h.b16 %v157
    %v1454 = vunpack.c.l.b16 %v158
    %v1455 = vunpack.c.h.b16 %v158
    %v1456 = vunpack.c.l.b16 %v159
    %v1457 = vunpack.c.h.b16 %v159
    %v1458 = vunpack.c.l.b16 %v160
    %v1459 = vunpack.c.h.b16 %v160
    %v1460 = vunpack.c.l.b16 %v161
    %v1461 = vunpack.c.h.b16 %v161
    %v1462 = vunpack.c.l.b16 %v162
    %v1463 = vunpack.c.h.b16 %v162
    %v1464 = vunpack.c.l.b16 %v163
    %v1465 = vunpack.c.h.b16 %v163
    %v1466 = vunpack.c.l.b16 %v164
    %v1467 = vunpack.c.h.b16 %v164
    %v1468 = vunpack.c.l.b16 %v165
    %v1469 = vunpack.c.h.b16 %v165
    %v1470 = vunpack.c.l.b16 %v166
    %v1471 = vunpack.c.h.b16 %v166
    %v1472 = vunpack.c.l.b16 %v167
    %v1473 = vunpack.c.h.b16 %v167
    %v1474 = vunpack.c.l.b16 %v168
    %v1475 = vunpack.c.h.b16 %v168
    %v1476 = vunpack.c.l.b16 %v169
    %v1477 = vunpack.c.h.b16 %v169
    %v1478 = vunpack.c.l.b16 %v170
    %v1479 = vunpack.c.h.b16 %v170
    %v1480 = vunpack.c.l.b16 %v171
    %v1481 = vunpack.c.h.b16 %v171
    %v1482 = vunpack.c.l.b16 %v172
    %v1483 = vunpack.c.h.b16 %v172
    %v1484 = vunpack.c.l.b16 %v173
    %v1485 = vunpack.c.h.b16 %v173
    %v1486 = vunpack.c.l.b16 %v174
    %v1487 = vunpack.c.h.b16 %v174
    %v1488 = vunpack.c.l.b16 %v175
    %v1489 = vunpack.c.h.b16 %v175
    %v1490 = vunpack.c.l.b16 %v176
    %v1491 = vunpack.c.h.b16 %v176
    %v1492 = vunpack.c.l.b16 %v177
    %v1493 = vunpack.c.h.b16 %v177
    %v1494 = vunpack.c.l.b16 %v178
    %v1495 = vunpack.c.h.b16 %v178
    %v1496 = vunpack.c.l.b16 %v179
    %v1497 = vunpack.c.h.b16 %v179
    %v1498 = vunpack.c.l.b16 %v180
    %v1499 = vunpack.c.h.b16 %v180
    %v1500 = vunpack.c.l.b16 %v181
    %v1501 = vunpack.c.h.b16 %v181
    %v1502 = vunpack.c.l.b16 %v182
    %v1503 = vunpack.c.h.b16 %v182
    %v1504 = vunpack.c.l.b16 %v183
    %v1505 = vunpack.c.h.b16 %v183
    %v1506 = vunpack.c.l.b16 %v184
    %v1507 = vunpack.c.h.b16 %v184
    %v1508 = vunpack.c.l.b16 %v185
    %v1509 = vunpack.c.h.b16 %v185
    %v1510 = vunpack.c.l.b16 %v186
    %v1511 = vunpack.c.h.b16 %v186
    %v1512 = vunpack.c.l.b16 %v187
    %v1513 = vunpack.c.h.b16 %v187
    %v1514 = vunpack.c.l.b16 %v188
    %v1515 = vunpack.c.h.b16 %v188
    %v1516 = vunpack.c.l.b16 %v189
    %v1517 = vunpack.c.h.b16 %v189
    %v1518 = vunpack.c.l.b16 %v190
    %v1519 = vunpack.c.h.b16 %v190
    %v1520 = vunpack.c.l.b16 %v191
    %v1521 = vunpack.c.h.b16 %v191
    %v1522 = vunpack.c.l.b16 %v192
    %v1523 = vunpack.c.h.b16 %v192
    %v1524 = vunpack.c.l.b16 %v193
    %v1525 = vunpack.c.h.b16 %v193
    %v1526 = vunpack.c.l.b16 %v194
    %v1527 = vunpack.c.h.b16 %v194
    %v1528 = vunpack.c.l.b16 %v195
    %v1529 = vunpack.c.h.b16 %v195
    %v1530 = vunpack.c.l.b16 %v196
    %v1531 = vunpack.c.h.b16 %v196
    %v1532 = vunpack.c.l.b16 %v197
    %v1533 = vunpack.c.h.b16 %v197
    %v1534 = vunpack.c.l.b16 %v198
    %v1535 = vunpack.c.h.b16 %v198
    %v1536 = vunpack.c.l.b16 %v199
    %v1537 = vunpack.c.h.b16 %v199
    %v1538 = vunpack.c.l.b16 %v200
    %v1539 = vunpack.c.h.b16 %v200
    %v1540 = vunpack.c.l.b16 %v201
    %v1541 = vunpack.c.h.b16 %v201
    %v1542 = vunpack.c.l.b16 %v202
    %v1543 = vunpack.c.h.b16 %v202
    %v1544 = vunpack.c.l.b16 %v203
    %v1545 = vunpack.c.h.b16 %v203
    %v1546 = vunpack.c.l.b16 %v204
    %v1547 = vunpack.c.h.b16 %v204
    %v1548 = vunpack.c.l.b16 %v205
    %v1549 = vunpack.c.h.b16 %v205
    %v1550 = vunpack.c.l.b16 %v206
    %v1551 = vunpack.c.h.b16 %v206
    %v1552 = vunpack.c.l.b16 %v207
    %v1553 = vunpack.c.h.b16 %v207
    %v1554 = vunpack.c.l.b16 %v208
    %v1555 = vunpack.c.h.b16 %v208
    %v1556 = vunpack.c.l.b16 %v209
    %v1557 = vunpack.c.h.b16 %v209
    %v1558 = vunpack.c.l.b16 %v210
    %v1559 = vunpack.c.h.b16 %v210
    %v1560 = vunpack.c.l.b16 %v211
    %v1561 = vunpack.c.h.b16 %v211
    %v1562 = vunpack.c.l.b16 %v212
    %v1563 = vunpack.c.h.b16 %v212
    %v1564 = vunpack.c.l.b16 %v213
    %v1565 = vunpack.c.h.b16 %v213
    %v1566 = vunpack.c.l.b16 %v214
    %v1567 = vunpack.c.h.b16 %v214
    %v1568 = vunpack.c.l.b16 %v215
    %v1569 = vunpack.c.h.b16 %v215
    %v1570 = vunpack.c.l.b16 %v216
    %v1571 = vunpack.c.h.b16 %v216
    %v1572 = vunpack.c.l.b16 %v217
    %v1573 = vunpack.c.h.b16 %v217
    %v1574 = vunpack.c.l.b16 %v218
    %v1575 = vunpack.c.h.b16 %v218
    %v1576 = vunpack.c.l.b16 %v219
    %v1577 = vunpack.c.h.b16 %v219
    %v1578 = vunpack.c.l.b16 %v220
    %v1579 = vunpack.c.h.b16 %v220
    %v1580 = vunpack.c.l.b16 %v221
    %v1581 = vunpack.c.h.b16 %v221
    %v1582 = vunpack.c.l.b16 %v222
    %v1583 = vunpack.c.h.b16 %v222
    %v1584 = vunpack.c.l.b16 %v223
    %v1585 = vunpack.c.h.b16 %v223
    %v1586 = vunpack.c.l.b16 %v224
    %v1587 = vunpack.c.h.b16 %v224
    %v1588 = vunpack.c.l.b16 %v225
    %v1589 = vunpack.c.h.b16 %v225
    %v1590 = vunpack.c.l.b16 %v226
    %v1591 = vunpack.c.h.b16 %v226
    %v1592 = vunpack.c.l.b16 %v227
    %v1593 = vunpack.c.h.b16 %v227
    %v1594 = vunpack.c.l.b16 %v228
    %v1595 = vunpack.c.h.b16 %v228
    %v1596 = vunpack.c.l.b16 %v229
    %v1597 = vunpack.c.h.b16 %v229
    %v1598 = vunpack.c.l.b16 %v230
    %v1599 = vunpack.c.h.b16 %v230
    %v1600 = vunpack.c.l.b16 %v231
    %v1601 = vunpack.c.h.b16 %v231
    %v1602 = vunpack.c.l.b16 %v232
    %v1603 = vunpack.c.h.b16 %v232
    %v1604 = vunpack.c.l.b16 %v233
    %v1605 = vunpack.c.h.b16 %v233
    %v1606 = vunpack.c.l.b16 %v234
    %v1607 = vunpack.c.h.b16 %v234
    %v1608 = vunpack.c.l.b16 %v235
    %v1609 = vunpack.c.h.b16 %v235
    %v1610 = vunpack.c.l.b16 %v236
    %v1611 = vunpack.c.h.b16 %v236
    %v1612 = vunpack.c.l.b16 %v237
    %v1613 = vunpack.c.h.b16 %v237
    %v1614 = vunpack.c.l.b16 %v238
    %v1615 = vunpack.c.h.b16 %v238
    %v1616 = vunpack.c.l.b16 %v239
    %v1617 = vunpack.c.h.b16 %v239
    %v1618 = vunpack.c.l.b16 %v240
    %v1619 = vunpack.c.h.b16 %v240
    %v1620 = vunpack.c.l.b16 %v241
    %v1621 = vunpack.c.h.b16 %v241
    %v1622 = vunpack.c.l.b16 %v242
    %v1623 = vunpack.c.h.b16 %v242
    %v1624 = vunpack.c.l.b16 %v243
    %v1625 = vunpack.c.h.b16 %v243
    %v1626 = vunpack.c.l.b16 %v244
    %v1627 = vunpack.c.h.b16 %v244
    %v1628 = vunpack.c.l.b16 %v245
    %v1629 = vunpack.c.h.b16 %v245
    %v1630 = vunpack.c.l.b16 %v246
    %v1631 = vunpack.c.h.b16 %v246
    %v1632 = vunpack.c.l.b16 %v247
    %v1633 = vunpack.c.h.b16 %v247
    %v1634 = vunpack.c.l.b16 %v248
    %v1635 = vunpack.c.h.b16 %v248
    %v1636 = vunpack.c.l.b16 %v249
    %v1637 = vunpack.c.h.b16 %v249
    %v1638 = vunpack.c.l.b16 %v250
    %v1639 = vunpack.c.h.b16 %v250
    %v1640 = vunpack.c.l.b16 %v251
    %v1641 = vunpack.c.h.b16 %v251
    %v1642 = vunpack.c.l.b16 %v252
    %v1643 = vunpack.c.h.b16 %v252
    %v1644 = vunpack.c.l.b16 %v253
    %v1645 = vunpack.c.h.b16 %v253
    %v1646 = vunpack.c.l.b16 %v254
    %v1647 = vunpack.c.h.b16 %v254
    %v1648 = vunpack.c.l.b16 %v255
    %v1649 = vunpack.c.h.b16 %v255
    %v1650 = vunpack.c.l.b16 %v256
    %v1651 = vunpack.c.h.b16 %v256
    %v1652 = vunpack.c.l.b16 %v257
    %v1653 = vunpack.c.h.b16 %v257
    %v1654 = vunpack.c.l.b16 %v258
    %v1655 = vunpack.c.h.b16 %v258
    %v1656 = vunpack.c.l.b16 %v259
    %v1657 = vunpack.c.h.b16 %v259
    %v1658 = vunpack.c.l.b16 %v260
    %v1659 = vunpack.c.h.b16 %v260
    %v1660 = vunpack.c.l.b16 %v261
    %v1661 = vunpack.c.h.b16 %v261
    %v1662 = vunpack.c.l.b16 %v262
    %v1663 = vunpack.c.h.b16 %v262
    %v1664 = vunpack.c.l.b16 %v263
    %v1665 = vunpack.c.h.b16 %v263
    %v1666 = vunpack.c.l.b16 %v264
    %v1667 = vunpack.c.h.b16 %v264
    %v1668 = vunpack.c.l.b16 %v265
    %v1669 = vunpack.c.h.b16 %v265
    %v1670 = vunpack.c.l.b16 %v266
    %v1671 = vunpack.c.h.b16 %v266
    %v1672 = vunpack.c.l.b16 %v267
    %v1673 = vunpack.c.h.b16 %v267
    %v1674 = vunpack.c.l.b16 %v268
    %v1675 = vunpack.c.h.b16 %v268
    %v1676 = vunpack.c.l.b16 %v269
    %v1677 = vunpack.c.h.b16 %v269
    %v1678 = vunpack.c.l.b16 %v270
    %v1679 = vunpack.c.h.b16 %v270
    %v1680 = vunpack.c.l.b16 %v271
    %v1681 = vunpack.c.h.b16 %v271
    %v1682 = vunpack.c.l.b16 %v272
    %v1683 = vunpack.c.h.b16 %v272
    %v1684 = vunpack.c.l.b16 %v273
    %v1685 = vunpack.c.h.b16 %v273
    %v1686 = vunpack.c.l.b16 %v274
    %v1687 = vunpack.c.h.b16 %v274
    %v1688 = vunpack.c.l.b16 %v275
    %v1689 = vunpack.c.h.b16 %v275
    %v1690 = vunpack.c.l.b16 %v276
    %v1691 = vunpack.c.h.b16 %v276
    %v1692 = vunpack.c.l.b16 %v277
    %v1693 = vunpack.c.h.b16 %v277
    %v1694 = vunpack.c.l.b16 %v278
    %v1695 = vunpack.c.h.b16 %v278
    %v1696 = vunpack.c.l.b16 %v279
    %v1697 = vunpack.c.h.b16 %v279
    %v1698 = vunpack.c.l.b16 %v280
    %v1699 = vunpack.c.h.b16 %v280
    %v1700 = vunpack.c.l.b16 %v281
    %v1701 = vunpack.c.h.b16 %v281
    %v1702 = vunpack.c.l.b16 %v282
    %v1703 = vunpack.c.h.b16 %v282
    %v1704 = vunpack.c.l.b16 %v283
    %v1705 = vunpack.c.h.b16 %v283
    %v1706 = vunpack.c.l.b16 %v284
    %v1707 = vunpack.c.h.b16 %v284
    %v1708 = vunpack.c.l.b16 %v285
    %v1709 = vunpack.c.h.b16 %v285
    %v1710 = vunpack.c.l.b16 %v286
    %v1711 = vunpack.c.h.b16 %v286
    %v1712 = vunpack.c.l.b16 %v287
    %v1713 = vunpack.c.h.b16 %v287
    %v1714 = vunpack.c.l.b16 %v288
    %v1715 = vunpack.c.h.b16 %v288
    %v1716 = vunpack.c.l.b16 %v289
    %v1717 = vunpack.c.h.b16 %v289
    %v1718 = vunpack.c.l.b16 %v290
    %v1719 = vunpack.c.h.b16 %v290
    %v1720 = vunpack.c.l.b16 %v291
    %v1721 = vunpack.c.h.b16 %v291
    %v1722 = vunpack.c.l.b16 %v292
    %v1723 = vunpack.c.h.b16 %v292
    %v1724 = vunpack.c.l.b16 %v293
    %v1725 = vunpack.c.h.b16 %v293
    %v1726 = vunpack.c.l.b16 %v294
    %v1727 = vunpack.c.h.b16 %v294
    %v1728 = vunpack.c.l.b16 %v295
    %v1729 = vunpack.c.h.b16 %v295
    %v1730 = vunpack.c.l.b16 %v296
    %v1731 = vunpack.c.h.b16 %v296
    %v1732 = vunpack.c.l.b16 %v297
    %v1733 = vunpack.c.h.b16 %v297
    %v1734 = vunpack.c.l.b16 %v298
    %v1735 = vunpack.c.h.b16 %v298
    %v1736 = vunpack.c.l.b16 %v299
    %v1737 = vunpack.c.h.b16 %v299
    %v1738 = vunpack.c.l.b16 %v300
    %v1739 = vunpack.c.h.b16 %v300
    %v1740 = vunpack.c.l.b16 %v301
    %v1741 = vunpack.c.h.b16 %v301
    %v1742 = vunpack.c.l.b16 %v302
    %v1743 = vunpack.c.h.b16 %v302
    %v1744 = vunpack.c.l.b16 %v303
    %v1745 = vunpack.c.h.b16 %v303
    %v1746 = vunpack.c.l.b16 %v304
    %v1747 = vunpack.c.h.b16 %v304
    %v1748 = vunpack.c.l.b16 %v305
    %v1749 = vunpack.c.h.b16 %v305
    %v1750 = vunpack.c.l.b16 %v306
    %v1751 = vunpack.c.h.b16 %v306
    %v1752 = vunpack.c.l.b16 %v307
    %v1753 = vunpack.c.h.b16 %v307
    %v1754 = vunpack.c.l.b16 %v308
    %v1755 = vunpack.c.h.b16 %v308
    %v1756 = vunpack.c.l.b16 %v309
    %v1757 = vunpack.c.h.b16 %v309
    %v1758 = vunpack.c.l.b16 %v310
    %v1759 = vunpack.c.h.b16 %v310
    %v1760 = vunpack.c.l.b16 %v311
    %v1761 = vunpack.c.h.b16 %v311
    %v1762 = vunpack.c.l.b16 %v312
    %v1763 = vunpack.c.h.b16 %v312
    %v1764 = vunpack.c.l.b16 %v313
    %v1765 = vunpack.c.h.b16 %v313
    %v1766 = vunpack.c.l.b16 %v314
    %v1767 = vunpack.c.h.b16 %v314
    %v1768 = vunpack.c.l.b16 %v315
    %v1769 = vunpack.c.h.b16 %v315
    %v1770 = vunpack.c.l.b16 %v316
    %v1771 = vunpack.c.h.b16 %v316
    %v1772 = vunpack.c.l.b16 %v317
    %v1773 = vunpack.c.h.b16 %v317
    %v1774 = vunpack.c.l.b16 %v318
    %v1775 = vunpack.c.h.b16 %v318
    %v1776 = vunpack.c.l.b16 %v319
    %v1777 = vunpack.c.h.b16 %v319
    %v1778 = vunpack.c.l.b16 %v320
    %v1779 = vunpack.c.h.b16 %v320
    %v1780 = vunpack.c.l.b16 %v321
    %v1781 = vunpack.c.h.b16 %v321
    %v1782 = vunpack.c.l.b16 %v322
    %v1783 = vunpack.c.h.b16 %v322
    %v1784 = vunpack.c.l.b16 %v323
    %v1785 = vunpack.c.h.b16 %v323
    %v1786 = vunpack.c.l.b16 %v324
    %v1787 = vunpack.c.h.b16 %v324
    %v1788 = vunpack.c.l.b16 %v325
    %v1789 = vunpack.c.h.b16 %v325
    %v1790 = vunpack.c.l.b16 %v326
    %v1791 = vunpack.c.h.b16 %v326
    %v1792 = vunpack.c.l.b16 %v327
    %v1793 = vunpack.c.h.b16 %v327
    %v1794 = vunpack.c.l.b16 %v328
    %v1795 = vunpack.c.h.b16 %v328
    %v1796 = vunpack.c.l.b16 %v329
    %v1797 = vunpack.c.h.b16 %v329
    %v1798 = vunpack.c.l.b16 %v330
    %v1799 = vunpack.c.h.b16 %v330
    %v1800 = vunpack.c.l.b16 %v331
    %v1801 = vunpack.c.h.b16 %v331
    %v1802 = vunpack.c.l.b16 %v332
    %v1803 = vunpack.c.h.b16 %v332
    %v1804 = vunpack.c.l.b16 %v333
    %v1805 = vunpack.c.h.b16 %v333
    %v1806 = vunpack.c.l.b16 %v334
    %v1807 = vunpack.c.h.b16 %v334
    %v1808 = vunpack.c.l.b16 %v335
    %v1809 = vunpack.c.h.b16 %v335
    %v1810 = vunpack.c.l.b16 %v336
    %v1811 = vunpack.c.h.b16 %v336
    %v1812 = vunpack.c.l.b16 %v337
    %v1813 = vunpack.c.h.b16 %v337
    %v1814 = vunpack.c.l.b16 %v338
    %v1815 = vunpack.c.h.b16 %v338
    %v1816 = vunpack.c.l.b16 %v339
    %v1817 = vunpack.c.h.b16 %v339
    %v1818 = vunpack.c.l.b16 %v340
    %v1819 = vunpack.c.h.b16 %v340
    %v1820 = vunpack.c.l.b16 %v341
    %v1821 = vunpack.c.h.b16 %v341
    %v1822 = vunpack.c.l.b16 %v342
    %v1823 = vunpack.c.h.b16 %v342
    %v1824 = vunpack.c.l.b16 %v343
    %v1825 = vunpack.c.h.b16 %v343
    %v1826 = vunpack.c.l.b16 %v344
    %v1827 = vunpack.c.h.b16 %v344
    %v1828 = vunpack.c.l.b16 %v345
    %v1829 = vunpack.c.h.b16 %v345
    %v1830 = vunpack.c.l.b16 %v346
    %v1831 = vunpack.c.h.b16 %v346
    %v1832 = vunpack.c.l.b16 %v347
    %v1833 = vunpack.c.h.b16 %v347
    %v1834 = vunpack.c.l.b16 %v348
    %v1835 = vunpack.c.h.b16 %v348
    %v1836 = vunpack.c.l.b16 %v349
    %v1837 = vunpack.c.h.b16 %v349
    %v1838 = vunpack.c.l.b16 %v350
    %v1839 = vunpack.c.h.b16 %v350
    %v1840 = vunpack.c.l.b16 %v351
    %v1841 = vunpack.c.h.b16 %v351
    %v1842 = vunpack.c.l.b16 %v352
    %v1843 = vunpack.c.h.b16 %v352
    %v1844 = vunpack.c.l.b16 %v353
    %v1845 = vunpack.c.h.b16 %v353
    %v1846 = vunpack.c.l.b16 %v354
    %v1847 = vunpack.c.h.b16 %v354
    %v1848 = vunpack.c.l.b16 %v355
    %v1849 = vunpack.c.h.b16 %v355
    %v1850 = vunpack.c.l.b16 %v356
    %v1851 = vunpack.c.h.b16 %v356
    %v1852 = vunpack.c.l.b16 %v357
    %v1853 = vunpack.c.h.b16 %v357
    %v1854 = vunpack.c.l.b16 %v358
    %v1855 = vunpack.c.h.b16 %v358
    %v1856 = vunpack.c.l.b16 %v359
    %v1857 = vunpack.c.h.b16 %v359
    %v1858 = vunpack.c.l.b16 %v360
    %v1859 = vunpack.c.h.b16 %v360
    %v1860 = vunpack.c.l.b16 %v361
    %v1861 = vunpack.c.h.b16 %v361
    %v1862 = vunpack.c.l.b16 %v362
    %v1863 = vunpack.c.h.b16 %v362
    %v1864 = vunpack.c.l.b16 %v363
    %v1865 = vunpack.c.h.b16 %v363
    %v1866 = vunpack.c.l.b16 %v364
    %v1867 = vunpack.c.h.b16 %v364
    %v1868 = vunpack.c.l.b16 %v365
    %v1869 = vunpack.c.h.b16 %v365
    %v1870 = vunpack.c.l.b16 %v366
    %v1871 = vunpack.c.h.b16 %v366
    %v1872 = vunpack.c.l.b16 %v367
    %v1873 = vunpack.c.h.b16 %v367
    %v1874 = vunpack.c.l.b16 %v368
    %v1875 = vunpack.c.h.b16 %v368
    %v1876 = vunpack.c.l.b16 %v369
    %v1877 = vunpack.c.h.b16 %v369
    %v1878 = vunpack.c.l.b16 %v370
    %v1879 = vunpack.c.h.b16 %v370
    %v1880 = vunpack.c.l.b16 %v371
    %v1881 = vunpack.c.h.b16 %v371
    %v1882 = vunpack.c.l.b16 %v372
    %v1883 = vunpack.c.h.b16 %v372
    %v1884 = vunpack.c.l.b16 %v373
    %v1885 = vunpack.c.h.b16 %v373
    %v1886 = vunpack.c.l.b16 %v374
    %v1887 = vunpack.c.h.b16 %v374
    %v1888 = vunpack.c.l.b16 %v375
    %v1889 = vunpack.c.h.b16 %v375
    %v1890 = vunpack.c.l.b16 %v376
    %v1891 = vunpack.c.h.b16 %v376
    %v1892 = vunpack.c.l.b16 %v377
    %v1893 = vunpack.c.h.b16 %v377
    %v1894 = vunpack.c.l.b16 %v378
    %v1895 = vunpack.c.h.b16 %v378
    %v1896 = vunpack.c.l.b16 %v379
    %v1897 = vunpack.c.h.b16 %v379
    %v1898 = vunpack.c.l.b16 %v380
    %v1899 = vunpack.c.h.b16 %v380
    %v1900 = vunpack.c.l.b16 %v381
    %v1901 = vunpack.c.h.b16 %v381
    %v1902 = vunpack.c.l.b16 %v382
    %v1903 = vunpack.c.h.b16 %v382
    %v1904 = vunpack.c.l.b16 %v383
    %v1905 = vunpack.c.h.b16 %v383
    %v1906 = vunpack.c.l.b16 %v384
    %v1907 = vunpack.c.h.b16 %v384
    %v1908 = vunpack.c.l.b16 %v385
    %v1909 = vunpack.c.h.b16 %v385
    %v1910 = vunpack.c.l.b16 %v386
    %v1911 = vunpack.c.h.b16 %v386
    %v1912 = vunpack.c.l.b16 %v387
    %v1913 = vunpack.c.h.b16 %v387
    %v1914 = vunpack.c.l.b16 %v388
    %v1915 = vunpack.c.h.b16 %v388
    %v1916 = vunpack.c.l.b16 %v389
    %v1917 = vunpack.c.h.b16 %v389
    %v1918 = vunpack.c.l.b16 %v390
    %v1919 = vunpack.c.h.b16 %v390
    %v1920 = vunpack.c.l.b16 %v391
    %v1921 = vunpack.c.h.b16 %v391
    %v1922 = vunpack.c.l.b16 %v392
    %v1923 = vunpack.c.h.b16 %v392
    %v1924 = vunpack.c.l.b16 %v393
    %v1925 = vunpack.c.h.b16 %v393
    %v1926 = vunpack.c.l.b16 %v394
    %v1927 = vunpack.c.h.b16 %v394
    %v1928 = vunpack.c.l.b16 %v395
    %v1929 = vunpack.c.h.b16 %v395
    %v1930 = vunpack.c.l.b16 %v396
    %v1931 = vunpack.c.h.b16 %v396
    %v1932 = vunpack.c.l.b16 %v397
    %v1933 = vunpack.c.h.b16 %v397
    %v1934 = vunpack.c.l.b16 %v398
    %v1935 = vunpack.c.h.b16 %v398
    %v1936 = vunpack.c.l.b16 %v399
    %v1937 = vunpack.c.h.b16 %v399
    %v1938 = vunpack.c.l.b16 %v400
    %v1939 = vunpack.c.h.b16 %v400
    %v1940 = vunpack.c.l.b16 %v401
    %v1941 = vunpack.c.h.b16 %v401
    %v1942 = vunpack.c.l.b16 %v402
    %v1943 = vunpack.c.h.b16 %v402
    %v1944 = vunpack.c.l.b16 %v403
    %v1945 = vunpack.c.h.b16 %v403
    %v1946 = vunpack.c.l.b16 %v404
    %v1947 = vunpack.c.h.b16 %v404
    %v1948 = vunpack.c.l.b16 %v405
    %v1949 = vunpack.c.h.b16 %v405
    %v1950 = vunpack.c.l.b16 %v406
    %v1951 = vunpack.c.h.b16 %v406
    %v1952 = vunpack.c.l.b16 %v407
    %v1953 = vunpack.c.h.b16 %v407
    %v1954 = vunpack.c.l.b16 %v408
    %v1955 = vunpack.c.h.b16 %v408
    %v1956 = vunpack.c.l.b16 %v409
    %v1957 = vunpack.c.h.b16 %v409
    %v1958 = vunpack.c.l.b16 %v410
    %v1959 = vunpack.c.h.b16 %v410
    %v1960 = vunpack.c.l.b16 %v411
    %v1961 = vunpack.c.h.b16 %v411
    %v1962 = vunpack.c.l.b16 %v412
    %v1963 = vunpack.c.h.b16 %v412
    %v1964 = vunpack.c.l.b16 %v413
    %v1965 = vunpack.c.h.b16 %v413
    %v1966 = vunpack.c.l.b16 %v414
    %v1967 = vunpack.c.h.b16 %v414
    %v1968 = vunpack.c.l.b16 %v415
    %v1969 = vunpack.c.h.b16 %v415
    %v1970 = vunpack.c.l.b16 %v416
    %v1971 = vunpack.c.h.b16 %v416
    %v1972 = vunpack.c.l.b16 %v417
    %v1973 = vunpack.c.h.b16 %v417
    %v1974 = vunpack.c.l.b16 %v418
    %v1975 = vunpack.c.h.b16 %v418
    %v1976 = vunpack.c.l.b16 %v419
    %v1977 = vunpack.c.h.b16 %v419
    %v1978 = vunpack.c.l.b16 %v420
    %v1979 = vunpack.c.h.b16 %v420
    %v1980 = vunpack.c.l.b16 %v421
    %v1981 = vunpack.c.h.b16 %v421
    %v1982 = vunpack.c.l.b16 %v422
    %v1983 = vunpack.c.h.b16 %v422
    %v1984 = vunpack.c.l.b16 %v423
    %v1985 = vunpack.c.h.b16 %v423
    %v1986 = vunpack.c.l.b16 %v424
    %v1987 = vunpack.c.h.b16 %v424
    %v1988 = vunpack.c.l.b16 %v425
    %v1989 = vunpack.c.h.b16 %v425
    %v1990 = vunpack.c.l.b16 %v426
    %v1991 = vunpack.c.h.b16 %v426
    %v1992 = vunpack.c.l.b16 %v427
    %v1993 = vunpack.c.h.b16 %v427
    %v1994 = vunpack.c.l.b16 %v428
    %v1995 = vunpack.c.h.b16 %v428
    %v1996 = vunpack.c.l.b16 %v429
    %v1997 = vunpack.c.h.b16 %v429
    %v1998 = vunpack.c.l.b16 %v430
    %v1999 = vunpack.c.h.b16 %v430
    %v2000 = vunpack.c.l.b16 %v431
    %v2001 = vunpack.c.h.b16 %v431
    %v2002 = vunpack.c.l.b16 %v432
    %v2003 = vunpack.c.h.b16 %v432
    %v2004 = vunpack.c.l.b16 %v433
    %v2005 = vunpack.c.h.b16 %v433
    %v2006 = vunpack.c.l.b16 %v434
    %v2007 = vunpack.c.h.b16 %v434
    %v2008 = vunpack.c.l.b16 %v435
    %v2009 = vunpack.c.h.b16 %v435
    %v2010 = vunpack.c.l.b16 %v436
    %v2011 = vunpack.c.h.b16 %v436
    %v2012 = vunpack.c.l.b16 %v437
    %v2013 = vunpack.c.h.b16 %v437
    %v2014 = vunpack.c.l.b16 %v438
    %v2015 = vunpack.c.h.b16 %v438
    %v2016 = vunpack.c.l.b16 %v439
    %v2017 = vunpack.c.h.b16 %v439
    %v2018 = vunpack.c.l.b16 %v440
    %v2019 = vunpack.c.h.b16 %v440
    %v2020 = vunpack.c.l.b16 %v441
    %v2021 = vunpack.c.h.b16 %v441
    %v2022 = vunpack.c.l.b16 %v442
    %v2023 = vunpack.c.h.b16 %v442
    %v2024 = vunpack.c.l.b16 %v443
    %v2025 = vunpack.c.h.b16 %v443
    %v2026 = vunpack.c.l.b16 %v444
    %v2027 = vunpack.c.h.b16 %v444
    %v2028 = vunpack.c.l.b16 %v445
    %v2029 = vunpack.c.h.b16 %v445
    %v2030 = vunpack.c.l.b16 %v446
    %v2031 = vunpack.c.h.b16 %v446
    %v2032 = vunpack.c.l.b16 %v447
    %v2033 = vunpack.c.h.b16 %v447
    %v2034 = vunpack.c.l.b16 %v448
    %v2035 = vunpack.c.h.b16 %v448
    %v2036 = vunpack.c.l.b16 %v449
    %v2037 = vunpack.c.h.b16 %v449
    %v2038 = vunpack.c.l.b16 %v450
    %v2039 = vunpack.c.h.b16 %v450
    %v2040 = vunpack.c.l.b16 %v451
    %v2041 = vunpack.c.h.b16 %v451
    %v2042 = vunpack.c.l.b16 %v452
    %v2043 = vunpack.c.h.b16 %v452
    %v2044 = vunpack.c.l.b16 %v453
    %v2045 = vunpack.c.h.b16 %v453
    %v2046 = vunpack.c.l.b16 %v454
    %v2047 = vunpack.c.h.b16 %v454
    %v2048 = vunpack.c.l.b16 %v455
    %v2049 = vunpack.c.h.b16 %v455
    %v2050 = vunpack.c.l.b16 %v456
    %v2051 = vunpack.c.h.b16 %v456
    %v2052 = vunpack.c.l.b16 %v457
    %v2053 = vunpack.c.h.b16 %v457
    %v2054 = vunpack.c.l.b16 %v458
    %v2055 = vunpack.c.h.b16 %v458
    %v2056 = vunpack.c.l.b16 %v459
    %v2057 = vunpack.c.h.b16 %v459
    %v2058 = vunpack.c.l.b16 %v460
    %v2059 = vunpack.c.h.b16 %v460
    %v2060 = vunpack.c.l.b16 %v461
    %v2061 = vunpack.c.h.b16 %v461
    %v2062 = vunpack.c.l.b16 %v462
    %v2063 = vunpack.c.h.b16 %v462
    %v2064 = vunpack.c.l.b16 %v463
    %v2065 = vunpack.c.h.b16 %v463
    %v2066 = vunpack.c.l.b16 %v464
    %v2067 = vunpack.c.h.b16 %v464
    %v2068 = vunpack.c.l.b16 %v465
    %v2069 = vunpack.c.h.b16 %v465
    %v2070 = vunpack.c.l.b16 %v466
    %v2071 = vunpack.c.h.b16 %v466
    %v2072 = vunpack.c.l.b16 %v467
    %v2073 = vunpack.c.h.b16 %v467
    %v2074 = vunpack.c.l.b16 %v468
    %v2075 = vunpack.c.h.b16 %v468
    %v2076 = vunpack.c.l.b16 %v469
    %v2077 = vunpack.c.h.b16 %v469
    %v2078 = vunpack.c.l.b16 %v470
    %v2079 = vunpack.c.h.b16 %v470
    %v2080 = vunpack.c.l.b16 %v471
    %v2081 = vunpack.c.h.b16 %v471
    %v2082 = vunpack.c.l.b16 %v472
    %v2083 = vunpack.c.h.b16 %v472
    %v2084 = vunpack.c.l.b16 %v473
    %v2085 = vunpack.c.h.b16 %v473
    %v2086 = vunpack.c.l.b16 %v474
    %v2087 = vunpack.c.h.b16 %v474
    %v2088 = vunpack.c.l.b16 %v475
    %v2089 = vunpack.c.h.b16 %v475
    %v2090 = vunpack.c.l.b16 %v476
    %v2091 = vunpack.c.h.b16 %v476
    %v2092 = vunpack.c.l.b16 %v477
    %v2093 = vunpack.c.h.b16 %v477
    %v2094 = vunpack.c.l.b16 %v478
    %v2095 = vunpack.c.h.b16 %v478
    %v2096 = vunpack.c.l.b16 %v479
    %v2097 = vunpack.c.h.b16 %v479
    %v2098 = vunpack.c.l.b16 %v480
    %v2099 = vunpack.c.h.b16 %v480
    %v2100 = vunpack.c.l.b16 %v481
    %v2101 = vunpack.c.h.b16 %v481
    %v2102 = vunpack.c.l.b16 %v482
    %v2103 = vunpack.c.h.b16 %v482
    %v2104 = vunpack.c.l.b16 %v483
    %v2105 = vunpack.c.h.b16 %v483
    %v2106 = vunpack.c.l.b16 %v484
    %v2107 = vunpack.c.h.b16 %v484
    %v2108 = vunpack.c.l.b16 %v485
    %v2109 = vunpack.c.h.b16 %v485
    %v2110 = vunpack.c.l.b16 %v486
    %v2111 = vunpack.c.h.b16 %v486
    %v2112 = vunpack.c.l.b16 %v487
    %v2113 = vunpack.c.h.b16 %v487
    %v2114 = vunpack.c.l.b16 %v488
    %v2115 = vunpack.c.h.b16 %v488
    %v2116 = vunpack.c.l.b16 %v489
    %v2117 = vunpack.c.h.b16 %v489
    %v2118 = vunpack.c.l.b16 %v490
    %v2119 = vunpack.c.h.b16 %v490
    %v2120 = vunpack.c.l.b16 %v491
    %v2121 = vunpack.c.h.b16 %v491
    %v2122 = vunpack.c.l.b16 %v492
    %v2123 = vunpack.c.h.b16 %v492
    %v2124 = vunpack.c.l.b16 %v493
    %v2125 = vunpack.c.h.b16 %v493
    %v2126 = vunpack.c.l.b16 %v494
    %v2127 = vunpack.c.h.b16 %v494
    %v2128 = vunpack.c.l.b16 %v495
    %v2129 = vunpack.c.h.b16 %v495
    %v2130 = vunpack.c.l.b16 %v496
    %v2131 = vunpack.c.h.b16 %v496
    %v2132 = vunpack.c.l.b16 %v497
    %v2133 = vunpack.c.h.b16 %v497
    %v2134 = vunpack.c.l.b16 %v498
    %v2135 = vunpack.c.h.b16 %v498
    %v2136 = vunpack.c.l.b16 %v499
    %v2137 = vunpack.c.h.b16 %v499
    %v2138 = vunpack.c.l.b16 %v500
    %v2139 = vunpack.c.h.b16 %v500
    %v2140 = vunpack.c.l.b16 %v501
    %v2141 = vunpack.c.h.b16 %v501
    %v2142 = vunpack.c.l.b16 %v502
    %v2143 = vunpack.c.h.b16 %v502
    %v2144 = vunpack.c.l.b16 %v503
    %v2145 = vunpack.c.h.b16 %v503
    %v2146 = vunpack.c.l.b16 %v504
    %v2147 = vunpack.c.h.b16 %v504
    %v2148 = vunpack.c.l.b16 %v505
    %v2149 = vunpack.c.h.b16 %v505
    %v2150 = vunpack.c.l.b16 %v506
    %v2151 = vunpack.c.h.b16 %v506
    %v2152 = vunpack.c.l.b16 %v507
    %v2153 = vunpack.c.h.b16 %v507
    %v2154 = vunpack.c.l.b16 %v508
    %v2155 = vunpack.c.h.b16 %v508
    %v2156 = vunpack.c.l.b16 %v509
    %v2157 = vunpack.c.h.b16 %v509
    %v2158 = vunpack.c.l.b16 %v510
    %v2159 = vunpack.c.h.b16 %v510
    %v2160 = vunpack.c.l.b16 %v511
    %v2161 = vunpack.c.h.b16 %v511
    %v2162 = vunpack.c.l.b16 %v512
    %v2163 = vunpack.c.h.b16 %v512
    %v2164 = vunpack.c.l.b16 %v513
    %v2165 = vunpack.c.h.b16 %v513
    %v2166 = vunpack.c.l.b16 %v514
    %v2167 = vunpack.c.h.b16 %v514
    %v2168 = vunpack.c.l.b16 %v515
    %v2169 = vunpack.c.h.b16 %v515
    %v2170 = vunpack.c.l.b16 %v516
    %v2171 = vunpack.c.h.b16 %v516
    %v2172 = vunpack.c.l.b16 %v517
    %v2173 = vunpack.c.h.b16 %v517
    %v2174 = vunpack.c.l.b16 %v518
    %v2175 = vunpack.c.h.b16 %v518
    %v2176 = vunpack.c.l.b16 %v519
    %v2177 = vunpack.c.h.b16 %v519
    %v2178 = vunpack.c.l.b16 %v520
    %v2179 = vunpack.c.h.b16 %v520
    %v2180 = vunpack.c.l.b16 %v521
    %v2181 = vunpack.c.h.b16 %v521
    %v2182 = vunpack.c.l.b16 %v522
    %v2183 = vunpack.c.h.b16 %v522
    %v2184 = vunpack.c.l.b16 %v523
    %v2185 = vunpack.c.h.b16 %v523
    %v2186 = vunpack.c.l.b16 %v524
    %v2187 = vunpack.c.h.b16 %v524
    %v2188 = vunpack.c.l.b16 %v525
    %v2189 = vunpack.c.h.b16 %v525
    %v2190 = vunpack.c.l.b16 %v526
    %v2191 = vunpack.c.h.b16 %v526
    %v2192 = vunpack.c.l.b16 %v527
    %v2193 = vunpack.c.h.b16 %v527
    %v2194 = vunpack.c.l.b16 %v528
    %v2195 = vunpack.c.h.b16 %v528
    %v2196 = vunpack.c.l.b16 %v529
    %v2197 = vunpack.c.h.b16 %v529
    %v2198 = vunpack.c.l.b16 %v530
    %v2199 = vunpack.c.h.b16 %v530
    %v2200 = vunpack.c.l.b16 %v531
    %v2201 = vunpack.c.h.b16 %v531
    %v2202 = vunpack.c.l.b16 %v532
    %v2203 = vunpack.c.h.b16 %v532
    %v2204 = vunpack.c.l.b16 %v533
    %v2205 = vunpack.c.h.b16 %v533
    %v2206 = vunpack.c.l.b16 %v534
    %v2207 = vunpack.c.h.b16 %v534
    %v2208 = vunpack.c.l.b16 %v535
    %v2209 = vunpack.c.h.b16 %v535
    %v2210 = vpack.c.b16 %v1190, %v1186
    %v2211 = vpack.c.b16 %v1191, %v1187
    %v2212 = vpack.c.b16 %v1192, %v1188
    %v2213 = vpack.c.b16 %v1193, %v1189
    %v2214 = vpack.c.b16 %v1198, %v1194
    %v2215 = vpack.c.b16 %v1199, %v1195
    %v2216 = vpack.c.b16 %v1200, %v1196
    %v2217 = vpack.c.b16 %v1201, %v1197
    %v2218 = vpack.c.b16 %v1206, %v1202
    %v2219 = vpack.c.b16 %v1207, %v1203
    %v2220 = vpack.c.b16 %v1208, %v1204
    %v2221 = vpack.c.b16 %v1209, %v1205
    %v2222 = vpack.c.b16 %v1214, %v1210
    %v2223 = vpack.c.b16 %v1215, %v1211
    %v2224 = vpack.c.b16 %v1216, %v1212
    %v2225 = vpack.c.b16 %v1217, %v1213
    %v2226 = vpack.c.b16 %v1222, %v1218
    %v2227 = vpack.c.b16 %v1223, %v1219
    %v2228 = vpack.c.b16 %v1224, %v1220
    %v2229 = vpack.c.b16 %v1225, %v1221
    %v2230 = vpack.c.b16 %v1230, %v1226
    %v2231 = vpack.c.b16 %v1231, %v1227
    %v2232 = vpack.c.b16 %v1232, %v1228
    %v2233 = vpack.c.b16 %v1233, %v1229
    %v2234 = vpack.c.b16 %v1238, %v1234
    %v2235 = vpack.c.b16 %v1239, %v1235
    %v2236 = vpack.c.b16 %v1240, %v1236
    %v2237 = vpack.c.b16 %v1241, %v1237
    %v2238 = vpack.c.b16 %v1246, %v1242
    %v2239 = vpack.c.b16 %v1247, %v1243
    %v2240 = vpack.c.b16 %v1248, %v1244
    %v2241 = vpack.c.b16 %v1249, %v1245
    %v2242 = vpack.c.b16 %v1254, %v1250
    %v2243 = vpack.c.b16 %v1255, %v1251
    %v2244 = vpack.c.b16 %v1256, %v1252
    %v2245 = vpack.c.b16 %v1257, %v1253
    %v2246 = vpack.c.b16 %v1262, %v1258
    %v2247 = vpack.c.b16 %v1263, %v1259
    %v2248 = vpack.c.b16 %v1264, %v1260
    %v2249 = vpack.c.b16 %v1265, %v1261
    %v2250 = vpack.c.b16 %v1270, %v1266
    %v2251 = vpack.c.b16 %v1271, %v1267
    %v2252 = vpack.c.b16 %v1272, %v1268
    %v2253 = vpack.c.b16 %v1273, %v1269
    %v2254 = vpack.c.b16 %v1278, %v1274
    %v2255 = vpack.c.b16 %v1279, %v1275
    %v2256 = vpack.c.b16 %v1280, %v1276
    %v2257 = vpack.c.b16 %v1281, %v1277
    %v2258 = vpack.c.b16 %v1286, %v1282
    %v2259 = vpack.c.b16 %v1287, %v1283
    %v2260 = vpack.c.b16 %v1288, %v1284
    %v2261 = vpack.c.b16 %v1289, %v1285
    %v2262 = vpack.c.b16 %v1294, %v1290
    %v2263 = vpack.c.b16 %v1295, %v1291
    %v2264 = vpack.c.b16 %v1296, %v1292
    %v2265 = vpack.c.b16 %v1297, %v1293
    %v2266 = vpack.c.b16 %v1302, %v1298
    %v2267 = vpack.c.b16 %v1303, %v1299
    %v2268 = vpack.c.b16 %v1304, %v1300
    %v2269 = vpack.c.b16 %v1305, %v1301
    %v2270 = vpack.c.b16 %v1310, %v1306
    %v2271 = vpack.c.b16 %v1311, %v1307
    %v2272 = vpack.c.b16 %v1312, %v1308
    %v2273 = vpack.c.b16 %v1313, %v1309
    %v2274 = vpack.c.b16 %v1318, %v1314
    %v2275 = vpack.c.b16 %v1319, %v1315
    %v2276 = vpack.c.b16 %v1320, %v1316
    %v2277 = vpack.c.b16 %v1321, %v1317
    %v2278 = vpack.c.b16 %v1326, %v1322
    %v2279 = vpack.c.b16 %v1327, %v1323
    %v2280 = vpack.c.b16 %v1328, %v1324
    %v2281 = vpack.c.b16 %v1329, %v1325
    %v2282 = vpack.c.b16 %v1334, %v1330
    %v2283 = vpack.c.b16 %v1335, %v1331
    %v2284 = vpack.c.b16 %v1336, %v1332
    %v2285 = vpack.c.b16 %v1337, %v1333
    %v2286 = vpack.c.b16 %v1342, %v1338
    %v2287 = vpack.c.b16 %v1343, %v1339
    %v2288 = vpack.c.b16 %v1344, %v1340
    %v2289 = vpack.c.b16 %v1345, %v1341
    %v2290 = vpack.c.b16 %v1350, %v1346
    %v2291 = vpack.c.b16 %v1351, %v1347
    %v2292 = vpack.c.b16 %v1352, %v1348
    %v2293 = vpack.c.b16 %v1353, %v1349
    %v2294 = vpack.c.b16 %v1358, %v1354
    %v2295 = vpack.c.b16 %v1359, %v1355
    %v2296 = vpack.c.b16 %v1360, %v1356
    %v2297 = vpack.c.b16 %v1361, %v1357
    %v2298 = vpack.c.b16 %v1366, %v1362
    %v2299 = vpack.c.b16 %v1367, %v1363
    %v2300 = vpack.c.b16 %v1368, %v1364
    %v2301 = vpack.c.b16 %v1369, %v1365
    %v2302 = vpack.c.b16 %v1374, %v1370
    %v2303 = vpack.c.b16 %v1375, %v1371
    %v2304 = vpack.c.b16 %v1376, %v1372
    %v2305 = vpack.c.b16 %v1377, %v1373
    %v2306 = vpack.c.b16 %v1382, %v1378
    %v2307 = vpack.c.b16 %v1383, %v1379
    %v2308 = vpack.c.b16 %v1384, %v1380
    %v2309 = vpack.c.b16 %v1385, %v1381
    %v2310 = vpack.c.b16 %v1390, %v1386
    %v2311 = vpack.c.b16 %v1391, %v1387
    %v2312 = vpack.c.b16 %v1392, %v1388
    %v2313 = vpack.c.b16 %v1393, %v1389
    %v2314 = vpack.c.b16 %v1398, %v1394
    %v2315 = vpack.c.b16 %v1399, %v1395
    %v2316 = vpack.c.b16 %v1400, %v1396
    %v2317 = vpack.c.b16 %v1401, %v1397
    %v2318 = vpack.c.b16 %v1406, %v1402
    %v2319 = vpack.c.b16 %v1407, %v1403
    %v2320 = vpack.c.b16 %v1408, %v1404
    %v2321 = vpack.c.b16 %v1409, %v1405
    %v2322 = vpack.c.b16 %v1414, %v1410
    %v2323 = vpack.c.b16 %v1415, %v1411
    %v2324 = vpack.c.b16 %v1416, %v1412
    %v2325 = vpack.c.b16 %v1417, %v1413
    %v2326 = vpack.c.b16 %v1422, %v1418
    %v2327 = vpack.c.b16 %v1423, %v1419
    %v2328 = vpack.c.b16 %v1424, %v1420
    %v2329 = vpack.c.b16 %v1425, %v1421
    %v2330 = vpack.c.b16 %v1430, %v1426
    %v2331 = vpack.c.b16 %v1431, %v1427
    %v2332 = vpack.c.b16 %v1432, %v1428
    %v2333 = vpack.c.b16 %v1433, %v1429
    %v2334 = vpack.c.b16 %v1438, %v1434
    %v2335 = vpack.c.b16 %v1439, %v1435
    %v2336 = vpack.c.b16 %v1440, %v1436
    %v2337 = vpack.c.b16 %v1441, %v1437
    %v2338 = vpack.c.b16 %v1446, %v1442
    %v2339 = vpack.c.b16 %v1447, %v1443
    %v2340 = vpack.c.b16 %v1448, %v1444
    %v2341 = vpack.c.b16 %v1449, %v1445
    %v2342 = vpack.c.b16 %v1454, %v1450
    %v2343 = vpack.c.b16 %v1455, %v1451
    %v2344 = vpack.c.b16 %v1456, %v1452
    %v2345 = vpack.c.b16 %v1457, %v1453
    %v2346 = vpack.c.b16 %v1462, %v1458
    %v2347 = vpack.c.b16 %v1463, %v1459
    %v2348 = vpack.c.b16 %v1464, %v1460
    %v2349 = vpack.c.b16 %v1465, %v1461
    %v2350 = vpack.c.b16 %v1470, %v1466
    %v2351 = vpack.c.b16 %v1471, %v1467
    %v2352 = vpack.c.b16 %v1472, %v1468
    %v2353 = vpack.c.b16 %v1473, %v1469
    %v2354 = vpack.c.b16 %v1478, %v1474
    %v2355 = vpack.c.b16 %v1479, %v1475
    %v2356 = vpack.c.b16 %v1480, %v1476
    %v2357 = vpack.c.b16 %v1481, %v1477
    %v2358 = vpack.c.b16 %v1486, %v1482
    %v2359 = vpack.c.b16 %v1487, %v1483
    %v2360 = vpack.c.b16 %v1488, %v1484
    %v2361 = vpack.c.b16 %v1489, %v1485
    %v2362 = vpack.c.b16 %v1494, %v1490
    %v2363 = vpack.c.b16 %v1495, %v1491
    %v2364 = vpack.c.b16 %v1496, %v1492
    %v2365 = vpack.c.b16 %v1497, %v1493
    %v2366 = vpack.c.b16 %v1502, %v1498
    %v2367 = vpack.c.b16 %v1503, %v1499
    %v2368 = vpack.c.b16 %v1504, %v1500
    %v2369 = vpack.c.b16 %v1505, %v1501
    %v2370 = vpack.c.b16 %v1510, %v1506
    %v2371 = vpack.c.b16 %v1511, %v1507
    %v2372 = vpack.c.b16 %v1512, %v1508
    %v2373 = vpack.c.b16 %v1513, %v1509
    %v2374 = vpack.c.b16 %v1518, %v1514
    %v2375 = vpack.c.b16 %v1519, %v1515
    %v2376 = vpack.c.b16 %v1520, %v1516
    %v2377 = vpack.c.b16 %v1521, %v1517
    %v2378 = vpack.c.b16 %v1526, %v1522
    %v2379 = vpack.c.b16 %v1527, %v1523
    %v2380 = vpack.c.b16 %v1528, %v1524
    %v2381 = vpack.c.b16 %v1529, %v1525
    %v2382 = vpack.c.b16 %v1534, %v1530
    %v2383 = vpack.c.b16 %v1535, %v1531
    %v2384 = vpack.c.b16 %v1536, %v1532
    %v2385 = vpack.c.b16 %v1537, %v1533
    %v2386 = vpack.c.b16 %v1542, %v1538
    %v2387 = vpack.c.b16 %v1543, %v1539
    %v2388 = vpack.c.b16 %v1544, %v1540
    %v2389 = vpack.c.b16 %v1545, %v1541
    %v2390 = vpack.c.b16 %v1550, %v1546
    %v2391 = vpack.c.b16 %v1551, %v1547
    %v2392 = vpack.c.b16 %v1552, %v1548
    %v2393 = vpack.c.b16 %v1553, %v1549
    %v2394 = vpack.c.b16 %v1558, %v1554
    %v2395 = vpack.c.b16 %v1559, %v1555
    %v2396 = vpack.c.b16 %v1560, %v1556
    %v2397 = vpack.c.b16 %v1561, %v1557
    %v2398 = vpack.c.b16 %v1566, %v1562
    %v2399 = vpack.c.b16 %v1567, %v1563
    %v2400 = vpack.c.b16 %v1568, %v1564
    %v2401 = vpack.c.b16 %v1569, %v1565
    %v2402 = vpack.c.b16 %v1574, %v1570
    %v2403 = vpack.c.b16 %v1575, %v1571
    %v2404 = vpack.c.b16 %v1576, %v1572
    %v2405 = vpack.c.b16 %v1577, %v1573
    %v2406 = vpack.c.b16 %v1582, %v1578
    %v2407 = vpack.c.b16 %v1583, %v1579
    %v2408 = vpack.c.b16 %v1584, %v1580
    %v2409 = vpack.c.b16 %v1585, %v1581
    %v2410 = vpack.c.b16 %v1590, %v1586
    %v2411 = vpack.c.b16 %v1591, %v1587
    %v2412 = vpack.c.b16 %v1592, %v1588
    %v2413 = vpack.c.b16 %v1593, %v1589
    %v2414 = vpack.c.b16 %v1598, %v1594
    %v2415 = vpack.c.b16 %v1599, %v1595
    %v2416 = vpack.c.b16 %v1600, %v1596
    %v2417 = vpack.c.b16 %v1601, %v1597
    %v2418 = vpack.c.b16 %v1606, %v1602
    %v2419 = vpack.c.b16 %v1607, %v1603
    %v2420 = vpack.c.b16 %v1608, %v1604
    %v2421 = vpack.c.b16 %v1609, %v1605
    %v2422 = vpack.c.b16 %v1614, %v1610
    %v2423 = vpack.c.b16 %v1615, %v1611
    %v2424 = vpack.c.b16 %v1616, %v1612
    %v2425 = vpack.c.b16 %v1617, %v1613
    %v2426 = vpack.c.b16 %v1622, %v1618
    %v2427 = vpack.c.b16 %v1623, %v1619
    %v2428 = vpack.c.b16 %v1624, %v1620
    %v2429 = vpack.c.b16 %v1625, %v1621
    %v2430 = vpack.c.b16 %v1630, %v1626
    %v2431 = vpack.c.b16 %v1631, %v1627
    %v2432 = vpack.c.b16 %v1632, %v1628
    %v2433 = vpack.c.b16 %v1633, %v1629
    %v2434 = vpack.c.b16 %v1638, %v1634
    %v2435 = vpack.c.b16 %v1639, %v1635
    %v2436 = vpack.c.b16 %v1640, %v1636
    %v2437 = vpack.c.b16 %v1641, %v1637
    %v2438 = vpack.c.b16 %v1646, %v1642
    %v2439 = vpack.c.b16 %v1647, %v1643
    %v2440 = vpack.c.b16 %v1648, %v1644
    %v2441 = vpack.c.b16 %v1649, %v1645
    %v2442 = vpack.c.b16 %v1654, %v1650
    %v2443 = vpack.c.b16 %v1655, %v1651
    %v2444 = vpack.c.b16 %v1656, %v1652
    %v2445 = vpack.c.b16 %v1657, %v1653
    %v2446 = vpack.c.b16 %v1662, %v1658
    %v2447 = vpack.c.b16 %v1663, %v1659
    %v2448 = vpack.c.b16 %v1664, %v1660
    %v2449 = vpack.c.b16 %v1665, %v1661
    %v2450 = vpack.c.b16 %v1670, %v1666
    %v2451 = vpack.c.b16 %v1671, %v1667
    %v2452 = vpack.c.b16 %v1672, %v1668
    %v2453 = vpack.c.b16 %v1673, %v1669
    %v2454 = vpack.c.b16 %v1678, %v1674
    %v2455 = vpack.c.b16 %v1679, %v1675
    %v2456 = vpack.c.b16 %v1680, %v1676
    %v2457 = vpack.c.b16 %v1681, %v1677
    %v2458 = vpack.c.b16 %v1686, %v1682
    %v2459 = vpack.c.b16 %v1687, %v1683
    %v2460 = vpack.c.b16 %v1688, %v1684
    %v2461 = vpack.c.b16 %v1689, %v1685
    %v2462 = vpack.c.b16 %v1694, %v1690
    %v2463 = vpack.c.b16 %v1695, %v1691
    %v2464 = vpack.c.b16 %v1696, %v1692
    %v2465 = vpack.c.b16 %v1697, %v1693
    %v2466 = vpack.c.b16 %v1702, %v1698
    %v2467 = vpack.c.b16 %v1703, %v1699
    %v2468 = vpack.c.b16 %v1704, %v1700
    %v2469 = vpack.c.b16 %v1705, %v1701
    %v2470 = vpack.c.b16 %v1710, %v1706
    %v2471 = vpack.c.b16 %v1711, %v1707
    %v2472 = vpack.c.b16 %v1712, %v1708
    %v2473 = vpack.c.b16 %v1713, %v1709
    %v2474 = vpack.c.b16 %v1718, %v1714
    %v2475 = vpack.c.b16 %v1719, %v1715
    %v2476 = vpack.c.b16 %v1720, %v1716
    %v2477 = vpack.c.b16 %v1721, %v1717
    %v2478 = vpack.c.b16 %v1726, %v1722
    %v2479 = vpack.c.b16 %v1727, %v1723
    %v2480 = vpack.c.b16 %v1728, %v1724
    %v2481 = vpack.c.b16 %v1729, %v1725
    %v2482 = vpack.c.b16 %v1734, %v1730
    %v2483 = vpack.c.b16 %v1735, %v1731
    %v2484 = vpack.c.b16 %v1736, %v1732
    %v2485 = vpack.c.b16 %v1737, %v1733
    %v2486 = vpack.c.b16 %v1742, %v1738
    %v2487 = vpack.c.b16 %v1743, %v1739
    %v2488 = vpack.c.b16 %v1744, %v1740
    %v2489 = vpack.c.b16 %v1745, %v1741
    %v2490 = vpack.c.b16 %v1750, %v1746
    %v2491 = vpack.c.b16 %v1751, %v1747
    %v2492 = vpack.c.b16 %v1752, %v1748
    %v2493 = vpack.c.b16 %v1753, %v1749
    %v2494 = vpack.c.b16 %v1758, %v1754
    %v2495 = vpack.c.b16 %v1759, %v1755
    %v2496 = vpack.c.b16 %v1760, %v1756
    %v2497 = vpack.c.b16 %v1761, %v1757
    %v2498 = vpack.c.b16 %v1766, %v1762
    %v2499 = vpack.c.b16 %v1767, %v1763
    %v2500 = vpack.c.b16 %v1768, %v1764
    %v2501 = vpack.c.b16 %v1769, %v1765
    %v2502 = vpack.c.b16 %v1774, %v1770
    %v2503 = vpack.c.b16 %v1775, %v1771
    %v2504 = vpack.c.b16 %v1776, %v1772
    %v2505 = vpack.c.b16 %v1777, %v1773
    %v2506 = vpack.c.b16 %v1782, %v1778
    %v2507 = vpack.c.b16 %v1783, %v1779
    %v2508 = vpack.c.b16 %v1784, %v1780
    %v2509 = vpack.c.b16 %v1785, %v1781
    %v2510 = vpack.c.b16 %v1790, %v1786
    %v2511 = vpack.c.b16 %v1791, %v1787
    %v2512 = vpack.c.b16 %v1792, %v1788
    %v2513 = vpack.c.b16 %v1793, %v1789
    %v2514 = vpack.c.b16 %v1798, %v1794
    %v2515 = vpack.c.b16 %v1799, %v1795
    %v2516 = vpack.c.b16 %v1800, %v1796
    %v2517 = vpack.c.b16 %v1801, %v1797
    %v2518 = vpack.c.b16 %v1806, %v1802
    %v2519 = vpack.c.b16 %v1807, %v1803
    %v2520 = vpack.c.b16 %v1808, %v1804
    %v2521 = vpack.c.b16 %v1809, %v1805
    %v2522 = vpack.c.b16 %v1814, %v1810
    %v2523 = vpack.c.b16 %v1815, %v1811
    %v2524 = vpack.c.b16 %v1816, %v1812
    %v2525 = vpack.c.b16 %v1817, %v1813
    %v2526 = vpack.c.b16 %v1822, %v1818
    %v2527 = vpack.c.b16 %v1823, %v1819
    %v2528 = vpack.c.b16 %v1824, %v1820
    %v2529 = vpack.c.b16 %v1825, %v1821
    %v2530 = vpack.c.b16 %v1830, %v1826
    %v2531 = vpack.c.b16 %v1831, %v1827
    %v2532 = vpack.c.b16 %v1832, %v1828
    %v2533 = vpack.c.b16 %v1833, %v1829
    %v2534 = vpack.c.b16 %v1838, %v1834
    %v2535 = vpack.c.b16 %v1839, %v1835
    %v2536 = vpack.c.b16 %v1840, %v1836
    %v2537 = vpack.c.b16 %v1841, %v1837
    %v2538 = vpack.c.b16 %v1846, %v1842
    %v2539 = vpack.c.b16 %v1847, %v1843
    %v2540 = vpack.c.b16 %v1848, %v1844
    %v2541 = vpack.c.b16 %v1849, %v1845
    %v2542 = vpack.c.b16 %v1854, %v1850
    %v2543 = vpack.c.b16 %v1855, %v1851
    %v2544 = vpack.c.b16 %v1856, %v1852
    %v2545 = vpack.c.b16 %v1857, %v1853
    %v2546 = vpack.c.b16 %v1862, %v1858
    %v2547 = vpack.c.b16 %v1863, %v1859
    %v2548 = vpack.c.b16 %v1864, %v1860
    %v2549 = vpack.c.b16 %v1865, %v1861
    %v2550 = vpack.c.b16 %v1870, %v1866
    %v2551 = vpack.c.b16 %v1871, %v1867
    %v2552 = vpack.c.b16 %v1872, %v1868
    %v2553 = vpack.c.b16 %v1873, %v1869
    %v2554 = vpack.c.b16 %v1878, %v1874
    %v2555 = vpack.c.b16 %v1879, %v1875
    %v2556 = vpack.c.b16 %v1880, %v1876
    %v2557 = vpack.c.b16 %v1881, %v1877
    %v2558 = vpack.c.b16 %v1886, %v1882
    %v2559 = vpack.c.b16 %v1887, %v1883
    %v2560 = vpack.c.b16 %v1888, %v1884
    %v2561 = vpack.c.b16 %v1889, %v1885
    %v2562 = vpack.c.b16 %v1894, %v1890
    %v2563 = vpack.c.b16 %v1895, %v1891
    %v2564 = vpack.c.b16 %v1896, %v1892
    %v2565 = vpack.c.b16 %v1897, %v1893
    %v2566 = vpack.c.b16 %v1902, %v1898
    %v2567 = vpack.c.b16 %v1903, %v1899
    %v2568 = vpack.c.b16 %v1904, %v1900
    %v2569 = vpack.c.b16 %v1905, %v1901
    %v2570 = vpack.c.b16 %v1910, %v1906
    %v2571 = vpack.c.b16 %v1911, %v1907
    %v2572 = vpack.c.b16 %v1912, %v1908
    %v2573 = vpack.c.b16 %v1913, %v1909
    %v2574 = vpack.c.b16 %v1918, %v1914
    %v2575 = vpack.c.b16 %v1919, %v1915
    %v2576 = vpack.c.b16 %v1920, %v1916
    %v2577 = vpack.c.b16 %v1921, %v1917
    %v2578 = vpack.c.b16 %v1926, %v1922
    %v2579 = vpack.c.b16 %v1927, %v1923
    %v2580 = vpack.c.b16 %v1928, %v1924
    %v2581 = vpack.c.b16 %v1929, %v1925
    %v2582 = vpack.c.b16 %v1934, %v1930
    %v2583 = vpack.c.b16 %v1935, %v1931
    %v2584 = vpack.c.b16 %v1936, %v1932
    %v2585 = vpack.c.b16 %v1937, %v1933
    %v2586 = vpack.c.b16 %v1942, %v1938
    %v2587 = vpack.c.b16 %v1943, %v1939
    %v2588 = vpack.c.b16 %v1944, %v1940
    %v2589 = vpack.c.b16 %v1945, %v1941
    %v2590 = vpack.c.b16 %v1950, %v1946
    %v2591 = vpack.c.b16 %v1951, %v1947
    %v2592 = vpack.c.b16 %v1952, %v1948
    %v2593 = vpack.c.b16 %v1953, %v1949
    %v2594 = vpack.c.b16 %v1958, %v1954
    %v2595 = vpack.c.b16 %v1959, %v1955
    %v2596 = vpack.c.b16 %v1960, %v1956
    %v2597 = vpack.c.b16 %v1961, %v1957
    %v2598 = vpack.c.b16 %v1966, %v1962
    %v2599 = vpack.c.b16 %v1967, %v1963
    %v2600 = vpack.c.b16 %v1968, %v1964
    %v2601 = vpack.c.b16 %v1969, %v1965
    %v2602 = vpack.c.b16 %v1974, %v1970
    %v2603 = vpack.c.b16 %v1975, %v1971
    %v2604 = vpack.c.b16 %v1976, %v1972
    %v2605 = vpack.c.b16 %v1977, %v1973
    %v2606 = vpack.c.b16 %v1982, %v1978
    %v2607 = vpack.c.b16 %v1983, %v1979
    %v2608 = vpack.c.b16 %v1984, %v1980
    %v2609 = vpack.c.b16 %v1985, %v1981
    %v2610 = vpack.c.b16 %v1990, %v1986
    %v2611 = vpack.c.b16 %v1991, %v1987
    %v2612 = vpack.c.b16 %v1992, %v1988
    %v2613 = vpack.c.b16 %v1993, %v1989
    %v2614 = vpack.c.b16 %v1998, %v1994
    %v2615 = vpack.c.b16 %v1999, %v1995
    %v2616 = vpack.c.b16 %v2000, %v1996
    %v2617 = vpack.c.b16 %v2001, %v1997
    %v2618 = vpack.c.b16 %v2006, %v2002
    %v2619 = vpack.c.b16 %v2007, %v2003
    %v2620 = vpack.c.b16 %v2008, %v2004
    %v2621 = vpack.c.b16 %v2009, %v2005
    %v2622 = vpack.c.b16 %v2014, %v2010
    %v2623 = vpack.c.b16 %v2015, %v2011
    %v2624 = vpack.c.b16 %v2016, %v2012
    %v2625 = vpack.c.b16 %v2017, %v2013
    %v2626 = vpack.c.b16 %v2022, %v2018
    %v2627 = vpack.c.b16 %v2023, %v2019
    %v2628 = vpack.c.b16 %v2024, %v2020
    %v2629 = vpack.c.b16 %v2025, %v2021
    %v2630 = vpack.c.b16 %v2030, %v2026
    %v2631 = vpack.c.b16 %v2031, %v2027
    %v2632 = vpack.c.b16 %v2032, %v2028
    %v2633 = vpack.c.b16 %v2033, %v2029
    %v2634 = vpack.c.b16 %v2038, %v2034
    %v2635 = vpack.c.b16 %v2039, %v2035
    %v2636 = vpack.c.b16 %v2040, %v2036
    %v2637 = vpack.c.b16 %v2041, %v2037
    %v2638 = vpack.c.b16 %v2046, %v2042
    %v2639 = vpack.c.b16 %v2047, %v2043
    %v2640 = vpack.c.b16 %v2048, %v2044
    %v2641 = vpack.c.b16 %v2049, %v2045
    %v2642 = vpack.c.b16 %v2054, %v2050
    %v2643 = vpack.c.b16 %v2055, %v2051
    %v2644 = vpack.c.b16 %v2056, %v2052
    %v2645 = vpack.c.b16 %v2057, %v2053
    %v2646 = vpack.c.b16 %v2062, %v2058
    %v2647 = vpack.c.b16 %v2063, %v2059
    %v2648 = vpack.c.b16 %v2064, %v2060
    %v2649 = vpack.c.b16 %v2065, %v2061
    %v2650 = vpack.c.b16 %v2070, %v2066
    %v2651 = vpack.c.b16 %v2071, %v2067
    %v2652 = vpack.c.b16 %v2072, %v2068
    %v2653 = vpack.c.b16 %v2073, %v2069
    %v2654 = vpack.c.b16 %v2078, %v2074
    %v2655 = vpack.c.b16 %v2079, %v2075
    %v2656 = vpack.c.b16 %v2080, %v2076
    %v2657 = vpack.c.b16 %v2081, %v2077
    %v2658 = vpack.c.b16 %v2086, %v2082
    %v2659 = vpack.c.b16 %v2087, %v2083
    %v2660 = vpack.c.b16 %v2088, %v2084
    %v2661 = vpack.c.b16 %v2089, %v2085
    %v2662 = vpack.c.b16 %v2094, %v2090
    %v2663 = vpack.c.b16 %v2095, %v2091
    %v2664 = vpack.c.b16 %v2096, %v2092
    %v2665 = vpack.c.b16 %v2097, %v2093
    %v2666 = vpack.c.b16 %v2102, %v2098
    %v2667 = vpack.c.b16 %v2103, %v2099
    %v2668 = vpack.c.b16 %v2104, %v2100
    %v2669 = vpack.c.b16 %v2105, %v2101
    %v2670 = vpack.c.b16 %v2110, %v2106
    %v2671 = vpack.c.b16 %v2111, %v2107
    %v2672 = vpack.c.b16 %v2112, %v2108
    %v2673 = vpack.c.b16 %v2113, %v2109
    %v2674 = vpack.c.b16 %v2118, %v2114
    %v2675 = vpack.c.b16 %v2119, %v2115
    %v2676 = vpack.c.b16 %v2120, %v2116
    %v2677 = vpack.c.b16 %v2121, %v2117
    %v2678 = vpack.c.b16 %v2126, %v2122
    %v2679 = vpack.c.b16 %v2127, %v2123
    %v2680 = vpack.c.b16 %v2128, %v2124
    %v2681 = vpack.c.b16 %v2129, %v2125
    %v2682 = vpack.c.b16 %v2134, %v2130
    %v2683 = vpack.c.b16 %v2135, %v2131
    %v2684 = vpack.c.b16 %v2136, %v2132
    %v2685 = vpack.c.b16 %v2137, %v2133
    %v2686 = vpack.c.b16 %v2142, %v2138
    %v2687 = vpack.c.b16 %v2143, %v2139
    %v2688 = vpack.c.b16 %v2144, %v2140
    %v2689 = vpack.c.b16 %v2145, %v2141
    %v2690 = vpack.c.b16 %v2150, %v2146
    %v2691 = vpack.c.b16 %v2151, %v2147
    %v2692 = vpack.c.b16 %v2152, %v2148
    %v2693 = vpack.c.b16 %v2153, %v2149
    %v2694 = vpack.c.b16 %v2158, %v2154
    %v2695 = vpack.c.b16 %v2159, %v2155
    %v2696 = vpack.c.b16 %v2160, %v2156
    %v2697 = vpack.c.b16 %v2161, %v2157
    %v2698 = vpack.c.b16 %v2166, %v2162
    %v2699 = vpack.c.b16 %v2167, %v2163
    %v2700 = vpack.c.b16 %v2168, %v2164
    %v2701 = vpack.c.b16 %v2169, %v2165
    %v2702 = vpack.c.b16 %v2174, %v2170
    %v2703 = vpack.c.b16 %v2175, %v2171
    %v2704 = vpack.c.b16 %v2176, %v2172
    %v2705 = vpack.c.b16 %v2177, %v2173
    %v2706 = vpack.c.b16 %v2182, %v2178
    %v2707 = vpack.c.b16 %v2183, %v2179
    %v2708 = vpack.c.b16 %v2184, %v2180
    %v2709 = vpack.c.b16 %v2185, %v2181
    %v2710 = vpack.c.b16 %v2190, %v2186
    %v2711 = vpack.c.b16 %v2191, %v2187
    %v2712 = vpack.c.b16 %v2192, %v2188
    %v2713 = vpack.c.b16 %v2193, %v2189
    %v2714 = vpack.c.b16 %v2198, %v2194
    %v2715 = vpack.c.b16 %v2199, %v2195
    %v2716 = vpack.c.b16 %v2200, %v2196
    %v2717 = vpack.c.b16 %v2201, %v2197
    %v2718 = vpack.c.b16 %v2206, %v2202
    %v2719 = vpack.c.b16 %v2207, %v2203
    %v2720 = vpack.c.b16 %v2208, %v2204
    %v2721 = vpack.c.b16 %v2209, %v2205
    %3234 = vmatprep.subr.bf16.mxu0 %v2211
    %3235 = vmatpush1.bf16.msra.mxu0 %v2210
    %3236 = vmatprep.subr.bf16.mxu0 %v2215
    %3237 = vmatpush1.bf16.msra.mxu0 %v2214
    %3238 = vmatprep.subr.bf16.mxu0 %v2219
    %3239 = vmatpush1.bf16.msra.mxu0 %v2218
    %3240 = vmatprep.subr.bf16.mxu0 %v2223
    %3241 = vmatpush1.bf16.msra.mxu0 %v2222
    %3242 = vmatprep.subr.bf16.mxu0 %v2227
    %3243 = vmatpush1.bf16.msra.mxu0 %v2226
    %3244 = vmatprep.subr.bf16.mxu0 %v2231
    %3245 = vmatpush1.bf16.msra.mxu0 %v2230
    %3246 = vmatprep.subr.bf16.mxu0 %v2235
    %3247 = vmatpush1.bf16.msra.mxu0 %v2234
    %3248 = vmatprep.subr.bf16.mxu0 %v2239
    %3249 = vmatpush1.bf16.msra.mxu0 %v2238
    %3250 = vmatprep.subr.bf16.mxu0 %v2243
    %3251 = vmatpush1.bf16.msra.mxu0 %v2242
    %3252 = vmatprep.subr.bf16.mxu0 %v2247
    %3253 = vmatpush1.bf16.msra.mxu0 %v2246
    %3254 = vmatprep.subr.bf16.mxu0 %v2251
    %3255 = vmatpush1.bf16.msra.mxu0 %v2250
    %3256 = vmatprep.subr.bf16.mxu0 %v2255
    %3257 = vmatpush1.bf16.msra.mxu0 %v2254
    %3258 = vmatprep.subr.bf16.mxu0 %v2259
    %3259 = vmatpush1.bf16.msra.mxu0 %v2258
    %3260 = vmatprep.subr.bf16.mxu0 %v2263
    %3261 = vmatpush1.bf16.msra.mxu0 %v2262
    %3262 = vmatprep.subr.bf16.mxu0 %v2267
    %3263 = vmatpush1.bf16.msra.mxu0 %v2266
    %3264 = vmatprep.subr.bf16.mxu0 %v2271
    %3265 = vmatpush1.bf16.msra.mxu0 %v2270
    %3266 = vmatprep.mubr.bf16.mxu0 %v597
    %3267 = vmatmul.mubr.bf16.gmra.mrb[0].mxu0 %v583
    %v3268 = vpop.f32.mrb[0].mxu0
    %v3269 = vadd.f32 %v541, %v3268
    %v3270 = vpop.f32.mrb[0].mxu0
    %v3271 = vadd.f32 %v545, %v3270
    %v3272 = vpop.f32.mrb[0].mxu0
    %v3273 = vpop.f32.mrb[0].mxu0
    %3274 = vdwg.mxu0
    %3275 = vmatprep.subr.bf16.mxu0 %v2275
    %3276 = vmatpush1.bf16.msra.mxu0 %v2274
    %3277 = vmatprep.subr.bf16.mxu0 %v2279
    %3278 = vmatpush1.bf16.msra.mxu0 %v2278
    %3279 = vmatprep.subr.bf16.mxu0 %v2283
    %3280 = vmatpush1.bf16.msra.mxu0 %v2282
    %3281 = vmatprep.subr.bf16.mxu0 %v2287
    %3282 = vmatpush1.bf16.msra.mxu0 %v2286
    %3283 = vmatprep.subr.bf16.mxu0 %v2291
    %3284 = vmatpush1.bf16.msra.mxu0 %v2290
    %3285 = vmatprep.subr.bf16.mxu0 %v2295
    %3286 = vmatpush1.bf16.msra.mxu0 %v2294
    %3287 = vmatprep.subr.bf16.mxu0 %v2299
    %3288 = vmatpush1.bf16.msra.mxu0 %v2298
    %3289 = vmatprep.subr.bf16.mxu0 %v2303
    %3290 = vmatpush1.bf16.msra.mxu0 %v2302
    %3291 = vmatprep.subr.bf16.mxu0 %v2307
    %3292 = vmatpush1.bf16.msra.mxu0 %v2306
    %3293 = vmatprep.subr.bf16.mxu0 %v2311
    %3294 = vmatpush1.bf16.msra.mxu0 %v2310
    %3295 = vmatprep.subr.bf16.mxu0 %v2315
    %3296 = vmatpush1.bf16.msra.mxu0 %v2314
    %3297 = vmatprep.subr.bf16.mxu0 %v2319
    %3298 = vmatpush1.bf16.msra.mxu0 %v2318
    %3299 = vmatprep.subr.bf16.mxu0 %v2323
    %3300 = vmatpush1.bf16.msra.mxu0 %v2322
    %3301 = vmatprep.subr.bf16.mxu0 %v2327
    %3302 = vmatpush1.bf16.msra.mxu0 %v2326
    %3303 = vmatprep.subr.bf16.mxu0 %v2331
    %3304 = vmatpush1.bf16.msra.mxu0 %v2330
    %3305 = vmatprep.subr.bf16.mxu0 %v2335
    %3306 = vmatpush1.bf16.msra.mxu0 %v2334
    %3307 = vmatprep.mubr.bf16.mxu0 %v607
    %3308 = vmatmul.mubr.bf16.gmra.mrb[0].mxu0 %v605
    %v3309 = vpop.f32.mrb[0].mxu0
    %v3310 = vadd.f32 %v3269, %v3309
    %v3311 = vpop.f32.mrb[0].mxu0
    %v3312 = vadd.f32 %v3271, %v3311
    %v3313 = vpop.f32.mrb[0].mxu0
    %v3314 = vpop.f32.mrb[0].mxu0
    %3315 = vdwg.mxu0
    %3316 = vmatprep.subr.bf16.mxu0 %v2339
    %3317 = vmatpush1.bf16.msra.mxu0 %v2338
    %3318 = vmatprep.subr.bf16.mxu0 %v2343
    %3319 = vmatpush1.bf16.msra.mxu0 %v2342
    %3320 = vmatprep.subr.bf16.mxu0 %v2347
    %3321 = vmatpush1.bf16.msra.mxu0 %v2346
    %3322 = vmatprep.subr.bf16.mxu0 %v2351
    %3323 = vmatpush1.bf16.msra.mxu0 %v2350
    %3324 = vmatprep.subr.bf16.mxu0 %v2355
    %3325 = vmatpush1.bf16.msra.mxu0 %v2354
    %3326 = vmatprep.subr.bf16.mxu0 %v2359
    %3327 = vmatpush1.bf16.msra.mxu0 %v2358
    %3328 = vmatprep.subr.bf16.mxu0 %v2363
    %3329 = vmatpush1.bf16.msra.mxu0 %v2362
    %3330 = vmatprep.subr.bf16.mxu0 %v2367
    %3331 = vmatpush1.bf16.msra.mxu0 %v2366
    %3332 = vmatprep.subr.bf16.mxu0 %v2371
    %3333 = vmatpush1.bf16.msra.mxu0 %v2370
    %3334 = vmatprep.subr.bf16.mxu0 %v2375
    %3335 = vmatpush1.bf16.msra.mxu0 %v2374
    %3336 = vmatprep.subr.bf16.mxu0 %v2379
    %3337 = vmatpush1.bf16.msra.mxu0 %v2378
    %3338 = vmatprep.subr.bf16.mxu0 %v2383
    %3339 = vmatpush1.bf16.msra.mxu0 %v2382
    %3340 = vmatprep.subr.bf16.mxu0 %v2387
    %3341 = vmatpush1.bf16.msra.mxu0 %v2386
    %3342 = vmatprep.subr.bf16.mxu0 %v2391
    %3343 = vmatpush1.bf16.msra.mxu0 %v2390
    %3344 = vmatprep.subr.bf16.mxu0 %v2395
    %3345 = vmatpush1.bf16.msra.mxu0 %v2394
    %3346 = vmatprep.subr.bf16.mxu0 %v2399
    %3347 = vmatpush1.bf16.msra.mxu0 %v2398
    %3348 = vmatprep.mubr.bf16.mxu0 %v604
    %3349 = vmatmul.mubr.bf16.gmra.mrb[0].mxu0 %v590
    %v3350 = vpop.f32.mrb[0].mxu0
    %v3351 = vadd.f32 %v3310, %v3350
    %v3352 = vpop.f32.mrb[0].mxu0
    %v3353 = vadd.f32 %v3312, %v3352
    %v3354 = vpop.f32.mrb[0].mxu0
    %v3355 = vpop.f32.mrb[0].mxu0
    %3356 = vdwg.mxu0
    %3357 = vmatprep.subr.bf16.mxu0 %v2403
    %3358 = vmatpush1.bf16.msra.mxu0 %v2402
    %3359 = vmatprep.subr.bf16.mxu0 %v2407
    %3360 = vmatpush1.bf16.msra.mxu0 %v2406
    %3361 = vmatprep.subr.bf16.mxu0 %v2411
    %3362 = vmatpush1.bf16.msra.mxu0 %v2410
    %3363 = vmatprep.subr.bf16.mxu0 %v2415
    %3364 = vmatpush1.bf16.msra.mxu0 %v2414
    %3365 = vmatprep.subr.bf16.mxu0 %v2419
    %3366 = vmatpush1.bf16.msra.mxu0 %v2418
    %3367 = vmatprep.subr.bf16.mxu0 %v2423
    %3368 = vmatpush1.bf16.msra.mxu0 %v2422
    %3369 = vmatprep.subr.bf16.mxu0 %v2427
    %3370 = vmatpush1.bf16.msra.mxu0 %v2426
    %3371 = vmatprep.subr.bf16.mxu0 %v2431
    %3372 = vmatpush1.bf16.msra.mxu0 %v2430
    %3373 = vmatprep.subr.bf16.mxu0 %v2435
    %3374 = vmatpush1.bf16.msra.mxu0 %v2434
    %3375 = vmatprep.subr.bf16.mxu0 %v2439
    %3376 = vmatpush1.bf16.msra.mxu0 %v2438
    %3377 = vmatprep.subr.bf16.mxu0 %v2443
    %3378 = vmatpush1.bf16.msra.mxu0 %v2442
    %3379 = vmatprep.subr.bf16.mxu0 %v2447
    %3380 = vmatpush1.bf16.msra.mxu0 %v2446
    %3381 = vmatprep.subr.bf16.mxu0 %v2451
    %3382 = vmatpush1.bf16.msra.mxu0 %v2450
    %3383 = vmatprep.subr.bf16.mxu0 %v2455
    %3384 = vmatpush1.bf16.msra.mxu0 %v2454
    %3385 = vmatprep.subr.bf16.mxu0 %v2459
    %3386 = vmatpush1.bf16.msra.mxu0 %v2458
    %3387 = vmatprep.subr.bf16.mxu0 %v2463
    %3388 = vmatpush1.bf16.msra.mxu0 %v2462
    %3389 = vmatprep.mubr.bf16.mxu0 %v608
    %3390 = vmatmul.mubr.bf16.gmra.mrb[0].mxu0 %v606
    %v3391 = vpop.f32.mrb[0].mxu0
    %v3392 = vadd.f32 %v3351, %v3391
    %v3393 = vpop.f32.mrb[0].mxu0
    %v3394 = vadd.f32 %v3353, %v3393
    %v3395 = vpop.f32.mrb[0].mxu0
    %v3396 = vpop.f32.mrb[0].mxu0
    %3397 = vdwg.mxu0
    %3398 = vmatprep.subr.bf16.mxu0 %v2467
    %3399 = vmatpush1.bf16.msra.mxu0 %v2466
    %3400 = vmatprep.subr.bf16.mxu0 %v2471
    %3401 = vmatpush1.bf16.msra.mxu0 %v2470
    %3402 = vmatprep.subr.bf16.mxu0 %v2475
    %3403 = vmatpush1.bf16.msra.mxu0 %v2474
    %3404 = vmatprep.subr.bf16.mxu0 %v2479
    %3405 = vmatpush1.bf16.msra.mxu0 %v2478
    %3406 = vmatprep.subr.bf16.mxu0 %v2483
    %3407 = vmatpush1.bf16.msra.mxu0 %v2482
    %3408 = vmatprep.subr.bf16.mxu0 %v2487
    %3409 = vmatpush1.bf16.msra.mxu0 %v2486
    %3410 = vmatprep.subr.bf16.mxu0 %v2491
    %3411 = vmatpush1.bf16.msra.mxu0 %v2490
    %3412 = vmatprep.subr.bf16.mxu0 %v2495
    %3413 = vmatpush1.bf16.msra.mxu0 %v2494
    %3414 = vmatprep.subr.bf16.mxu0 %v2499
    %3415 = vmatpush1.bf16.msra.mxu0 %v2498
    %3416 = vmatprep.subr.bf16.mxu0 %v2503
    %3417 = vmatpush1.bf16.msra.mxu0 %v2502
    %3418 = vmatprep.subr.bf16.mxu0 %v2507
    %3419 = vmatpush1.bf16.msra.mxu0 %v2506
    %3420 = vmatprep.subr.bf16.mxu0 %v2511
    %3421 = vmatpush1.bf16.msra.mxu0 %v2510
    %3422 = vmatprep.subr.bf16.mxu0 %v2515
    %3423 = vmatpush1.bf16.msra.mxu0 %v2514
    %3424 = vmatprep.subr.bf16.mxu0 %v2519
    %3425 = vmatpush1.bf16.msra.mxu0 %v2518
    %3426 = vmatprep.subr.bf16.mxu0 %v2523
    %3427 = vmatpush1.bf16.msra.mxu0 %v2522
    %3428 = vmatprep.subr.bf16.mxu0 %v2527
    %3429 = vmatpush1.bf16.msra.mxu0 %v2526
    %3430 = vmatprep.mubr.bf16.mxu0 %v646
    %3431 = vmatmul.mubr.bf16.gmra.mrb[0].mxu0 %v632
    %v3432 = vpop.f32.mrb[0].mxu0
    %v3433 = vadd.f32 %v3392, %v3432
    %v3434 = vpop.f32.mrb[0].mxu0
    %v3435 = vadd.f32 %v3394, %v3434
    %v3436 = vpop.f32.mrb[0].mxu0
    %v3437 = vpop.f32.mrb[0].mxu0
    %3438 = vdwg.mxu0
    %3439 = vmatprep.subr.bf16.mxu0 %v2531
    %3440 = vmatpush1.bf16.msra.mxu0 %v2530
    %3441 = vmatprep.subr.bf16.mxu0 %v2535
    %3442 = vmatpush1.bf16.msra.mxu0 %v2534
    %3443 = vmatprep.subr.bf16.mxu0 %v2539
    %3444 = vmatpush1.bf16.msra.mxu0 %v2538
    %3445 = vmatprep.subr.bf16.mxu0 %v2543
    %3446 = vmatpush1.bf16.msra.mxu0 %v2542
    %3447 = vmatprep.subr.bf16.mxu0 %v2547
    %3448 = vmatpush1.bf16.msra.mxu0 %v2546
    %3449 = vmatprep.subr.bf16.mxu0 %v2551
    %3450 = vmatpush1.bf16.msra.mxu0 %v2550
    %3451 = vmatprep.subr.bf16.mxu0 %v2555
    %3452 = vmatpush1.bf16.msra.mxu0 %v2554
    %3453 = vmatprep.subr.bf16.mxu0 %v2559
    %3454 = vmatpush1.bf16.msra.mxu0 %v2558
    %3455 = vmatprep.subr.bf16.mxu0 %v2563
    %3456 = vmatpush1.bf16.msra.mxu0 %v2562
    %3457 = vmatprep.subr.bf16.mxu0 %v2567
    %3458 = vmatpush1.bf16.msra.mxu0 %v2566
    %3459 = vmatprep.subr.bf16.mxu0 %v2571
    %3460 = vmatpush1.bf16.msra.mxu0 %v2570
    %3461 = vmatprep.subr.bf16.mxu0 %v2575
    %3462 = vmatpush1.bf16.msra.mxu0 %v2574
    %3463 = vmatprep.subr.bf16.mxu0 %v2579
    %3464 = vmatpush1.bf16.msra.mxu0 %v2578
    %3465 = vmatprep.subr.bf16.mxu0 %v2583
    %3466 = vmatpush1.bf16.msra.mxu0 %v2582
    %3467 = vmatprep.subr.bf16.mxu0 %v2587
    %3468 = vmatpush1.bf16.msra.mxu0 %v2586
    %3469 = vmatprep.subr.bf16.mxu0 %v2591
    %3470 = vmatpush1.bf16.msra.mxu0 %v2590
    %3471 = vmatprep.mubr.bf16.mxu0 %v656
    %3472 = vmatmul.mubr.bf16.gmra.mrb[0].mxu0 %v654
    %v3473 = vpop.f32.mrb[0].mxu0
    %v3474 = vadd.f32 %v3433, %v3473
    %v3475 = vpop.f32.mrb[0].mxu0
    %v3476 = vadd.f32 %v3435, %v3475
    %v3477 = vpop.f32.mrb[0].mxu0
    %v3478 = vpop.f32.mrb[0].mxu0
    %3479 = vdwg.mxu0
    %3480 = vmatprep.subr.bf16.mxu0 %v2595
    %3481 = vmatpush1.bf16.msra.mxu0 %v2594
    %3482 = vmatprep.subr.bf16.mxu0 %v2599
    %3483 = vmatpush1.bf16.msra.mxu0 %v2598
    %3484 = vmatprep.subr.bf16.mxu0 %v2603
    %3485 = vmatpush1.bf16.msra.mxu0 %v2602
    %3486 = vmatprep.subr.bf16.mxu0 %v2607
    %3487 = vmatpush1.bf16.msra.mxu0 %v2606
    %3488 = vmatprep.subr.bf16.mxu0 %v2611
    %3489 = vmatpush1.bf16.msra.mxu0 %v2610
    %3490 = vmatprep.subr.bf16.mxu0 %v2615
    %3491 = vmatpush1.bf16.msra.mxu0 %v2614
    %3492 = vmatprep.subr.bf16.mxu0 %v2619
    %3493 = vmatpush1.bf16.msra.mxu0 %v2618
    %3494 = vmatprep.subr.bf16.mxu0 %v2623
    %3495 = vmatpush1.bf16.msra.mxu0 %v2622
    %3496 = vmatprep.subr.bf16.mxu0 %v2627
    %3497 = vmatpush1.bf16.msra.mxu0 %v2626
    %3498 = vmatprep.subr.bf16.mxu0 %v2631
    %3499 = vmatpush1.bf16.msra.mxu0 %v2630
    %3500 = vmatprep.subr.bf16.mxu0 %v2635
    %3501 = vmatpush1.bf16.msra.mxu0 %v2634
    %3502 = vmatprep.subr.bf16.mxu0 %v2639
    %3503 = vmatpush1.bf16.msra.mxu0 %v2638
    %3504 = vmatprep.subr.bf16.mxu0 %v2643
    %3505 = vmatpush1.bf16.msra.mxu0 %v2642
    %3506 = vmatprep.subr.bf16.mxu0 %v2647
    %3507 = vmatpush1.bf16.msra.mxu0 %v2646
    %3508 = vmatprep.subr.bf16.mxu0 %v2651
    %3509 = vmatpush1.bf16.msra.mxu0 %v2650
    %3510 = vmatprep.subr.bf16.mxu0 %v2655
    %3511 = vmatpush1.bf16.msra.mxu0 %v2654
    %3512 = vmatprep.mubr.bf16.mxu0 %v653
    %3513 = vmatmul.mubr.bf16.gmra.mrb[0].mxu0 %v639
    %v3514 = vpop.f32.mrb[0].mxu0
    %v3515 = vadd.f32 %v3474, %v3514
    %v3516 = vpop.f32.mrb[0].mxu0
    %v3517 = vadd.f32 %v3476, %v3516
    %v3518 = vpop.f32.mrb[0].mxu0
    %v3519 = vpop.f32.mrb[0].mxu0
    %3520 = vdwg.mxu0
    %3521 = vmatprep.subr.bf16.mxu0 %v2659
    %3522 = vmatpush1.bf16.msra.mxu0 %v2658
    %3523 = vmatprep.subr.bf16.mxu0 %v2663
    %3524 = vmatpush1.bf16.msra.mxu0 %v2662
    %3525 = vmatprep.subr.bf16.mxu0 %v2667
    %3526 = vmatpush1.bf16.msra.mxu0 %v2666
    %3527 = vmatprep.subr.bf16.mxu0 %v2671
    %3528 = vmatpush1.bf16.msra.mxu0 %v2670
    %3529 = vmatprep.subr.bf16.mxu0 %v2675
    %3530 = vmatpush1.bf16.msra.mxu0 %v2674
    %3531 = vmatprep.subr.bf16.mxu0 %v2679
    %3532 = vmatpush1.bf16.msra.mxu0 %v2678
    %3533 = vmatprep.subr.bf16.mxu0 %v2683
    %3534 = vmatpush1.bf16.msra.mxu0 %v2682
    %3535 = vmatprep.subr.bf16.mxu0 %v2687
    %3536 = vmatpush1.bf16.msra.mxu0 %v2686
    %3537 = vmatprep.subr.bf16.mxu0 %v2691
    %3538 = vmatpush1.bf16.msra.mxu0 %v2690
    %3539 = vmatprep.subr.bf16.mxu0 %v2695
    %3540 = vmatpush1.bf16.msra.mxu0 %v2694
    %3541 = vmatprep.subr.bf16.mxu0 %v2699
    %3542 = vmatpush1.bf16.msra.mxu0 %v2698
    %3543 = vmatprep.subr.bf16.mxu0 %v2703
    %3544 = vmatpush1.bf16.msra.mxu0 %v2702
    %3545 = vmatprep.subr.bf16.mxu0 %v2707
    %3546 = vmatpush1.bf16.msra.mxu0 %v2706
    %3547 = vmatprep.subr.bf16.mxu0 %v2711
    %3548 = vmatpush1.bf16.msra.mxu0 %v2710
    %3549 = vmatprep.subr.bf16.mxu0 %v2715
    %3550 = vmatpush1.bf16.msra.mxu0 %v2714
    %3551 = vmatprep.subr.bf16.mxu0 %v2719
    %3552 = vmatpush1.bf16.msra.mxu0 %v2718
    %3553 = vmatprep.mubr.bf16.mxu0 %v657
    %3554 = vmatmul.mubr.bf16.gmra.mrb[0].mxu0 %v655
    %v3555 = vpop.f32.mrb[0].mxu0
    %v3556 = vadd.f32 %v3515, %v3555
    %v3557 = vpop.f32.mrb[0].mxu0
    %v3558 = vadd.f32 %v3517, %v3557
    %v3559 = vpop.f32.mrb[0].mxu0
    %v3560 = vpop.f32.mrb[0].mxu0
    %3561 = vdwg.mxu0
    %3562 = vmatprep.subr.bf16.mxu0 %v2213
    %3563 = vmatpush1.bf16.msra.mxu0 %v2212
    %3564 = vmatprep.subr.bf16.mxu0 %v2217
    %3565 = vmatpush1.bf16.msra.mxu0 %v2216
    %3566 = vmatprep.subr.bf16.mxu0 %v2221
    %3567 = vmatpush1.bf16.msra.mxu0 %v2220
    %3568 = vmatprep.subr.bf16.mxu0 %v2225
    %3569 = vmatpush1.bf16.msra.mxu0 %v2224
    %3570 = vmatprep.subr.bf16.mxu0 %v2229
    %3571 = vmatpush1.bf16.msra.mxu0 %v2228
    %3572 = vmatprep.subr.bf16.mxu0 %v2233
    %3573 = vmatpush1.bf16.msra.mxu0 %v2232
    %3574 = vmatprep.subr.bf16.mxu0 %v2237
    %3575 = vmatpush1.bf16.msra.mxu0 %v2236
    %3576 = vmatprep.subr.bf16.mxu0 %v2241
    %3577 = vmatpush1.bf16.msra.mxu0 %v2240
    %3578 = vmatprep.subr.bf16.mxu0 %v2245
    %3579 = vmatpush1.bf16.msra.mxu0 %v2244
    %3580 = vmatprep.subr.bf16.mxu0 %v2249
    %3581 = vmatpush1.bf16.msra.mxu0 %v2248
    %3582 = vmatprep.subr.bf16.mxu0 %v2253
    %3583 = vmatpush1.bf16.msra.mxu0 %v2252
    %3584 = vmatprep.subr.bf16.mxu0 %v2257
    %3585 = vmatpush1.bf16.msra.mxu0 %v2256
    %3586 = vmatprep.subr.bf16.mxu0 %v2261
    %3587 = vmatpush1.bf16.msra.mxu0 %v2260
    %3588 = vmatprep.subr.bf16.mxu0 %v2265
    %3589 = vmatpush1.bf16.msra.mxu0 %v2264
    %3590 = vmatprep.subr.bf16.mxu0 %v2269
    %3591 = vmatpush1.bf16.msra.mxu0 %v2268
    %3592 = vmatprep.subr.bf16.mxu0 %v2273
    %3593 = vmatpush1.bf16.msra.mxu0 %v2272
    %3594 = vmatprep.mubr.bf16.mxu0 %v597
    %3595 = vmatmul.mubr.bf16.gmra.mrb[0].mxu0 %v583
    %v3596 = vpop.f32.mrb[0].mxu0
    %v3597 = vadd.f32 %v549, %v3596
    %v3598 = vpop.f32.mrb[0].mxu0
    %v3599 = vadd.f32 %v553, %v3598
    %v3600 = vpop.f32.mrb[0].mxu0
    %v3601 = vpop.f32.mrb[0].mxu0
    %3602 = vdwg.mxu0
    %3603 = vmatprep.subr.bf16.mxu0 %v2277
    %3604 = vmatpush1.bf16.msra.mxu0 %v2276
    %3605 = vmatprep.subr.bf16.mxu0 %v2281
    %3606 = vmatpush1.bf16.msra.mxu0 %v2280
    %3607 = vmatprep.subr.bf16.mxu0 %v2285
    %3608 = vmatpush1.bf16.msra.mxu0 %v2284
    %3609 = vmatprep.subr.bf16.mxu0 %v2289
    %3610 = vmatpush1.bf16.msra.mxu0 %v2288
    %3611 = vmatprep.subr.bf16.mxu0 %v2293
    %3612 = vmatpush1.bf16.msra.mxu0 %v2292
    %3613 = vmatprep.subr.bf16.mxu0 %v2297
    %3614 = vmatpush1.bf16.msra.mxu0 %v2296
    %3615 = vmatprep.subr.bf16.mxu0 %v2301
    %3616 = vmatpush1.bf16.msra.mxu0 %v2300
    %3617 = vmatprep.subr.bf16.mxu0 %v2305
    %3618 = vmatpush1.bf16.msra.mxu0 %v2304
    %3619 = vmatprep.subr.bf16.mxu0 %v2309
    %3620 = vmatpush1.bf16.msra.mxu0 %v2308
    %3621 = vmatprep.subr.bf16.mxu0 %v2313
    %3622 = vmatpush1.bf16.msra.mxu0 %v2312
    %3623 = vmatprep.subr.bf16.mxu0 %v2317
    %3624 = vmatpush1.bf16.msra.mxu0 %v2316
    %3625 = vmatprep.subr.bf16.mxu0 %v2321
    %3626 = vmatpush1.bf16.msra.mxu0 %v2320
    %3627 = vmatprep.subr.bf16.mxu0 %v2325
    %3628 = vmatpush1.bf16.msra.mxu0 %v2324
    %3629 = vmatprep.subr.bf16.mxu0 %v2329
    %3630 = vmatpush1.bf16.msra.mxu0 %v2328
    %3631 = vmatprep.subr.bf16.mxu0 %v2333
    %3632 = vmatpush1.bf16.msra.mxu0 %v2332
    %3633 = vmatprep.subr.bf16.mxu0 %v2337
    %3634 = vmatpush1.bf16.msra.mxu0 %v2336
    %3635 = vmatprep.mubr.bf16.mxu0 %v607
    %3636 = vmatmul.mubr.bf16.gmra.mrb[0].mxu0 %v605
    %v3637 = vpop.f32.mrb[0].mxu0
    %v3638 = vadd.f32 %v3597, %v3637
    %v3639 = vpop.f32.mrb[0].mxu0
    %v3640 = vadd.f32 %v3599, %v3639
    %v3641 = vpop.f32.mrb[0].mxu0
    %v3642 = vpop.f32.mrb[0].mxu0
    %3643 = vdwg.mxu0
    %3644 = vmatprep.subr.bf16.mxu0 %v2341
    %3645 = vmatpush1.bf16.msra.mxu0 %v2340
    %3646 = vmatprep.subr.bf16.mxu0 %v2345
    %3647 = vmatpush1.bf16.msra.mxu0 %v2344
    %3648 = vmatprep.subr.bf16.mxu0 %v2349
    %3649 = vmatpush1.bf16.msra.mxu0 %v2348
    %3650 = vmatprep.subr.bf16.mxu0 %v2353
    %3651 = vmatpush1.bf16.msra.mxu0 %v2352
    %3652 = vmatprep.subr.bf16.mxu0 %v2357
    %3653 = vmatpush1.bf16.msra.mxu0 %v2356
    %3654 = vmatprep.subr.bf16.mxu0 %v2361
    %3655 = vmatpush1.bf16.msra.mxu0 %v2360
    %3656 = vmatprep.subr.bf16.mxu0 %v2365
    %3657 = vmatpush1.bf16.msra.mxu0 %v2364
    %3658 = vmatprep.subr.bf16.mxu0 %v2369
    %3659 = vmatpush1.bf16.msra.mxu0 %v2368
    %3660 = vmatprep.subr.bf16.mxu0 %v2373
    %3661 = vmatpush1.bf16.msra.mxu0 %v2372
    %3662 = vmatprep.subr.bf16.mxu0 %v2377
    %3663 = vmatpush1.bf16.msra.mxu0 %v2376
    %3664 = vmatprep.subr.bf16.mxu0 %v2381
    %3665 = vmatpush1.bf16.msra.mxu0 %v2380
    %3666 = vmatprep.subr.bf16.mxu0 %v2385
    %3667 = vmatpush1.bf16.msra.mxu0 %v2384
    %3668 = vmatprep.subr.bf16.mxu0 %v2389
    %3669 = vmatpush1.bf16.msra.mxu0 %v2388
    %3670 = vmatprep.subr.bf16.mxu0 %v2393
    %3671 = vmatpush1.bf16.msra.mxu0 %v2392
    %3672 = vmatprep.subr.bf16.mxu0 %v2397
    %3673 = vmatpush1.bf16.msra.mxu0 %v2396
    %3674 = vmatprep.subr.bf16.mxu0 %v2401
    %3675 = vmatpush1.bf16.msra.mxu0 %v2400
    %3676 = vmatprep.mubr.bf16.mxu0 %v604
    %3677 = vmatmul.mubr.bf16.gmra.mrb[0].mxu0 %v590
    %v3678 = vpop.f32.mrb[0].mxu0
    %v3679 = vadd.f32 %v3638, %v3678
    %v3680 = vpop.f32.mrb[0].mxu0
    %v3681 = vadd.f32 %v3640, %v3680
    %v3682 = vpop.f32.mrb[0].mxu0
    %v3683 = vpop.f32.mrb[0].mxu0
    %3684 = vdwg.mxu0
    %3685 = vmatprep.subr.bf16.mxu0 %v2405
    %3686 = vmatpush1.bf16.msra.mxu0 %v2404
    %3687 = vmatprep.subr.bf16.mxu0 %v2409
    %3688 = vmatpush1.bf16.msra.mxu0 %v2408
    %3689 = vmatprep.subr.bf16.mxu0 %v2413
    %3690 = vmatpush1.bf16.msra.mxu0 %v2412
    %3691 = vmatprep.subr.bf16.mxu0 %v2417
    %3692 = vmatpush1.bf16.msra.mxu0 %v2416
    %3693 = vmatprep.subr.bf16.mxu0 %v2421
    %3694 = vmatpush1.bf16.msra.mxu0 %v2420
    %3695 = vmatprep.subr.bf16.mxu0 %v2425
    %3696 = vmatpush1.bf16.msra.mxu0 %v2424
    %3697 = vmatprep.subr.bf16.mxu0 %v2429
    %3698 = vmatpush1.bf16.msra.mxu0 %v2428
    %3699 = vmatprep.subr.bf16.mxu0 %v2433
    %3700 = vmatpush1.bf16.msra.mxu0 %v2432
    %3701 = vmatprep.subr.bf16.mxu0 %v2437
    %3702 = vmatpush1.bf16.msra.mxu0 %v2436
    %3703 = vmatprep.subr.bf16.mxu0 %v2441
    %3704 = vmatpush1.bf16.msra.mxu0 %v2440
    %3705 = vmatprep.subr.bf16.mxu0 %v2445
    %3706 = vmatpush1.bf16.msra.mxu0 %v2444
    %3707 = vmatprep.subr.bf16.mxu0 %v2449
    %3708 = vmatpush1.bf16.msra.mxu0 %v2448
    %3709 = vmatprep.subr.bf16.mxu0 %v2453
    %3710 = vmatpush1.bf16.msra.mxu0 %v2452
    %3711 = vmatprep.subr.bf16.mxu0 %v2457
    %3712 = vmatpush1.bf16.msra.mxu0 %v2456
    %3713 = vmatprep.subr.bf16.mxu0 %v2461
    %3714 = vmatpush1.bf16.msra.mxu0 %v2460
    %3715 = vmatprep.subr.bf16.mxu0 %v2465
    %3716 = vmatpush1.bf16.msra.mxu0 %v2464
    %3717 = vmatprep.mubr.bf16.mxu0 %v608
    %3718 = vmatmul.mubr.bf16.gmra.mrb[0].mxu0 %v606
    %v3719 = vpop.f32.mrb[0].mxu0
    %v3720 = vadd.f32 %v3679, %v3719
    %v3721 = vpop.f32.mrb[0].mxu0
    %v3722 = vadd.f32 %v3681, %v3721
    %v3723 = vpop.f32.mrb[0].mxu0
    %v3724 = vpop.f32.mrb[0].mxu0
    %3725 = vdwg.mxu0
    %3726 = vmatprep.subr.bf16.mxu0 %v2469
    %3727 = vmatpush1.bf16.msra.mxu0 %v2468
    %3728 = vmatprep.subr.bf16.mxu0 %v2473
    %3729 = vmatpush1.bf16.msra.mxu0 %v2472
    %3730 = vmatprep.subr.bf16.mxu0 %v2477
    %3731 = vmatpush1.bf16.msra.mxu0 %v2476
    %3732 = vmatprep.subr.bf16.mxu0 %v2481
    %3733 = vmatpush1.bf16.msra.mxu0 %v2480
    %3734 = vmatprep.subr.bf16.mxu0 %v2485
    %3735 = vmatpush1.bf16.msra.mxu0 %v2484
    %3736 = vmatprep.subr.bf16.mxu0 %v2489
    %3737 = vmatpush1.bf16.msra.mxu0 %v2488
    %3738 = vmatprep.subr.bf16.mxu0 %v2493
    %3739 = vmatpush1.bf16.msra.mxu0 %v2492
    %3740 = vmatprep.subr.bf16.mxu0 %v2497
    %3741 = vmatpush1.bf16.msra.mxu0 %v2496
    %3742 = vmatprep.subr.bf16.mxu0 %v2501
    %3743 = vmatpush1.bf16.msra.mxu0 %v2500
    %3744 = vmatprep.subr.bf16.mxu0 %v2505
    %3745 = vmatpush1.bf16.msra.mxu0 %v2504
    %3746 = vmatprep.subr.bf16.mxu0 %v2509
    %3747 = vmatpush1.bf16.msra.mxu0 %v2508
    %3748 = vmatprep.subr.bf16.mxu0 %v2513
    %3749 = vmatpush1.bf16.msra.mxu0 %v2512
    %3750 = vmatprep.subr.bf16.mxu0 %v2517
    %3751 = vmatpush1.bf16.msra.mxu0 %v2516
    %3752 = vmatprep.subr.bf16.mxu0 %v2521
    %3753 = vmatpush1.bf16.msra.mxu0 %v2520
    %3754 = vmatprep.subr.bf16.mxu0 %v2525
    %3755 = vmatpush1.bf16.msra.mxu0 %v2524
    %3756 = vmatprep.subr.bf16.mxu0 %v2529
    %3757 = vmatpush1.bf16.msra.mxu0 %v2528
    %3758 = vmatprep.mubr.bf16.mxu0 %v646
    %3759 = vmatmul.mubr.bf16.gmra.mrb[0].mxu0 %v632
    %v3760 = vpop.f32.mrb[0].mxu0
    %v3761 = vadd.f32 %v3720, %v3760
    %v3762 = vpop.f32.mrb[0].mxu0
    %v3763 = vadd.f32 %v3722, %v3762
    %v3764 = vpop.f32.mrb[0].mxu0
    %v3765 = vpop.f32.mrb[0].mxu0
    %3766 = vdwg.mxu0
    %3767 = vmatprep.subr.bf16.mxu0 %v2533
    %3768 = vmatpush1.bf16.msra.mxu0 %v2532
    %3769 = vmatprep.subr.bf16.mxu0 %v2537
    %3770 = vmatpush1.bf16.msra.mxu0 %v2536
    %3771 = vmatprep.subr.bf16.mxu0 %v2541
    %3772 = vmatpush1.bf16.msra.mxu0 %v2540
    %3773 = vmatprep.subr.bf16.mxu0 %v2545
    %3774 = vmatpush1.bf16.msra.mxu0 %v2544
    %3775 = vmatprep.subr.bf16.mxu0 %v2549
    %3776 = vmatpush1.bf16.msra.mxu0 %v2548
    %3777 = vmatprep.subr.bf16.mxu0 %v2553
    %3778 = vmatpush1.bf16.msra.mxu0 %v2552
    %3779 = vmatprep.subr.bf16.mxu0 %v2557
    %3780 = vmatpush1.bf16.msra.mxu0 %v2556
    %3781 = vmatprep.subr.bf16.mxu0 %v2561
    %3782 = vmatpush1.bf16.msra.mxu0 %v2560
    %3783 = vmatprep.subr.bf16.mxu0 %v2565
    %3784 = vmatpush1.bf16.msra.mxu0 %v2564
    %3785 = vmatprep.subr.bf16.mxu0 %v2569
    %3786 = vmatpush1.bf16.msra.mxu0 %v2568
    %3787 = vmatprep.subr.bf16.mxu0 %v2573
    %3788 = vmatpush1.bf16.msra.mxu0 %v2572
    %3789 = vmatprep.subr.bf16.mxu0 %v2577
    %3790 = vmatpush1.bf16.msra.mxu0 %v2576
    %3791 = vmatprep.subr.bf16.mxu0 %v2581
    %3792 = vmatpush1.bf16.msra.mxu0 %v2580
    %3793 = vmatprep.subr.bf16.mxu0 %v2585
    %3794 = vmatpush1.bf16.msra.mxu0 %v2584
    %3795 = vmatprep.subr.bf16.mxu0 %v2589
    %3796 = vmatpush1.bf16.msra.mxu0 %v2588
    %3797 = vmatprep.subr.bf16.mxu0 %v2593
    %3798 = vmatpush1.bf16.msra.mxu0 %v2592
    %3799 = vmatprep.mubr.bf16.mxu0 %v656
    %3800 = vmatmul.mubr.bf16.gmra.mrb[0].mxu0 %v654
    %v3801 = vpop.f32.mrb[0].mxu0
    %v3802 = vadd.f32 %v3761, %v3801
    %v3803 = vpop.f32.mrb[0].mxu0
    %v3804 = vadd.f32 %v3763, %v3803
    %v3805 = vpop.f32.mrb[0].mxu0
    %v3806 = vpop.f32.mrb[0].mxu0
    %3807 = vdwg.mxu0
    %3808 = vmatprep.subr.bf16.mxu0 %v2597
    %3809 = vmatpush1.bf16.msra.mxu0 %v2596
    %3810 = vmatprep.subr.bf16.mxu0 %v2601
    %3811 = vmatpush1.bf16.msra.mxu0 %v2600
    %3812 = vmatprep.subr.bf16.mxu0 %v2605
    %3813 = vmatpush1.bf16.msra.mxu0 %v2604
    %3814 = vmatprep.subr.bf16.mxu0 %v2609
    %3815 = vmatpush1.bf16.msra.mxu0 %v2608
    %3816 = vmatprep.subr.bf16.mxu0 %v2613
    %3817 = vmatpush1.bf16.msra.mxu0 %v2612
    %3818 = vmatprep.subr.bf16.mxu0 %v2617
    %3819 = vmatpush1.bf16.msra.mxu0 %v2616
    %3820 = vmatprep.subr.bf16.mxu0 %v2621
    %3821 = vmatpush1.bf16.msra.mxu0 %v2620
    %3822 = vmatprep.subr.bf16.mxu0 %v2625
    %3823 = vmatpush1.bf16.msra.mxu0 %v2624
    %3824 = vmatprep.subr.bf16.mxu0 %v2629
    %3825 = vmatpush1.bf16.msra.mxu0 %v2628
    %3826 = vmatprep.subr.bf16.mxu0 %v2633
    %3827 = vmatpush1.bf16.msra.mxu0 %v2632
    %3828 = vmatprep.subr.bf16.mxu0 %v2637
    %3829 = vmatpush1.bf16.msra.mxu0 %v2636
    %3830 = vmatprep.subr.bf16.mxu0 %v2641
    %3831 = vmatpush1.bf16.msra.mxu0 %v2640
    %3832 = vmatprep.subr.bf16.mxu0 %v2645
    %3833 = vmatpush1.bf16.msra.mxu0 %v2644
    %3834 = vmatprep.subr.bf16.mxu0 %v2649
    %3835 = vmatpush1.bf16.msra.mxu0 %v2648
    %3836 = vmatprep.subr.bf16.mxu0 %v2653
    %3837 = vmatpush1.bf16.msra.mxu0 %v2652
    %3838 = vmatprep.subr.bf16.mxu0 %v2657
    %3839 = vmatpush1.bf16.msra.mxu0 %v2656
    %3840 = vmatprep.mubr.bf16.mxu0 %v653
    %3841 = vmatmul.mubr.bf16.gmra.mrb[0].mxu0 %v639
    %v3842 = vpop.f32.mrb[0].mxu0
    %v3843 = vadd.f32 %v3802, %v3842
    %v3844 = vpop.f32.mrb[0].mxu0
    %v3845 = vadd.f32 %v3804, %v3844
    %v3846 = vpop.f32.mrb[0].mxu0
    %v3847 = vpop.f32.mrb[0].mxu0
    %3848 = vdwg.mxu0
    %3849 = vmatprep.subr.bf16.mxu0 %v2661
    %3850 = vmatpush1.bf16.msra.mxu0 %v2660
    %3851 = vmatprep.subr.bf16.mxu0 %v2665
    %3852 = vmatpush1.bf16.msra.mxu0 %v2664
    %3853 = vmatprep.subr.bf16.mxu0 %v2669
    %3854 = vmatpush1.bf16.msra.mxu0 %v2668
    %3855 = vmatprep.subr.bf16.mxu0 %v2673
    %3856 = vmatpush1.bf16.msra.mxu0 %v2672
    %3857 = vmatprep.subr.bf16.mxu0 %v2677
    %3858 = vmatpush1.bf16.msra.mxu0 %v2676
    %3859 = vmatprep.subr.bf16.mxu0 %v2681
    %3860 = vmatpush1.bf16.msra.mxu0 %v2680
    %3861 = vmatprep.subr.bf16.mxu0 %v2685
    %3862 = vmatpush1.bf16.msra.mxu0 %v2684
    %3863 = vmatprep.subr.bf16.mxu0 %v2689
    %3864 = vmatpush1.bf16.msra.mxu0 %v2688
    %3865 = vmatprep.subr.bf16.mxu0 %v2693
    %3866 = vmatpush1.bf16.msra.mxu0 %v2692
    %3867 = vmatprep.subr.bf16.mxu0 %v2697
    %3868 = vmatpush1.bf16.msra.mxu0 %v2696
    %3869 = vmatprep.subr.bf16.mxu0 %v2701
    %3870 = vmatpush1.bf16.msra.mxu0 %v2700
    %3871 = vmatprep.subr.bf16.mxu0 %v2705
    %3872 = vmatpush1.bf16.msra.mxu0 %v2704
    %3873 = vmatprep.subr.bf16.mxu0 %v2709
    %3874 = vmatpush1.bf16.msra.mxu0 %v2708
    %3875 = vmatprep.subr.bf16.mxu0 %v2713
    %3876 = vmatpush1.bf16.msra.mxu0 %v2712
    %3877 = vmatprep.subr.bf16.mxu0 %v2717
    %3878 = vmatpush1.bf16.msra.mxu0 %v2716
    %3879 = vmatprep.subr.bf16.mxu0 %v2721
    %3880 = vmatpush1.bf16.msra.mxu0 %v2720
    %3881 = vmatprep.mubr.bf16.mxu0 %v657
    %3882 = vmatmul.mubr.bf16.gmra.mrb[0].mxu0 %v655
    %v3883 = vpop.f32.mrb[0].mxu0
    %v3884 = vadd.f32 %v3843, %v3883
    %v3885 = vpop.f32.mrb[0].mxu0
    %v3886 = vadd.f32 %v3845, %v3885
    %v3887 = vpop.f32.mrb[0].mxu0
    %v3888 = vpop.f32.mrb[0].mxu0
    %3889 = vdwg.mxu0
    %v3890 = vmax.f32 %v3556, 0.0
    %v3891 = vmax.f32 %v3558, 0.0
    %v3892 = vmax.f32 %v3884, 0.0
    %v3893 = vmax.f32 %v3886, 0.0
    %v3894 = vpack.c.bf16 %v3890, %v3890
    %v3895 = vpack.c.bf16 %v3891, %v3891
    %v3896 = vpack.c.bf16 %v3892, %v3892
    %v3897 = vpack.c.bf16 %v3893, %v3893
    %v3898 = vld [vmem:[%s3] sm:$0xf]
    %v3899 = vld [vmem:[%s3 + $0x4] sm:$0xf]
    %v3900 = vld [vmem:[%s3 + $0x8] sm:$0xf]
    %v3901 = vld [vmem:[%s3 + $0xc] sm:$0xf]
    %v3902 = vld [vmem:[%s3 + $0x10] sm:$0xf]
    %v3903 = vld [vmem:[%s3 + $0x14] sm:$0xf]
    %v3904 = vld [vmem:[%s3 + $0x18] sm:$0xf]
    %v3905 = vld [vmem:[%s3 + $0x1c] sm:$0xf]
    %v3906 = vld [vmem:[%s3 + $0x20] sm:$0xf]
    %v3907 = vld [vmem:[%s3 + $0x24] sm:$0xf]
    %v3908 = vld [vmem:[%s3 + $0x28] sm:$0xf]
    %v3909 = vld [vmem:[%s3 + $0x2c] sm:$0xf]
    %v3910 = vld [vmem:[%s3 + $0x30] sm:$0xf]
    %v3911 = vld [vmem:[%s3 + $0x34] sm:$0xf]
    %v3912 = vld [vmem:[%s3 + $0x38] sm:$0xf]
    %v3913 = vld [vmem:[%s3 + $0x3c] sm:$0xf]
    %v3914 = vld [vmem:[%s3 + $0x40] sm:$0xf]
    %v3915 = vld [vmem:[%s3 + $0x44] sm:$0xf]
    %v3916 = vld [vmem:[%s3 + $0x48] sm:$0xf]
    %v3917 = vld [vmem:[%s3 + $0x4c] sm:$0xf]
    %v3918 = vld [vmem:[%s3 + $0x50] sm:$0xf]
    %v3919 = vld [vmem:[%s3 + $0x54] sm:$0xf]
    %v3920 = vld [vmem:[%s3 + $0x58] sm:$0xf]
    %v3921 = vld [vmem:[%s3 + $0x5c] sm:$0xf]
    %v3922 = vld [vmem:[%s3 + $0x60] sm:$0xf]
    %v3923 = vld [vmem:[%s3 + $0x64] sm:$0xf]
    %v3924 = vld [vmem:[%s3 + $0x68] sm:$0xf]
    %v3925 = vld [vmem:[%s3 + $0x6c] sm:$0xf]
    %v3926 = vld [vmem:[%s3 + $0x70] sm:$0xf]
    %v3927 = vld [vmem:[%s3 + $0x74] sm:$0xf]
    %v3928 = vld [vmem:[%s3 + $0x78] sm:$0xf]
    %v3929 = vld [vmem:[%s3 + $0x7c] sm:$0xf]
    %v3930 = vld [vmem:[%s3 + $0x80] sm:$0xf]
    %v3931 = vld [vmem:[%s3 + $0x84] sm:$0xf]
    %v3932 = vld [vmem:[%s3 + $0x88] sm:$0xf]
    %v3933 = vld [vmem:[%s3 + $0x8c] sm:$0xf]
    %v3934 = vld [vmem:[%s3 + $0x90] sm:$0xf]
    %v3935 = vld [vmem:[%s3 + $0x94] sm:$0xf]
    %v3936 = vld [vmem:[%s3 + $0x98] sm:$0xf]
    %v3937 = vld [vmem:[%s3 + $0x9c] sm:$0xf]
    %v3938 = vld [vmem:[%s3 + $0xa0] sm:$0xf]
    %v3939 = vld [vmem:[%s3 + $0xa4] sm:$0xf]
    %v3940 = vld [vmem:[%s3 + $0xa8] sm:$0xf]
    %v3941 = vld [vmem:[%s3 + $0xac] sm:$0xf]
    %v3942 = vld [vmem:[%s3 + $0xb0] sm:$0xf]
    %v3943 = vld [vmem:[%s3 + $0xb4] sm:$0xf]
    %v3944 = vld [vmem:[%s3 + $0xb8] sm:$0xf]
    %v3945 = vld [vmem:[%s3 + $0xbc] sm:$0xf]
    %v3946 = vld [vmem:[%s3 + $0xc0] sm:$0xf]
    %v3947 = vld [vmem:[%s3 + $0xc4] sm:$0xf]
    %v3948 = vld [vmem:[%s3 + $0xc8] sm:$0xf]
    %v3949 = vld [vmem:[%s3 + $0xcc] sm:$0xf]
    %v3950 = vld [vmem:[%s3 + $0xd0] sm:$0xf]
    %v3951 = vld [vmem:[%s3 + $0xd4] sm:$0xf]
    %v3952 = vld [vmem:[%s3 + $0xd8] sm:$0xf]
    %v3953 = vld [vmem:[%s3 + $0xdc] sm:$0xf]
    %v3954 = vld [vmem:[%s3 + $0xe0] sm:$0xf]
    %v3955 = vld [vmem:[%s3 + $0xe4] sm:$0xf]
    %v3956 = vld [vmem:[%s3 + $0xe8] sm:$0xf]
    %v3957 = vld [vmem:[%s3 + $0xec] sm:$0xf]
    %v3958 = vld [vmem:[%s3 + $0xf0] sm:$0xf]
    %v3959 = vld [vmem:[%s3 + $0xf4] sm:$0xf]
    %v3960 = vld [vmem:[%s3 + $0xf8] sm:$0xf]
    %v3961 = vld [vmem:[%s3 + $0xfc] sm:$0xf]
    %v3962 = vld [vmem:[%s4] sm:$0x1]
    %v3964 = vlaneseq
    %v3965 = vshrl.u32 %v3964, 7
    %v3966 = vsub.s32 0, %v3965
    %v3967 = vrot.slane %v3962, %v3966
    %v4033 = vunpack.c.l.b16 %v3898
    %v4034 = vunpack.c.l.b16 %v3899
    %v4035 = vunpack.c.l.b16 %v3900
    %v4036 = vunpack.c.l.b16 %v3901
    %v4037 = vunpack.c.l.b16 %v3902
    %v4038 = vunpack.c.l.b16 %v3903
    %v4039 = vunpack.c.l.b16 %v3904
    %v4040 = vunpack.c.l.b16 %v3905
    %v4041 = vunpack.c.l.b16 %v3906
    %v4042 = vunpack.c.l.b16 %v3907
    %v4043 = vunpack.c.l.b16 %v3908
    %v4044 = vunpack.c.l.b16 %v3909
    %v4045 = vunpack.c.l.b16 %v3910
    %v4046 = vunpack.c.l.b16 %v3911
    %v4047 = vunpack.c.l.b16 %v3912
    %v4048 = vunpack.c.l.b16 %v3913
    %v4049 = vunpack.c.l.b16 %v3914
    %v4050 = vunpack.c.l.b16 %v3915
    %v4051 = vunpack.c.l.b16 %v3916
    %v4052 = vunpack.c.l.b16 %v3917
    %v4053 = vunpack.c.l.b16 %v3918
    %v4054 = vunpack.c.l.b16 %v3919
    %v4055 = vunpack.c.l.b16 %v3920
    %v4056 = vunpack.c.l.b16 %v3921
    %v4057 = vunpack.c.l.b16 %v3922
    %v4058 = vunpack.c.l.b16 %v3923
    %v4059 = vunpack.c.l.b16 %v3924
    %v4060 = vunpack.c.l.b16 %v3925
    %v4061 = vunpack.c.l.b16 %v3926
    %v4062 = vunpack.c.l.b16 %v3927
    %v4063 = vunpack.c.l.b16 %v3928
    %v4064 = vunpack.c.l.b16 %v3929
    %v4065 = vunpack.c.l.b16 %v3930
    %v4066 = vunpack.c.l.b16 %v3931
    %v4067 = vunpack.c.l.b16 %v3932
    %v4068 = vunpack.c.l.b16 %v3933
    %v4069 = vunpack.c.l.b16 %v3934
    %v4070 = vunpack.c.l.b16 %v3935
    %v4071 = vunpack.c.l.b16 %v3936
    %v4072 = vunpack.c.l.b16 %v3937
    %v4073 = vunpack.c.l.b16 %v3938
    %v4074 = vunpack.c.l.b16 %v3939
    %v4075 = vunpack.c.l.b16 %v3940
    %v4076 = vunpack.c.l.b16 %v3941
    %v4077 = vunpack.c.l.b16 %v3942
    %v4078 = vunpack.c.l.b16 %v3943
    %v4079 = vunpack.c.l.b16 %v3944
    %v4080 = vunpack.c.l.b16 %v3945
    %v4081 = vunpack.c.l.b16 %v3946
    %v4082 = vunpack.c.l.b16 %v3947
    %v4083 = vunpack.c.l.b16 %v3948
    %v4084 = vunpack.c.l.b16 %v3949
    %v4085 = vunpack.c.l.b16 %v3950
    %v4086 = vunpack.c.l.b16 %v3951
    %v4087 = vunpack.c.l.b16 %v3952
    %v4088 = vunpack.c.l.b16 %v3953
    %v4089 = vunpack.c.l.b16 %v3954
    %v4090 = vunpack.c.l.b16 %v3955
    %v4091 = vunpack.c.l.b16 %v3956
    %v4092 = vunpack.c.l.b16 %v3957
    %v4093 = vunpack.c.l.b16 %v3958
    %v4094 = vunpack.c.l.b16 %v3959
    %v4095 = vunpack.c.l.b16 %v3960
    %v4096 = vunpack.c.l.b16 %v3961
    %v4097 = vpack.c.b16 %v4034, %v4033
    %v4098 = vpack.c.b16 %v4036, %v4035
    %v4099 = vpack.c.b16 %v4038, %v4037
    %v4100 = vpack.c.b16 %v4040, %v4039
    %v4101 = vpack.c.b16 %v4042, %v4041
    %v4102 = vpack.c.b16 %v4044, %v4043
    %v4103 = vpack.c.b16 %v4046, %v4045
    %v4104 = vpack.c.b16 %v4048, %v4047
    %v4105 = vpack.c.b16 %v4050, %v4049
    %v4106 = vpack.c.b16 %v4052, %v4051
    %v4107 = vpack.c.b16 %v4054, %v4053
    %v4108 = vpack.c.b16 %v4056, %v4055
    %v4109 = vpack.c.b16 %v4058, %v4057
    %v4110 = vpack.c.b16 %v4060, %v4059
    %v4111 = vpack.c.b16 %v4062, %v4061
    %v4112 = vpack.c.b16 %v4064, %v4063
    %v4113 = vpack.c.b16 %v4066, %v4065
    %v4114 = vpack.c.b16 %v4068, %v4067
    %v4115 = vpack.c.b16 %v4070, %v4069
    %v4116 = vpack.c.b16 %v4072, %v4071
    %v4117 = vpack.c.b16 %v4074, %v4073
    %v4118 = vpack.c.b16 %v4076, %v4075
    %v4119 = vpack.c.b16 %v4078, %v4077
    %v4120 = vpack.c.b16 %v4080, %v4079
    %v4121 = vpack.c.b16 %v4082, %v4081
    %v4122 = vpack.c.b16 %v4084, %v4083
    %v4123 = vpack.c.b16 %v4086, %v4085
    %v4124 = vpack.c.b16 %v4088, %v4087
    %v4125 = vpack.c.b16 %v4090, %v4089
    %v4126 = vpack.c.b16 %v4092, %v4091
    %v4127 = vpack.c.b16 %v4094, %v4093
    %v4128 = vpack.c.b16 %v4096, %v4095
    %4161 = vmatprep.subr.bf16.mxu0 0
    %4162 = vmatpush1.bf16.msra.mxu0 %v4097
    %4163 = vmatprep.subr.bf16.mxu0 0
    %4164 = vmatpush1.bf16.msra.mxu0 %v4098
    %4165 = vmatprep.subr.bf16.mxu0 0
    %4166 = vmatpush1.bf16.msra.mxu0 %v4099
    %4167 = vmatprep.subr.bf16.mxu0 0
    %4168 = vmatpush1.bf16.msra.mxu0 %v4100
    %4169 = vmatprep.subr.bf16.mxu0 0
    %4170 = vmatpush1.bf16.msra.mxu0 %v4101
    %4171 = vmatprep.subr.bf16.mxu0 0
    %4172 = vmatpush1.bf16.msra.mxu0 %v4102
    %4173 = vmatprep.subr.bf16.mxu0 0
    %4174 = vmatpush1.bf16.msra.mxu0 %v4103
    %4175 = vmatprep.subr.bf16.mxu0 0
    %4176 = vmatpush1.bf16.msra.mxu0 %v4104
    %4177 = vmatprep.subr.bf16.mxu0 0
    %4178 = vmatpush1.bf16.msra.mxu0 %v4105
    %4179 = vmatprep.subr.bf16.mxu0 0
    %4180 = vmatpush1.bf16.msra.mxu0 %v4106
    %4181 = vmatprep.subr.bf16.mxu0 0
    %4182 = vmatpush1.bf16.msra.mxu0 %v4107
    %4183 = vmatprep.subr.bf16.mxu0 0
    %4184 = vmatpush1.bf16.msra.mxu0 %v4108
    %4185 = vmatprep.subr.bf16.mxu0 0
    %4186 = vmatpush1.bf16.msra.mxu0 %v4109
    %4187 = vmatprep.subr.bf16.mxu0 0
    %4188 = vmatpush1.bf16.msra.mxu0 %v4110
    %4189 = vmatprep.subr.bf16.mxu0 0
    %4190 = vmatpush1.bf16.msra.mxu0 %v4111
    %4191 = vmatprep.subr.bf16.mxu0 0
    %4192 = vmatpush1.bf16.msra.mxu0 %v4112
    %4193 = vmatprep.mubr.bf16.mxu0 %v3895
    %4194 = vmatmul.mubr.bf16.gmra.mrb[0].mxu0 %v3894
    %v4195 = vpop.f32.mrb[0].mxu0
    %v4196 = vadd.f32 %v3967, %v4195
    %v4197 = vpop.f32.mrb[0].mxu0
    %v4198 = vpop.f32.mrb[0].mxu0
    %v4199 = vpop.f32.mrb[0].mxu0
    %4200 = vdwg.mxu0
    %4201 = vmatprep.subr.bf16.mxu0 0
    %4202 = vmatpush1.bf16.msra.mxu0 %v4113
    %4203 = vmatprep.subr.bf16.mxu0 0
    %4204 = vmatpush1.bf16.msra.mxu0 %v4114
    %4205 = vmatprep.subr.bf16.mxu0 0
    %4206 = vmatpush1.bf16.msra.mxu0 %v4115
    %4207 = vmatprep.subr.bf16.mxu0 0
    %4208 = vmatpush1.bf16.msra.mxu0 %v4116
    %4209 = vmatprep.subr.bf16.mxu0 0
    %4210 = vmatpush1.bf16.msra.mxu0 %v4117
    %4211 = vmatprep.subr.bf16.mxu0 0
    %4212 = vmatpush1.bf16.msra.mxu0 %v4118
    %4213 = vmatprep.subr.bf16.mxu0 0
    %4214 = vmatpush1.bf16.msra.mxu0 %v4119
    %4215 = vmatprep.subr.bf16.mxu0 0
    %4216 = vmatpush1.bf16.msra.mxu0 %v4120
    %4217 = vmatprep.subr.bf16.mxu0 0
    %4218 = vmatpush1.bf16.msra.mxu0 %v4121
    %4219 = vmatprep.subr.bf16.mxu0 0
    %4220 = vmatpush1.bf16.msra.mxu0 %v4122
    %4221 = vmatprep.subr.bf16.mxu0 0
    %4222 = vmatpush1.bf16.msra.mxu0 %v4123
    %4223 = vmatprep.subr.bf16.mxu0 0
    %4224 = vmatpush1.bf16.msra.mxu0 %v4124
    %4225 = vmatprep.subr.bf16.mxu0 0
    %4226 = vmatpush1.bf16.msra.mxu0 %v4125
    %4227 = vmatprep.subr.bf16.mxu0 0
    %4228 = vmatpush1.bf16.msra.mxu0 %v4126
    %4229 = vmatprep.subr.bf16.mxu0 0
    %4230 = vmatpush1.bf16.msra.mxu0 %v4127
    %4231 = vmatprep.subr.bf16.mxu0 0
    %4232 = vmatpush1.bf16.msra.mxu0 %v4128
    %4233 = vmatprep.mubr.bf16.mxu0 %v3897
    %4234 = vmatmul.mubr.bf16.gmra.mrb[0].mxu0 %v3896
    %v4235 = vpop.f32.mrb[0].mxu0
    %v4236 = vadd.f32 %v4196, %v4235
    %v4237 = vpop.f32.mrb[0].mxu0
    %v4238 = vpop.f32.mrb[0].mxu0
    %v4239 = vpop.f32.mrb[0].mxu0
    %4240 = vdwg.mxu0
    %4241 = vst [vmem:[#allocation2] sm:$0x3] %v4236
    // Predicated region
    $region22: #{pose_classifier_forward.3} parent=1 // pred_check
      _
    $region23: #{pose_classifier_forward.3} parent=1 // pred_check_branch
      %4243 = sbr.rel (0) target = $region25
    $region24: #{pose_classifier_forward.3} parent=1 // pred_region
      %s4245 = ssub.s32 32, 32
      %4246 = vsyncadd [#allocation3], %s4245
      %s4248 = sshll.u32 [#allocation2], 4
      %s4249 = int_to_ptr.vmem [resolvable:$true] %s4248
      %4251 = dma.vmem_to_hbm [thread:$0]  %s4249, 32, %s5, [#allocation3]
    $region25: #{pose_classifier_forward.3} parent=1 // pred_fallthru
      _
    // Predicated region
    $region26: #{pose_classifier_forward.3} parent=1 // pred_check
      _
    $region27: #{pose_classifier_forward.3} parent=1 // pred_check_branch
      %4253 = sbr.rel (0) target = $region29
    $region28: #{pose_classifier_forward.3} parent=1 // pred_region
      %4254 = dma.done [#allocation3], 32
    $region29: #{pose_classifier_forward.3} parent=1 // pred_fallthru
      _
    %4255 = vsyncpa [#allocation3], 1

// kernel: pose_classifier_forward.2
$region0: #{pose_classifier_forward.2}
  #allocation0 [shape = 'u32[]', space=smem, size = 0x4, offset = 0x4, fixed_abs, tag = 'smem constant byte address 0x4 - core index']
  #allocation1 [shape = 'u32[144,128]{1,0:T(1,128)}', space=vmem, size = 0x12000, scoped, tag = 'internal scratch']
  %s0 = inlined_call_operand.vmem [shape: bf16[2,32,96], index: 0, kind: input, shape index: {}]
  %s1 = inlined_call_operand.hbm [shape: bf16[288,512], index: 1, kind: input, shape index: {}]
  %s2 = inlined_call_operand.hbm [shape: f32[1,512], index: 2, kind: input, shape index: {}]
  %s3 = inlined_call_operand.hbm [shape: bf16[512,256], index: 3, kind: input, shape index: {}]
  %s4 = inlined_call_operand.hbm [shape: bf16[512,256], index: 4, kind: input, shape index: {}]
  %s5 = inlined_call_operand.hbm [shape: bf16[768,512], index: 5, kind: input, shape index: {}]
  %s6 = inlined_call_operand.hbm [shape: f32[1,512], index: 6, kind: input, shape index: {}]
  %s7 = inlined_call_operand.hbm [shape: bf16[512,256], index: 7, kind: input, shape index: {}]
  %s8 = inlined_call_operand.hbm [shape: bf16[512,256], index: 8, kind: input, shape index: {}]
  %s9 = inlined_call_operand.vmem [shape: f32[2,8,256], index: 9, kind: output, shape index: {}]
  %s10 = sld [smem:[#allocation0]]
  $region101: #{pose_classifier_forward.2} parent=0
    _
  %s12 = ssub.s32 1, %s10
  %s13 = scalar_select 0, %s12, %s10
  $region1: #{pose_classifier_forward.2} parent=0
    #allocation2 [shape = 'u8[294912]{0}', space=vmem, size = 0x48000, scoped, tag = 'input window, operand 1, single buffered']
    #allocation3 [shape = 's32[2]{0}', space=sflag, size = 0x8, scoped, tag = 'scoped memory for pose_classifier_forward.2']
    #allocation4 [shape = 'u8[2048]{0}', space=vmem, size = 0x800, scoped, tag = 'input window, operand 2, single buffered']
    #allocation5 [shape = 's32[1]{0}', space=sflag, size = 0x4, scoped, tag = 'scoped memory for pose_classifier_forward.2']
    #allocation6 [shape = 'u8[262144]{0}', space=vmem, size = 0x40000, scoped, tag = 'input window, operand 3, single buffered']
    #allocation7 [shape = 'u8[262144]{0}', space=vmem, size = 0x40000, scoped, tag = 'input window, operand 4, single buffered']
    #allocation8 [shape = 's32[1]{0}', space=sflag, size = 0x4, scoped, tag = 'scoped memory for pose_classifier_forward.2']
    #allocation9 [shape = 'u8[786432]{0}', space=vmem, size = 0xc0000, scoped, tag = 'input window, operand 5, single buffered']
    #allocation10 [shape = 'u8[2048]{0}', space=vmem, size = 0x800, scoped, tag = 'input window, operand 6, single buffered']
    #allocation11 [shape = 's32[1]{0}', space=sflag, size = 0x4, scoped, tag = 'scoped memory for pose_classifier_forward.2']
    #allocation12 [shape = 'u8[262144]{0}', space=vmem, size = 0x40000, scoped, tag = 'input window, operand 7, single buffered']
    #allocation13 [shape = 'u8[262144]{0}', space=vmem, size = 0x40000, scoped, tag = 'input window, operand 8, single buffered']
    #allocation14 [shape = 's32[1]{0}', space=sflag, size = 0x4, scoped, tag = 'scoped memory for pose_classifier_forward.2']
    %14 = vsyncpa [#allocation3], 0
    %15 = vsyncpa [#allocation5], 0
    %16 = vsyncpa [#allocation8], 0
    %17 = vsyncpa [#allocation11], 0
    %18 = vsyncpa [#allocation14], 0
    loop: start=0, step=1, limit=4
    $region2: #{pose_classifier_forward.2} parent=1 // loop_pre_header
      _
    $region3: #{pose_classifier_forward.2} parent=1 // loop_header
      %s20 = sphi 0, %s24
      %p21 = scmp.ge.s32.totalorder %s20, 4
      %s30 = sphi 0, %s32
      %s33 = sphi 0, %s30
      %s34 = sphi 0, %s33
      %s50 = sphi 0, %s34
      %s54 = sphi 0, %s54
      %s56 = sphi 0, %s54
      %s57 = sphi 0, %s56
      %s71 = sphi 0, %s57
      %s75 = sphi 0, %s75
      %s77 = sphi 0, %s75
      %s78 = sphi 0, %s77
      %s92 = sphi 0, %s78
      %s96 = sphi 0, %s96
      %s98 = sphi 0, %s96
      %s99 = sphi 0, %s98
      %s113 = sphi 0, %s99
      %s117 = sphi 0, %s117
      %s119 = sphi 0, %s117
      %s120 = sphi 0, %s119
      %s134 = sphi 0, %s120
      %s138 = sphi 0, %s138
      %s140 = sphi 0, %s138
      %s141 = sphi 0, %s140
      %s155 = sphi 0, %s141
      %s159 = sphi 0, %s159
      %s161 = sphi 0, %s159
      %s162 = sphi 0, %s161
      %s176 = sphi 0, %s162
      %s180 = sphi 0, %s180
      %s182 = sphi 0, %s180
      %s183 = sphi 0, %s182
      %s197 = sphi 0, %s183
      %s201 = sphi 0, %s201
      %s203 = sphi 0, %s201
      %s204 = sphi 0, %s203
      %s218 = sphi 0, %s204
      %s224 = sphi 0, %s226
      %s227 = sphi 0, %s224
      %s228 = sphi 0, %s227
      %s244 = sphi 0, %s228
    $region4: #{pose_classifier_forward.2} parent=1 // loop_header_branch
      %23 = sbr.rel (%p21) target = $region8
    $region5: #{pose_classifier_forward.2} parent=1 // loop_body
      %s25 = ssub.s32 %s20, 1
      %s26 = ssub.s32 %s20, 2
      %s27 = sadd.s32 %s20, 1
      %s28 = ssub.s32 %s20, %s27
      %p29 = scmp.eq.s32.totalorder %s28, 0
      %s31 = sadd.s32 %s30, 1
      %s32 = scalar_select %p29, %s30, %s31
      %p35 = pneg %p29
      %p36 = scmp.eq.s32.totalorder %s20, 1
      %p37 = por %p35, %p36
      %p38 = scmp.ne.s32.totalorder %s30, %s33
      %p39 = scmp.eq.s32.totalorder %s20, 0
      %p40 = por %p38, %p39
      %p41 = scmp.ne.s32.totalorder %s30, %s33
      %p42 = scmp.eq.s32.totalorder %s25, 1
      %p43 = por %p41, %p42
      %p44 = scmp.ne.s32.totalorder %s33, %s34
      %p45 = scmp.eq.s32.totalorder %s25, 0
      %p46 = por %p44, %p45
      %p47 = scmp.ne.s32.totalorder %s33, %s34
      %p48 = scmp.eq.s32.totalorder %s26, 1
      %p49 = por %p47, %p48
      %p51 = scmp.ne.s32.totalorder %s34, %s50
      %p52 = scmp.eq.s32.totalorder %s26, 0
      %p53 = por %p51, %p52
      %s55 = sadd.s32 %s54, 1
      %p58 = scmp.eq.s32.totalorder %s20, 1
      %p59 = scmp.ne.s32.totalorder %s54, %s56
      %p60 = scmp.eq.s32.totalorder %s20, 0
      %p61 = por %p59, %p60
      %p62 = scmp.ne.s32.totalorder %s54, %s56
      %p63 = scmp.eq.s32.totalorder %s25, 1
      %p64 = por %p62, %p63
      %p65 = scmp.ne.s32.totalorder %s56, %s57
      %p66 = scmp.eq.s32.totalorder %s25, 0
      %p67 = por %p65, %p66
      %p68 = scmp.ne.s32.totalorder %s56, %s57
      %p69 = scmp.eq.s32.totalorder %s26, 1
      %p70 = por %p68, %p69
      %p72 = scmp.ne.s32.totalorder %s57, %s71
      %p73 = scmp.eq.s32.totalorder %s26, 0
      %p74 = por %p72, %p73
      %s76 = sadd.s32 %s75, 1
      %p79 = scmp.eq.s32.totalorder %s20, 1
      %p80 = scmp.ne.s32.totalorder %s75, %s77
      %p81 = scmp.eq.s32.totalorder %s20, 0
      %p82 = por %p80, %p81
      %p83 = scmp.ne.s32.totalorder %s75, %s77
      %p84 = scmp.eq.s32.totalorder %s25, 1
      %p85 = por %p83, %p84
      %p86 = scmp.ne.s32.totalorder %s77, %s78
      %p87 = scmp.eq.s32.totalorder %s25, 0
      %p88 = por %p86, %p87
      %p89 = scmp.ne.s32.totalorder %s77, %s78
      %p90 = scmp.eq.s32.totalorder %s26, 1
      %p91 = por %p89, %p90
      %p93 = scmp.ne.s32.totalorder %s78, %s92
      %p94 = scmp.eq.s32.totalorder %s26, 0
      %p95 = por %p93, %p94
      %s97 = sadd.s32 %s96, 1
      %p100 = scmp.eq.s32.totalorder %s20, 1
      %p101 = scmp.ne.s32.totalorder %s96, %s98
      %p102 = scmp.eq.s32.totalorder %s20, 0
      %p103 = por %p101, %p102
      %p104 = scmp.ne.s32.totalorder %s96, %s98
      %p105 = scmp.eq.s32.totalorder %s25, 1
      %p106 = por %p104, %p105
      %p107 = scmp.ne.s32.totalorder %s98, %s99
      %p108 = scmp.eq.s32.totalorder %s25, 0
      %p109 = por %p107, %p108
      %p110 = scmp.ne.s32.totalorder %s98, %s99
      %p111 = scmp.eq.s32.totalorder %s26, 1
      %p112 = por %p110, %p111
      %p114 = scmp.ne.s32.totalorder %s99, %s113
      %p115 = scmp.eq.s32.totalorder %s26, 0
      %p116 = por %p114, %p115
      %s118 = sadd.s32 %s117, 1
      %p121 = scmp.eq.s32.totalorder %s20, 1
      %p122 = scmp.ne.s32.totalorder %s117, %s119
      %p123 = scmp.eq.s32.totalorder %s20, 0
      %p124 = por %p122, %p123
      %p125 = scmp.ne.s32.totalorder %s117, %s119
      %p126 = scmp.eq.s32.totalorder %s25, 1
      %p127 = por %p125, %p126
      %p128 = scmp.ne.s32.totalorder %s119, %s120
      %p129 = scmp.eq.s32.totalorder %s25, 0
      %p130 = por %p128, %p129
      %p131 = scmp.ne.s32.totalorder %s119, %s120
      %p132 = scmp.eq.s32.totalorder %s26, 1
      %p133 = por %p131, %p132
      %p135 = scmp.ne.s32.totalorder %s120, %s134
      %p136 = scmp.eq.s32.totalorder %s26, 0
      %p137 = por %p135, %p136
      %s139 = sadd.s32 %s138, 1
      %p142 = scmp.eq.s32.totalorder %s20, 1
      %p143 = scmp.ne.s32.totalorder %s138, %s140
      %p144 = scmp.eq.s32.totalorder %s20, 0
      %p145 = por %p143, %p144
      %p146 = scmp.ne.s32.totalorder %s138, %s140
      %p147 = scmp.eq.s32.totalorder %s25, 1
      %p148 = por %p146, %p147
      %p149 = scmp.ne.s32.totalorder %s140, %s141
      %p150 = scmp.eq.s32.totalorder %s25, 0
      %p151 = por %p149, %p150
      %p152 = scmp.ne.s32.totalorder %s140, %s141
      %p153 = scmp.eq.s32.totalorder %s26, 1
      %p154 = por %p152, %p153
      %p156 = scmp.ne.s32.totalorder %s141, %s155
      %p157 = scmp.eq.s32.totalorder %s26, 0
      %p158 = por %p156, %p157
      %s160 = sadd.s32 %s159, 1
      %p163 = scmp.eq.s32.totalorder %s20, 1
      %p164 = scmp.ne.s32.totalorder %s159, %s161
      %p165 = scmp.eq.s32.totalorder %s20, 0
      %p166 = por %p164, %p165
      %p167 = scmp.ne.s32.totalorder %s159, %s161
      %p168 = scmp.eq.s32.totalorder %s25, 1
      %p169 = por %p167, %p168
      %p170 = scmp.ne.s32.totalorder %s161, %s162
      %p171 = scmp.eq.s32.totalorder %s25, 0
      %p172 = por %p170, %p171
      %p173 = scmp.ne.s32.totalorder %s161, %s162
      %p174 = scmp.eq.s32.totalorder %s26, 1
      %p175 = por %p173, %p174
      %p177 = scmp.ne.s32.totalorder %s162, %s176
      %p178 = scmp.eq.s32.totalorder %s26, 0
      %p179 = por %p177, %p178
      %s181 = sadd.s32 %s180, 1
      %p184 = scmp.eq.s32.totalorder %s20, 1
      %p185 = scmp.ne.s32.totalorder %s180, %s182
      %p186 = scmp.eq.s32.totalorder %s20, 0
      %p187 = por %p185, %p186
      %p188 = scmp.ne.s32.totalorder %s180, %s182
      %p189 = scmp.eq.s32.totalorder %s25, 1
      %p190 = por %p188, %p189
      %p191 = scmp.ne.s32.totalorder %s182, %s183
      %p192 = scmp.eq.s32.totalorder %s25, 0
      %p193 = por %p191, %p192
      %p194 = scmp.ne.s32.totalorder %s182, %s183
      %p195 = scmp.eq.s32.totalorder %s26, 1
      %p196 = por %p194, %p195
      %p198 = scmp.ne.s32.totalorder %s183, %s197
      %p199 = scmp.eq.s32.totalorder %s26, 0
      %p200 = por %p198, %p199
      %s202 = sadd.s32 %s201, 1
      %p205 = scmp.eq.s32.totalorder %s20, 1
      %p206 = scmp.ne.s32.totalorder %s201, %s203
      %p207 = scmp.eq.s32.totalorder %s20, 0
      %p208 = por %p206, %p207
      %p209 = scmp.ne.s32.totalorder %s201, %s203
      %p210 = scmp.eq.s32.totalorder %s25, 1
      %p211 = por %p209, %p210
      %p212 = scmp.ne.s32.totalorder %s203, %s204
      %p213 = scmp.eq.s32.totalorder %s25, 0
      %p214 = por %p212, %p213
      %p215 = scmp.ne.s32.totalorder %s203, %s204
      %p216 = scmp.eq.s32.totalorder %s26, 1
      %p217 = por %p215, %p216
      %p219 = scmp.ne.s32.totalorder %s204, %s218
      %p220 = scmp.eq.s32.totalorder %s26, 0
      %p221 = por %p219, %p220
      %s222 = ssub.s32 %s20, %s27
      %p223 = scmp.eq.s32.totalorder %s222, 0
      %s225 = sadd.s32 %s224, 1
      %s226 = scalar_select %p223, %s224, %s225
      %p229 = pneg %p223
      %p230 = scmp.eq.s32.totalorder %s20, 1
      %p231 = por %p229, %p230
      %p232 = scmp.ne.s32.totalorder %s224, %s227
      %p233 = scmp.eq.s32.totalorder %s20, 0
      %p234 = por %p232, %p233
      %p235 = scmp.ne.s32.totalorder %s224, %s227
      %p236 = scmp.eq.s32.totalorder %s25, 1
      %p237 = por %p235, %p236
      %p238 = scmp.ne.s32.totalorder %s227, %s228
      %p239 = scmp.eq.s32.totalorder %s25, 0
      %p240 = por %p238, %p239
      %p241 = scmp.ne.s32.totalorder %s227, %s228
      %p242 = scmp.eq.s32.totalorder %s26, 1
      %p243 = por %p241, %p242
      %p245 = scmp.ne.s32.totalorder %s228, %s244
      %p246 = scmp.eq.s32.totalorder %s26, 0
      %p247 = por %p245, %p246
      %p248 = scmp.le.s32.totalorder 1, %s20
      %p249 = scmp.lt.s32.totalorder %s20, 3
      %p250 = pnand %p248, %p249
      %p251 = pneg %p250
      // Predicated region
      $region9: #{pose_classifier_forward.2} parent=5 // pred_check
        _
      $region10: #{pose_classifier_forward.2} parent=5 // pred_check_branch
        %253 = sbr.rel (%p250) target = $region12
      $region11: #{pose_classifier_forward.2} parent=5 // pred_region
        %s254 = ssub.s32 %s20, 1
        // Predicated region
        $region13: #{pose_classifier_forward.2} parent=11 // pred_check
          %p255 = pneg %p67
        $region14: #{pose_classifier_forward.2} parent=11 // pred_check_branch
          %257 = sbr.rel (%p255) target = $region16
        $region15: #{pose_classifier_forward.2} parent=11 // pred_region
          %s259 = ssub.s32 9216, 9216
          %260 = vsyncadd [#allocation3], %s259
          %s261 = sshll.u32 [#allocation2], 4
          %s262 = int_to_ptr.vmem [resolvable:$true] %s261
          %267 = dma.hbm_to_vmem [thread:$0]  %s1, 9216, %s262, [#allocation3], 256, 256, 16
        $region16: #{pose_classifier_forward.2} parent=11 // pred_fallthru
          _
        // Predicated region
        $region17: #{pose_classifier_forward.2} parent=11 // pred_check
          %p268 = pneg %p88
        $region18: #{pose_classifier_forward.2} parent=11 // pred_check_branch
          %270 = sbr.rel (%p268) target = $region20
        $region19: #{pose_classifier_forward.2} parent=11 // pred_region
          %s272 = ssub.s32 64, 64
          %273 = vsyncadd [#allocation5], %s272
          %s275 = sshll.u32 [#allocation4], 4
          %s276 = int_to_ptr.vmem [resolvable:$true] %s275
          %278 = dma.hbm_to_vmem [thread:$0]  %s2, 64, %s276, [#allocation5]
        $region20: #{pose_classifier_forward.2} parent=11 // pred_fallthru
          _
        // Predicated region
        $region21: #{pose_classifier_forward.2} parent=11 // pred_check
          %p279 = pneg %p109
        $region22: #{pose_classifier_forward.2} parent=11 // pred_check_branch
          %281 = sbr.rel (%p279) target = $region24
        $region23: #{pose_classifier_forward.2} parent=11 // pred_region
          %s283 = ssub.s32 8192, 8192
          %284 = vsyncadd [#allocation5], %s283
          %s285 = sshll.u32 [#allocation6], 4
          %s286 = int_to_ptr.vmem [resolvable:$true] %s285
          %291 = dma.hbm_to_vmem [thread:$0]  %s3, 8192, %s286, [#allocation5], 128, 128, 8
        $region24: #{pose_classifier_forward.2} parent=11 // pred_fallthru
          _
        // Predicated region
        $region25: #{pose_classifier_forward.2} parent=11 // pred_check
          %p292 = pneg %p130
        $region26: #{pose_classifier_forward.2} parent=11 // pred_check_branch
          %294 = sbr.rel (%p292) target = $region28
        $region27: #{pose_classifier_forward.2} parent=11 // pred_region
          %s296 = ssub.s32 8192, 8192
          %297 = vsyncadd [#allocation8], %s296
          %s298 = sshll.u32 [#allocation7], 4
          %s299 = int_to_ptr.vmem [resolvable:$true] %s298
          %304 = dma.hbm_to_vmem [thread:$0]  %s4, 8192, %s299, [#allocation8], 128, 128, 8
        $region28: #{pose_classifier_forward.2} parent=11 // pred_fallthru
          _
        // Predicated region
        $region29: #{pose_classifier_forward.2} parent=11 // pred_check
          %p305 = pneg %p151
        $region30: #{pose_classifier_forward.2} parent=11 // pred_check_branch
          %307 = sbr.rel (%p305) target = $region32
        $region31: #{pose_classifier_forward.2} parent=11 // pred_region
          %s309 = ssub.s32 24576, 24576
          %310 = vsyncadd [#allocation8], %s309
          %s311 = sshll.u32 [#allocation9], 4
          %s312 = int_to_ptr.vmem [resolvable:$true] %s311
          %317 = dma.hbm_to_vmem [thread:$0]  %s5, 24576, %s312, [#allocation8], 256, 256, 16
        $region32: #{pose_classifier_forward.2} parent=11 // pred_fallthru
          _
        // Predicated region
        $region33: #{pose_classifier_forward.2} parent=11 // pred_check
          %p318 = pneg %p172
        $region34: #{pose_classifier_forward.2} parent=11 // pred_check_branch
          %320 = sbr.rel (%p318) target = $region36
        $region35: #{pose_classifier_forward.2} parent=11 // pred_region
          %s322 = ssub.s32 64, 64
          %323 = vsyncadd [#allocation11], %s322
          %s325 = sshll.u32 [#allocation10], 4
          %s326 = int_to_ptr.vmem [resolvable:$true] %s325
          %328 = dma.hbm_to_vmem [thread:$0]  %s6, 64, %s326, [#allocation11]
        $region36: #{pose_classifier_forward.2} parent=11 // pred_fallthru
          _
        // Predicated region
        $region37: #{pose_classifier_forward.2} parent=11 // pred_check
          %p329 = pneg %p193
        $region38: #{pose_classifier_forward.2} parent=11 // pred_check_branch
          %331 = sbr.rel (%p329) target = $region40
        $region39: #{pose_classifier_forward.2} parent=11 // pred_region
          %s333 = ssub.s32 8192, 8192
          %334 = vsyncadd [#allocation11], %s333
          %s335 = sshll.u32 [#allocation12], 4
          %s336 = int_to_ptr.vmem [resolvable:$true] %s335
          %341 = dma.hbm_to_vmem [thread:$0]  %s7, 8192, %s336, [#allocation11], 128, 128, 8
        $region40: #{pose_classifier_forward.2} parent=11 // pred_fallthru
          _
        // Predicated region
        $region41: #{pose_classifier_forward.2} parent=11 // pred_check
          %p342 = pneg %p214
        $region42: #{pose_classifier_forward.2} parent=11 // pred_check_branch
          %344 = sbr.rel (%p342) target = $region44
        $region43: #{pose_classifier_forward.2} parent=11 // pred_region
          %s346 = ssub.s32 8192, 8192
          %347 = vsyncadd [#allocation14], %s346
          %s348 = sshll.u32 [#allocation13], 4
          %s349 = int_to_ptr.vmem [resolvable:$true] %s348
          %354 = dma.hbm_to_vmem [thread:$0]  %s8, 8192, %s349, [#allocation14], 128, 128, 8
        $region44: #{pose_classifier_forward.2} parent=11 // pred_fallthru
          _
      $region12: #{pose_classifier_forward.2} parent=5 // pred_fallthru
        _
      %p355 = scmp.lt.s32.totalorder %s20, 2
      // Predicated region
      $region45: #{pose_classifier_forward.2} parent=5 // pred_check
        %p356 = pneg %p355
      $region46: #{pose_classifier_forward.2} parent=5 // pred_check_branch
        %358 = sbr.rel (%p356) target = $region48
      $region47: #{pose_classifier_forward.2} parent=5 // pred_region
        // Predicated region
        $region49: #{pose_classifier_forward.2} parent=47 // pred_check
          %p359 = pneg %p40
        $region50: #{pose_classifier_forward.2} parent=47 // pred_check_branch
          %361 = sbr.rel (%p359) target = $region52
        $region51: #{pose_classifier_forward.2} parent=47 // pred_region
          %p362 = scmp.lt.s32.totalorder %s20, 1
          %s363 = scalar_select %p362, %s20, 1
          %s364 = smul.addr %s363, 4
          %s365 = smul.addr %s364, 4
          %s366 = scalar_lea.vmem %s0, %s365
        $region52: #{pose_classifier_forward.2} parent=47 // pred_fallthru
          _
      $region48: #{pose_classifier_forward.2} parent=5 // pred_fallthru
        _
      %p367 = scmp.le.s32.totalorder 1, %s20
      %p368 = scmp.lt.s32.totalorder %s20, 3
      %p369 = pnand %p367, %p368
      %p370 = pneg %p369
      // Predicated region
      $region53: #{pose_classifier_forward.2} parent=5 // pred_check
        _
      $region54: #{pose_classifier_forward.2} parent=5 // pred_check_branch
        %372 = sbr.rel (%p369) target = $region56
      $region55: #{pose_classifier_forward.2} parent=5 // pred_region
        %s373 = ssub.s32 %s20, 1
        // Predicated region
        $region57: #{pose_classifier_forward.2} parent=55 // pred_check
          %p374 = pneg %p67
        $region58: #{pose_classifier_forward.2} parent=55 // pred_check_branch
          %376 = sbr.rel (%p374) target = $region60
        $region59: #{pose_classifier_forward.2} parent=55 // pred_region
          %377 = dma.done [#allocation3], 9216
        $region60: #{pose_classifier_forward.2} parent=55 // pred_fallthru
          _
        // Predicated region
        $region61: #{pose_classifier_forward.2} parent=55 // pred_check
          %p378 = pneg %p88
        $region62: #{pose_classifier_forward.2} parent=55 // pred_check_branch
          %380 = sbr.rel (%p378) target = $region64
        $region63: #{pose_classifier_forward.2} parent=55 // pred_region
          %381 = dma.done [#allocation5], 64
        $region64: #{pose_classifier_forward.2} parent=55 // pred_fallthru
          _
        // Predicated region
        $region65: #{pose_classifier_forward.2} parent=55 // pred_check
          %p382 = pneg %p109
        $region66: #{pose_classifier_forward.2} parent=55 // pred_check_branch
          %384 = sbr.rel (%p382) target = $region68
        $region67: #{pose_classifier_forward.2} parent=55 // pred_region
          %385 = dma.done [#allocation5], 8192
        $region68: #{pose_classifier_forward.2} parent=55 // pred_fallthru
          _
        // Predicated region
        $region69: #{pose_classifier_forward.2} parent=55 // pred_check
          %p386 = pneg %p130
        $region70: #{pose_classifier_forward.2} parent=55 // pred_check_branch
          %388 = sbr.rel (%p386) target = $region72
        $region71: #{pose_classifier_forward.2} parent=55 // pred_region
          %389 = dma.done [#allocation8], 8192
        $region72: #{pose_classifier_forward.2} parent=55 // pred_fallthru
          _
        // Predicated region
        $region73: #{pose_classifier_forward.2} parent=55 // pred_check
          %p390 = pneg %p151
        $region74: #{pose_classifier_forward.2} parent=55 // pred_check_branch
          %392 = sbr.rel (%p390) target = $region76
        $region75: #{pose_classifier_forward.2} parent=55 // pred_region
          %393 = dma.done [#allocation8], 24576
        $region76: #{pose_classifier_forward.2} parent=55 // pred_fallthru
          _
        // Predicated region
        $region77: #{pose_classifier_forward.2} parent=55 // pred_check
          %p394 = pneg %p172
        $region78: #{pose_classifier_forward.2} parent=55 // pred_check_branch
          %396 = sbr.rel (%p394) target = $region80
        $region79: #{pose_classifier_forward.2} parent=55 // pred_region
          %397 = dma.done [#allocation11], 64
        $region80: #{pose_classifier_forward.2} parent=55 // pred_fallthru
          _
        // Predicated region
        $region81: #{pose_classifier_forward.2} parent=55 // pred_check
          %p398 = pneg %p193
        $region82: #{pose_classifier_forward.2} parent=55 // pred_check_branch
          %400 = sbr.rel (%p398) target = $region84
        $region83: #{pose_classifier_forward.2} parent=55 // pred_region
          %401 = dma.done [#allocation11], 8192
        $region84: #{pose_classifier_forward.2} parent=55 // pred_fallthru
          _
        // Predicated region
        $region85: #{pose_classifier_forward.2} parent=55 // pred_check
          %p402 = pneg %p214
        $region86: #{pose_classifier_forward.2} parent=55 // pred_check_branch
          %404 = sbr.rel (%p402) target = $region88
        $region87: #{pose_classifier_forward.2} parent=55 // pred_region
          %405 = dma.done [#allocation14], 8192
        $region88: #{pose_classifier_forward.2} parent=55 // pred_fallthru
          _
        %p406 = scmp.lt.s32.totalorder %s25, 1
        %s407 = scalar_select %p406, %s25, 1
        %s408 = smul.addr %s407, 4
        %s409 = smul.addr %s408, 4
        %s410 = scalar_lea.vmem %s0, %s409
        %p411 = pneg %p46
        %p412 = pneg %p43
        %p413 = pneg %p67
        %p414 = pneg %p64
        %p415 = pneg %p88
        %p416 = pneg %p85
        %p417 = pneg %p109
        %p418 = pneg %p106
        %p419 = pneg %p130
        %p420 = pneg %p127
        %p421 = pneg %p151
        %p422 = pneg %p148
        %p423 = pneg %p172
        %p424 = pneg %p169
        %p425 = pneg %p193
        %p426 = pneg %p190
        %p427 = pneg %p214
        %p428 = pneg %p211
        %p429 = pneg %p240
        %p430 = pneg %p237
        %p431 = scmp.lt.s32.totalorder %s25, 1
        %s432 = scalar_select %p431, %s25, 1
        %s433 = smul.addr %s432, 2
        %s434 = smul.addr %s433, 8
        %s435 = scalar_lea.vmem %s9, %s434
        %p436 = scmp.lt.s32.totalorder %s25, 1
        %s437 = scalar_select %p436, %s25, 1
        %s438 = smul.addr %s437, 4
        %s439 = smul.addr %s438, 4
        %s440 = scalar_lea.vmem %s0, %s439
        %p441 = scmp.lt.s32.totalorder %s25, 1
        %s442 = scalar_select %p441, %s25, 1
        %s443 = smul.addr %s442, 2
        %s444 = smul.addr %s443, 8
        %s445 = scalar_lea.vmem %s9, %s444
        %v447 = vld [vmem:[%s440] sm:$0xf]
        %v448 = vld [vmem:[%s440 + $0x4] sm:$0xf]
        %v449 = vld [vmem:[%s440 + $0x8] sm:$0xf]
        %v450 = vld [vmem:[%s440 + $0xc] sm:$0xf]
        %v455 = vunpack.c.l.b16 %v447
        %v456 = vunpack.c.l.b16 %v448
        %v457 = vunpack.c.l.b16 %v449
        %v458 = vunpack.c.l.b16 %v450
        %v459 = vpack.c.b16 %v456, %v455
        %v460 = vpack.c.b16 %v458, %v457
        %vm461 = vsmask.f32 256
        %v463 = vshrl.u32 %v459, 16
        %v465 = vrot.slane %v463, 7
        %v466 = vshll.u32 %v459, 16
        %v468 = vor.u32 %v465, %v466
        %v470 = vshrl.u32 %v460, 16
        %v472 = vrot.slane %v470, 7
        %v473 = vshll.u32 %v460, 16
        %v475 = vor.u32 %v472, %v473
        %v476 = vsel %vm461, %v465, %v475
        %vm478 = vcmask 1040384
        %vm479 = vmand %vm478, %vm461
        %v480 = vsel %vm479, 0, %v468
        %vm481 = vsmask.f32 7424
        %v482 = vrot.slane %v466, 1
        %v483 = vor.u32 %v463, %v482
        %v484 = vrot.slane %v473, 1
        %v485 = vsel %vm481, %v483, %v484
        %v486 = vor.u32 %v470, %v484
        %vm488 = vcmask 1047552
        %vm489 = vmand %vm488, %vm481
        %v490 = vsel %vm489, %v486, 0
        %491 = vrot.lane.b32.xlu0 %v459, 96
        %v492 = vpop.permute.xlu0 %491
        %493 = vrot.lane.b32.xlu0 %v460, 96
        %v494 = vpop.permute.xlu0 %493
        %496 = vrot.lane.b32.xlu0 %v485, 64
        %v497 = vpop.permute.xlu0 %496
        %498 = vrot.lane.b32.xlu0 %v490, 64
        %v499 = vpop.permute.xlu0 %498
        %vm500 = vcmask 785408
        %v503 = vsel %vm500, %v480, %v492
        %v507 = vsel %vm500, %v476, %v494
        %vm509 = vcmask 523264
        %v511 = vsel %vm509, %v492, %v497
        %v514 = vsel %vm509, %v494, %v499
        %v516 = vld [vmem:[#allocation2] sm:$0xff]
        %v517 = vld [vmem:[#allocation2 + $0x8] sm:$0xff]
        %v518 = vld [vmem:[#allocation2 + $0x10] sm:$0xff]
        %v519 = vld [vmem:[#allocation2 + $0x18] sm:$0xff]
        %v520 = vld [vmem:[#allocation2 + $0x20] sm:$0xff]
        %v521 = vld [vmem:[#allocation2 + $0x28] sm:$0xff]
        %v522 = vld [vmem:[#allocation2 + $0x30] sm:$0xff]
        %v523 = vld [vmem:[#allocation2 + $0x38] sm:$0xff]
        %v524 = vld [vmem:[#allocation2 + $0x40] sm:$0xff]
        %v525 = vld [vmem:[#allocation2 + $0x48] sm:$0xff]
        %v526 = vld [vmem:[#allocation2 + $0x50] sm:$0xff]
        %v527 = vld [vmem:[#allocation2 + $0x58] sm:$0xff]
        %v528 = vld [vmem:[#allocation2 + $0x60] sm:$0xff]
        %v529 = vld [vmem:[#allocation2 + $0x68] sm:$0xff]
        %v530 = vld [vmem:[#allocation2 + $0x70] sm:$0xff]
        %v531 = vld [vmem:[#allocation2 + $0x78] sm:$0xff]
        %v532 = vld [vmem:[#allocation2 + $0x80] sm:$0xff]
        %v533 = vld [vmem:[#allocation2 + $0x88] sm:$0xff]
        %v534 = vld [vmem:[#allocation2 + $0x90] sm:$0xff]
        %v535 = vld [vmem:[#allocation2 + $0x98] sm:$0xff]
        %v536 = vld [vmem:[#allocation2 + $0xa0] sm:$0xff]
        %v537 = vld [vmem:[#allocation2 + $0xa8] sm:$0xff]
        %v538 = vld [vmem:[#allocation2 + $0xb0] sm:$0xff]
        %v539 = vld [vmem:[#allocation2 + $0xb8] sm:$0xff]
        %v540 = vld [vmem:[#allocation2 + $0xc0] sm:$0xff]
        %v541 = vld [vmem:[#allocation2 + $0xc8] sm:$0xff]
        %v542 = vld [vmem:[#allocation2 + $0xd0] sm:$0xff]
        %v543 = vld [vmem:[#allocation2 + $0xd8] sm:$0xff]
        %v544 = vld [vmem:[#allocation2 + $0xe0] sm:$0xff]
        %v545 = vld [vmem:[#allocation2 + $0xe8] sm:$0xff]
        %v546 = vld [vmem:[#allocation2 + $0xf0] sm:$0xff]
        %v547 = vld [vmem:[#allocation2 + $0xf8] sm:$0xff]
        %v548 = vld [vmem:[#allocation2 + $0x100] sm:$0xff]
        %v549 = vld [vmem:[#allocation2 + $0x108] sm:$0xff]
        %v550 = vld [vmem:[#allocation2 + $0x110] sm:$0xff]
        %v551 = vld [vmem:[#allocation2 + $0x118] sm:$0xff]
        %v552 = vld [vmem:[#allocation2 + $0x120] sm:$0xff]
        %v553 = vld [vmem:[#allocation2 + $0x128] sm:$0xff]
        %v554 = vld [vmem:[#allocation2 + $0x130] sm:$0xff]
        %v555 = vld [vmem:[#allocation2 + $0x138] sm:$0xff]
        %v556 = vld [vmem:[#allocation2 + $0x140] sm:$0xff]
        %v557 = vld [vmem:[#allocation2 + $0x148] sm:$0xff]
        %v558 = vld [vmem:[#allocation2 + $0x150] sm:$0xff]
        %v559 = vld [vmem:[#allocation2 + $0x158] sm:$0xff]
        %v560 = vld [vmem:[#allocation2 + $0x160] sm:$0xff]
        %v561 = vld [vmem:[#allocation2 + $0x168] sm:$0xff]
        %v562 = vld [vmem:[#allocation2 + $0x170] sm:$0xff]
        %v563 = vld [vmem:[#allocation2 + $0x178] sm:$0xff]
        %v564 = vld [vmem:[#allocation2 + $0x180] sm:$0xff]
        %v565 = vld [vmem:[#allocation2 + $0x188] sm:$0xff]
        %v566 = vld [vmem:[#allocation2 + $0x190] sm:$0xff]
        %v567 = vld [vmem:[#allocation2 + $0x198] sm:$0xff]
        %v568 = vld [vmem:[#allocation2 + $0x1a0] sm:$0xff]
        %v569 = vld [vmem:[#allocation2 + $0x1a8] sm:$0xff]
        %v570 = vld [vmem:[#allocation2 + $0x1b0] sm:$0xff]
        %v571 = vld [vmem:[#allocation2 + $0x1b8] sm:$0xff]
        %v572 = vld [vmem:[#allocation2 + $0x1c0] sm:$0xff]
        %v573 = vld [vmem:[#allocation2 + $0x1c8] sm:$0xff]
        %v574 = vld [vmem:[#allocation2 + $0x1d0] sm:$0xff]
        %v575 = vld [vmem:[#allocation2 + $0x1d8] sm:$0xff]
        %v576 = vld [vmem:[#allocation2 + $0x1e0] sm:$0xff]
        %v577 = vld [vmem:[#allocation2 + $0x1e8] sm:$0xff]
        %v578 = vld [vmem:[#allocation2 + $0x1f0] sm:$0xff]
        %v579 = vld [vmem:[#allocation2 + $0x1f8] sm:$0xff]
        %v580 = vld [vmem:[#allocation2 + $0x200] sm:$0xff]
        %v581 = vld [vmem:[#allocation2 + $0x208] sm:$0xff]
        %v582 = vld [vmem:[#allocation2 + $0x210] sm:$0xff]
        %v583 = vld [vmem:[#allocation2 + $0x218] sm:$0xff]
        %v584 = vld [vmem:[#allocation2 + $0x220] sm:$0xff]
        %v585 = vld [vmem:[#allocation2 + $0x228] sm:$0xff]
        %v586 = vld [vmem:[#allocation2 + $0x230] sm:$0xff]
        %v587 = vld [vmem:[#allocation2 + $0x238] sm:$0xff]
        %v588 = vld [vmem:[#allocation4] sm:$0xf]
        %v590 = vlaneseq
        %v591 = vshrl.u32 %v590, 7
        %v592 = vsub.s32 0, %v591
        %v593 = vrot.slane %v588, %v592
        %v594 = vlaneseq
        %v595 = vshrl.u32 %v594, 7
        %v596 = vsub.s32 1, %v595
        %v597 = vrot.slane %v588, %v596
        %v598 = vlaneseq
        %v599 = vshrl.u32 %v598, 7
        %v600 = vsub.s32 2, %v599
        %v601 = vrot.slane %v588, %v600
        %v602 = vlaneseq
        %v603 = vshrl.u32 %v602, 7
        %v604 = vsub.s32 3, %v603
        %v605 = vrot.slane %v588, %v604
        %v682 = vunpack.c.l.b16 %v516
        %v683 = vunpack.c.h.b16 %v516
        %v684 = vunpack.c.l.b16 %v517
        %v685 = vunpack.c.h.b16 %v517
        %v686 = vunpack.c.l.b16 %v518
        %v687 = vunpack.c.h.b16 %v518
        %v688 = vunpack.c.l.b16 %v519
        %v689 = vunpack.c.h.b16 %v519
        %v690 = vunpack.c.l.b16 %v520
        %v691 = vunpack.c.h.b16 %v520
        %v692 = vunpack.c.l.b16 %v521
        %v693 = vunpack.c.h.b16 %v521
        %v694 = vunpack.c.l.b16 %v522
        %v695 = vunpack.c.h.b16 %v522
        %v696 = vunpack.c.l.b16 %v523
        %v697 = vunpack.c.h.b16 %v523
        %v698 = vunpack.c.l.b16 %v524
        %v699 = vunpack.c.h.b16 %v524
        %v700 = vunpack.c.l.b16 %v525
        %v701 = vunpack.c.h.b16 %v525
        %v702 = vunpack.c.l.b16 %v526
        %v703 = vunpack.c.h.b16 %v526
        %v704 = vunpack.c.l.b16 %v527
        %v705 = vunpack.c.h.b16 %v527
        %v706 = vunpack.c.l.b16 %v528
        %v707 = vunpack.c.h.b16 %v528
        %v708 = vunpack.c.l.b16 %v529
        %v709 = vunpack.c.h.b16 %v529
        %v710 = vunpack.c.l.b16 %v530
        %v711 = vunpack.c.h.b16 %v530
        %v712 = vunpack.c.l.b16 %v531
        %v713 = vunpack.c.h.b16 %v531
        %v714 = vunpack.c.l.b16 %v532
        %v715 = vunpack.c.h.b16 %v532
        %v716 = vunpack.c.l.b16 %v533
        %v717 = vunpack.c.h.b16 %v533
        %v718 = vunpack.c.l.b16 %v534
        %v719 = vunpack.c.h.b16 %v534
        %v720 = vunpack.c.l.b16 %v535
        %v721 = vunpack.c.h.b16 %v535
        %v722 = vunpack.c.l.b16 %v536
        %v723 = vunpack.c.h.b16 %v536
        %v724 = vunpack.c.l.b16 %v537
        %v725 = vunpack.c.h.b16 %v537
        %v726 = vunpack.c.l.b16 %v538
        %v727 = vunpack.c.h.b16 %v538
        %v728 = vunpack.c.l.b16 %v539
        %v729 = vunpack.c.h.b16 %v539
        %v730 = vunpack.c.l.b16 %v540
        %v731 = vunpack.c.h.b16 %v540
        %v732 = vunpack.c.l.b16 %v541
        %v733 = vunpack.c.h.b16 %v541
        %v734 = vunpack.c.l.b16 %v542
        %v735 = vunpack.c.h.b16 %v542
        %v736 = vunpack.c.l.b16 %v543
        %v737 = vunpack.c.h.b16 %v543
        %v738 = vunpack.c.l.b16 %v544
        %v739 = vunpack.c.h.b16 %v544
        %v740 = vunpack.c.l.b16 %v545
        %v741 = vunpack.c.h.b16 %v545
        %v742 = vunpack.c.l.b16 %v546
        %v743 = vunpack.c.h.b16 %v546
        %v744 = vunpack.c.l.b16 %v547
        %v745 = vunpack.c.h.b16 %v547
        %v746 = vunpack.c.l.b16 %v548
        %v747 = vunpack.c.h.b16 %v548
        %v748 = vunpack.c.l.b16 %v549
        %v749 = vunpack.c.h.b16 %v549
        %v750 = vunpack.c.l.b16 %v550
        %v751 = vunpack.c.h.b16 %v550
        %v752 = vunpack.c.l.b16 %v551
        %v753 = vunpack.c.h.b16 %v551
        %v754 = vunpack.c.l.b16 %v552
        %v755 = vunpack.c.h.b16 %v552
        %v756 = vunpack.c.l.b16 %v553
        %v757 = vunpack.c.h.b16 %v553
        %v758 = vunpack.c.l.b16 %v554
        %v759 = vunpack.c.h.b16 %v554
        %v760 = vunpack.c.l.b16 %v555
        %v761 = vunpack.c.h.b16 %v555
        %v762 = vunpack.c.l.b16 %v556
        %v763 = vunpack.c.h.b16 %v556
        %v764 = vunpack.c.l.b16 %v557
        %v765 = vunpack.c.h.b16 %v557
        %v766 = vunpack.c.l.b16 %v558
        %v767 = vunpack.c.h.b16 %v558
        %v768 = vunpack.c.l.b16 %v559
        %v769 = vunpack.c.h.b16 %v559
        %v770 = vunpack.c.l.b16 %v560
        %v771 = vunpack.c.h.b16 %v560
        %v772 = vunpack.c.l.b16 %v561
        %v773 = vunpack.c.h.b16 %v561
        %v774 = vunpack.c.l.b16 %v562
        %v775 = vunpack.c.h.b16 %v562
        %v776 = vunpack.c.l.b16 %v563
        %v777 = vunpack.c.h.b16 %v563
        %v778 = vunpack.c.l.b16 %v564
        %v779 = vunpack.c.h.b16 %v564
        %v780 = vunpack.c.l.b16 %v565
        %v781 = vunpack.c.h.b16 %v565
        %v782 = vunpack.c.l.b16 %v566
        %v783 = vunpack.c.h.b16 %v566
        %v784 = vunpack.c.l.b16 %v567
        %v785 = vunpack.c.h.b16 %v567
        %v786 = vunpack.c.l.b16 %v568
        %v787 = vunpack.c.h.b16 %v568
        %v788 = vunpack.c.l.b16 %v569
        %v789 = vunpack.c.h.b16 %v569
        %v790 = vunpack.c.l.b16 %v570
        %v791 = vunpack.c.h.b16 %v570
        %v792 = vunpack.c.l.b16 %v571
        %v793 = vunpack.c.h.b16 %v571
        %v794 = vunpack.c.l.b16 %v572
        %v795 = vunpack.c.h.b16 %v572
        %v796 = vunpack.c.l.b16 %v573
        %v797 = vunpack.c.h.b16 %v573
        %v798 = vunpack.c.l.b16 %v574
        %v799 = vunpack.c.h.b16 %v574
        %v800 = vunpack.c.l.b16 %v575
        %v801 = vunpack.c.h.b16 %v575
        %v802 = vunpack.c.l.b16 %v576
        %v803 = vunpack.c.h.b16 %v576
        %v804 = vunpack.c.l.b16 %v577
        %v805 = vunpack.c.h.b16 %v577
        %v806 = vunpack.c.l.b16 %v578
        %v807 = vunpack.c.h.b16 %v578
        %v808 = vunpack.c.l.b16 %v579
        %v809 = vunpack.c.h.b16 %v579
        %v810 = vunpack.c.l.b16 %v580
        %v811 = vunpack.c.h.b16 %v580
        %v812 = vunpack.c.l.b16 %v581
        %v813 = vunpack.c.h.b16 %v581
        %v814 = vunpack.c.l.b16 %v582
        %v815 = vunpack.c.h.b16 %v582
        %v816 = vunpack.c.l.b16 %v583
        %v817 = vunpack.c.h.b16 %v583
        %v818 = vunpack.c.l.b16 %v584
        %v819 = vunpack.c.h.b16 %v584
        %v820 = vunpack.c.l.b16 %v585
        %v821 = vunpack.c.h.b16 %v585
        %v822 = vunpack.c.l.b16 %v586
        %v823 = vunpack.c.h.b16 %v586
        %v824 = vunpack.c.l.b16 %v587
        %v825 = vunpack.c.h.b16 %v587
        %v826 = vpack.c.b16 %v686, %v682
        %v827 = vpack.c.b16 %v687, %v683
        %v828 = vpack.c.b16 %v688, %v684
        %v829 = vpack.c.b16 %v689, %v685
        %v830 = vpack.c.b16 %v694, %v690
        %v831 = vpack.c.b16 %v695, %v691
        %v832 = vpack.c.b16 %v696, %v692
        %v833 = vpack.c.b16 %v697, %v693
        %v834 = vpack.c.b16 %v702, %v698
        %v835 = vpack.c.b16 %v703, %v699
        %v836 = vpack.c.b16 %v704, %v700
        %v837 = vpack.c.b16 %v705, %v701
        %v838 = vpack.c.b16 %v710, %v706
        %v839 = vpack.c.b16 %v711, %v707
        %v840 = vpack.c.b16 %v712, %v708
        %v841 = vpack.c.b16 %v713, %v709
        %v842 = vpack.c.b16 %v718, %v714
        %v843 = vpack.c.b16 %v719, %v715
        %v844 = vpack.c.b16 %v720, %v716
        %v845 = vpack.c.b16 %v721, %v717
        %v846 = vpack.c.b16 %v726, %v722
        %v847 = vpack.c.b16 %v727, %v723
        %v848 = vpack.c.b16 %v728, %v724
        %v849 = vpack.c.b16 %v729, %v725
        %v850 = vpack.c.b16 %v734, %v730
        %v851 = vpack.c.b16 %v735, %v731
        %v852 = vpack.c.b16 %v736, %v732
        %v853 = vpack.c.b16 %v737, %v733
        %v854 = vpack.c.b16 %v742, %v738
        %v855 = vpack.c.b16 %v743, %v739
        %v856 = vpack.c.b16 %v744, %v740
        %v857 = vpack.c.b16 %v745, %v741
        %v858 = vpack.c.b16 %v750, %v746
        %v859 = vpack.c.b16 %v751, %v747
        %v860 = vpack.c.b16 %v752, %v748
        %v861 = vpack.c.b16 %v753, %v749
        %v862 = vpack.c.b16 %v758, %v754
        %v863 = vpack.c.b16 %v759, %v755
        %v864 = vpack.c.b16 %v760, %v756
        %v865 = vpack.c.b16 %v761, %v757
        %v866 = vpack.c.b16 %v766, %v762
        %v867 = vpack.c.b16 %v767, %v763
        %v868 = vpack.c.b16 %v768, %v764
        %v869 = vpack.c.b16 %v769, %v765
        %v870 = vpack.c.b16 %v774, %v770
        %v871 = vpack.c.b16 %v775, %v771
        %v872 = vpack.c.b16 %v776, %v772
        %v873 = vpack.c.b16 %v777, %v773
        %v874 = vpack.c.b16 %v782, %v778
        %v875 = vpack.c.b16 %v783, %v779
        %v876 = vpack.c.b16 %v784, %v780
        %v877 = vpack.c.b16 %v785, %v781
        %v878 = vpack.c.b16 %v790, %v786
        %v879 = vpack.c.b16 %v791, %v787
        %v880 = vpack.c.b16 %v792, %v788
        %v881 = vpack.c.b16 %v793, %v789
        %v882 = vpack.c.b16 %v798, %v794
        %v883 = vpack.c.b16 %v799, %v795
        %v884 = vpack.c.b16 %v800, %v796
        %v885 = vpack.c.b16 %v801, %v797
        %v886 = vpack.c.b16 %v806, %v802
        %v887 = vpack.c.b16 %v807, %v803
        %v888 = vpack.c.b16 %v808, %v804
        %v889 = vpack.c.b16 %v809, %v805
        %v890 = vpack.c.b16 %v814, %v810
        %v891 = vpack.c.b16 %v815, %v811
        %v892 = vpack.c.b16 %v816, %v812
        %v893 = vpack.c.b16 %v817, %v813
        %v894 = vpack.c.b16 %v822, %v818
        %v895 = vpack.c.b16 %v823, %v819
        %v896 = vpack.c.b16 %v824, %v820
        %v897 = vpack.c.b16 %v825, %v821
        %vm970 = vcmask 261120
        %v971 = vsel %vm970, %v497, 0
        %v973 = vsel %vm970, %v499, 0
        %975 = vmatprep.subr.bf16.mxu0 %v827
        %976 = vmatpush1.bf16.msra.mxu0 %v826
        %977 = vmatprep.subr.bf16.mxu0 %v831
        %978 = vmatpush1.bf16.msra.mxu0 %v830
        %979 = vmatprep.subr.bf16.mxu0 %v835
        %980 = vmatpush1.bf16.msra.mxu0 %v834
        %981 = vmatprep.subr.bf16.mxu0 %v839
        %982 = vmatpush1.bf16.msra.mxu0 %v838
        %983 = vmatprep.subr.bf16.mxu0 %v843
        %984 = vmatpush1.bf16.msra.mxu0 %v842
        %985 = vmatprep.subr.bf16.mxu0 %v847
        %986 = vmatpush1.bf16.msra.mxu0 %v846
        %987 = vmatprep.subr.bf16.mxu0 %v851
        %988 = vmatpush1.bf16.msra.mxu0 %v850
        %989 = vmatprep.subr.bf16.mxu0 %v855
        %990 = vmatpush1.bf16.msra.mxu0 %v854
        %991 = vmatprep.subr.bf16.mxu0 %v859
        %992 = vmatpush1.bf16.msra.mxu0 %v858
        %993 = vmatprep.subr.bf16.mxu0 %v863
        %994 = vmatpush1.bf16.msra.mxu0 %v862
        %995 = vmatprep.subr.bf16.mxu0 %v867
        %996 = vmatpush1.bf16.msra.mxu0 %v866
        %997 = vmatprep.subr.bf16.mxu0 %v871
        %998 = vmatpush1.bf16.msra.mxu0 %v870
        %999 = vmatprep.subr.bf16.mxu0 %v875
        %1000 = vmatpush1.bf16.msra.mxu0 %v874
        %1001 = vmatprep.subr.bf16.mxu0 %v879
        %1002 = vmatpush1.bf16.msra.mxu0 %v878
        %1003 = vmatprep.subr.bf16.mxu0 %v883
        %1004 = vmatpush1.bf16.msra.mxu0 %v882
        %1005 = vmatprep.subr.bf16.mxu0 %v887
        %1006 = vmatpush1.bf16.msra.mxu0 %v886
        %1007 = vmatprep.mubr.bf16.mxu0 %v511
        %1008 = vmatmul.mubr.bf16.gmra.mrb[0].mxu0 %v503
        %v1009 = vpop.f32.mrb[0].mxu0
        %v1010 = vadd.f32 %v593, %v1009
        %v1011 = vpop.f32.mrb[0].mxu0
        %v1012 = vadd.f32 %v597, %v1011
        %v1013 = vpop.f32.mrb[0].mxu0
        %v1014 = vadd.f32 %v593, %v1013
        %v1015 = vpop.f32.mrb[0].mxu0
        %v1016 = vadd.f32 %v597, %v1015
        %1017 = vmatprep.mubr.bf16.mxu0 %v514
        %1018 = vmatmul.mubr.bf16.gmra.mrb[0].mxu0 %v507
        %v1019 = vpop.f32.mrb[0].mxu0
        %v1020 = vadd.f32 %v593, %v1019
        %v1021 = vpop.f32.mrb[0].mxu0
        %v1022 = vadd.f32 %v597, %v1021
        %v1023 = vpop.f32.mrb[0].mxu0
        %v1024 = vadd.f32 %v593, %v1023
        %v1025 = vpop.f32.mrb[0].mxu0
        %v1026 = vadd.f32 %v597, %v1025
        %1027 = vdwg.mxu0
        %1028 = vmatprep.subr.bf16.mxu0 %v891
        %1029 = vmatpush1.bf16.msra.mxu0 %v890
        %1030 = vmatprep.subr.bf16.mxu0 %v895
        %1031 = vmatpush1.bf16.msra.mxu0 %v894
        %1032 = vmatprep.subr.bf16.mxu0 0
        %1033 = vmatpush1.bf16.msra.mxu0 0
        %1034 = vmatprep.subr.bf16.mxu0 0
        %1035 = vmatpush1.bf16.msra.mxu0 0
        %1036 = vmatprep.subr.bf16.mxu0 0
        %1037 = vmatpush1.bf16.msra.mxu0 0
        %1038 = vmatprep.subr.bf16.mxu0 0
        %1039 = vmatpush1.bf16.msra.mxu0 0
        %1040 = vmatprep.subr.bf16.mxu0 0
        %1041 = vmatpush1.bf16.msra.mxu0 0
        %1042 = vmatprep.subr.bf16.mxu0 0
        %1043 = vmatpush1.bf16.msra.mxu0 0
        %1044 = vmatprep.subr.bf16.mxu0 0
        %1045 = vmatpush1.bf16.msra.mxu0 0
        %1046 = vmatprep.subr.bf16.mxu0 0
        %1047 = vmatpush1.bf16.msra.mxu0 0
        %1048 = vmatprep.subr.bf16.mxu0 0
        %1049 = vmatpush1.bf16.msra.mxu0 0
        %1050 = vmatprep.subr.bf16.mxu0 0
        %1051 = vmatpush1.bf16.msra.mxu0 0
        %1052 = vmatprep.subr.bf16.mxu0 0
        %1053 = vmatpush1.bf16.msra.mxu0 0
        %1054 = vmatprep.subr.bf16.mxu0 0
        %1055 = vmatpush1.bf16.msra.mxu0 0
        %1056 = vmatprep.subr.bf16.mxu0 0
        %1057 = vmatpush1.bf16.msra.mxu0 0
        %1058 = vmatprep.subr.bf16.mxu0 0
        %1059 = vmatpush1.bf16.msra.mxu0 0
        %1060 = vmatprep.mubr.bf16.mxu0 0
        %1061 = vmatmul.mubr.bf16.gmra.mrb[0].mxu0 %v971
        %v1062 = vpop.f32.mrb[0].mxu0
        %v1063 = vadd.f32 %v1010, %v1062
        %v1064 = vpop.f32.mrb[0].mxu0
        %v1065 = vadd.f32 %v1012, %v1064
        %v1066 = vpop.f32.mrb[0].mxu0
        %v1067 = vadd.f32 %v1014, %v1066
        %v1068 = vpop.f32.mrb[0].mxu0
        %v1069 = vadd.f32 %v1016, %v1068
        %1070 = vmatprep.mubr.bf16.mxu0 0
        %1071 = vmatmul.mubr.bf16.gmra.mrb[0].mxu0 %v973
        %v1072 = vpop.f32.mrb[0].mxu0
        %v1073 = vadd.f32 %v1020, %v1072
        %v1074 = vpop.f32.mrb[0].mxu0
        %v1075 = vadd.f32 %v1022, %v1074
        %v1076 = vpop.f32.mrb[0].mxu0
        %v1077 = vadd.f32 %v1024, %v1076
        %v1078 = vpop.f32.mrb[0].mxu0
        %v1079 = vadd.f32 %v1026, %v1078
        %1080 = vdwg.mxu0
        %1081 = vmatprep.subr.bf16.mxu0 %v829
        %1082 = vmatpush1.bf16.msra.mxu0 %v828
        %1083 = vmatprep.subr.bf16.mxu0 %v833
        %1084 = vmatpush1.bf16.msra.mxu0 %v832
        %1085 = vmatprep.subr.bf16.mxu0 %v837
        %1086 = vmatpush1.bf16.msra.mxu0 %v836
        %1087 = vmatprep.subr.bf16.mxu0 %v841
        %1088 = vmatpush1.bf16.msra.mxu0 %v840
        %1089 = vmatprep.subr.bf16.mxu0 %v845
        %1090 = vmatpush1.bf16.msra.mxu0 %v844
        %1091 = vmatprep.subr.bf16.mxu0 %v849
        %1092 = vmatpush1.bf16.msra.mxu0 %v848
        %1093 = vmatprep.subr.bf16.mxu0 %v853
        %1094 = vmatpush1.bf16.msra.mxu0 %v852
        %1095 = vmatprep.subr.bf16.mxu0 %v857
        %1096 = vmatpush1.bf16.msra.mxu0 %v856
        %1097 = vmatprep.subr.bf16.mxu0 %v861
        %1098 = vmatpush1.bf16.msra.mxu0 %v860
        %1099 = vmatprep.subr.bf16.mxu0 %v865
        %1100 = vmatpush1.bf16.msra.mxu0 %v864
        %1101 = vmatprep.subr.bf16.mxu0 %v869
        %1102 = vmatpush1.bf16.msra.mxu0 %v868
        %1103 = vmatprep.subr.bf16.mxu0 %v873
        %1104 = vmatpush1.bf16.msra.mxu0 %v872
        %1105 = vmatprep.subr.bf16.mxu0 %v877
        %1106 = vmatpush1.bf16.msra.mxu0 %v876
        %1107 = vmatprep.subr.bf16.mxu0 %v881
        %1108 = vmatpush1.bf16.msra.mxu0 %v880
        %1109 = vmatprep.subr.bf16.mxu0 %v885
        %1110 = vmatpush1.bf16.msra.mxu0 %v884
        %1111 = vmatprep.subr.bf16.mxu0 %v889
        %1112 = vmatpush1.bf16.msra.mxu0 %v888
        %1113 = vmatprep.mubr.bf16.mxu0 %v511
        %1114 = vmatmul.mubr.bf16.gmra.mrb[0].mxu0 %v503
        %v1115 = vpop.f32.mrb[0].mxu0
        %v1116 = vadd.f32 %v601, %v1115
        %v1117 = vpop.f32.mrb[0].mxu0
        %v1118 = vadd.f32 %v605, %v1117
        %v1119 = vpop.f32.mrb[0].mxu0
        %v1120 = vadd.f32 %v601, %v1119
        %v1121 = vpop.f32.mrb[0].mxu0
        %v1122 = vadd.f32 %v605, %v1121
        %1123 = vmatprep.mubr.bf16.mxu0 %v514
        %1124 = vmatmul.mubr.bf16.gmra.mrb[0].mxu0 %v507
        %v1125 = vpop.f32.mrb[0].mxu0
        %v1126 = vadd.f32 %v601, %v1125
        %v1127 = vpop.f32.mrb[0].mxu0
        %v1128 = vadd.f32 %v605, %v1127
        %v1129 = vpop.f32.mrb[0].mxu0
        %v1130 = vadd.f32 %v601, %v1129
        %v1131 = vpop.f32.mrb[0].mxu0
        %v1132 = vadd.f32 %v605, %v1131
        %1133 = vdwg.mxu0
        %1134 = vmatprep.subr.bf16.mxu0 %v893
        %1135 = vmatpush1.bf16.msra.mxu0 %v892
        %1136 = vmatprep.subr.bf16.mxu0 %v897
        %1137 = vmatpush1.bf16.msra.mxu0 %v896
        %1138 = vmatprep.subr.bf16.mxu0 0
        %1139 = vmatpush1.bf16.msra.mxu0 0
        %1140 = vmatprep.subr.bf16.mxu0 0
        %1141 = vmatpush1.bf16.msra.mxu0 0
        %1142 = vmatprep.subr.bf16.mxu0 0
        %1143 = vmatpush1.bf16.msra.mxu0 0
        %1144 = vmatprep.subr.bf16.mxu0 0
        %1145 = vmatpush1.bf16.msra.mxu0 0
        %1146 = vmatprep.subr.bf16.mxu0 0
        %1147 = vmatpush1.bf16.msra.mxu0 0
        %1148 = vmatprep.subr.bf16.mxu0 0
        %1149 = vmatpush1.bf16.msra.mxu0 0
        %1150 = vmatprep.subr.bf16.mxu0 0
        %1151 = vmatpush1.bf16.msra.mxu0 0
        %1152 = vmatprep.subr.bf16.mxu0 0
        %1153 = vmatpush1.bf16.msra.mxu0 0
        %1154 = vmatprep.subr.bf16.mxu0 0
        %1155 = vmatpush1.bf16.msra.mxu0 0
        %1156 = vmatprep.subr.bf16.mxu0 0
        %1157 = vmatpush1.bf16.msra.mxu0 0
        %1158 = vmatprep.subr.bf16.mxu0 0
        %1159 = vmatpush1.bf16.msra.mxu0 0
        %1160 = vmatprep.subr.bf16.mxu0 0
        %1161 = vmatpush1.bf16.msra.mxu0 0
        %1162 = vmatprep.subr.bf16.mxu0 0
        %1163 = vmatpush1.bf16.msra.mxu0 0
        %1164 = vmatprep.subr.bf16.mxu0 0
        %1165 = vmatpush1.bf16.msra.mxu0 0
        %1166 = vmatprep.mubr.bf16.mxu0 0
        %1167 = vmatmul.mubr.bf16.gmra.mrb[0].mxu0 %v971
        %v1168 = vpop.f32.mrb[0].mxu0
        %v1169 = vadd.f32 %v1116, %v1168
        %v1170 = vpop.f32.mrb[0].mxu0
        %v1171 = vadd.f32 %v1118, %v1170
        %v1172 = vpop.f32.mrb[0].mxu0
        %v1173 = vadd.f32 %v1120, %v1172
        %v1174 = vpop.f32.mrb[0].mxu0
        %v1175 = vadd.f32 %v1122, %v1174
        %1176 = vmatprep.mubr.bf16.mxu0 0
        %1177 = vmatmul.mubr.bf16.gmra.mrb[0].mxu0 %v973
        %v1178 = vpop.f32.mrb[0].mxu0
        %v1179 = vadd.f32 %v1126, %v1178
        %v1180 = vpop.f32.mrb[0].mxu0
        %v1181 = vadd.f32 %v1128, %v1180
        %v1182 = vpop.f32.mrb[0].mxu0
        %v1183 = vadd.f32 %v1130, %v1182
        %v1184 = vpop.f32.mrb[0].mxu0
        %v1185 = vadd.f32 %v1132, %v1184
        %1186 = vdwg.mxu0
        %v1187 = vmax.f32 %v1063, 0.0
        %v1188 = vmax.f32 %v1065, 0.0
        %v1189 = vmax.f32 %v1169, 0.0
        %v1190 = vmax.f32 %v1171, 0.0
        %v1191 = vmax.f32 %v1067, 0.0
        %v1192 = vmax.f32 %v1069, 0.0
        %v1193 = vmax.f32 %v1173, 0.0
        %v1194 = vmax.f32 %v1175, 0.0
        %v1195 = vmax.f32 %v1073, 0.0
        %v1196 = vmax.f32 %v1075, 0.0
        %v1197 = vmax.f32 %v1179, 0.0
        %v1198 = vmax.f32 %v1181, 0.0
        %v1199 = vmax.f32 %v1077, 0.0
        %v1200 = vmax.f32 %v1079, 0.0
        %v1201 = vmax.f32 %v1183, 0.0
        %v1202 = vmax.f32 %v1185, 0.0
        %v1203 = vpack.c.bf16 %v1191, %v1187
        %v1204 = vpack.c.bf16 %v1192, %v1188
        %v1205 = vpack.c.bf16 %v1193, %v1189
        %v1206 = vpack.c.bf16 %v1194, %v1190
        %v1207 = vpack.c.bf16 %v1199, %v1195
        %v1208 = vpack.c.bf16 %v1200, %v1196
        %v1209 = vpack.c.bf16 %v1201, %v1197
        %v1210 = vpack.c.bf16 %v1202, %v1198
        %v1211 = vld [vmem:[#allocation6] sm:$0xff]
        %v1212 = vld [vmem:[#allocation6 + $0x8] sm:$0xff]
        %v1213 = vld [vmem:[#allocation6 + $0x10] sm:$0xff]
        %v1214 = vld [vmem:[#allocation6 + $0x18] sm:$0xff]
        %v1215 = vld [vmem:[#allocation6 + $0x20] sm:$0xff]
        %v1216 = vld [vmem:[#allocation6 + $0x28] sm:$0xff]
        %v1217 = vld [vmem:[#allocation6 + $0x30] sm:$0xff]
        %v1218 = vld [vmem:[#allocation6 + $0x38] sm:$0xff]
        %v1219 = vld [vmem:[#allocation6 + $0x40] sm:$0xff]
        %v1220 = vld [vmem:[#allocation6 + $0x48] sm:$0xff]
        %v1221 = vld [vmem:[#allocation6 + $0x50] sm:$0xff]
        %v1222 = vld [vmem:[#allocation6 + $0x58] sm:$0xff]
        %v1223 = vld [vmem:[#allocation6 + $0x60] sm:$0xff]
        %v1224 = vld [vmem:[#allocation6 + $0x68] sm:$0xff]
        %v1225 = vld [vmem:[#allocation6 + $0x70] sm:$0xff]
        %v1226 = vld [vmem:[#allocation6 + $0x78] sm:$0xff]
        %v1227 = vld [vmem:[#allocation6 + $0x80] sm:$0xff]
        %v1228 = vld [vmem:[#allocation6 + $0x88] sm:$0xff]
        %v1229 = vld [vmem:[#allocation6 + $0x90] sm:$0xff]
        %v1230 = vld [vmem:[#allocation6 + $0x98] sm:$0xff]
        %v1231 = vld [vmem:[#allocation6 + $0xa0] sm:$0xff]
        %v1232 = vld [vmem:[#allocation6 + $0xa8] sm:$0xff]
        %v1233 = vld [vmem:[#allocation6 + $0xb0] sm:$0xff]
        %v1234 = vld [vmem:[#allocation6 + $0xb8] sm:$0xff]
        %v1235 = vld [vmem:[#allocation6 + $0xc0] sm:$0xff]
        %v1236 = vld [vmem:[#allocation6 + $0xc8] sm:$0xff]
        %v1237 = vld [vmem:[#allocation6 + $0xd0] sm:$0xff]
        %v1238 = vld [vmem:[#allocation6 + $0xd8] sm:$0xff]
        %v1239 = vld [vmem:[#allocation6 + $0xe0] sm:$0xff]
        %v1240 = vld [vmem:[#allocation6 + $0xe8] sm:$0xff]
        %v1241 = vld [vmem:[#allocation6 + $0xf0] sm:$0xff]
        %v1242 = vld [vmem:[#allocation6 + $0xf8] sm:$0xff]
        %v1243 = vld [vmem:[#allocation6 + $0x100] sm:$0xff]
        %v1244 = vld [vmem:[#allocation6 + $0x108] sm:$0xff]
        %v1245 = vld [vmem:[#allocation6 + $0x110] sm:$0xff]
        %v1246 = vld [vmem:[#allocation6 + $0x118] sm:$0xff]
        %v1247 = vld [vmem:[#allocation6 + $0x120] sm:$0xff]
        %v1248 = vld [vmem:[#allocation6 + $0x128] sm:$0xff]
        %v1249 = vld [vmem:[#allocation6 + $0x130] sm:$0xff]
        %v1250 = vld [vmem:[#allocation6 + $0x138] sm:$0xff]
        %v1251 = vld [vmem:[#allocation6 + $0x140] sm:$0xff]
        %v1252 = vld [vmem:[#allocation6 + $0x148] sm:$0xff]
        %v1253 = vld [vmem:[#allocation6 + $0x150] sm:$0xff]
        %v1254 = vld [vmem:[#allocation6 + $0x158] sm:$0xff]
        %v1255 = vld [vmem:[#allocation6 + $0x160] sm:$0xff]
        %v1256 = vld [vmem:[#allocation6 + $0x168] sm:$0xff]
        %v1257 = vld [vmem:[#allocation6 + $0x170] sm:$0xff]
        %v1258 = vld [vmem:[#allocation6 + $0x178] sm:$0xff]
        %v1259 = vld [vmem:[#allocation6 + $0x180] sm:$0xff]
        %v1260 = vld [vmem:[#allocation6 + $0x188] sm:$0xff]
        %v1261 = vld [vmem:[#allocation6 + $0x190] sm:$0xff]
        %v1262 = vld [vmem:[#allocation6 + $0x198] sm:$0xff]
        %v1263 = vld [vmem:[#allocation6 + $0x1a0] sm:$0xff]
        %v1264 = vld [vmem:[#allocation6 + $0x1a8] sm:$0xff]
        %v1265 = vld [vmem:[#allocation6 + $0x1b0] sm:$0xff]
        %v1266 = vld [vmem:[#allocation6 + $0x1b8] sm:$0xff]
        %v1267 = vld [vmem:[#allocation6 + $0x1c0] sm:$0xff]
        %v1268 = vld [vmem:[#allocation6 + $0x1c8] sm:$0xff]
        %v1269 = vld [vmem:[#allocation6 + $0x1d0] sm:$0xff]
        %v1270 = vld [vmem:[#allocation6 + $0x1d8] sm:$0xff]
        %v1271 = vld [vmem:[#allocation6 + $0x1e0] sm:$0xff]
        %v1272 = vld [vmem:[#allocation6 + $0x1e8] sm:$0xff]
        %v1273 = vld [vmem:[#allocation6 + $0x1f0] sm:$0xff]
        %v1274 = vld [vmem:[#allocation6 + $0x1f8] sm:$0xff]
        %v1339 = vunpack.c.l.b16 %v1211
        %v1340 = vunpack.c.h.b16 %v1211
        %v1341 = vunpack.c.l.b16 %v1212
        %v1342 = vunpack.c.h.b16 %v1212
        %v1343 = vunpack.c.l.b16 %v1213
        %v1344 = vunpack.c.h.b16 %v1213
        %v1345 = vunpack.c.l.b16 %v1214
        %v1346 = vunpack.c.h.b16 %v1214
        %v1347 = vunpack.c.l.b16 %v1215
        %v1348 = vunpack.c.h.b16 %v1215
        %v1349 = vunpack.c.l.b16 %v1216
        %v1350 = vunpack.c.h.b16 %v1216
        %v1351 = vunpack.c.l.b16 %v1217
        %v1352 = vunpack.c.h.b16 %v1217
        %v1353 = vunpack.c.l.b16 %v1218
        %v1354 = vunpack.c.h.b16 %v1218
        %v1355 = vunpack.c.l.b16 %v1219
        %v1356 = vunpack.c.h.b16 %v1219
        %v1357 = vunpack.c.l.b16 %v1220
        %v1358 = vunpack.c.h.b16 %v1220
        %v1359 = vunpack.c.l.b16 %v1221
        %v1360 = vunpack.c.h.b16 %v1221
        %v1361 = vunpack.c.l.b16 %v1222
        %v1362 = vunpack.c.h.b16 %v1222
        %v1363 = vunpack.c.l.b16 %v1223
        %v1364 = vunpack.c.h.b16 %v1223
        %v1365 = vunpack.c.l.b16 %v1224
        %v1366 = vunpack.c.h.b16 %v1224
        %v1367 = vunpack.c.l.b16 %v1225
        %v1368 = vunpack.c.h.b16 %v1225
        %v1369 = vunpack.c.l.b16 %v1226
        %v1370 = vunpack.c.h.b16 %v1226
        %v1371 = vunpack.c.l.b16 %v1227
        %v1372 = vunpack.c.h.b16 %v1227
        %v1373 = vunpack.c.l.b16 %v1228
        %v1374 = vunpack.c.h.b16 %v1228
        %v1375 = vunpack.c.l.b16 %v1229
        %v1376 = vunpack.c.h.b16 %v1229
        %v1377 = vunpack.c.l.b16 %v1230
        %v1378 = vunpack.c.h.b16 %v1230
        %v1379 = vunpack.c.l.b16 %v1231
        %v1380 = vunpack.c.h.b16 %v1231
        %v1381 = vunpack.c.l.b16 %v1232
        %v1382 = vunpack.c.h.b16 %v1232
        %v1383 = vunpack.c.l.b16 %v1233
        %v1384 = vunpack.c.h.b16 %v1233
        %v1385 = vunpack.c.l.b16 %v1234
        %v1386 = vunpack.c.h.b16 %v1234
        %v1387 = vunpack.c.l.b16 %v1235
        %v1388 = vunpack.c.h.b16 %v1235
        %v1389 = vunpack.c.l.b16 %v1236
        %v1390 = vunpack.c.h.b16 %v1236
        %v1391 = vunpack.c.l.b16 %v1237
        %v1392 = vunpack.c.h.b16 %v1237
        %v1393 = vunpack.c.l.b16 %v1238
        %v1394 = vunpack.c.h.b16 %v1238
        %v1395 = vunpack.c.l.b16 %v1239
        %v1396 = vunpack.c.h.b16 %v1239
        %v1397 = vunpack.c.l.b16 %v1240
        %v1398 = vunpack.c.h.b16 %v1240
        %v1399 = vunpack.c.l.b16 %v1241
        %v1400 = vunpack.c.h.b16 %v1241
        %v1401 = vunpack.c.l.b16 %v1242
        %v1402 = vunpack.c.h.b16 %v1242
        %v1403 = vunpack.c.l.b16 %v1243
        %v1404 = vunpack.c.h.b16 %v1243
        %v1405 = vunpack.c.l.b16 %v1244
        %v1406 = vunpack.c.h.b16 %v1244
        %v1407 = vunpack.c.l.b16 %v1245
        %v1408 = vunpack.c.h.b16 %v1245
        %v1409 = vunpack.c.l.b16 %v1246
        %v1410 = vunpack.c.h.b16 %v1246
        %v1411 = vunpack.c.l.b16 %v1247
        %v1412 = vunpack.c.h.b16 %v1247
        %v1413 = vunpack.c.l.b16 %v1248
        %v1414 = vunpack.c.h.b16 %v1248
        %v1415 = vunpack.c.l.b16 %v1249
        %v1416 = vunpack.c.h.b16 %v1249
        %v1417 = vunpack.c.l.b16 %v1250
        %v1418 = vunpack.c.h.b16 %v1250
        %v1419 = vunpack.c.l.b16 %v1251
        %v1420 = vunpack.c.h.b16 %v1251
        %v1421 = vunpack.c.l.b16 %v1252
        %v1422 = vunpack.c.h.b16 %v1252
        %v1423 = vunpack.c.l.b16 %v1253
        %v1424 = vunpack.c.h.b16 %v1253
        %v1425 = vunpack.c.l.b16 %v1254
        %v1426 = vunpack.c.h.b16 %v1254
        %v1427 = vunpack.c.l.b16 %v1255
        %v1428 = vunpack.c.h.b16 %v1255
        %v1429 = vunpack.c.l.b16 %v1256
        %v1430 = vunpack.c.h.b16 %v1256
        %v1431 = vunpack.c.l.b16 %v1257
        %v1432 = vunpack.c.h.b16 %v1257
        %v1433 = vunpack.c.l.b16 %v1258
        %v1434 = vunpack.c.h.b16 %v1258
        %v1435 = vunpack.c.l.b16 %v1259
        %v1436 = vunpack.c.h.b16 %v1259
        %v1437 = vunpack.c.l.b16 %v1260
        %v1438 = vunpack.c.h.b16 %v1260
        %v1439 = vunpack.c.l.b16 %v1261
        %v1440 = vunpack.c.h.b16 %v1261
        %v1441 = vunpack.c.l.b16 %v1262
        %v1442 = vunpack.c.h.b16 %v1262
        %v1443 = vunpack.c.l.b16 %v1263
        %v1444 = vunpack.c.h.b16 %v1263
        %v1445 = vunpack.c.l.b16 %v1264
        %v1446 = vunpack.c.h.b16 %v1264
        %v1447 = vunpack.c.l.b16 %v1265
        %v1448 = vunpack.c.h.b16 %v1265
        %v1449 = vunpack.c.l.b16 %v1266
        %v1450 = vunpack.c.h.b16 %v1266
        %v1451 = vunpack.c.l.b16 %v1267
        %v1452 = vunpack.c.h.b16 %v1267
        %v1453 = vunpack.c.l.b16 %v1268
        %v1454 = vunpack.c.h.b16 %v1268
        %v1455 = vunpack.c.l.b16 %v1269
        %v1456 = vunpack.c.h.b16 %v1269
        %v1457 = vunpack.c.l.b16 %v1270
        %v1458 = vunpack.c.h.b16 %v1270
        %v1459 = vunpack.c.l.b16 %v1271
        %v1460 = vunpack.c.h.b16 %v1271
        %v1461 = vunpack.c.l.b16 %v1272
        %v1462 = vunpack.c.h.b16 %v1272
        %v1463 = vunpack.c.l.b16 %v1273
        %v1464 = vunpack.c.h.b16 %v1273
        %v1465 = vunpack.c.l.b16 %v1274
        %v1466 = vunpack.c.h.b16 %v1274
        %v1467 = vpack.c.b16 %v1341, %v1339
        %v1468 = vpack.c.b16 %v1342, %v1340
        %v1469 = vpack.c.b16 %v1345, %v1343
        %v1470 = vpack.c.b16 %v1346, %v1344
        %v1471 = vpack.c.b16 %v1349, %v1347
        %v1472 = vpack.c.b16 %v1350, %v1348
        %v1473 = vpack.c.b16 %v1353, %v1351
        %v1474 = vpack.c.b16 %v1354, %v1352
        %v1475 = vpack.c.b16 %v1357, %v1355
        %v1476 = vpack.c.b16 %v1358, %v1356
        %v1477 = vpack.c.b16 %v1361, %v1359
        %v1478 = vpack.c.b16 %v1362, %v1360
        %v1479 = vpack.c.b16 %v1365, %v1363
        %v1480 = vpack.c.b16 %v1366, %v1364
        %v1481 = vpack.c.b16 %v1369, %v1367
        %v1482 = vpack.c.b16 %v1370, %v1368
        %v1483 = vpack.c.b16 %v1373, %v1371
        %v1484 = vpack.c.b16 %v1374, %v1372
        %v1485 = vpack.c.b16 %v1377, %v1375
        %v1486 = vpack.c.b16 %v1378, %v1376
        %v1487 = vpack.c.b16 %v1381, %v1379
        %v1488 = vpack.c.b16 %v1382, %v1380
        %v1489 = vpack.c.b16 %v1385, %v1383
        %v1490 = vpack.c.b16 %v1386, %v1384
        %v1491 = vpack.c.b16 %v1389, %v1387
        %v1492 = vpack.c.b16 %v1390, %v1388
        %v1493 = vpack.c.b16 %v1393, %v1391
        %v1494 = vpack.c.b16 %v1394, %v1392
        %v1495 = vpack.c.b16 %v1397, %v1395
        %v1496 = vpack.c.b16 %v1398, %v1396
        %v1497 = vpack.c.b16 %v1401, %v1399
        %v1498 = vpack.c.b16 %v1402, %v1400
        %v1499 = vpack.c.b16 %v1405, %v1403
        %v1500 = vpack.c.b16 %v1406, %v1404
        %v1501 = vpack.c.b16 %v1409, %v1407
        %v1502 = vpack.c.b16 %v1410, %v1408
        %v1503 = vpack.c.b16 %v1413, %v1411
        %v1504 = vpack.c.b16 %v1414, %v1412
        %v1505 = vpack.c.b16 %v1417, %v1415
        %v1506 = vpack.c.b16 %v1418, %v1416
        %v1507 = vpack.c.b16 %v1421, %v1419
        %v1508 = vpack.c.b16 %v1422, %v1420
        %v1509 = vpack.c.b16 %v1425, %v1423
        %v1510 = vpack.c.b16 %v1426, %v1424
        %v1511 = vpack.c.b16 %v1429, %v1427
        %v1512 = vpack.c.b16 %v1430, %v1428
        %v1513 = vpack.c.b16 %v1433, %v1431
        %v1514 = vpack.c.b16 %v1434, %v1432
        %v1515 = vpack.c.b16 %v1437, %v1435
        %v1516 = vpack.c.b16 %v1438, %v1436
        %v1517 = vpack.c.b16 %v1441, %v1439
        %v1518 = vpack.c.b16 %v1442, %v1440
        %v1519 = vpack.c.b16 %v1445, %v1443
        %v1520 = vpack.c.b16 %v1446, %v1444
        %v1521 = vpack.c.b16 %v1449, %v1447
        %v1522 = vpack.c.b16 %v1450, %v1448
        %v1523 = vpack.c.b16 %v1453, %v1451
        %v1524 = vpack.c.b16 %v1454, %v1452
        %v1525 = vpack.c.b16 %v1457, %v1455
        %v1526 = vpack.c.b16 %v1458, %v1456
        %v1527 = vpack.c.b16 %v1461, %v1459
        %v1528 = vpack.c.b16 %v1462, %v1460
        %v1529 = vpack.c.b16 %v1465, %v1463
        %v1530 = vpack.c.b16 %v1466, %v1464
        %1595 = vmatprep.subr.bf16.mxu0 %v1468
        %1596 = vmatpush1.bf16.msra.mxu0 %v1467
        %1597 = vmatprep.subr.bf16.mxu0 %v1470
        %1598 = vmatpush1.bf16.msra.mxu0 %v1469
        %1599 = vmatprep.subr.bf16.mxu0 %v1472
        %1600 = vmatpush1.bf16.msra.mxu0 %v1471
        %1601 = vmatprep.subr.bf16.mxu0 %v1474
        %1602 = vmatpush1.bf16.msra.mxu0 %v1473
        %1603 = vmatprep.subr.bf16.mxu0 %v1476
        %1604 = vmatpush1.bf16.msra.mxu0 %v1475
        %1605 = vmatprep.subr.bf16.mxu0 %v1478
        %1606 = vmatpush1.bf16.msra.mxu0 %v1477
        %1607 = vmatprep.subr.bf16.mxu0 %v1480
        %1608 = vmatpush1.bf16.msra.mxu0 %v1479
        %1609 = vmatprep.subr.bf16.mxu0 %v1482
        %1610 = vmatpush1.bf16.msra.mxu0 %v1481
        %1611 = vmatprep.subr.bf16.mxu0 %v1484
        %1612 = vmatpush1.bf16.msra.mxu0 %v1483
        %1613 = vmatprep.subr.bf16.mxu0 %v1486
        %1614 = vmatpush1.bf16.msra.mxu0 %v1485
        %1615 = vmatprep.subr.bf16.mxu0 %v1488
        %1616 = vmatpush1.bf16.msra.mxu0 %v1487
        %1617 = vmatprep.subr.bf16.mxu0 %v1490
        %1618 = vmatpush1.bf16.msra.mxu0 %v1489
        %1619 = vmatprep.subr.bf16.mxu0 %v1492
        %1620 = vmatpush1.bf16.msra.mxu0 %v1491
        %1621 = vmatprep.subr.bf16.mxu0 %v1494
        %1622 = vmatpush1.bf16.msra.mxu0 %v1493
        %1623 = vmatprep.subr.bf16.mxu0 %v1496
        %1624 = vmatpush1.bf16.msra.mxu0 %v1495
        %1625 = vmatprep.subr.bf16.mxu0 %v1498
        %1626 = vmatpush1.bf16.msra.mxu0 %v1497
        %1627 = vmatprep.mubr.bf16.mxu0 %v1204
        %1628 = vmatmul.mubr.bf16.gmra.mrb[0].mxu0 %v1203
        %v1629 = vpop.f32.mrb[0].mxu0
        %v1630 = vadd.f32 0.0, %v1629
        %v1631 = vpop.f32.mrb[0].mxu0
        %v1632 = vadd.f32 0.0, %v1631
        %v1633 = vpop.f32.mrb[0].mxu0
        %v1634 = vadd.f32 0.0, %v1633
        %v1635 = vpop.f32.mrb[0].mxu0
        %v1636 = vadd.f32 0.0, %v1635
        %1637 = vmatprep.mubr.bf16.mxu0 %v1208
        %1638 = vmatmul.mubr.bf16.gmra.mrb[0].mxu0 %v1207
        %v1639 = vpop.f32.mrb[0].mxu0
        %v1640 = vadd.f32 0.0, %v1639
        %v1641 = vpop.f32.mrb[0].mxu0
        %v1642 = vadd.f32 0.0, %v1641
        %v1643 = vpop.f32.mrb[0].mxu0
        %v1644 = vadd.f32 0.0, %v1643
        %v1645 = vpop.f32.mrb[0].mxu0
        %v1646 = vadd.f32 0.0, %v1645
        %1647 = vdwg.mxu0
        %1648 = vmatprep.subr.bf16.mxu0 %v1500
        %1649 = vmatpush1.bf16.msra.mxu0 %v1499
        %1650 = vmatprep.subr.bf16.mxu0 %v1502
        %1651 = vmatpush1.bf16.msra.mxu0 %v1501
        %1652 = vmatprep.subr.bf16.mxu0 %v1504
        %1653 = vmatpush1.bf16.msra.mxu0 %v1503
        %1654 = vmatprep.subr.bf16.mxu0 %v1506
        %1655 = vmatpush1.bf16.msra.mxu0 %v1505
        %1656 = vmatprep.subr.bf16.mxu0 %v1508
        %1657 = vmatpush1.bf16.msra.mxu0 %v1507
        %1658 = vmatprep.subr.bf16.mxu0 %v1510
        %1659 = vmatpush1.bf16.msra.mxu0 %v1509
        %1660 = vmatprep.subr.bf16.mxu0 %v1512
        %1661 = vmatpush1.bf16.msra.mxu0 %v1511
        %1662 = vmatprep.subr.bf16.mxu0 %v1514
        %1663 = vmatpush1.bf16.msra.mxu0 %v1513
        %1664 = vmatprep.subr.bf16.mxu0 %v1516
        %1665 = vmatpush1.bf16.msra.mxu0 %v1515
        %1666 = vmatprep.subr.bf16.mxu0 %v1518
        %1667 = vmatpush1.bf16.msra.mxu0 %v1517
        %1668 = vmatprep.subr.bf16.mxu0 %v1520
        %1669 = vmatpush1.bf16.msra.mxu0 %v1519
        %1670 = vmatprep.subr.bf16.mxu0 %v1522
        %1671 = vmatpush1.bf16.msra.mxu0 %v1521
        %1672 = vmatprep.subr.bf16.mxu0 %v1524
        %1673 = vmatpush1.bf16.msra.mxu0 %v1523
        %1674 = vmatprep.subr.bf16.mxu0 %v1526
        %1675 = vmatpush1.bf16.msra.mxu0 %v1525
        %1676 = vmatprep.subr.bf16.mxu0 %v1528
        %1677 = vmatpush1.bf16.msra.mxu0 %v1527
        %1678 = vmatprep.subr.bf16.mxu0 %v1530
        %1679 = vmatpush1.bf16.msra.mxu0 %v1529
        %1680 = vmatprep.mubr.bf16.mxu0 %v1206
        %1681 = vmatmul.mubr.bf16.gmra.mrb[0].mxu0 %v1205
        %v1682 = vpop.f32.mrb[0].mxu0
        %v1683 = vadd.f32 %v1630, %v1682
        %v1684 = vpop.f32.mrb[0].mxu0
        %v1685 = vadd.f32 %v1632, %v1684
        %v1686 = vpop.f32.mrb[0].mxu0
        %v1687 = vadd.f32 %v1634, %v1686
        %v1688 = vpop.f32.mrb[0].mxu0
        %v1689 = vadd.f32 %v1636, %v1688
        %1690 = vmatprep.mubr.bf16.mxu0 %v1210
        %1691 = vmatmul.mubr.bf16.gmra.mrb[0].mxu0 %v1209
        %v1692 = vpop.f32.mrb[0].mxu0
        %v1693 = vadd.f32 %v1640, %v1692
        %v1694 = vpop.f32.mrb[0].mxu0
        %v1695 = vadd.f32 %v1642, %v1694
        %v1696 = vpop.f32.mrb[0].mxu0
        %v1697 = vadd.f32 %v1644, %v1696
        %v1698 = vpop.f32.mrb[0].mxu0
        %v1699 = vadd.f32 %v1646, %v1698
        %1700 = vdwg.mxu0
        %v1701 = vld [vmem:[#allocation7] sm:$0xff]
        %v1702 = vld [vmem:[#allocation7 + $0x8] sm:$0xff]
        %v1703 = vld [vmem:[#allocation7 + $0x10] sm:$0xff]
        %v1704 = vld [vmem:[#allocation7 + $0x18] sm:$0xff]
        %v1705 = vld [vmem:[#allocation7 + $0x20] sm:$0xff]
        %v1706 = vld [vmem:[#allocation7 + $0x28] sm:$0xff]
        %v1707 = vld [vmem:[#allocation7 + $0x30] sm:$0xff]
        %v1708 = vld [vmem:[#allocation7 + $0x38] sm:$0xff]
        %v1709 = vld [vmem:[#allocation7 + $0x40] sm:$0xff]
        %v1710 = vld [vmem:[#allocation7 + $0x48] sm:$0xff]
        %v1711 = vld [vmem:[#allocation7 + $0x50] sm:$0xff]
        %v1712 = vld [vmem:[#allocation7 + $0x58] sm:$0xff]
        %v1713 = vld [vmem:[#allocation7 + $0x60] sm:$0xff]
        %v1714 = vld [vmem:[#allocation7 + $0x68] sm:$0xff]
        %v1715 = vld [vmem:[#allocation7 + $0x70] sm:$0xff]
        %v1716 = vld [vmem:[#allocation7 + $0x78] sm:$0xff]
        %v1717 = vld [vmem:[#allocation7 + $0x80] sm:$0xff]
        %v1718 = vld [vmem:[#allocation7 + $0x88] sm:$0xff]
        %v1719 = vld [vmem:[#allocation7 + $0x90] sm:$0xff]
        %v1720 = vld [vmem:[#allocation7 + $0x98] sm:$0xff]
        %v1721 = vld [vmem:[#allocation7 + $0xa0] sm:$0xff]
        %v1722 = vld [vmem:[#allocation7 + $0xa8] sm:$0xff]
        %v1723 = vld [vmem:[#allocation7 + $0xb0] sm:$0xff]
        %v1724 = vld [vmem:[#allocation7 + $0xb8] sm:$0xff]
        %v1725 = vld [vmem:[#allocation7 + $0xc0] sm:$0xff]
        %v1726 = vld [vmem:[#allocation7 + $0xc8] sm:$0xff]
        %v1727 = vld [vmem:[#allocation7 + $0xd0] sm:$0xff]
        %v1728 = vld [vmem:[#allocation7 + $0xd8] sm:$0xff]
        %v1729 = vld [vmem:[#allocation7 + $0xe0] sm:$0xff]
        %v1730 = vld [vmem:[#allocation7 + $0xe8] sm:$0xff]
        %v1731 = vld [vmem:[#allocation7 + $0xf0] sm:$0xff]
        %v1732 = vld [vmem:[#allocation7 + $0xf8] sm:$0xff]
        %v1733 = vld [vmem:[#allocation7 + $0x100] sm:$0xff]
        %v1734 = vld [vmem:[#allocation7 + $0x108] sm:$0xff]
        %v1735 = vld [vmem:[#allocation7 + $0x110] sm:$0xff]
        %v1736 = vld [vmem:[#allocation7 + $0x118] sm:$0xff]
        %v1737 = vld [vmem:[#allocation7 + $0x120] sm:$0xff]
        %v1738 = vld [vmem:[#allocation7 + $0x128] sm:$0xff]
        %v1739 = vld [vmem:[#allocation7 + $0x130] sm:$0xff]
        %v1740 = vld [vmem:[#allocation7 + $0x138] sm:$0xff]
        %v1741 = vld [vmem:[#allocation7 + $0x140] sm:$0xff]
        %v1742 = vld [vmem:[#allocation7 + $0x148] sm:$0xff]
        %v1743 = vld [vmem:[#allocation7 + $0x150] sm:$0xff]
        %v1744 = vld [vmem:[#allocation7 + $0x158] sm:$0xff]
        %v1745 = vld [vmem:[#allocation7 + $0x160] sm:$0xff]
        %v1746 = vld [vmem:[#allocation7 + $0x168] sm:$0xff]
        %v1747 = vld [vmem:[#allocation7 + $0x170] sm:$0xff]
        %v1748 = vld [vmem:[#allocation7 + $0x178] sm:$0xff]
        %v1749 = vld [vmem:[#allocation7 + $0x180] sm:$0xff]
        %v1750 = vld [vmem:[#allocation7 + $0x188] sm:$0xff]
        %v1751 = vld [vmem:[#allocation7 + $0x190] sm:$0xff]
        %v1752 = vld [vmem:[#allocation7 + $0x198] sm:$0xff]
        %v1753 = vld [vmem:[#allocation7 + $0x1a0] sm:$0xff]
        %v1754 = vld [vmem:[#allocation7 + $0x1a8] sm:$0xff]
        %v1755 = vld [vmem:[#allocation7 + $0x1b0] sm:$0xff]
        %v1756 = vld [vmem:[#allocation7 + $0x1b8] sm:$0xff]
        %v1757 = vld [vmem:[#allocation7 + $0x1c0] sm:$0xff]
        %v1758 = vld [vmem:[#allocation7 + $0x1c8] sm:$0xff]
        %v1759 = vld [vmem:[#allocation7 + $0x1d0] sm:$0xff]
        %v1760 = vld [vmem:[#allocation7 + $0x1d8] sm:$0xff]
        %v1761 = vld [vmem:[#allocation7 + $0x1e0] sm:$0xff]
        %v1762 = vld [vmem:[#allocation7 + $0x1e8] sm:$0xff]
        %v1763 = vld [vmem:[#allocation7 + $0x1f0] sm:$0xff]
        %v1764 = vld [vmem:[#allocation7 + $0x1f8] sm:$0xff]
        %v1829 = vunpack.c.l.b16 %v1701
        %v1830 = vunpack.c.h.b16 %v1701
        %v1831 = vunpack.c.l.b16 %v1702
        %v1832 = vunpack.c.h.b16 %v1702
        %v1833 = vunpack.c.l.b16 %v1703
        %v1834 = vunpack.c.h.b16 %v1703
        %v1835 = vunpack.c.l.b16 %v1704
        %v1836 = vunpack.c.h.b16 %v1704
        %v1837 = vunpack.c.l.b16 %v1705
        %v1838 = vunpack.c.h.b16 %v1705
        %v1839 = vunpack.c.l.b16 %v1706
        %v1840 = vunpack.c.h.b16 %v1706
        %v1841 = vunpack.c.l.b16 %v1707
        %v1842 = vunpack.c.h.b16 %v1707
        %v1843 = vunpack.c.l.b16 %v1708
        %v1844 = vunpack.c.h.b16 %v1708
        %v1845 = vunpack.c.l.b16 %v1709
        %v1846 = vunpack.c.h.b16 %v1709
        %v1847 = vunpack.c.l.b16 %v1710
        %v1848 = vunpack.c.h.b16 %v1710
        %v1849 = vunpack.c.l.b16 %v1711
        %v1850 = vunpack.c.h.b16 %v1711
        %v1851 = vunpack.c.l.b16 %v1712
        %v1852 = vunpack.c.h.b16 %v1712
        %v1853 = vunpack.c.l.b16 %v1713
        %v1854 = vunpack.c.h.b16 %v1713
        %v1855 = vunpack.c.l.b16 %v1714
        %v1856 = vunpack.c.h.b16 %v1714
        %v1857 = vunpack.c.l.b16 %v1715
        %v1858 = vunpack.c.h.b16 %v1715
        %v1859 = vunpack.c.l.b16 %v1716
        %v1860 = vunpack.c.h.b16 %v1716
        %v1861 = vunpack.c.l.b16 %v1717
        %v1862 = vunpack.c.h.b16 %v1717
        %v1863 = vunpack.c.l.b16 %v1718
        %v1864 = vunpack.c.h.b16 %v1718
        %v1865 = vunpack.c.l.b16 %v1719
        %v1866 = vunpack.c.h.b16 %v1719
        %v1867 = vunpack.c.l.b16 %v1720
        %v1868 = vunpack.c.h.b16 %v1720
        %v1869 = vunpack.c.l.b16 %v1721
        %v1870 = vunpack.c.h.b16 %v1721
        %v1871 = vunpack.c.l.b16 %v1722
        %v1872 = vunpack.c.h.b16 %v1722
        %v1873 = vunpack.c.l.b16 %v1723
        %v1874 = vunpack.c.h.b16 %v1723
        %v1875 = vunpack.c.l.b16 %v1724
        %v1876 = vunpack.c.h.b16 %v1724
        %v1877 = vunpack.c.l.b16 %v1725
        %v1878 = vunpack.c.h.b16 %v1725
        %v1879 = vunpack.c.l.b16 %v1726
        %v1880 = vunpack.c.h.b16 %v1726
        %v1881 = vunpack.c.l.b16 %v1727
        %v1882 = vunpack.c.h.b16 %v1727
        %v1883 = vunpack.c.l.b16 %v1728
        %v1884 = vunpack.c.h.b16 %v1728
        %v1885 = vunpack.c.l.b16 %v1729
        %v1886 = vunpack.c.h.b16 %v1729
        %v1887 = vunpack.c.l.b16 %v1730
        %v1888 = vunpack.c.h.b16 %v1730
        %v1889 = vunpack.c.l.b16 %v1731
        %v1890 = vunpack.c.h.b16 %v1731
        %v1891 = vunpack.c.l.b16 %v1732
        %v1892 = vunpack.c.h.b16 %v1732
        %v1893 = vunpack.c.l.b16 %v1733
        %v1894 = vunpack.c.h.b16 %v1733
        %v1895 = vunpack.c.l.b16 %v1734
        %v1896 = vunpack.c.h.b16 %v1734
        %v1897 = vunpack.c.l.b16 %v1735
        %v1898 = vunpack.c.h.b16 %v1735
        %v1899 = vunpack.c.l.b16 %v1736
        %v1900 = vunpack.c.h.b16 %v1736
        %v1901 = vunpack.c.l.b16 %v1737
        %v1902 = vunpack.c.h.b16 %v1737
        %v1903 = vunpack.c.l.b16 %v1738
        %v1904 = vunpack.c.h.b16 %v1738
        %v1905 = vunpack.c.l.b16 %v1739
        %v1906 = vunpack.c.h.b16 %v1739
        %v1907 = vunpack.c.l.b16 %v1740
        %v1908 = vunpack.c.h.b16 %v1740
        %v1909 = vunpack.c.l.b16 %v1741
        %v1910 = vunpack.c.h.b16 %v1741
        %v1911 = vunpack.c.l.b16 %v1742
        %v1912 = vunpack.c.h.b16 %v1742
        %v1913 = vunpack.c.l.b16 %v1743
        %v1914 = vunpack.c.h.b16 %v1743
        %v1915 = vunpack.c.l.b16 %v1744
        %v1916 = vunpack.c.h.b16 %v1744
        %v1917 = vunpack.c.l.b16 %v1745
        %v1918 = vunpack.c.h.b16 %v1745
        %v1919 = vunpack.c.l.b16 %v1746
        %v1920 = vunpack.c.h.b16 %v1746
        %v1921 = vunpack.c.l.b16 %v1747
        %v1922 = vunpack.c.h.b16 %v1747
        %v1923 = vunpack.c.l.b16 %v1748
        %v1924 = vunpack.c.h.b16 %v1748
        %v1925 = vunpack.c.l.b16 %v1749
        %v1926 = vunpack.c.h.b16 %v1749
        %v1927 = vunpack.c.l.b16 %v1750
        %v1928 = vunpack.c.h.b16 %v1750
        %v1929 = vunpack.c.l.b16 %v1751
        %v1930 = vunpack.c.h.b16 %v1751
        %v1931 = vunpack.c.l.b16 %v1752
        %v1932 = vunpack.c.h.b16 %v1752
        %v1933 = vunpack.c.l.b16 %v1753
        %v1934 = vunpack.c.h.b16 %v1753
        %v1935 = vunpack.c.l.b16 %v1754
        %v1936 = vunpack.c.h.b16 %v1754
        %v1937 = vunpack.c.l.b16 %v1755
        %v1938 = vunpack.c.h.b16 %v1755
        %v1939 = vunpack.c.l.b16 %v1756
        %v1940 = vunpack.c.h.b16 %v1756
        %v1941 = vunpack.c.l.b16 %v1757
        %v1942 = vunpack.c.h.b16 %v1757
        %v1943 = vunpack.c.l.b16 %v1758
        %v1944 = vunpack.c.h.b16 %v1758
        %v1945 = vunpack.c.l.b16 %v1759
        %v1946 = vunpack.c.h.b16 %v1759
        %v1947 = vunpack.c.l.b16 %v1760
        %v1948 = vunpack.c.h.b16 %v1760
        %v1949 = vunpack.c.l.b16 %v1761
        %v1950 = vunpack.c.h.b16 %v1761
        %v1951 = vunpack.c.l.b16 %v1762
        %v1952 = vunpack.c.h.b16 %v1762
        %v1953 = vunpack.c.l.b16 %v1763
        %v1954 = vunpack.c.h.b16 %v1763
        %v1955 = vunpack.c.l.b16 %v1764
        %v1956 = vunpack.c.h.b16 %v1764
        %v1957 = vpack.c.b16 %v1831, %v1829
        %v1958 = vpack.c.b16 %v1832, %v1830
        %v1959 = vpack.c.b16 %v1835, %v1833
        %v1960 = vpack.c.b16 %v1836, %v1834
        %v1961 = vpack.c.b16 %v1839, %v1837
        %v1962 = vpack.c.b16 %v1840, %v1838
        %v1963 = vpack.c.b16 %v1843, %v1841
        %v1964 = vpack.c.b16 %v1844, %v1842
        %v1965 = vpack.c.b16 %v1847, %v1845
        %v1966 = vpack.c.b16 %v1848, %v1846
        %v1967 = vpack.c.b16 %v1851, %v1849
        %v1968 = vpack.c.b16 %v1852, %v1850
        %v1969 = vpack.c.b16 %v1855, %v1853
        %v1970 = vpack.c.b16 %v1856, %v1854
        %v1971 = vpack.c.b16 %v1859, %v1857
        %v1972 = vpack.c.b16 %v1860, %v1858
        %v1973 = vpack.c.b16 %v1863, %v1861
        %v1974 = vpack.c.b16 %v1864, %v1862
        %v1975 = vpack.c.b16 %v1867, %v1865
        %v1976 = vpack.c.b16 %v1868, %v1866
        %v1977 = vpack.c.b16 %v1871, %v1869
        %v1978 = vpack.c.b16 %v1872, %v1870
        %v1979 = vpack.c.b16 %v1875, %v1873
        %v1980 = vpack.c.b16 %v1876, %v1874
        %v1981 = vpack.c.b16 %v1879, %v1877
        %v1982 = vpack.c.b16 %v1880, %v1878
        %v1983 = vpack.c.b16 %v1883, %v1881
        %v1984 = vpack.c.b16 %v1884, %v1882
        %v1985 = vpack.c.b16 %v1887, %v1885
        %v1986 = vpack.c.b16 %v1888, %v1886
        %v1987 = vpack.c.b16 %v1891, %v1889
        %v1988 = vpack.c.b16 %v1892, %v1890
        %v1989 = vpack.c.b16 %v1895, %v1893
        %v1990 = vpack.c.b16 %v1896, %v1894
        %v1991 = vpack.c.b16 %v1899, %v1897
        %v1992 = vpack.c.b16 %v1900, %v1898
        %v1993 = vpack.c.b16 %v1903, %v1901
        %v1994 = vpack.c.b16 %v1904, %v1902
        %v1995 = vpack.c.b16 %v1907, %v1905
        %v1996 = vpack.c.b16 %v1908, %v1906
        %v1997 = vpack.c.b16 %v1911, %v1909
        %v1998 = vpack.c.b16 %v1912, %v1910
        %v1999 = vpack.c.b16 %v1915, %v1913
        %v2000 = vpack.c.b16 %v1916, %v1914
        %v2001 = vpack.c.b16 %v1919, %v1917
        %v2002 = vpack.c.b16 %v1920, %v1918
        %v2003 = vpack.c.b16 %v1923, %v1921
        %v2004 = vpack.c.b16 %v1924, %v1922
        %v2005 = vpack.c.b16 %v1927, %v1925
        %v2006 = vpack.c.b16 %v1928, %v1926
        %v2007 = vpack.c.b16 %v1931, %v1929
        %v2008 = vpack.c.b16 %v1932, %v1930
        %v2009 = vpack.c.b16 %v1935, %v1933
        %v2010 = vpack.c.b16 %v1936, %v1934
        %v2011 = vpack.c.b16 %v1939, %v1937
        %v2012 = vpack.c.b16 %v1940, %v1938
        %v2013 = vpack.c.b16 %v1943, %v1941
        %v2014 = vpack.c.b16 %v1944, %v1942
        %v2015 = vpack.c.b16 %v1947, %v1945
        %v2016 = vpack.c.b16 %v1948, %v1946
        %v2017 = vpack.c.b16 %v1951, %v1949
        %v2018 = vpack.c.b16 %v1952, %v1950
        %v2019 = vpack.c.b16 %v1955, %v1953
        %v2020 = vpack.c.b16 %v1956, %v1954
        %2085 = vmatprep.subr.bf16.mxu0 %v1958
        %2086 = vmatpush1.bf16.msra.mxu0 %v1957
        %2087 = vmatprep.subr.bf16.mxu0 %v1960
        %2088 = vmatpush1.bf16.msra.mxu0 %v1959
        %2089 = vmatprep.subr.bf16.mxu0 %v1962
        %2090 = vmatpush1.bf16.msra.mxu0 %v1961
        %2091 = vmatprep.subr.bf16.mxu0 %v1964
        %2092 = vmatpush1.bf16.msra.mxu0 %v1963
        %2093 = vmatprep.subr.bf16.mxu0 %v1966
        %2094 = vmatpush1.bf16.msra.mxu0 %v1965
        %2095 = vmatprep.subr.bf16.mxu0 %v1968
        %2096 = vmatpush1.bf16.msra.mxu0 %v1967
        %2097 = vmatprep.subr.bf16.mxu0 %v1970
        %2098 = vmatpush1.bf16.msra.mxu0 %v1969
        %2099 = vmatprep.subr.bf16.mxu0 %v1972
        %2100 = vmatpush1.bf16.msra.mxu0 %v1971
        %2101 = vmatprep.subr.bf16.mxu0 %v1974
        %2102 = vmatpush1.bf16.msra.mxu0 %v1973
        %2103 = vmatprep.subr.bf16.mxu0 %v1976
        %2104 = vmatpush1.bf16.msra.mxu0 %v1975
        %2105 = vmatprep.subr.bf16.mxu0 %v1978
        %2106 = vmatpush1.bf16.msra.mxu0 %v1977
        %2107 = vmatprep.subr.bf16.mxu0 %v1980
        %2108 = vmatpush1.bf16.msra.mxu0 %v1979
        %2109 = vmatprep.subr.bf16.mxu0 %v1982
        %2110 = vmatpush1.bf16.msra.mxu0 %v1981
        %2111 = vmatprep.subr.bf16.mxu0 %v1984
        %2112 = vmatpush1.bf16.msra.mxu0 %v1983
        %2113 = vmatprep.subr.bf16.mxu0 %v1986
        %2114 = vmatpush1.bf16.msra.mxu0 %v1985
        %2115 = vmatprep.subr.bf16.mxu0 %v1988
        %2116 = vmatpush1.bf16.msra.mxu0 %v1987
        %2117 = vmatprep.mubr.bf16.mxu0 %v1204
        %2118 = vmatmul.mubr.bf16.gmra.mrb[0].mxu0 %v1203
        %v2119 = vpop.f32.mrb[0].mxu0
        %v2120 = vadd.f32 0.0, %v2119
        %v2121 = vpop.f32.mrb[0].mxu0
        %v2122 = vadd.f32 0.0, %v2121
        %v2123 = vpop.f32.mrb[0].mxu0
        %v2124 = vadd.f32 0.0, %v2123
        %v2125 = vpop.f32.mrb[0].mxu0
        %v2126 = vadd.f32 0.0, %v2125
        %2127 = vmatprep.mubr.bf16.mxu0 %v1208
        %2128 = vmatmul.mubr.bf16.gmra.mrb[0].mxu0 %v1207
        %v2129 = vpop.f32.mrb[0].mxu0
        %v2130 = vadd.f32 0.0, %v2129
        %v2131 = vpop.f32.mrb[0].mxu0
        %v2132 = vadd.f32 0.0, %v2131
        %v2133 = vpop.f32.mrb[0].mxu0
        %v2134 = vadd.f32 0.0, %v2133
        %v2135 = vpop.f32.mrb[0].mxu0
        %v2136 = vadd.f32 0.0, %v2135
        %2137 = vdwg.mxu0
        %2138 = vmatprep.subr.bf16.mxu0 %v1990
        %2139 = vmatpush1.bf16.msra.mxu0 %v1989
        %2140 = vmatprep.subr.bf16.mxu0 %v1992
        %2141 = vmatpush1.bf16.msra.mxu0 %v1991
        %2142 = vmatprep.subr.bf16.mxu0 %v1994
        %2143 = vmatpush1.bf16.msra.mxu0 %v1993
        %2144 = vmatprep.subr.bf16.mxu0 %v1996
        %2145 = vmatpush1.bf16.msra.mxu0 %v1995
        %2146 = vmatprep.subr.bf16.mxu0 %v1998
        %2147 = vmatpush1.bf16.msra.mxu0 %v1997
        %2148 = vmatprep.subr.bf16.mxu0 %v2000
        %2149 = vmatpush1.bf16.msra.mxu0 %v1999
        %2150 = vmatprep.subr.bf16.mxu0 %v2002
        %2151 = vmatpush1.bf16.msra.mxu0 %v2001
        %2152 = vmatprep.subr.bf16.mxu0 %v2004
        %2153 = vmatpush1.bf16.msra.mxu0 %v2003
        %2154 = vmatprep.subr.bf16.mxu0 %v2006
        %2155 = vmatpush1.bf16.msra.mxu0 %v2005
        %2156 = vmatprep.subr.bf16.mxu0 %v2008
        %2157 = vmatpush1.bf16.msra.mxu0 %v2007
        %2158 = vmatprep.subr.bf16.mxu0 %v2010
        %2159 = vmatpush1.bf16.msra.mxu0 %v2009
        %2160 = vmatprep.subr.bf16.mxu0 %v2012
        %2161 = vmatpush1.bf16.msra.mxu0 %v2011
        %2162 = vmatprep.subr.bf16.mxu0 %v2014
        %2163 = vmatpush1.bf16.msra.mxu0 %v2013
        %2164 = vmatprep.subr.bf16.mxu0 %v2016
        %2165 = vmatpush1.bf16.msra.mxu0 %v2015
        %2166 = vmatprep.subr.bf16.mxu0 %v2018
        %2167 = vmatpush1.bf16.msra.mxu0 %v2017
        %2168 = vmatprep.subr.bf16.mxu0 %v2020
        %2169 = vmatpush1.bf16.msra.mxu0 %v2019
        %2170 = vmatprep.mubr.bf16.mxu0 %v1206
        %2171 = vmatmul.mubr.bf16.gmra.mrb[0].mxu0 %v1205
        %v2172 = vpop.f32.mrb[0].mxu0
        %v2173 = vadd.f32 %v2120, %v2172
        %v2174 = vpop.f32.mrb[0].mxu0
        %v2175 = vadd.f32 %v2122, %v2174
        %v2176 = vpop.f32.mrb[0].mxu0
        %v2177 = vadd.f32 %v2124, %v2176
        %v2178 = vpop.f32.mrb[0].mxu0
        %v2179 = vadd.f32 %v2126, %v2178
        %2180 = vmatprep.mubr.bf16.mxu0 %v1210
        %2181 = vmatmul.mubr.bf16.gmra.mrb[0].mxu0 %v1209
        %v2182 = vpop.f32.mrb[0].mxu0
        %v2183 = vadd.f32 %v2130, %v2182
        %v2184 = vpop.f32.mrb[0].mxu0
        %v2185 = vadd.f32 %v2132, %v2184
        %v2186 = vpop.f32.mrb[0].mxu0
        %v2187 = vadd.f32 %v2134, %v2186
        %v2188 = vpop.f32.mrb[0].mxu0
        %v2189 = vadd.f32 %v2136, %v2188
        %2190 = vdwg.mxu0
        %v2191 = vmax.f32 %v1683, %v2173
        %v2192 = vmax.f32 %v1685, %v2175
        %v2193 = vmax.f32 %v1687, %v2177
        %v2194 = vmax.f32 %v1689, %v2179
        %v2195 = vmax.f32 %v1693, %v2183
        %v2196 = vmax.f32 %v1695, %v2185
        %v2197 = vmax.f32 %v1697, %v2187
        %v2198 = vmax.f32 %v1699, %v2189
        %v2207 = vcombine.low %v2191, %v2192
        %v2208 = vcombine.high %v2191, %v2192
        %v2210 = vunpack.c.l.s4 1983009808
        %v2211 = vunpack.c.0.s8 %v2210
        %v2212 = vlaneseq
        %v2213 = vshrl.u32 %v2212, 7
        %v2214 = vsub.s32 %v2211, %v2213
        %v2215 = vrot.slane %v2207, %v2214
        %v2217 = vunpack.c.l.s4 1983009808
        %v2218 = vunpack.c.0.s8 %v2217
        %v2219 = vlaneseq
        %v2220 = vshrl.u32 %v2219, 7
        %v2221 = vsub.s32 %v2218, %v2220
        %v2222 = vrot.slane %v2208, %v2221
        %v2223 = vcombine.high %v2215, %v2215
        %v2224 = vcombine.high %v2222, %v2222
        %v2225 = vcombine.low %v2193, %v2194
        %v2226 = vcombine.high %v2193, %v2194
        %v2228 = vunpack.c.l.s4 1983009808
        %v2229 = vunpack.c.0.s8 %v2228
        %v2230 = vlaneseq
        %v2231 = vshrl.u32 %v2230, 7
        %v2232 = vsub.s32 %v2229, %v2231
        %v2233 = vrot.slane %v2225, %v2232
        %v2235 = vunpack.c.l.s4 1983009808
        %v2236 = vunpack.c.0.s8 %v2235
        %v2237 = vlaneseq
        %v2238 = vshrl.u32 %v2237, 7
        %v2239 = vsub.s32 %v2236, %v2238
        %v2240 = vrot.slane %v2226, %v2239
        %v2241 = vcombine.high %v2233, %v2233
        %v2242 = vcombine.high %v2240, %v2240
        %v2243 = vcombine.low %v2195, %v2196
        %v2244 = vcombine.high %v2195, %v2196
        %v2246 = vunpack.c.l.s4 1983009808
        %v2247 = vunpack.c.0.s8 %v2246
        %v2248 = vlaneseq
        %v2249 = vshrl.u32 %v2248, 7
        %v2250 = vsub.s32 %v2247, %v2249
        %v2251 = vrot.slane %v2243, %v2250
        %v2253 = vunpack.c.l.s4 1983009808
        %v2254 = vunpack.c.0.s8 %v2253
        %v2255 = vlaneseq
        %v2256 = vshrl.u32 %v2255, 7
        %v2257 = vsub.s32 %v2254, %v2256
        %v2258 = vrot.slane %v2244, %v2257
        %v2259 = vcombine.high %v2251, %v2251
        %v2260 = vcombine.high %v2258, %v2258
        %v2261 = vcombine.low %v2197, %v2198
        %v2262 = vcombine.high %v2197, %v2198
        %v2264 = vunpack.c.l.s4 1983009808
        %v2265 = vunpack.c.0.s8 %v2264
        %v2266 = vlaneseq
        %v2267 = vshrl.u32 %v2266, 7
        %v2268 = vsub.s32 %v2265, %v2267
        %v2269 = vrot.slane %v2261, %v2268
        %v2271 = vunpack.c.l.s4 1983009808
        %v2272 = vunpack.c.0.s8 %v2271
        %v2273 = vlaneseq
        %v2274 = vshrl.u32 %v2273, 7
        %v2275 = vsub.s32 %v2272, %v2274
        %v2276 = vrot.slane %v2262, %v2275
        %v2277 = vcombine.high %v2269, %v2269
        %v2278 = vcombine.high %v2276, %v2276
        %v2280 = vunpack.c.l.s4 1983009808
        %v2281 = vunpack.c.0.s8 %v2280
        %v2282 = vlaneseq
        %v2283 = vshrl.u32 %v2282, 7
        %v2284 = vsub.s32 %v2281, %v2283
        %v2285 = vrot.slane %v2215, %v2284
        %v2286 = vcombine.high %v2285, %v2285
        %v2288 = vunpack.c.l.s4 1983009808
        %v2289 = vunpack.c.0.s8 %v2288
        %v2290 = vlaneseq
        %v2291 = vshrl.u32 %v2290, 7
        %v2292 = vsub.s32 %v2289, %v2291
        %v2293 = vrot.slane %v2223, %v2292
        %v2294 = vcombine.high %v2293, %v2293
        %v2296 = vunpack.c.l.s4 1983009808
        %v2297 = vunpack.c.0.s8 %v2296
        %v2298 = vlaneseq
        %v2299 = vshrl.u32 %v2298, 7
        %v2300 = vsub.s32 %v2297, %v2299
        %v2301 = vrot.slane %v2222, %v2300
        %v2302 = vcombine.high %v2301, %v2301
        %v2304 = vunpack.c.l.s4 1983009808
        %v2305 = vunpack.c.0.s8 %v2304
        %v2306 = vlaneseq
        %v2307 = vshrl.u32 %v2306, 7
        %v2308 = vsub.s32 %v2305, %v2307
        %v2309 = vrot.slane %v2224, %v2308
        %v2310 = vcombine.high %v2309, %v2309
        %v2312 = vunpack.c.l.s4 1983009808
        %v2313 = vunpack.c.0.s8 %v2312
        %v2314 = vlaneseq
        %v2315 = vshrl.u32 %v2314, 7
        %v2316 = vsub.s32 %v2313, %v2315
        %v2317 = vrot.slane %v2233, %v2316
        %v2318 = vcombine.high %v2317, %v2317
        %v2320 = vunpack.c.l.s4 1983009808
        %v2321 = vunpack.c.0.s8 %v2320
        %v2322 = vlaneseq
        %v2323 = vshrl.u32 %v2322, 7
        %v2324 = vsub.s32 %v2321, %v2323
        %v2325 = vrot.slane %v2241, %v2324
        %v2326 = vcombine.high %v2325, %v2325
        %v2328 = vunpack.c.l.s4 1983009808
        %v2329 = vunpack.c.0.s8 %v2328
        %v2330 = vlaneseq
        %v2331 = vshrl.u32 %v2330, 7
        %v2332 = vsub.s32 %v2329, %v2331
        %v2333 = vrot.slane %v2240, %v2332
        %v2334 = vcombine.high %v2333, %v2333
        %v2336 = vunpack.c.l.s4 1983009808
        %v2337 = vunpack.c.0.s8 %v2336
        %v2338 = vlaneseq
        %v2339 = vshrl.u32 %v2338, 7
        %v2340 = vsub.s32 %v2337, %v2339
        %v2341 = vrot.slane %v2242, %v2340
        %v2342 = vcombine.high %v2341, %v2341
        %v2344 = vunpack.c.l.s4 1983009808
        %v2345 = vunpack.c.0.s8 %v2344
        %v2346 = vlaneseq
        %v2347 = vshrl.u32 %v2346, 7
        %v2348 = vsub.s32 %v2345, %v2347
        %v2349 = vrot.slane %v2251, %v2348
        %v2350 = vcombine.high %v2349, %v2349
        %v2352 = vunpack.c.l.s4 1983009808
        %v2353 = vunpack.c.0.s8 %v2352
        %v2354 = vlaneseq
        %v2355 = vshrl.u32 %v2354, 7
        %v2356 = vsub.s32 %v2353, %v2355
        %v2357 = vrot.slane %v2259, %v2356
        %v2358 = vcombine.high %v2357, %v2357
        %v2360 = vunpack.c.l.s4 1983009808
        %v2361 = vunpack.c.0.s8 %v2360
        %v2362 = vlaneseq
        %v2363 = vshrl.u32 %v2362, 7
        %v2364 = vsub.s32 %v2361, %v2363
        %v2365 = vrot.slane %v2258, %v2364
        %v2366 = vcombine.high %v2365, %v2365
        %v2368 = vunpack.c.l.s4 1983009808
        %v2369 = vunpack.c.0.s8 %v2368
        %v2370 = vlaneseq
        %v2371 = vshrl.u32 %v2370, 7
        %v2372 = vsub.s32 %v2369, %v2371
        %v2373 = vrot.slane %v2260, %v2372
        %v2374 = vcombine.high %v2373, %v2373
        %v2376 = vunpack.c.l.s4 1983009808
        %v2377 = vunpack.c.0.s8 %v2376
        %v2378 = vlaneseq
        %v2379 = vshrl.u32 %v2378, 7
        %v2380 = vsub.s32 %v2377, %v2379
        %v2381 = vrot.slane %v2269, %v2380
        %v2382 = vcombine.high %v2381, %v2381
        %v2384 = vunpack.c.l.s4 1983009808
        %v2385 = vunpack.c.0.s8 %v2384
        %v2386 = vlaneseq
        %v2387 = vshrl.u32 %v2386, 7
        %v2388 = vsub.s32 %v2385, %v2387
        %v2389 = vrot.slane %v2277, %v2388
        %v2390 = vcombine.high %v2389, %v2389
        %v2392 = vunpack.c.l.s4 1983009808
        %v2393 = vunpack.c.0.s8 %v2392
        %v2394 = vlaneseq
        %v2395 = vshrl.u32 %v2394, 7
        %v2396 = vsub.s32 %v2393, %v2395
        %v2397 = vrot.slane %v2276, %v2396
        %v2398 = vcombine.high %v2397, %v2397
        %v2400 = vunpack.c.l.s4 1983009808
        %v2401 = vunpack.c.0.s8 %v2400
        %v2402 = vlaneseq
        %v2403 = vshrl.u32 %v2402, 7
        %v2404 = vsub.s32 %v2401, %v2403
        %v2405 = vrot.slane %v2278, %v2404
        %v2406 = vcombine.high %v2405, %v2405
        %vm2439 = vcmask 1041408
        %v2440 = vsel %vm2439, %v2285, -inf
        %v2441 = vrot.slane %v2440, 4
        %v2442 = vmax.f32 %v2440, %v2441
        %v2443 = vrot.slane %v2442, 2
        %v2444 = vmax.f32 %v2442, %v2443
        %v2445 = vrot.slane %v2444, 1
        %v2446 = vmax.f32 %v2444, %v2445
        %v2447 = vsel %vm2439, %v2286, -inf
        %v2448 = vrot.slane %v2447, 4
        %v2449 = vmax.f32 %v2447, %v2448
        %v2450 = vrot.slane %v2449, 2
        %v2451 = vmax.f32 %v2449, %v2450
        %v2452 = vrot.slane %v2451, 1
        %v2453 = vmax.f32 %v2451, %v2452
        %v2454 = vsel %vm2439, %v2293, -inf
        %v2455 = vrot.slane %v2454, 4
        %v2456 = vmax.f32 %v2454, %v2455
        %v2457 = vrot.slane %v2456, 2
        %v2458 = vmax.f32 %v2456, %v2457
        %v2459 = vrot.slane %v2458, 1
        %v2460 = vmax.f32 %v2458, %v2459
        %v2461 = vsel %vm2439, %v2294, -inf
        %v2462 = vrot.slane %v2461, 4
        %v2463 = vmax.f32 %v2461, %v2462
        %v2464 = vrot.slane %v2463, 2
        %v2465 = vmax.f32 %v2463, %v2464
        %v2466 = vrot.slane %v2465, 1
        %v2467 = vmax.f32 %v2465, %v2466
        %v2468 = vsel %vm2439, %v2301, -inf
        %v2469 = vrot.slane %v2468, 4
        %v2470 = vmax.f32 %v2468, %v2469
        %v2471 = vrot.slane %v2470, 2
        %v2472 = vmax.f32 %v2470, %v2471
        %v2473 = vrot.slane %v2472, 1
        %v2474 = vmax.f32 %v2472, %v2473
        %v2475 = vsel %vm2439, %v2302, -inf
        %v2476 = vrot.slane %v2475, 4
        %v2477 = vmax.f32 %v2475, %v2476
        %v2478 = vrot.slane %v2477, 2
        %v2479 = vmax.f32 %v2477, %v2478
        %v2480 = vrot.slane %v2479, 1
        %v2481 = vmax.f32 %v2479, %v2480
        %v2482 = vsel %vm2439, %v2309, -inf
        %v2483 = vrot.slane %v2482, 4
        %v2484 = vmax.f32 %v2482, %v2483
        %v2485 = vrot.slane %v2484, 2
        %v2486 = vmax.f32 %v2484, %v2485
        %v2487 = vrot.slane %v2486, 1
        %v2488 = vmax.f32 %v2486, %v2487
        %v2489 = vsel %vm2439, %v2310, -inf
        %v2490 = vrot.slane %v2489, 4
        %v2491 = vmax.f32 %v2489, %v2490
        %v2492 = vrot.slane %v2491, 2
        %v2493 = vmax.f32 %v2491, %v2492
        %v2494 = vrot.slane %v2493, 1
        %v2495 = vmax.f32 %v2493, %v2494
        %v2496 = vsel %vm2439, %v2317, -inf
        %v2497 = vrot.slane %v2496, 4
        %v2498 = vmax.f32 %v2496, %v2497
        %v2499 = vrot.slane %v2498, 2
        %v2500 = vmax.f32 %v2498, %v2499
        %v2501 = vrot.slane %v2500, 1
        %v2502 = vmax.f32 %v2500, %v2501
        %v2503 = vsel %vm2439, %v2318, -inf
        %v2504 = vrot.slane %v2503, 4
        %v2505 = vmax.f32 %v2503, %v2504
        %v2506 = vrot.slane %v2505, 2
        %v2507 = vmax.f32 %v2505, %v2506
        %v2508 = vrot.slane %v2507, 1
        %v2509 = vmax.f32 %v2507, %v2508
        %v2510 = vsel %vm2439, %v2325, -inf
        %v2511 = vrot.slane %v2510, 4
        %v2512 = vmax.f32 %v2510, %v2511
        %v2513 = vrot.slane %v2512, 2
        %v2514 = vmax.f32 %v2512, %v2513
        %v2515 = vrot.slane %v2514, 1
        %v2516 = vmax.f32 %v2514, %v2515
        %v2517 = vsel %vm2439, %v2326, -inf
        %v2518 = vrot.slane %v2517, 4
        %v2519 = vmax.f32 %v2517, %v2518
        %v2520 = vrot.slane %v2519, 2
        %v2521 = vmax.f32 %v2519, %v2520
        %v2522 = vrot.slane %v2521, 1
        %v2523 = vmax.f32 %v2521, %v2522
        %v2524 = vsel %vm2439, %v2333, -inf
        %v2525 = vrot.slane %v2524, 4
        %v2526 = vmax.f32 %v2524, %v2525
        %v2527 = vrot.slane %v2526, 2
        %v2528 = vmax.f32 %v2526, %v2527
        %v2529 = vrot.slane %v2528, 1
        %v2530 = vmax.f32 %v2528, %v2529
        %v2531 = vsel %vm2439, %v2334, -inf
        %v2532 = vrot.slane %v2531, 4
        %v2533 = vmax.f32 %v2531, %v2532
        %v2534 = vrot.slane %v2533, 2
        %v2535 = vmax.f32 %v2533, %v2534
        %v2536 = vrot.slane %v2535, 1
        %v2537 = vmax.f32 %v2535, %v2536
        %v2538 = vsel %vm2439, %v2341, -inf
        %v2539 = vrot.slane %v2538, 4
        %v2540 = vmax.f32 %v2538, %v2539
        %v2541 = vrot.slane %v2540, 2
        %v2542 = vmax.f32 %v2540, %v2541
        %v2543 = vrot.slane %v2542, 1
        %v2544 = vmax.f32 %v2542, %v2543
        %v2545 = vsel %vm2439, %v2342, -inf
        %v2546 = vrot.slane %v2545, 4
        %v2547 = vmax.f32 %v2545, %v2546
        %v2548 = vrot.slane %v2547, 2
        %v2549 = vmax.f32 %v2547, %v2548
        %v2550 = vrot.slane %v2549, 1
        %v2551 = vmax.f32 %v2549, %v2550
        %v2552 = vsel %vm2439, %v2349, -inf
        %v2553 = vrot.slane %v2552, 4
        %v2554 = vmax.f32 %v2552, %v2553
        %v2555 = vrot.slane %v2554, 2
        %v2556 = vmax.f32 %v2554, %v2555
        %v2557 = vrot.slane %v2556, 1
        %v2558 = vmax.f32 %v2556, %v2557
        %v2559 = vsel %vm2439, %v2350, -inf
        %v2560 = vrot.slane %v2559, 4
        %v2561 = vmax.f32 %v2559, %v2560
        %v2562 = vrot.slane %v2561, 2
        %v2563 = vmax.f32 %v2561, %v2562
        %v2564 = vrot.slane %v2563, 1
        %v2565 = vmax.f32 %v2563, %v2564
        %v2566 = vsel %vm2439, %v2357, -inf
        %v2567 = vrot.slane %v2566, 4
        %v2568 = vmax.f32 %v2566, %v2567
        %v2569 = vrot.slane %v2568, 2
        %v2570 = vmax.f32 %v2568, %v2569
        %v2571 = vrot.slane %v2570, 1
        %v2572 = vmax.f32 %v2570, %v2571
        %v2573 = vsel %vm2439, %v2358, -inf
        %v2574 = vrot.slane %v2573, 4
        %v2575 = vmax.f32 %v2573, %v2574
        %v2576 = vrot.slane %v2575, 2
        %v2577 = vmax.f32 %v2575, %v2576
        %v2578 = vrot.slane %v2577, 1
        %v2579 = vmax.f32 %v2577, %v2578
        %v2580 = vsel %vm2439, %v2365, -inf
        %v2581 = vrot.slane %v2580, 4
        %v2582 = vmax.f32 %v2580, %v2581
        %v2583 = vrot.slane %v2582, 2
        %v2584 = vmax.f32 %v2582, %v2583
        %v2585 = vrot.slane %v2584, 1
        %v2586 = vmax.f32 %v2584, %v2585
        %v2587 = vsel %vm2439, %v2366, -inf
        %v2588 = vrot.slane %v2587, 4
        %v2589 = vmax.f32 %v2587, %v2588
        %v2590 = vrot.slane %v2589, 2
        %v2591 = vmax.f32 %v2589, %v2590
        %v2592 = vrot.slane %v2591, 1
        %v2593 = vmax.f32 %v2591, %v2592
        %v2594 = vsel %vm2439, %v2373, -inf
        %v2595 = vrot.slane %v2594, 4
        %v2596 = vmax.f32 %v2594, %v2595
        %v2597 = vrot.slane %v2596, 2
        %v2598 = vmax.f32 %v2596, %v2597
        %v2599 = vrot.slane %v2598, 1
        %v2600 = vmax.f32 %v2598, %v2599
        %v2601 = vsel %vm2439, %v2374, -inf
        %v2602 = vrot.slane %v2601, 4
        %v2603 = vmax.f32 %v2601, %v2602
        %v2604 = vrot.slane %v2603, 2
        %v2605 = vmax.f32 %v2603, %v2604
        %v2606 = vrot.slane %v2605, 1
        %v2607 = vmax.f32 %v2605, %v2606
        %v2608 = vsel %vm2439, %v2381, -inf
        %v2609 = vrot.slane %v2608, 4
        %v2610 = vmax.f32 %v2608, %v2609
        %v2611 = vrot.slane %v2610, 2
        %v2612 = vmax.f32 %v2610, %v2611
        %v2613 = vrot.slane %v2612, 1
        %v2614 = vmax.f32 %v2612, %v2613
        %v2615 = vsel %vm2439, %v2382, -inf
        %v2616 = vrot.slane %v2615, 4
        %v2617 = vmax.f32 %v2615, %v2616
        %v2618 = vrot.slane %v2617, 2
        %v2619 = vmax.f32 %v2617, %v2618
        %v2620 = vrot.slane %v2619, 1
        %v2621 = vmax.f32 %v2619, %v2620
        %v2622 = vsel %vm2439, %v2389, -inf
        %v2623 = vrot.slane %v2622, 4
        %v2624 = vmax.f32 %v2622, %v2623
        %v2625 = vrot.slane %v2624, 2
        %v2626 = vmax.f32 %v2624, %v2625
        %v2627 = vrot.slane %v2626, 1
        %v2628 = vmax.f32 %v2626, %v2627
        %v2629 = vsel %vm2439, %v2390, -inf
        %v2630 = vrot.slane %v2629, 4
        %v2631 = vmax.f32 %v2629, %v2630
        %v2632 = vrot.slane %v2631, 2
        %v2633 = vmax.f32 %v2631, %v2632
        %v2634 = vrot.slane %v2633, 1
        %v2635 = vmax.f32 %v2633, %v2634
        %v2636 = vsel %vm2439, %v2397, -inf
        %v2637 = vrot.slane %v2636, 4
        %v2638 = vmax.f32 %v2636, %v2637
        %v2639 = vrot.slane %v2638, 2
        %v2640 = vmax.f32 %v2638, %v2639
        %v2641 = vrot.slane %v2640, 1
        %v2642 = vmax.f32 %v2640, %v2641
        %v2643 = vsel %vm2439, %v2398, -inf
        %v2644 = vrot.slane %v2643, 4
        %v2645 = vmax.f32 %v2643, %v2644
        %v2646 = vrot.slane %v2645, 2
        %v2647 = vmax.f32 %v2645, %v2646
        %v2648 = vrot.slane %v2647, 1
        %v2649 = vmax.f32 %v2647, %v2648
        %v2650 = vsel %vm2439, %v2405, -inf
        %v2651 = vrot.slane %v2650, 4
        %v2652 = vmax.f32 %v2650, %v2651
        %v2653 = vrot.slane %v2652, 2
        %v2654 = vmax.f32 %v2652, %v2653
        %v2655 = vrot.slane %v2654, 1
        %v2656 = vmax.f32 %v2654, %v2655
        %v2657 = vsel %vm2439, %v2406, -inf
        %v2658 = vrot.slane %v2657, 4
        %v2659 = vmax.f32 %v2657, %v2658
        %v2660 = vrot.slane %v2659, 2
        %v2661 = vmax.f32 %v2659, %v2660
        %v2662 = vrot.slane %v2661, 1
        %v2663 = vmax.f32 %v2661, %v2662
        %v2664 = vpack.c.bf16 %v2446, %v2446
        %v2665 = vpack.c.bf16 %v2453, %v2453
        %v2666 = vpack.c.bf16 %v2460, %v2460
        %v2667 = vpack.c.bf16 %v2467, %v2467
        %v2668 = vpack.c.bf16 %v2474, %v2474
        %v2669 = vpack.c.bf16 %v2481, %v2481
        %v2670 = vpack.c.bf16 %v2488, %v2488
        %v2671 = vpack.c.bf16 %v2495, %v2495
        %v2672 = vpack.c.bf16 %v2502, %v2502
        %v2673 = vpack.c.bf16 %v2509, %v2509
        %v2674 = vpack.c.bf16 %v2516, %v2516
        %v2675 = vpack.c.bf16 %v2523, %v2523
        %v2676 = vpack.c.bf16 %v2530, %v2530
        %v2677 = vpack.c.bf16 %v2537, %v2537
        %v2678 = vpack.c.bf16 %v2544, %v2544
        %v2679 = vpack.c.bf16 %v2551, %v2551
        %v2680 = vpack.c.bf16 %v2558, %v2558
        %v2681 = vpack.c.bf16 %v2565, %v2565
        %v2682 = vpack.c.bf16 %v2572, %v2572
        %v2683 = vpack.c.bf16 %v2579, %v2579
        %v2684 = vpack.c.bf16 %v2586, %v2586
        %v2685 = vpack.c.bf16 %v2593, %v2593
        %v2686 = vpack.c.bf16 %v2600, %v2600
        %v2687 = vpack.c.bf16 %v2607, %v2607
        %v2688 = vpack.c.bf16 %v2614, %v2614
        %v2689 = vpack.c.bf16 %v2621, %v2621
        %v2690 = vpack.c.bf16 %v2628, %v2628
        %v2691 = vpack.c.bf16 %v2635, %v2635
        %v2692 = vpack.c.bf16 %v2642, %v2642
        %v2693 = vpack.c.bf16 %v2649, %v2649
        %v2694 = vpack.c.bf16 %v2656, %v2656
        %v2695 = vpack.c.bf16 %v2663, %v2663
        %v2726 = vunpack.c.l.b16 %v2664
        %v2727 = vunpack.c.l.b16 %v2665
        %v2728 = vunpack.c.l.b16 %v2666
        %v2729 = vunpack.c.l.b16 %v2667
        %v2730 = vunpack.c.l.b16 %v2668
        %v2731 = vunpack.c.l.b16 %v2669
        %v2732 = vunpack.c.l.b16 %v2670
        %v2733 = vunpack.c.l.b16 %v2671
        %v2734 = vunpack.c.l.b16 %v2672
        %v2735 = vunpack.c.l.b16 %v2673
        %v2736 = vunpack.c.l.b16 %v2674
        %v2737 = vunpack.c.l.b16 %v2675
        %v2738 = vunpack.c.l.b16 %v2676
        %v2739 = vunpack.c.l.b16 %v2677
        %v2740 = vunpack.c.l.b16 %v2678
        %v2741 = vunpack.c.l.b16 %v2679
        %v2742 = vunpack.c.l.b16 %v2680
        %v2743 = vunpack.c.l.b16 %v2681
        %v2744 = vunpack.c.l.b16 %v2682
        %v2745 = vunpack.c.l.b16 %v2683
        %v2746 = vunpack.c.l.b16 %v2684
        %v2747 = vunpack.c.l.b16 %v2685
        %v2748 = vunpack.c.l.b16 %v2686
        %v2749 = vunpack.c.l.b16 %v2687
        %v2750 = vunpack.c.l.b16 %v2688
        %v2751 = vunpack.c.l.b16 %v2689
        %v2752 = vunpack.c.l.b16 %v2690
        %v2753 = vunpack.c.l.b16 %v2691
        %v2754 = vunpack.c.l.b16 %v2692
        %v2755 = vunpack.c.l.b16 %v2693
        %vm2756 = vcmask 1042434
        %v2757 = vsel %vm2756, %v2728, %v2726
        %vm2758 = vcmask 1043459
        %v2759 = vsel %vm2758, %v2730, %v2757
        %vm2760 = vcmask 1044484
        %v2761 = vsel %vm2760, %v2732, %v2759
        %vm2762 = vcmask 1045509
        %v2763 = vsel %vm2762, %v2734, %v2761
        %vm2764 = vcmask 1046534
        %v2765 = vsel %vm2764, %v2736, %v2763
        %vm2766 = vcmask 1047559
        %v2767 = vsel %vm2766, %v2738, %v2765
        %v2768 = vsel %vm2756, %v2729, %v2727
        %v2769 = vsel %vm2758, %v2731, %v2768
        %v2770 = vsel %vm2760, %v2733, %v2769
        %v2771 = vsel %vm2762, %v2735, %v2770
        %v2772 = vsel %vm2764, %v2737, %v2771
        %v2773 = vsel %vm2766, %v2739, %v2772
        %vm2774 = vcmask 1041409
        %v2775 = vsel %vm2774, %v2742, %v2740
        %v2776 = vsel %vm2756, %v2744, %v2775
        %v2777 = vsel %vm2758, %v2746, %v2776
        %v2778 = vsel %vm2760, %v2748, %v2777
        %v2779 = vsel %vm2762, %v2750, %v2778
        %v2780 = vsel %vm2764, %v2752, %v2779
        %v2781 = vsel %vm2766, %v2754, %v2780
        %v2782 = vsel %vm2774, %v2743, %v2741
        %v2783 = vsel %vm2756, %v2745, %v2782
        %v2784 = vsel %vm2758, %v2747, %v2783
        %v2785 = vsel %vm2760, %v2749, %v2784
        %v2786 = vsel %vm2762, %v2751, %v2785
        %v2787 = vsel %vm2764, %v2753, %v2786
        %v2788 = vsel %vm2766, %v2755, %v2787
        %v2789 = vpack.c.b16 %v2781, %v2767
        %v2790 = vpack.c.b16 %v2788, %v2773
        %v2793 = vsel %vm479, 0, %v2789
        %v2794 = vsel %vm479, 0, %v2790
        %v2797 = vunpack.c.l.b16 %v2694
        %v2798 = vunpack.c.l.b16 %v2695
        %v2799 = vsel %vm2774, %v2730, %v2728
        %v2800 = vsel %vm2756, %v2732, %v2799
        %v2801 = vsel %vm2758, %v2734, %v2800
        %v2802 = vsel %vm2760, %v2736, %v2801
        %v2803 = vsel %vm2762, %v2738, %v2802
        %v2804 = vsel %vm2764, %v2740, %v2803
        %v2805 = vsel %vm2766, %v2742, %v2804
        %v2806 = vsel %vm2774, %v2731, %v2729
        %v2807 = vsel %vm2756, %v2733, %v2806
        %v2808 = vsel %vm2758, %v2735, %v2807
        %v2809 = vsel %vm2760, %v2737, %v2808
        %v2810 = vsel %vm2762, %v2739, %v2809
        %v2811 = vsel %vm2764, %v2741, %v2810
        %v2812 = vsel %vm2766, %v2743, %v2811
        %v2813 = vsel %vm2774, %v2746, %v2744
        %v2814 = vsel %vm2756, %v2748, %v2813
        %v2815 = vsel %vm2758, %v2750, %v2814
        %v2816 = vsel %vm2760, %v2752, %v2815
        %v2817 = vsel %vm2762, %v2754, %v2816
        %v2818 = vsel %vm2764, %v2797, %v2817
        %v2819 = vsel %vm2774, %v2747, %v2745
        %v2820 = vsel %vm2756, %v2749, %v2819
        %v2821 = vsel %vm2758, %v2751, %v2820
        %v2822 = vsel %vm2760, %v2753, %v2821
        %v2823 = vsel %vm2762, %v2755, %v2822
        %v2824 = vsel %vm2764, %v2798, %v2823
        %v2825 = vpack.c.b16 %v2818, %v2805
        %v2826 = vpack.c.b16 %v2824, %v2812
        %v2829 = vsel %vm489, %v2825, 0
        %v2830 = vsel %vm489, %v2826, 0
        %v2831 = vsel %vm2774, %v2728, %v2726
        %v2832 = vsel %vm2756, %v2730, %v2831
        %v2833 = vsel %vm2758, %v2732, %v2832
        %v2834 = vsel %vm2760, %v2734, %v2833
        %v2835 = vsel %vm2762, %v2736, %v2834
        %v2836 = vsel %vm2764, %v2738, %v2835
        %v2837 = vsel %vm2766, %v2740, %v2836
        %v2838 = vsel %vm2774, %v2729, %v2727
        %v2839 = vsel %vm2756, %v2731, %v2838
        %v2840 = vsel %vm2758, %v2733, %v2839
        %v2841 = vsel %vm2760, %v2735, %v2840
        %v2842 = vsel %vm2762, %v2737, %v2841
        %v2843 = vsel %vm2764, %v2739, %v2842
        %v2844 = vsel %vm2766, %v2741, %v2843
        %v2845 = vsel %vm2774, %v2744, %v2742
        %v2846 = vsel %vm2756, %v2746, %v2845
        %v2847 = vsel %vm2758, %v2748, %v2846
        %v2848 = vsel %vm2760, %v2750, %v2847
        %v2849 = vsel %vm2762, %v2752, %v2848
        %v2850 = vsel %vm2764, %v2754, %v2849
        %v2851 = vsel %vm2766, %v2797, %v2850
        %v2852 = vsel %vm2774, %v2745, %v2743
        %v2853 = vsel %vm2756, %v2747, %v2852
        %v2854 = vsel %vm2758, %v2749, %v2853
        %v2855 = vsel %vm2760, %v2751, %v2854
        %v2856 = vsel %vm2762, %v2753, %v2855
        %v2857 = vsel %vm2764, %v2755, %v2856
        %v2858 = vsel %vm2766, %v2798, %v2857
        %v2859 = vpack.c.b16 %v2851, %v2837
        %v2860 = vpack.c.b16 %v2858, %v2844
        %v2863 = vld [vmem:[#allocation9] sm:$0xff]
        %v2864 = vld [vmem:[#allocation9 + $0x8] sm:$0xff]
        %v2865 = vld [vmem:[#allocation9 + $0x10] sm:$0xff]
        %v2866 = vld [vmem:[#allocation9 + $0x18] sm:$0xff]
        %v2867 = vld [vmem:[#allocation9 + $0x20] sm:$0xff]
        %v2868 = vld [vmem:[#allocation9 + $0x28] sm:$0xff]
        %v2869 = vld [vmem:[#allocation9 + $0x30] sm:$0xff]
        %v2870 = vld [vmem:[#allocation9 + $0x38] sm:$0xff]
        %v2871 = vld [vmem:[#allocation9 + $0x40] sm:$0xff]
        %v2872 = vld [vmem:[#allocation9 + $0x48] sm:$0xff]
        %v2873 = vld [vmem:[#allocation9 + $0x50] sm:$0xff]
        %v2874 = vld [vmem:[#allocation9 + $0x58] sm:$0xff]
        %v2875 = vld [vmem:[#allocation9 + $0x60] sm:$0xff]
        %v2876 = vld [vmem:[#allocation9 + $0x68] sm:$0xff]
        %v2877 = vld [vmem:[#allocation9 + $0x70] sm:$0xff]
        %v2878 = vld [vmem:[#allocation9 + $0x78] sm:$0xff]
        %v2879 = vld [vmem:[#allocation9 + $0x80] sm:$0xff]
        %v2880 = vld [vmem:[#allocation9 + $0x88] sm:$0xff]
        %v2881 = vld [vmem:[#allocation9 + $0x90] sm:$0xff]
        %v2882 = vld [vmem:[#allocation9 + $0x98] sm:$0xff]
        %v2883 = vld [vmem:[#allocation9 + $0xa0] sm:$0xff]
        %v2884 = vld [vmem:[#allocation9 + $0xa8] sm:$0xff]
        %v2885 = vld [vmem:[#allocation9 + $0xb0] sm:$0xff]
        %v2886 = vld [vmem:[#allocation9 + $0xb8] sm:$0xff]
        %v2887 = vld [vmem:[#allocation9 + $0xc0] sm:$0xff]
        %v2888 = vld [vmem:[#allocation9 + $0xc8] sm:$0xff]
        %v2889 = vld [vmem:[#allocation9 + $0xd0] sm:$0xff]
        %v2890 = vld [vmem:[#allocation9 + $0xd8] sm:$0xff]
        %v2891 = vld [vmem:[#allocation9 + $0xe0] sm:$0xff]
        %v2892 = vld [vmem:[#allocation9 + $0xe8] sm:$0xff]
        %v2893 = vld [vmem:[#allocation9 + $0xf0] sm:$0xff]
        %v2894 = vld [vmem:[#allocation9 + $0xf8] sm:$0xff]
        %v2895 = vld [vmem:[#allocation9 + $0x100] sm:$0xff]
        %v2896 = vld [vmem:[#allocation9 + $0x108] sm:$0xff]
        %v2897 = vld [vmem:[#allocation9 + $0x110] sm:$0xff]
        %v2898 = vld [vmem:[#allocation9 + $0x118] sm:$0xff]
        %v2899 = vld [vmem:[#allocation9 + $0x120] sm:$0xff]
        %v2900 = vld [vmem:[#allocation9 + $0x128] sm:$0xff]
        %v2901 = vld [vmem:[#allocation9 + $0x130] sm:$0xff]
        %v2902 = vld [vmem:[#allocation9 + $0x138] sm:$0xff]
        %v2903 = vld [vmem:[#allocation9 + $0x140] sm:$0xff]
        %v2904 = vld [vmem:[#allocation9 + $0x148] sm:$0xff]
        %v2905 = vld [vmem:[#allocation9 + $0x150] sm:$0xff]
        %v2906 = vld [vmem:[#allocation9 + $0x158] sm:$0xff]
        %v2907 = vld [vmem:[#allocation9 + $0x160] sm:$0xff]
        %v2908 = vld [vmem:[#allocation9 + $0x168] sm:$0xff]
        %v2909 = vld [vmem:[#allocation9 + $0x170] sm:$0xff]
        %v2910 = vld [vmem:[#allocation9 + $0x178] sm:$0xff]
        %v2911 = vld [vmem:[#allocation9 + $0x180] sm:$0xff]
        %v2912 = vld [vmem:[#allocation9 + $0x188] sm:$0xff]
        %v2913 = vld [vmem:[#allocation9 + $0x190] sm:$0xff]
        %v2914 = vld [vmem:[#allocation9 + $0x198] sm:$0xff]
        %v2915 = vld [vmem:[#allocation9 + $0x1a0] sm:$0xff]
        %v2916 = vld [vmem:[#allocation9 + $0x1a8] sm:$0xff]
        %v2917 = vld [vmem:[#allocation9 + $0x1b0] sm:$0xff]
        %v2918 = vld [vmem:[#allocation9 + $0x1b8] sm:$0xff]
        %v2919 = vld [vmem:[#allocation9 + $0x1c0] sm:$0xff]
        %v2920 = vld [vmem:[#allocation9 + $0x1c8] sm:$0xff]
        %v2921 = vld [vmem:[#allocation9 + $0x1d0] sm:$0xff]
        %v2922 = vld [vmem:[#allocation9 + $0x1d8] sm:$0xff]
        %v2923 = vld [vmem:[#allocation9 + $0x1e0] sm:$0xff]
        %v2924 = vld [vmem:[#allocation9 + $0x1e8] sm:$0xff]
        %v2925 = vld [vmem:[#allocation9 + $0x1f0] sm:$0xff]
        %v2926 = vld [vmem:[#allocation9 + $0x1f8] sm:$0xff]
        %v2927 = vld [vmem:[#allocation9 + $0x200] sm:$0xff]
        %v2928 = vld [vmem:[#allocation9 + $0x208] sm:$0xff]
        %v2929 = vld [vmem:[#allocation9 + $0x210] sm:$0xff]
        %v2930 = vld [vmem:[#allocation9 + $0x218] sm:$0xff]
        %v2931 = vld [vmem:[#allocation9 + $0x220] sm:$0xff]
        %v2932 = vld [vmem:[#allocation9 + $0x228] sm:$0xff]
        %v2933 = vld [vmem:[#allocation9 + $0x230] sm:$0xff]
        %v2934 = vld [vmem:[#allocation9 + $0x238] sm:$0xff]
        %v2935 = vld [vmem:[#allocation9 + $0x240] sm:$0xff]
        %v2936 = vld [vmem:[#allocation9 + $0x248] sm:$0xff]
        %v2937 = vld [vmem:[#allocation9 + $0x250] sm:$0xff]
        %v2938 = vld [vmem:[#allocation9 + $0x258] sm:$0xff]
        %v2939 = vld [vmem:[#allocation9 + $0x260] sm:$0xff]
        %v2940 = vld [vmem:[#allocation9 + $0x268] sm:$0xff]
        %v2941 = vld [vmem:[#allocation9 + $0x270] sm:$0xff]
        %v2942 = vld [vmem:[#allocation9 + $0x278] sm:$0xff]
        %v2943 = vld [vmem:[#allocation9 + $0x280] sm:$0xff]
        %v2944 = vld [vmem:[#allocation9 + $0x288] sm:$0xff]
        %v2945 = vld [vmem:[#allocation9 + $0x290] sm:$0xff]
        %v2946 = vld [vmem:[#allocation9 + $0x298] sm:$0xff]
        %v2947 = vld [vmem:[#allocation9 + $0x2a0] sm:$0xff]
        %v2948 = vld [vmem:[#allocation9 + $0x2a8] sm:$0xff]
        %v2949 = vld [vmem:[#allocation9 + $0x2b0] sm:$0xff]
        %v2950 = vld [vmem:[#allocation9 + $0x2b8] sm:$0xff]
        %v2951 = vld [vmem:[#allocation9 + $0x2c0] sm:$0xff]
        %v2952 = vld [vmem:[#allocation9 + $0x2c8] sm:$0xff]
        %v2953 = vld [vmem:[#allocation9 + $0x2d0] sm:$0xff]
        %v2954 = vld [vmem:[#allocation9 + $0x2d8] sm:$0xff]
        %v2955 = vld [vmem:[#allocation9 + $0x2e0] sm:$0xff]
        %v2956 = vld [vmem:[#allocation9 + $0x2e8] sm:$0xff]
        %v2957 = vld [vmem:[#allocation9 + $0x2f0] sm:$0xff]
        %v2958 = vld [vmem:[#allocation9 + $0x2f8] sm:$0xff]
        %v2959 = vld [vmem:[#allocation9 + $0x300] sm:$0xff]
        %v2960 = vld [vmem:[#allocation9 + $0x308] sm:$0xff]
        %v2961 = vld [vmem:[#allocation9 + $0x310] sm:$0xff]
        %v2962 = vld [vmem:[#allocation9 + $0x318] sm:$0xff]
        %v2963 = vld [vmem:[#allocation9 + $0x320] sm:$0xff]
        %v2964 = vld [vmem:[#allocation9 + $0x328] sm:$0xff]
        %v2965 = vld [vmem:[#allocation9 + $0x330] sm:$0xff]
        %v2966 = vld [vmem:[#allocation9 + $0x338] sm:$0xff]
        %v2967 = vld [vmem:[#allocation9 + $0x340] sm:$0xff]
        %v2968 = vld [vmem:[#allocation9 + $0x348] sm:$0xff]
        %v2969 = vld [vmem:[#allocation9 + $0x350] sm:$0xff]
        %v2970 = vld [vmem:[#allocation9 + $0x358] sm:$0xff]
        %v2971 = vld [vmem:[#allocation9 + $0x360] sm:$0xff]
        %v2972 = vld [vmem:[#allocation9 + $0x368] sm:$0xff]
        %v2973 = vld [vmem:[#allocation9 + $0x370] sm:$0xff]
        %v2974 = vld [vmem:[#allocation9 + $0x378] sm:$0xff]
        %v2975 = vld [vmem:[#allocation9 + $0x380] sm:$0xff]
        %v2976 = vld [vmem:[#allocation9 + $0x388] sm:$0xff]
        %v2977 = vld [vmem:[#allocation9 + $0x390] sm:$0xff]
        %v2978 = vld [vmem:[#allocation9 + $0x398] sm:$0xff]
        %v2979 = vld [vmem:[#allocation9 + $0x3a0] sm:$0xff]
        %v2980 = vld [vmem:[#allocation9 + $0x3a8] sm:$0xff]
        %v2981 = vld [vmem:[#allocation9 + $0x3b0] sm:$0xff]
        %v2982 = vld [vmem:[#allocation9 + $0x3b8] sm:$0xff]
        %v2983 = vld [vmem:[#allocation9 + $0x3c0] sm:$0xff]
        %v2984 = vld [vmem:[#allocation9 + $0x3c8] sm:$0xff]
        %v2985 = vld [vmem:[#allocation9 + $0x3d0] sm:$0xff]
        %v2986 = vld [vmem:[#allocation9 + $0x3d8] sm:$0xff]
        %v2987 = vld [vmem:[#allocation9 + $0x3e0] sm:$0xff]
        %v2988 = vld [vmem:[#allocation9 + $0x3e8] sm:$0xff]
        %v2989 = vld [vmem:[#allocation9 + $0x3f0] sm:$0xff]
        %v2990 = vld [vmem:[#allocation9 + $0x3f8] sm:$0xff]
        %v2991 = vld [vmem:[#allocation9 + $0x400] sm:$0xff]
        %v2992 = vld [vmem:[#allocation9 + $0x408] sm:$0xff]
        %v2993 = vld [vmem:[#allocation9 + $0x410] sm:$0xff]
        %v2994 = vld [vmem:[#allocation9 + $0x418] sm:$0xff]
        %v2995 = vld [vmem:[#allocation9 + $0x420] sm:$0xff]
        %v2996 = vld [vmem:[#allocation9 + $0x428] sm:$0xff]
        %v2997 = vld [vmem:[#allocation9 + $0x430] sm:$0xff]
        %v2998 = vld [vmem:[#allocation9 + $0x438] sm:$0xff]
        %v2999 = vld [vmem:[#allocation9 + $0x440] sm:$0xff]
        %v3000 = vld [vmem:[#allocation9 + $0x448] sm:$0xff]
        %v3001 = vld [vmem:[#allocation9 + $0x450] sm:$0xff]
        %v3002 = vld [vmem:[#allocation9 + $0x458] sm:$0xff]
        %v3003 = vld [vmem:[#allocation9 + $0x460] sm:$0xff]
        %v3004 = vld [vmem:[#allocation9 + $0x468] sm:$0xff]
        %v3005 = vld [vmem:[#allocation9 + $0x470] sm:$0xff]
        %v3006 = vld [vmem:[#allocation9 + $0x478] sm:$0xff]
        %v3007 = vld [vmem:[#allocation9 + $0x480] sm:$0xff]
        %v3008 = vld [vmem:[#allocation9 + $0x488] sm:$0xff]
        %v3009 = vld [vmem:[#allocation9 + $0x490] sm:$0xff]
        %v3010 = vld [vmem:[#allocation9 + $0x498] sm:$0xff]
        %v3011 = vld [vmem:[#allocation9 + $0x4a0] sm:$0xff]
        %v3012 = vld [vmem:[#allocation9 + $0x4a8] sm:$0xff]
        %v3013 = vld [vmem:[#allocation9 + $0x4b0] sm:$0xff]
        %v3014 = vld [vmem:[#allocation9 + $0x4b8] sm:$0xff]
        %v3015 = vld [vmem:[#allocation9 + $0x4c0] sm:$0xff]
        %v3016 = vld [vmem:[#allocation9 + $0x4c8] sm:$0xff]
        %v3017 = vld [vmem:[#allocation9 + $0x4d0] sm:$0xff]
        %v3018 = vld [vmem:[#allocation9 + $0x4d8] sm:$0xff]
        %v3019 = vld [vmem:[#allocation9 + $0x4e0] sm:$0xff]
        %v3020 = vld [vmem:[#allocation9 + $0x4e8] sm:$0xff]
        %v3021 = vld [vmem:[#allocation9 + $0x4f0] sm:$0xff]
        %v3022 = vld [vmem:[#allocation9 + $0x4f8] sm:$0xff]
        %v3023 = vld [vmem:[#allocation9 + $0x500] sm:$0xff]
        %v3024 = vld [vmem:[#allocation9 + $0x508] sm:$0xff]
        %v3025 = vld [vmem:[#allocation9 + $0x510] sm:$0xff]
        %v3026 = vld [vmem:[#allocation9 + $0x518] sm:$0xff]
        %v3027 = vld [vmem:[#allocation9 + $0x520] sm:$0xff]
        %v3028 = vld [vmem:[#allocation9 + $0x528] sm:$0xff]
        %v3029 = vld [vmem:[#allocation9 + $0x530] sm:$0xff]
        %v3030 = vld [vmem:[#allocation9 + $0x538] sm:$0xff]
        %v3031 = vld [vmem:[#allocation9 + $0x540] sm:$0xff]
        %v3032 = vld [vmem:[#allocation9 + $0x548] sm:$0xff]
        %v3033 = vld [vmem:[#allocation9 + $0x550] sm:$0xff]
        %v3034 = vld [vmem:[#allocation9 + $0x558] sm:$0xff]
        %v3035 = vld [vmem:[#allocation9 + $0x560] sm:$0xff]
        %v3036 = vld [vmem:[#allocation9 + $0x568] sm:$0xff]
        %v3037 = vld [vmem:[#allocation9 + $0x570] sm:$0xff]
        %v3038 = vld [vmem:[#allocation9 + $0x578] sm:$0xff]
        %v3039 = vld [vmem:[#allocation9 + $0x580] sm:$0xff]
        %v3040 = vld [vmem:[#allocation9 + $0x588] sm:$0xff]
        %v3041 = vld [vmem:[#allocation9 + $0x590] sm:$0xff]
        %v3042 = vld [vmem:[#allocation9 + $0x598] sm:$0xff]
        %v3043 = vld [vmem:[#allocation9 + $0x5a0] sm:$0xff]
        %v3044 = vld [vmem:[#allocation9 + $0x5a8] sm:$0xff]
        %v3045 = vld [vmem:[#allocation9 + $0x5b0] sm:$0xff]
        %v3046 = vld [vmem:[#allocation9 + $0x5b8] sm:$0xff]
        %v3047 = vld [vmem:[#allocation9 + $0x5c0] sm:$0xff]
        %v3048 = vld [vmem:[#allocation9 + $0x5c8] sm:$0xff]
        %v3049 = vld [vmem:[#allocation9 + $0x5d0] sm:$0xff]
        %v3050 = vld [vmem:[#allocation9 + $0x5d8] sm:$0xff]
        %v3051 = vld [vmem:[#allocation9 + $0x5e0] sm:$0xff]
        %v3052 = vld [vmem:[#allocation9 + $0x5e8] sm:$0xff]
        %v3053 = vld [vmem:[#allocation9 + $0x5f0] sm:$0xff]
        %v3054 = vld [vmem:[#allocation9 + $0x5f8] sm:$0xff]
        %v3055 = vld [vmem:[#allocation10] sm:$0xf]
        %v3057 = vlaneseq
        %v3058 = vshrl.u32 %v3057, 7
        %v3059 = vsub.s32 0, %v3058
        %v3060 = vrot.slane %v3055, %v3059
        %v3061 = vlaneseq
        %v3062 = vshrl.u32 %v3061, 7
        %v3063 = vsub.s32 1, %v3062
        %v3064 = vrot.slane %v3055, %v3063
        %v3065 = vlaneseq
        %v3066 = vshrl.u32 %v3065, 7
        %v3067 = vsub.s32 2, %v3066
        %v3068 = vrot.slane %v3055, %v3067
        %v3069 = vlaneseq
        %v3070 = vshrl.u32 %v3069, 7
        %v3071 = vsub.s32 3, %v3070
        %v3072 = vrot.slane %v3055, %v3071
        %v3269 = vunpack.c.l.b16 %v2863
        %v3270 = vunpack.c.h.b16 %v2863
        %v3271 = vunpack.c.l.b16 %v2864
        %v3272 = vunpack.c.h.b16 %v2864
        %v3273 = vunpack.c.l.b16 %v2865
        %v3274 = vunpack.c.h.b16 %v2865
        %v3275 = vunpack.c.l.b16 %v2866
        %v3276 = vunpack.c.h.b16 %v2866
        %v3277 = vunpack.c.l.b16 %v2867
        %v3278 = vunpack.c.h.b16 %v2867
        %v3279 = vunpack.c.l.b16 %v2868
        %v3280 = vunpack.c.h.b16 %v2868
        %v3281 = vunpack.c.l.b16 %v2869
        %v3282 = vunpack.c.h.b16 %v2869
        %v3283 = vunpack.c.l.b16 %v2870
        %v3284 = vunpack.c.h.b16 %v2870
        %v3285 = vunpack.c.l.b16 %v2871
        %v3286 = vunpack.c.h.b16 %v2871
        %v3287 = vunpack.c.l.b16 %v2872
        %v3288 = vunpack.c.h.b16 %v2872
        %v3289 = vunpack.c.l.b16 %v2873
        %v3290 = vunpack.c.h.b16 %v2873
        %v3291 = vunpack.c.l.b16 %v2874
        %v3292 = vunpack.c.h.b16 %v2874
        %v3293 = vunpack.c.l.b16 %v2875
        %v3294 = vunpack.c.h.b16 %v2875
        %v3295 = vunpack.c.l.b16 %v2876
        %v3296 = vunpack.c.h.b16 %v2876
        %v3297 = vunpack.c.l.b16 %v2877
        %v3298 = vunpack.c.h.b16 %v2877
        %v3299 = vunpack.c.l.b16 %v2878
        %v3300 = vunpack.c.h.b16 %v2878
        %v3301 = vunpack.c.l.b16 %v2879
        %v3302 = vunpack.c.h.b16 %v2879
        %v3303 = vunpack.c.l.b16 %v2880
        %v3304 = vunpack.c.h.b16 %v2880
        %v3305 = vunpack.c.l.b16 %v2881
        %v3306 = vunpack.c.h.b16 %v2881
        %v3307 = vunpack.c.l.b16 %v2882
        %v3308 = vunpack.c.h.b16 %v2882
        %v3309 = vunpack.c.l.b16 %v2883
        %v3310 = vunpack.c.h.b16 %v2883
        %v3311 = vunpack.c.l.b16 %v2884
        %v3312 = vunpack.c.h.b16 %v2884
        %v3313 = vunpack.c.l.b16 %v2885
        %v3314 = vunpack.c.h.b16 %v2885
        %v3315 = vunpack.c.l.b16 %v2886
        %v3316 = vunpack.c.h.b16 %v2886
        %v3317 = vunpack.c.l.b16 %v2887
        %v3318 = vunpack.c.h.b16 %v2887
        %v3319 = vunpack.c.l.b16 %v2888
        %v3320 = vunpack.c.h.b16 %v2888
        %v3321 = vunpack.c.l.b16 %v2889
        %v3322 = vunpack.c.h.b16 %v2889
        %v3323 = vunpack.c.l.b16 %v2890
        %v3324 = vunpack.c.h.b16 %v2890
        %v3325 = vunpack.c.l.b16 %v2891
        %v3326 = vunpack.c.h.b16 %v2891
        %v3327 = vunpack.c.l.b16 %v2892
        %v3328 = vunpack.c.h.b16 %v2892
        %v3329 = vunpack.c.l.b16 %v2893
        %v3330 = vunpack.c.h.b16 %v2893
        %v3331 = vunpack.c.l.b16 %v2894
        %v3332 = vunpack.c.h.b16 %v2894
        %v3333 = vunpack.c.l.b16 %v2895
        %v3334 = vunpack.c.h.b16 %v2895
        %v3335 = vunpack.c.l.b16 %v2896
        %v3336 = vunpack.c.h.b16 %v2896
        %v3337 = vunpack.c.l.b16 %v2897
        %v3338 = vunpack.c.h.b16 %v2897
        %v3339 = vunpack.c.l.b16 %v2898
        %v3340 = vunpack.c.h.b16 %v2898
        %v3341 = vunpack.c.l.b16 %v2899
        %v3342 = vunpack.c.h.b16 %v2899
        %v3343 = vunpack.c.l.b16 %v2900
        %v3344 = vunpack.c.h.b16 %v2900
        %v3345 = vunpack.c.l.b16 %v2901
        %v3346 = vunpack.c.h.b16 %v2901
        %v3347 = vunpack.c.l.b16 %v2902
        %v3348 = vunpack.c.h.b16 %v2902
        %v3349 = vunpack.c.l.b16 %v2903
        %v3350 = vunpack.c.h.b16 %v2903
        %v3351 = vunpack.c.l.b16 %v2904
        %v3352 = vunpack.c.h.b16 %v2904
        %v3353 = vunpack.c.l.b16 %v2905
        %v3354 = vunpack.c.h.b16 %v2905
        %v3355 = vunpack.c.l.b16 %v2906
        %v3356 = vunpack.c.h.b16 %v2906
        %v3357 = vunpack.c.l.b16 %v2907
        %v3358 = vunpack.c.h.b16 %v2907
        %v3359 = vunpack.c.l.b16 %v2908
        %v3360 = vunpack.c.h.b16 %v2908
        %v3361 = vunpack.c.l.b16 %v2909
        %v3362 = vunpack.c.h.b16 %v2909
        %v3363 = vunpack.c.l.b16 %v2910
        %v3364 = vunpack.c.h.b16 %v2910
        %v3365 = vunpack.c.l.b16 %v2911
        %v3366 = vunpack.c.h.b16 %v2911
        %v3367 = vunpack.c.l.b16 %v2912
        %v3368 = vunpack.c.h.b16 %v2912
        %v3369 = vunpack.c.l.b16 %v2913
        %v3370 = vunpack.c.h.b16 %v2913
        %v3371 = vunpack.c.l.b16 %v2914
        %v3372 = vunpack.c.h.b16 %v2914
        %v3373 = vunpack.c.l.b16 %v2915
        %v3374 = vunpack.c.h.b16 %v2915
        %v3375 = vunpack.c.l.b16 %v2916
        %v3376 = vunpack.c.h.b16 %v2916
        %v3377 = vunpack.c.l.b16 %v2917
        %v3378 = vunpack.c.h.b16 %v2917
        %v3379 = vunpack.c.l.b16 %v2918
        %v3380 = vunpack.c.h.b16 %v2918
        %v3381 = vunpack.c.l.b16 %v2919
        %v3382 = vunpack.c.h.b16 %v2919
        %v3383 = vunpack.c.l.b16 %v2920
        %v3384 = vunpack.c.h.b16 %v2920
        %v3385 = vunpack.c.l.b16 %v2921
        %v3386 = vunpack.c.h.b16 %v2921
        %v3387 = vunpack.c.l.b16 %v2922
        %v3388 = vunpack.c.h.b16 %v2922
        %v3389 = vunpack.c.l.b16 %v2923
        %v3390 = vunpack.c.h.b16 %v2923
        %v3391 = vunpack.c.l.b16 %v2924
        %v3392 = vunpack.c.h.b16 %v2924
        %v3393 = vunpack.c.l.b16 %v2925
        %v3394 = vunpack.c.h.b16 %v2925
        %v3395 = vunpack.c.l.b16 %v2926
        %v3396 = vunpack.c.h.b16 %v2926
        %v3397 = vunpack.c.l.b16 %v2927
        %v3398 = vunpack.c.h.b16 %v2927
        %v3399 = vunpack.c.l.b16 %v2928
        %v3400 = vunpack.c.h.b16 %v2928
        %v3401 = vunpack.c.l.b16 %v2929
        %v3402 = vunpack.c.h.b16 %v2929
        %v3403 = vunpack.c.l.b16 %v2930
        %v3404 = vunpack.c.h.b16 %v2930
        %v3405 = vunpack.c.l.b16 %v2931
        %v3406 = vunpack.c.h.b16 %v2931
        %v3407 = vunpack.c.l.b16 %v2932
        %v3408 = vunpack.c.h.b16 %v2932
        %v3409 = vunpack.c.l.b16 %v2933
        %v3410 = vunpack.c.h.b16 %v2933
        %v3411 = vunpack.c.l.b16 %v2934
        %v3412 = vunpack.c.h.b16 %v2934
        %v3413 = vunpack.c.l.b16 %v2935
        %v3414 = vunpack.c.h.b16 %v2935
        %v3415 = vunpack.c.l.b16 %v2936
        %v3416 = vunpack.c.h.b16 %v2936
        %v3417 = vunpack.c.l.b16 %v2937
        %v3418 = vunpack.c.h.b16 %v2937
        %v3419 = vunpack.c.l.b16 %v2938
        %v3420 = vunpack.c.h.b16 %v2938
        %v3421 = vunpack.c.l.b16 %v2939
        %v3422 = vunpack.c.h.b16 %v2939
        %v3423 = vunpack.c.l.b16 %v2940
        %v3424 = vunpack.c.h.b16 %v2940
        %v3425 = vunpack.c.l.b16 %v2941
        %v3426 = vunpack.c.h.b16 %v2941
        %v3427 = vunpack.c.l.b16 %v2942
        %v3428 = vunpack.c.h.b16 %v2942
        %v3429 = vunpack.c.l.b16 %v2943
        %v3430 = vunpack.c.h.b16 %v2943
        %v3431 = vunpack.c.l.b16 %v2944
        %v3432 = vunpack.c.h.b16 %v2944
        %v3433 = vunpack.c.l.b16 %v2945
        %v3434 = vunpack.c.h.b16 %v2945
        %v3435 = vunpack.c.l.b16 %v2946
        %v3436 = vunpack.c.h.b16 %v2946
        %v3437 = vunpack.c.l.b16 %v2947
        %v3438 = vunpack.c.h.b16 %v2947
        %v3439 = vunpack.c.l.b16 %v2948
        %v3440 = vunpack.c.h.b16 %v2948
        %v3441 = vunpack.c.l.b16 %v2949
        %v3442 = vunpack.c.h.b16 %v2949
        %v3443 = vunpack.c.l.b16 %v2950
        %v3444 = vunpack.c.h.b16 %v2950
        %v3445 = vunpack.c.l.b16 %v2951
        %v3446 = vunpack.c.h.b16 %v2951
        %v3447 = vunpack.c.l.b16 %v2952
        %v3448 = vunpack.c.h.b16 %v2952
        %v3449 = vunpack.c.l.b16 %v2953
        %v3450 = vunpack.c.h.b16 %v2953
        %v3451 = vunpack.c.l.b16 %v2954
        %v3452 = vunpack.c.h.b16 %v2954
        %v3453 = vunpack.c.l.b16 %v2955
        %v3454 = vunpack.c.h.b16 %v2955
        %v3455 = vunpack.c.l.b16 %v2956
        %v3456 = vunpack.c.h.b16 %v2956
        %v3457 = vunpack.c.l.b16 %v2957
        %v3458 = vunpack.c.h.b16 %v2957
        %v3459 = vunpack.c.l.b16 %v2958
        %v3460 = vunpack.c.h.b16 %v2958
        %v3461 = vunpack.c.l.b16 %v2959
        %v3462 = vunpack.c.h.b16 %v2959
        %v3463 = vunpack.c.l.b16 %v2960
        %v3464 = vunpack.c.h.b16 %v2960
        %v3465 = vunpack.c.l.b16 %v2961
        %v3466 = vunpack.c.h.b16 %v2961
        %v3467 = vunpack.c.l.b16 %v2962
        %v3468 = vunpack.c.h.b16 %v2962
        %v3469 = vunpack.c.l.b16 %v2963
        %v3470 = vunpack.c.h.b16 %v2963
        %v3471 = vunpack.c.l.b16 %v2964
        %v3472 = vunpack.c.h.b16 %v2964
        %v3473 = vunpack.c.l.b16 %v2965
        %v3474 = vunpack.c.h.b16 %v2965
        %v3475 = vunpack.c.l.b16 %v2966
        %v3476 = vunpack.c.h.b16 %v2966
        %v3477 = vunpack.c.l.b16 %v2967
        %v3478 = vunpack.c.h.b16 %v2967
        %v3479 = vunpack.c.l.b16 %v2968
        %v3480 = vunpack.c.h.b16 %v2968
        %v3481 = vunpack.c.l.b16 %v2969
        %v3482 = vunpack.c.h.b16 %v2969
        %v3483 = vunpack.c.l.b16 %v2970
        %v3484 = vunpack.c.h.b16 %v2970
        %v3485 = vunpack.c.l.b16 %v2971
        %v3486 = vunpack.c.h.b16 %v2971
        %v3487 = vunpack.c.l.b16 %v2972
        %v3488 = vunpack.c.h.b16 %v2972
        %v3489 = vunpack.c.l.b16 %v2973
        %v3490 = vunpack.c.h.b16 %v2973
        %v3491 = vunpack.c.l.b16 %v2974
        %v3492 = vunpack.c.h.b16 %v2974
        %v3493 = vunpack.c.l.b16 %v2975
        %v3494 = vunpack.c.h.b16 %v2975
        %v3495 = vunpack.c.l.b16 %v2976
        %v3496 = vunpack.c.h.b16 %v2976
        %v3497 = vunpack.c.l.b16 %v2977
        %v3498 = vunpack.c.h.b16 %v2977
        %v3499 = vunpack.c.l.b16 %v2978
        %v3500 = vunpack.c.h.b16 %v2978
        %v3501 = vunpack.c.l.b16 %v2979
        %v3502 = vunpack.c.h.b16 %v2979
        %v3503 = vunpack.c.l.b16 %v2980
        %v3504 = vunpack.c.h.b16 %v2980
        %v3505 = vunpack.c.l.b16 %v2981
        %v3506 = vunpack.c.h.b16 %v2981
        %v3507 = vunpack.c.l.b16 %v2982
        %v3508 = vunpack.c.h.b16 %v2982
        %v3509 = vunpack.c.l.b16 %v2983
        %v3510 = vunpack.c.h.b16 %v2983
        %v3511 = vunpack.c.l.b16 %v2984
        %v3512 = vunpack.c.h.b16 %v2984
        %v3513 = vunpack.c.l.b16 %v2985
        %v3514 = vunpack.c.h.b16 %v2985
        %v3515 = vunpack.c.l.b16 %v2986
        %v3516 = vunpack.c.h.b16 %v2986
        %v3517 = vunpack.c.l.b16 %v2987
        %v3518 = vunpack.c.h.b16 %v2987
        %v3519 = vunpack.c.l.b16 %v2988
        %v3520 = vunpack.c.h.b16 %v2988
        %v3521 = vunpack.c.l.b16 %v2989
        %v3522 = vunpack.c.h.b16 %v2989
        %v3523 = vunpack.c.l.b16 %v2990
        %v3524 = vunpack.c.h.b16 %v2990
        %v3525 = vunpack.c.l.b16 %v2991
        %v3526 = vunpack.c.h.b16 %v2991
        %v3527 = vunpack.c.l.b16 %v2992
        %v3528 = vunpack.c.h.b16 %v2992
        %v3529 = vunpack.c.l.b16 %v2993
        %v3530 = vunpack.c.h.b16 %v2993
        %v3531 = vunpack.c.l.b16 %v2994
        %v3532 = vunpack.c.h.b16 %v2994
        %v3533 = vunpack.c.l.b16 %v2995
        %v3534 = vunpack.c.h.b16 %v2995
        %v3535 = vunpack.c.l.b16 %v2996
        %v3536 = vunpack.c.h.b16 %v2996
        %v3537 = vunpack.c.l.b16 %v2997
        %v3538 = vunpack.c.h.b16 %v2997
        %v3539 = vunpack.c.l.b16 %v2998
        %v3540 = vunpack.c.h.b16 %v2998
        %v3541 = vunpack.c.l.b16 %v2999
        %v3542 = vunpack.c.h.b16 %v2999
        %v3543 = vunpack.c.l.b16 %v3000
        %v3544 = vunpack.c.h.b16 %v3000
        %v3545 = vunpack.c.l.b16 %v3001
        %v3546 = vunpack.c.h.b16 %v3001
        %v3547 = vunpack.c.l.b16 %v3002
        %v3548 = vunpack.c.h.b16 %v3002
        %v3549 = vunpack.c.l.b16 %v3003
        %v3550 = vunpack.c.h.b16 %v3003
        %v3551 = vunpack.c.l.b16 %v3004
        %v3552 = vunpack.c.h.b16 %v3004
        %v3553 = vunpack.c.l.b16 %v3005
        %v3554 = vunpack.c.h.b16 %v3005
        %v3555 = vunpack.c.l.b16 %v3006
        %v3556 = vunpack.c.h.b16 %v3006
        %v3557 = vunpack.c.l.b16 %v3007
        %v3558 = vunpack.c.h.b16 %v3007
        %v3559 = vunpack.c.l.b16 %v3008
        %v3560 = vunpack.c.h.b16 %v3008
        %v3561 = vunpack.c.l.b16 %v3009
        %v3562 = vunpack.c.h.b16 %v3009
        %v3563 = vunpack.c.l.b16 %v3010
        %v3564 = vunpack.c.h.b16 %v3010
        %v3565 = vunpack.c.l.b16 %v3011
        %v3566 = vunpack.c.h.b16 %v3011
        %v3567 = vunpack.c.l.b16 %v3012
        %v3568 = vunpack.c.h.b16 %v3012
        %v3569 = vunpack.c.l.b16 %v3013
        %v3570 = vunpack.c.h.b16 %v3013
        %v3571 = vunpack.c.l.b16 %v3014
        %v3572 = vunpack.c.h.b16 %v3014
        %v3573 = vunpack.c.l.b16 %v3015
        %v3574 = vunpack.c.h.b16 %v3015
        %v3575 = vunpack.c.l.b16 %v3016
        %v3576 = vunpack.c.h.b16 %v3016
        %v3577 = vunpack.c.l.b16 %v3017
        %v3578 = vunpack.c.h.b16 %v3017
        %v3579 = vunpack.c.l.b16 %v3018
        %v3580 = vunpack.c.h.b16 %v3018
        %v3581 = vunpack.c.l.b16 %v3019
        %v3582 = vunpack.c.h.b16 %v3019
        %v3583 = vunpack.c.l.b16 %v3020
        %v3584 = vunpack.c.h.b16 %v3020
        %v3585 = vunpack.c.l.b16 %v3021
        %v3586 = vunpack.c.h.b16 %v3021
        %v3587 = vunpack.c.l.b16 %v3022
        %v3588 = vunpack.c.h.b16 %v3022
        %v3589 = vunpack.c.l.b16 %v3023
        %v3590 = vunpack.c.h.b16 %v3023
        %v3591 = vunpack.c.l.b16 %v3024
        %v3592 = vunpack.c.h.b16 %v3024
        %v3593 = vunpack.c.l.b16 %v3025
        %v3594 = vunpack.c.h.b16 %v3025
        %v3595 = vunpack.c.l.b16 %v3026
        %v3596 = vunpack.c.h.b16 %v3026
        %v3597 = vunpack.c.l.b16 %v3027
        %v3598 = vunpack.c.h.b16 %v3027
        %v3599 = vunpack.c.l.b16 %v3028
        %v3600 = vunpack.c.h.b16 %v3028
        %v3601 = vunpack.c.l.b16 %v3029
        %v3602 = vunpack.c.h.b16 %v3029
        %v3603 = vunpack.c.l.b16 %v3030
        %v3604 = vunpack.c.h.b16 %v3030
        %v3605 = vunpack.c.l.b16 %v3031
        %v3606 = vunpack.c.h.b16 %v3031
        %v3607 = vunpack.c.l.b16 %v3032
        %v3608 = vunpack.c.h.b16 %v3032
        %v3609 = vunpack.c.l.b16 %v3033
        %v3610 = vunpack.c.h.b16 %v3033
        %v3611 = vunpack.c.l.b16 %v3034
        %v3612 = vunpack.c.h.b16 %v3034
        %v3613 = vunpack.c.l.b16 %v3035
        %v3614 = vunpack.c.h.b16 %v3035
        %v3615 = vunpack.c.l.b16 %v3036
        %v3616 = vunpack.c.h.b16 %v3036
        %v3617 = vunpack.c.l.b16 %v3037
        %v3618 = vunpack.c.h.b16 %v3037
        %v3619 = vunpack.c.l.b16 %v3038
        %v3620 = vunpack.c.h.b16 %v3038
        %v3621 = vunpack.c.l.b16 %v3039
        %v3622 = vunpack.c.h.b16 %v3039
        %v3623 = vunpack.c.l.b16 %v3040
        %v3624 = vunpack.c.h.b16 %v3040
        %v3625 = vunpack.c.l.b16 %v3041
        %v3626 = vunpack.c.h.b16 %v3041
        %v3627 = vunpack.c.l.b16 %v3042
        %v3628 = vunpack.c.h.b16 %v3042
        %v3629 = vunpack.c.l.b16 %v3043
        %v3630 = vunpack.c.h.b16 %v3043
        %v3631 = vunpack.c.l.b16 %v3044
        %v3632 = vunpack.c.h.b16 %v3044
        %v3633 = vunpack.c.l.b16 %v3045
        %v3634 = vunpack.c.h.b16 %v3045
        %v3635 = vunpack.c.l.b16 %v3046
        %v3636 = vunpack.c.h.b16 %v3046
        %v3637 = vunpack.c.l.b16 %v3047
        %v3638 = vunpack.c.h.b16 %v3047
        %v3639 = vunpack.c.l.b16 %v3048
        %v3640 = vunpack.c.h.b16 %v3048
        %v3641 = vunpack.c.l.b16 %v3049
        %v3642 = vunpack.c.h.b16 %v3049
        %v3643 = vunpack.c.l.b16 %v3050
        %v3644 = vunpack.c.h.b16 %v3050
        %v3645 = vunpack.c.l.b16 %v3051
        %v3646 = vunpack.c.h.b16 %v3051
        %v3647 = vunpack.c.l.b16 %v3052
        %v3648 = vunpack.c.h.b16 %v3052
        %v3649 = vunpack.c.l.b16 %v3053
        %v3650 = vunpack.c.h.b16 %v3053
        %v3651 = vunpack.c.l.b16 %v3054
        %v3652 = vunpack.c.h.b16 %v3054
        %v3653 = vpack.c.b16 %v3273, %v3269
        %v3654 = vpack.c.b16 %v3274, %v3270
        %v3655 = vpack.c.b16 %v3275, %v3271
        %v3656 = vpack.c.b16 %v3276, %v3272
        %v3657 = vpack.c.b16 %v3281, %v3277
        %v3658 = vpack.c.b16 %v3282, %v3278
        %v3659 = vpack.c.b16 %v3283, %v3279
        %v3660 = vpack.c.b16 %v3284, %v3280
        %v3661 = vpack.c.b16 %v3289, %v3285
        %v3662 = vpack.c.b16 %v3290, %v3286
        %v3663 = vpack.c.b16 %v3291, %v3287
        %v3664 = vpack.c.b16 %v3292, %v3288
        %v3665 = vpack.c.b16 %v3297, %v3293
        %v3666 = vpack.c.b16 %v3298, %v3294
        %v3667 = vpack.c.b16 %v3299, %v3295
        %v3668 = vpack.c.b16 %v3300, %v3296
        %v3669 = vpack.c.b16 %v3305, %v3301
        %v3670 = vpack.c.b16 %v3306, %v3302
        %v3671 = vpack.c.b16 %v3307, %v3303
        %v3672 = vpack.c.b16 %v3308, %v3304
        %v3673 = vpack.c.b16 %v3313, %v3309
        %v3674 = vpack.c.b16 %v3314, %v3310
        %v3675 = vpack.c.b16 %v3315, %v3311
        %v3676 = vpack.c.b16 %v3316, %v3312
        %v3677 = vpack.c.b16 %v3321, %v3317
        %v3678 = vpack.c.b16 %v3322, %v3318
        %v3679 = vpack.c.b16 %v3323, %v3319
        %v3680 = vpack.c.b16 %v3324, %v3320
        %v3681 = vpack.c.b16 %v3329, %v3325
        %v3682 = vpack.c.b16 %v3330, %v3326
        %v3683 = vpack.c.b16 %v3331, %v3327
        %v3684 = vpack.c.b16 %v3332, %v3328
        %v3685 = vpack.c.b16 %v3337, %v3333
        %v3686 = vpack.c.b16 %v3338, %v3334
        %v3687 = vpack.c.b16 %v3339, %v3335
        %v3688 = vpack.c.b16 %v3340, %v3336
        %v3689 = vpack.c.b16 %v3345, %v3341
        %v3690 = vpack.c.b16 %v3346, %v3342
        %v3691 = vpack.c.b16 %v3347, %v3343
        %v3692 = vpack.c.b16 %v3348, %v3344
        %v3693 = vpack.c.b16 %v3353, %v3349
        %v3694 = vpack.c.b16 %v3354, %v3350
        %v3695 = vpack.c.b16 %v3355, %v3351
        %v3696 = vpack.c.b16 %v3356, %v3352
        %v3697 = vpack.c.b16 %v3361, %v3357
        %v3698 = vpack.c.b16 %v3362, %v3358
        %v3699 = vpack.c.b16 %v3363, %v3359
        %v3700 = vpack.c.b16 %v3364, %v3360
        %v3701 = vpack.c.b16 %v3369, %v3365
        %v3702 = vpack.c.b16 %v3370, %v3366
        %v3703 = vpack.c.b16 %v3371, %v3367
        %v3704 = vpack.c.b16 %v3372, %v3368
        %v3705 = vpack.c.b16 %v3377, %v3373
        %v3706 = vpack.c.b16 %v3378, %v3374
        %v3707 = vpack.c.b16 %v3379, %v3375
        %v3708 = vpack.c.b16 %v3380, %v3376
        %v3709 = vpack.c.b16 %v3385, %v3381
        %v3710 = vpack.c.b16 %v3386, %v3382
        %v3711 = vpack.c.b16 %v3387, %v3383
        %v3712 = vpack.c.b16 %v3388, %v3384
        %v3713 = vpack.c.b16 %v3393, %v3389
        %v3714 = vpack.c.b16 %v3394, %v3390
        %v3715 = vpack.c.b16 %v3395, %v3391
        %v3716 = vpack.c.b16 %v3396, %v3392
        %v3717 = vpack.c.b16 %v3401, %v3397
        %v3718 = vpack.c.b16 %v3402, %v3398
        %v3719 = vpack.c.b16 %v3403, %v3399
        %v3720 = vpack.c.b16 %v3404, %v3400
        %v3721 = vpack.c.b16 %v3409, %v3405
        %v3722 = vpack.c.b16 %v3410, %v3406
        %v3723 = vpack.c.b16 %v3411, %v3407
        %v3724 = vpack.c.b16 %v3412, %v3408
        %v3725 = vpack.c.b16 %v3417, %v3413
        %v3726 = vpack.c.b16 %v3418, %v3414
        %v3727 = vpack.c.b16 %v3419, %v3415
        %v3728 = vpack.c.b16 %v3420, %v3416
        %v3729 = vpack.c.b16 %v3425, %v3421
        %v3730 = vpack.c.b16 %v3426, %v3422
        %v3731 = vpack.c.b16 %v3427, %v3423
        %v3732 = vpack.c.b16 %v3428, %v3424
        %v3733 = vpack.c.b16 %v3433, %v3429
        %v3734 = vpack.c.b16 %v3434, %v3430
        %v3735 = vpack.c.b16 %v3435, %v3431
        %v3736 = vpack.c.b16 %v3436, %v3432
        %v3737 = vpack.c.b16 %v3441, %v3437
        %v3738 = vpack.c.b16 %v3442, %v3438
        %v3739 = vpack.c.b16 %v3443, %v3439
        %v3740 = vpack.c.b16 %v3444, %v3440
        %v3741 = vpack.c.b16 %v3449, %v3445
        %v3742 = vpack.c.b16 %v3450, %v3446
        %v3743 = vpack.c.b16 %v3451, %v3447
        %v3744 = vpack.c.b16 %v3452, %v3448
        %v3745 = vpack.c.b16 %v3457, %v3453
        %v3746 = vpack.c.b16 %v3458, %v3454
        %v3747 = vpack.c.b16 %v3459, %v3455
        %v3748 = vpack.c.b16 %v3460, %v3456
        %v3749 = vpack.c.b16 %v3465, %v3461
        %v3750 = vpack.c.b16 %v3466, %v3462
        %v3751 = vpack.c.b16 %v3467, %v3463
        %v3752 = vpack.c.b16 %v3468, %v3464
        %v3753 = vpack.c.b16 %v3473, %v3469
        %v3754 = vpack.c.b16 %v3474, %v3470
        %v3755 = vpack.c.b16 %v3475, %v3471
        %v3756 = vpack.c.b16 %v3476, %v3472
        %v3757 = vpack.c.b16 %v3481, %v3477
        %v3758 = vpack.c.b16 %v3482, %v3478
        %v3759 = vpack.c.b16 %v3483, %v3479
        %v3760 = vpack.c.b16 %v3484, %v3480
        %v3761 = vpack.c.b16 %v3489, %v3485
        %v3762 = vpack.c.b16 %v3490, %v3486
        %v3763 = vpack.c.b16 %v3491, %v3487
        %v3764 = vpack.c.b16 %v3492, %v3488
        %v3765 = vpack.c.b16 %v3497, %v3493
        %v3766 = vpack.c.b16 %v3498, %v3494
        %v3767 = vpack.c.b16 %v3499, %v3495
        %v3768 = vpack.c.b16 %v3500, %v3496
        %v3769 = vpack.c.b16 %v3505, %v3501
        %v3770 = vpack.c.b16 %v3506, %v3502
        %v3771 = vpack.c.b16 %v3507, %v3503
        %v3772 = vpack.c.b16 %v3508, %v3504
        %v3773 = vpack.c.b16 %v3513, %v3509
        %v3774 = vpack.c.b16 %v3514, %v3510
        %v3775 = vpack.c.b16 %v3515, %v3511
        %v3776 = vpack.c.b16 %v3516, %v3512
        %v3777 = vpack.c.b16 %v3521, %v3517
        %v3778 = vpack.c.b16 %v3522, %v3518
        %v3779 = vpack.c.b16 %v3523, %v3519
        %v3780 = vpack.c.b16 %v3524, %v3520
        %v3781 = vpack.c.b16 %v3529, %v3525
        %v3782 = vpack.c.b16 %v3530, %v3526
        %v3783 = vpack.c.b16 %v3531, %v3527
        %v3784 = vpack.c.b16 %v3532, %v3528
        %v3785 = vpack.c.b16 %v3537, %v3533
        %v3786 = vpack.c.b16 %v3538, %v3534
        %v3787 = vpack.c.b16 %v3539, %v3535
        %v3788 = vpack.c.b16 %v3540, %v3536
        %v3789 = vpack.c.b16 %v3545, %v3541
        %v3790 = vpack.c.b16 %v3546, %v3542
        %v3791 = vpack.c.b16 %v3547, %v3543
        %v3792 = vpack.c.b16 %v3548, %v3544
        %v3793 = vpack.c.b16 %v3553, %v3549
        %v3794 = vpack.c.b16 %v3554, %v3550
        %v3795 = vpack.c.b16 %v3555, %v3551
        %v3796 = vpack.c.b16 %v3556, %v3552
        %v3797 = vpack.c.b16 %v3561, %v3557
        %v3798 = vpack.c.b16 %v3562, %v3558
        %v3799 = vpack.c.b16 %v3563, %v3559
        %v3800 = vpack.c.b16 %v3564, %v3560
        %v3801 = vpack.c.b16 %v3569, %v3565
        %v3802 = vpack.c.b16 %v3570, %v3566
        %v3803 = vpack.c.b16 %v3571, %v3567
        %v3804 = vpack.c.b16 %v3572, %v3568
        %v3805 = vpack.c.b16 %v3577, %v3573
        %v3806 = vpack.c.b16 %v3578, %v3574
        %v3807 = vpack.c.b16 %v3579, %v3575
        %v3808 = vpack.c.b16 %v3580, %v3576
        %v3809 = vpack.c.b16 %v3585, %v3581
        %v3810 = vpack.c.b16 %v3586, %v3582
        %v3811 = vpack.c.b16 %v3587, %v3583
        %v3812 = vpack.c.b16 %v3588, %v3584
        %v3813 = vpack.c.b16 %v3593, %v3589
        %v3814 = vpack.c.b16 %v3594, %v3590
        %v3815 = vpack.c.b16 %v3595, %v3591
        %v3816 = vpack.c.b16 %v3596, %v3592
        %v3817 = vpack.c.b16 %v3601, %v3597
        %v3818 = vpack.c.b16 %v3602, %v3598
        %v3819 = vpack.c.b16 %v3603, %v3599
        %v3820 = vpack.c.b16 %v3604, %v3600
        %v3821 = vpack.c.b16 %v3609, %v3605
        %v3822 = vpack.c.b16 %v3610, %v3606
        %v3823 = vpack.c.b16 %v3611, %v3607
        %v3824 = vpack.c.b16 %v3612, %v3608
        %v3825 = vpack.c.b16 %v3617, %v3613
        %v3826 = vpack.c.b16 %v3618, %v3614
        %v3827 = vpack.c.b16 %v3619, %v3615
        %v3828 = vpack.c.b16 %v3620, %v3616
        %v3829 = vpack.c.b16 %v3625, %v3621
        %v3830 = vpack.c.b16 %v3626, %v3622
        %v3831 = vpack.c.b16 %v3627, %v3623
        %v3832 = vpack.c.b16 %v3628, %v3624
        %v3833 = vpack.c.b16 %v3633, %v3629
        %v3834 = vpack.c.b16 %v3634, %v3630
        %v3835 = vpack.c.b16 %v3635, %v3631
        %v3836 = vpack.c.b16 %v3636, %v3632
        %v3837 = vpack.c.b16 %v3641, %v3637
        %v3838 = vpack.c.b16 %v3642, %v3638
        %v3839 = vpack.c.b16 %v3643, %v3639
        %v3840 = vpack.c.b16 %v3644, %v3640
        %v3841 = vpack.c.b16 %v3649, %v3645
        %v3842 = vpack.c.b16 %v3650, %v3646
        %v3843 = vpack.c.b16 %v3651, %v3647
        %v3844 = vpack.c.b16 %v3652, %v3648
        %4037 = vmatprep.subr.bf16.mxu0 %v3654
        %4038 = vmatpush1.bf16.msra.mxu0 %v3653
        %4039 = vmatprep.subr.bf16.mxu0 %v3658
        %4040 = vmatpush1.bf16.msra.mxu0 %v3657
        %4041 = vmatprep.subr.bf16.mxu0 %v3662
        %4042 = vmatpush1.bf16.msra.mxu0 %v3661
        %4043 = vmatprep.subr.bf16.mxu0 %v3666
        %4044 = vmatpush1.bf16.msra.mxu0 %v3665
        %4045 = vmatprep.subr.bf16.mxu0 %v3670
        %4046 = vmatpush1.bf16.msra.mxu0 %v3669
        %4047 = vmatprep.subr.bf16.mxu0 %v3674
        %4048 = vmatpush1.bf16.msra.mxu0 %v3673
        %4049 = vmatprep.subr.bf16.mxu0 %v3678
        %4050 = vmatpush1.bf16.msra.mxu0 %v3677
        %4051 = vmatprep.subr.bf16.mxu0 %v3682
        %4052 = vmatpush1.bf16.msra.mxu0 %v3681
        %4053 = vmatprep.subr.bf16.mxu0 %v3686
        %4054 = vmatpush1.bf16.msra.mxu0 %v3685
        %4055 = vmatprep.subr.bf16.mxu0 %v3690
        %4056 = vmatpush1.bf16.msra.mxu0 %v3689
        %4057 = vmatprep.subr.bf16.mxu0 %v3694
        %4058 = vmatpush1.bf16.msra.mxu0 %v3693
        %4059 = vmatprep.subr.bf16.mxu0 %v3698
        %4060 = vmatpush1.bf16.msra.mxu0 %v3697
        %4061 = vmatprep.subr.bf16.mxu0 %v3702
        %4062 = vmatpush1.bf16.msra.mxu0 %v3701
        %4063 = vmatprep.subr.bf16.mxu0 %v3706
        %4064 = vmatpush1.bf16.msra.mxu0 %v3705
        %4065 = vmatprep.subr.bf16.mxu0 %v3710
        %4066 = vmatpush1.bf16.msra.mxu0 %v3709
        %4067 = vmatprep.subr.bf16.mxu0 %v3714
        %4068 = vmatpush1.bf16.msra.mxu0 %v3713
        %4069 = vmatprep.mubr.bf16.mxu0 %v2794
        %4070 = vmatmul.mubr.bf16.gmra.mrb[0].mxu0 %v2793
        %v4071 = vpop.f32.mrb[0].mxu0
        %v4072 = vadd.f32 %v3060, %v4071
        %v4073 = vpop.f32.mrb[0].mxu0
        %v4074 = vadd.f32 %v3064, %v4073
        %v4075 = vpop.f32.mrb[0].mxu0
        %v4076 = vadd.f32 %v3060, %v4075
        %v4077 = vpop.f32.mrb[0].mxu0
        %v4078 = vadd.f32 %v3064, %v4077
        %4079 = vdwg.mxu0
        %4080 = vmatprep.subr.bf16.mxu0 %v3718
        %4081 = vmatpush1.bf16.msra.mxu0 %v3717
        %4082 = vmatprep.subr.bf16.mxu0 %v3722
        %4083 = vmatpush1.bf16.msra.mxu0 %v3721
        %4084 = vmatprep.subr.bf16.mxu0 %v3726
        %4085 = vmatpush1.bf16.msra.mxu0 %v3725
        %4086 = vmatprep.subr.bf16.mxu0 %v3730
        %4087 = vmatpush1.bf16.msra.mxu0 %v3729
        %4088 = vmatprep.subr.bf16.mxu0 %v3734
        %4089 = vmatpush1.bf16.msra.mxu0 %v3733
        %4090 = vmatprep.subr.bf16.mxu0 %v3738
        %4091 = vmatpush1.bf16.msra.mxu0 %v3737
        %4092 = vmatprep.subr.bf16.mxu0 %v3742
        %4093 = vmatpush1.bf16.msra.mxu0 %v3741
        %4094 = vmatprep.subr.bf16.mxu0 %v3746
        %4095 = vmatpush1.bf16.msra.mxu0 %v3745
        %4096 = vmatprep.subr.bf16.mxu0 %v3750
        %4097 = vmatpush1.bf16.msra.mxu0 %v3749
        %4098 = vmatprep.subr.bf16.mxu0 %v3754
        %4099 = vmatpush1.bf16.msra.mxu0 %v3753
        %4100 = vmatprep.subr.bf16.mxu0 %v3758
        %4101 = vmatpush1.bf16.msra.mxu0 %v3757
        %4102 = vmatprep.subr.bf16.mxu0 %v3762
        %4103 = vmatpush1.bf16.msra.mxu0 %v3761
        %4104 = vmatprep.subr.bf16.mxu0 %v3766
        %4105 = vmatpush1.bf16.msra.mxu0 %v3765
        %4106 = vmatprep.subr.bf16.mxu0 %v3770
        %4107 = vmatpush1.bf16.msra.mxu0 %v3769
        %4108 = vmatprep.subr.bf16.mxu0 %v3774
        %4109 = vmatpush1.bf16.msra.mxu0 %v3773
        %4110 = vmatprep.subr.bf16.mxu0 %v3778
        %4111 = vmatpush1.bf16.msra.mxu0 %v3777
        %4112 = vmatprep.mubr.bf16.mxu0 %v2860
        %4113 = vmatmul.mubr.bf16.gmra.mrb[0].mxu0 %v2859
        %v4114 = vpop.f32.mrb[0].mxu0
        %v4115 = vadd.f32 %v4072, %v4114
        %v4116 = vpop.f32.mrb[0].mxu0
        %v4117 = vadd.f32 %v4074, %v4116
        %v4118 = vpop.f32.mrb[0].mxu0
        %v4119 = vadd.f32 %v4076, %v4118
        %v4120 = vpop.f32.mrb[0].mxu0
        %v4121 = vadd.f32 %v4078, %v4120
        %4122 = vdwg.mxu0
        %4123 = vmatprep.subr.bf16.mxu0 %v3782
        %4124 = vmatpush1.bf16.msra.mxu0 %v3781
        %4125 = vmatprep.subr.bf16.mxu0 %v3786
        %4126 = vmatpush1.bf16.msra.mxu0 %v3785
        %4127 = vmatprep.subr.bf16.mxu0 %v3790
        %4128 = vmatpush1.bf16.msra.mxu0 %v3789
        %4129 = vmatprep.subr.bf16.mxu0 %v3794
        %4130 = vmatpush1.bf16.msra.mxu0 %v3793
        %4131 = vmatprep.subr.bf16.mxu0 %v3798
        %4132 = vmatpush1.bf16.msra.mxu0 %v3797
        %4133 = vmatprep.subr.bf16.mxu0 %v3802
        %4134 = vmatpush1.bf16.msra.mxu0 %v3801
        %4135 = vmatprep.subr.bf16.mxu0 %v3806
        %4136 = vmatpush1.bf16.msra.mxu0 %v3805
        %4137 = vmatprep.subr.bf16.mxu0 %v3810
        %4138 = vmatpush1.bf16.msra.mxu0 %v3809
        %4139 = vmatprep.subr.bf16.mxu0 %v3814
        %4140 = vmatpush1.bf16.msra.mxu0 %v3813
        %4141 = vmatprep.subr.bf16.mxu0 %v3818
        %4142 = vmatpush1.bf16.msra.mxu0 %v3817
        %4143 = vmatprep.subr.bf16.mxu0 %v3822
        %4144 = vmatpush1.bf16.msra.mxu0 %v3821
        %4145 = vmatprep.subr.bf16.mxu0 %v3826
        %4146 = vmatpush1.bf16.msra.mxu0 %v3825
        %4147 = vmatprep.subr.bf16.mxu0 %v3830
        %4148 = vmatpush1.bf16.msra.mxu0 %v3829
        %4149 = vmatprep.subr.bf16.mxu0 %v3834
        %4150 = vmatpush1.bf16.msra.mxu0 %v3833
        %4151 = vmatprep.subr.bf16.mxu0 %v3838
        %4152 = vmatpush1.bf16.msra.mxu0 %v3837
        %4153 = vmatprep.subr.bf16.mxu0 %v3842
        %4154 = vmatpush1.bf16.msra.mxu0 %v3841
        %4155 = vmatprep.mubr.bf16.mxu0 %v2830
        %4156 = vmatmul.mubr.bf16.gmra.mrb[0].mxu0 %v2829
        %v4157 = vpop.f32.mrb[0].mxu0
        %v4158 = vadd.f32 %v4115, %v4157
        %v4159 = vpop.f32.mrb[0].mxu0
        %v4160 = vadd.f32 %v4117, %v4159
        %v4161 = vpop.f32.mrb[0].mxu0
        %v4162 = vadd.f32 %v4119, %v4161
        %v4163 = vpop.f32.mrb[0].mxu0
        %v4164 = vadd.f32 %v4121, %v4163
        %4165 = vdwg.mxu0
        %4166 = vmatprep.subr.bf16.mxu0 %v3656
        %4167 = vmatpush1.bf16.msra.mxu0 %v3655
        %4168 = vmatprep.subr.bf16.mxu0 %v3660
        %4169 = vmatpush1.bf16.msra.mxu0 %v3659
        %4170 = vmatprep.subr.bf16.mxu0 %v3664
        %4171 = vmatpush1.bf16.msra.mxu0 %v3663
        %4172 = vmatprep.subr.bf16.mxu0 %v3668
        %4173 = vmatpush1.bf16.msra.mxu0 %v3667
        %4174 = vmatprep.subr.bf16.mxu0 %v3672
        %4175 = vmatpush1.bf16.msra.mxu0 %v3671
        %4176 = vmatprep.subr.bf16.mxu0 %v3676
        %4177 = vmatpush1.bf16.msra.mxu0 %v3675
        %4178 = vmatprep.subr.bf16.mxu0 %v3680
        %4179 = vmatpush1.bf16.msra.mxu0 %v3679
        %4180 = vmatprep.subr.bf16.mxu0 %v3684
        %4181 = vmatpush1.bf16.msra.mxu0 %v3683
        %4182 = vmatprep.subr.bf16.mxu0 %v3688
        %4183 = vmatpush1.bf16.msra.mxu0 %v3687
        %4184 = vmatprep.subr.bf16.mxu0 %v3692
        %4185 = vmatpush1.bf16.msra.mxu0 %v3691
        %4186 = vmatprep.subr.bf16.mxu0 %v3696
        %4187 = vmatpush1.bf16.msra.mxu0 %v3695
        %4188 = vmatprep.subr.bf16.mxu0 %v3700
        %4189 = vmatpush1.bf16.msra.mxu0 %v3699
        %4190 = vmatprep.subr.bf16.mxu0 %v3704
        %4191 = vmatpush1.bf16.msra.mxu0 %v3703
        %4192 = vmatprep.subr.bf16.mxu0 %v3708
        %4193 = vmatpush1.bf16.msra.mxu0 %v3707
        %4194 = vmatprep.subr.bf16.mxu0 %v3712
        %4195 = vmatpush1.bf16.msra.mxu0 %v3711
        %4196 = vmatprep.subr.bf16.mxu0 %v3716
        %4197 = vmatpush1.bf16.msra.mxu0 %v3715
        %4198 = vmatprep.mubr.bf16.mxu0 %v2794
        %4199 = vmatmul.mubr.bf16.gmra.mrb[0].mxu0 %v2793
        %v4200 = vpop.f32.mrb[0].mxu0
        %v4201 = vadd.f32 %v3068, %v4200
        %v4202 = vpop.f32.mrb[0].mxu0
        %v4203 = vadd.f32 %v3072, %v4202
        %v4204 = vpop.f32.mrb[0].mxu0
        %v4205 = vadd.f32 %v3068, %v4204
        %v4206 = vpop.f32.mrb[0].mxu0
        %v4207 = vadd.f32 %v3072, %v4206
        %4208 = vdwg.mxu0
        %4209 = vmatprep.subr.bf16.mxu0 %v3720
        %4210 = vmatpush1.bf16.msra.mxu0 %v3719
        %4211 = vmatprep.subr.bf16.mxu0 %v3724
        %4212 = vmatpush1.bf16.msra.mxu0 %v3723
        %4213 = vmatprep.subr.bf16.mxu0 %v3728
        %4214 = vmatpush1.bf16.msra.mxu0 %v3727
        %4215 = vmatprep.subr.bf16.mxu0 %v3732
        %4216 = vmatpush1.bf16.msra.mxu0 %v3731
        %4217 = vmatprep.subr.bf16.mxu0 %v3736
        %4218 = vmatpush1.bf16.msra.mxu0 %v3735
        %4219 = vmatprep.subr.bf16.mxu0 %v3740
        %4220 = vmatpush1.bf16.msra.mxu0 %v3739
        %4221 = vmatprep.subr.bf16.mxu0 %v3744
        %4222 = vmatpush1.bf16.msra.mxu0 %v3743
        %4223 = vmatprep.subr.bf16.mxu0 %v3748
        %4224 = vmatpush1.bf16.msra.mxu0 %v3747
        %4225 = vmatprep.subr.bf16.mxu0 %v3752
        %4226 = vmatpush1.bf16.msra.mxu0 %v3751
        %4227 = vmatprep.subr.bf16.mxu0 %v3756
        %4228 = vmatpush1.bf16.msra.mxu0 %v3755
        %4229 = vmatprep.subr.bf16.mxu0 %v3760
        %4230 = vmatpush1.bf16.msra.mxu0 %v3759
        %4231 = vmatprep.subr.bf16.mxu0 %v3764
        %4232 = vmatpush1.bf16.msra.mxu0 %v3763
        %4233 = vmatprep.subr.bf16.mxu0 %v3768
        %4234 = vmatpush1.bf16.msra.mxu0 %v3767
        %4235 = vmatprep.subr.bf16.mxu0 %v3772
        %4236 = vmatpush1.bf16.msra.mxu0 %v3771
        %4237 = vmatprep.subr.bf16.mxu0 %v3776
        %4238 = vmatpush1.bf16.msra.mxu0 %v3775
        %4239 = vmatprep.subr.bf16.mxu0 %v3780
        %4240 = vmatpush1.bf16.msra.mxu0 %v3779
        %4241 = vmatprep.mubr.bf16.mxu0 %v2860
        %4242 = vmatmul.mubr.bf16.gmra.mrb[0].mxu0 %v2859
        %v4243 = vpop.f32.mrb[0].mxu0
        %v4244 = vadd.f32 %v4201, %v4243
        %v4245 = vpop.f32.mrb[0].mxu0
        %v4246 = vadd.f32 %v4203, %v4245
        %v4247 = vpop.f32.mrb[0].mxu0
        %v4248 = vadd.f32 %v4205, %v4247
        %v4249 = vpop.f32.mrb[0].mxu0
        %v4250 = vadd.f32 %v4207, %v4249
        %4251 = vdwg.mxu0
        %4252 = vmatprep.subr.bf16.mxu0 %v3784
        %4253 = vmatpush1.bf16.msra.mxu0 %v3783
        %4254 = vmatprep.subr.bf16.mxu0 %v3788
        %4255 = vmatpush1.bf16.msra.mxu0 %v3787
        %4256 = vmatprep.subr.bf16.mxu0 %v3792
        %4257 = vmatpush1.bf16.msra.mxu0 %v3791
        %4258 = vmatprep.subr.bf16.mxu0 %v3796
        %4259 = vmatpush1.bf16.msra.mxu0 %v3795
        %4260 = vmatprep.subr.bf16.mxu0 %v3800
        %4261 = vmatpush1.bf16.msra.mxu0 %v3799
        %4262 = vmatprep.subr.bf16.mxu0 %v3804
        %4263 = vmatpush1.bf16.msra.mxu0 %v3803
        %4264 = vmatprep.subr.bf16.mxu0 %v3808
        %4265 = vmatpush1.bf16.msra.mxu0 %v3807
        %4266 = vmatprep.subr.bf16.mxu0 %v3812
        %4267 = vmatpush1.bf16.msra.mxu0 %v3811
        %4268 = vmatprep.subr.bf16.mxu0 %v3816
        %4269 = vmatpush1.bf16.msra.mxu0 %v3815
        %4270 = vmatprep.subr.bf16.mxu0 %v3820
        %4271 = vmatpush1.bf16.msra.mxu0 %v3819
        %4272 = vmatprep.subr.bf16.mxu0 %v3824
        %4273 = vmatpush1.bf16.msra.mxu0 %v3823
        %4274 = vmatprep.subr.bf16.mxu0 %v3828
        %4275 = vmatpush1.bf16.msra.mxu0 %v3827
        %4276 = vmatprep.subr.bf16.mxu0 %v3832
        %4277 = vmatpush1.bf16.msra.mxu0 %v3831
        %4278 = vmatprep.subr.bf16.mxu0 %v3836
        %4279 = vmatpush1.bf16.msra.mxu0 %v3835
        %4280 = vmatprep.subr.bf16.mxu0 %v3840
        %4281 = vmatpush1.bf16.msra.mxu0 %v3839
        %4282 = vmatprep.subr.bf16.mxu0 %v3844
        %4283 = vmatpush1.bf16.msra.mxu0 %v3843
        %4284 = vmatprep.mubr.bf16.mxu0 %v2830
        %4285 = vmatmul.mubr.bf16.gmra.mrb[0].mxu0 %v2829
        %v4286 = vpop.f32.mrb[0].mxu0
        %v4287 = vadd.f32 %v4244, %v4286
        %v4288 = vpop.f32.mrb[0].mxu0
        %v4289 = vadd.f32 %v4246, %v4288
        %v4290 = vpop.f32.mrb[0].mxu0
        %v4291 = vadd.f32 %v4248, %v4290
        %v4292 = vpop.f32.mrb[0].mxu0
        %v4293 = vadd.f32 %v4250, %v4292
        %4294 = vdwg.mxu0
        %v4295 = vmax.f32 %v4158, 0.0
        %v4296 = vmax.f32 %v4160, 0.0
        %v4297 = vmax.f32 %v4287, 0.0
        %v4298 = vmax.f32 %v4289, 0.0
        %v4299 = vmax.f32 %v4162, 0.0
        %v4300 = vmax.f32 %v4164, 0.0
        %v4301 = vmax.f32 %v4291, 0.0
        %v4302 = vmax.f32 %v4293, 0.0
        %v4303 = vpack.c.bf16 %v4299, %v4295
        %v4304 = vpack.c.bf16 %v4300, %v4296
        %v4305 = vpack.c.bf16 %v4301, %v4297
        %v4306 = vpack.c.bf16 %v4302, %v4298
        %v4307 = vld [vmem:[#allocation12] sm:$0xff]
        %v4308 = vld [vmem:[#allocation12 + $0x8] sm:$0xff]
        %v4309 = vld [vmem:[#allocation12 + $0x10] sm:$0xff]
        %v4310 = vld [vmem:[#allocation12 + $0x18] sm:$0xff]
        %v4311 = vld [vmem:[#allocation12 + $0x20] sm:$0xff]
        %v4312 = vld [vmem:[#allocation12 + $0x28] sm:$0xff]
        %v4313 = vld [vmem:[#allocation12 + $0x30] sm:$0xff]
        %v4314 = vld [vmem:[#allocation12 + $0x38] sm:$0xff]
        %v4315 = vld [vmem:[#allocation12 + $0x40] sm:$0xff]
        %v4316 = vld [vmem:[#allocation12 + $0x48] sm:$0xff]
        %v4317 = vld [vmem:[#allocation12 + $0x50] sm:$0xff]
        %v4318 = vld [vmem:[#allocation12 + $0x58] sm:$0xff]
        %v4319 = vld [vmem:[#allocation12 + $0x60] sm:$0xff]
        %v4320 = vld [vmem:[#allocation12 + $0x68] sm:$0xff]
        %v4321 = vld [vmem:[#allocation12 + $0x70] sm:$0xff]
        %v4322 = vld [vmem:[#allocation12 + $0x78] sm:$0xff]
        %v4323 = vld [vmem:[#allocation12 + $0x80] sm:$0xff]
        %v4324 = vld [vmem:[#allocation12 + $0x88] sm:$0xff]
        %v4325 = vld [vmem:[#allocation12 + $0x90] sm:$0xff]
        %v4326 = vld [vmem:[#allocation12 + $0x98] sm:$0xff]
        %v4327 = vld [vmem:[#allocation12 + $0xa0] sm:$0xff]
        %v4328 = vld [vmem:[#allocation12 + $0xa8] sm:$0xff]
        %v4329 = vld [vmem:[#allocation12 + $0xb0] sm:$0xff]
        %v4330 = vld [vmem:[#allocation12 + $0xb8] sm:$0xff]
        %v4331 = vld [vmem:[#allocation12 + $0xc0] sm:$0xff]
        %v4332 = vld [vmem:[#allocation12 + $0xc8] sm:$0xff]
        %v4333 = vld [vmem:[#allocation12 + $0xd0] sm:$0xff]
        %v4334 = vld [vmem:[#allocation12 + $0xd8] sm:$0xff]
        %v4335 = vld [vmem:[#allocation12 + $0xe0] sm:$0xff]
        %v4336 = vld [vmem:[#allocation12 + $0xe8] sm:$0xff]
        %v4337 = vld [vmem:[#allocation12 + $0xf0] sm:$0xff]
        %v4338 = vld [vmem:[#allocation12 + $0xf8] sm:$0xff]
        %v4339 = vld [vmem:[#allocation12 + $0x100] sm:$0xff]
        %v4340 = vld [vmem:[#allocation12 + $0x108] sm:$0xff]
        %v4341 = vld [vmem:[#allocation12 + $0x110] sm:$0xff]
        %v4342 = vld [vmem:[#allocation12 + $0x118] sm:$0xff]
        %v4343 = vld [vmem:[#allocation12 + $0x120] sm:$0xff]
        %v4344 = vld [vmem:[#allocation12 + $0x128] sm:$0xff]
        %v4345 = vld [vmem:[#allocation12 + $0x130] sm:$0xff]
        %v4346 = vld [vmem:[#allocation12 + $0x138] sm:$0xff]
        %v4347 = vld [vmem:[#allocation12 + $0x140] sm:$0xff]
        %v4348 = vld [vmem:[#allocation12 + $0x148] sm:$0xff]
        %v4349 = vld [vmem:[#allocation12 + $0x150] sm:$0xff]
        %v4350 = vld [vmem:[#allocation12 + $0x158] sm:$0xff]
        %v4351 = vld [vmem:[#allocation12 + $0x160] sm:$0xff]
        %v4352 = vld [vmem:[#allocation12 + $0x168] sm:$0xff]
        %v4353 = vld [vmem:[#allocation12 + $0x170] sm:$0xff]
        %v4354 = vld [vmem:[#allocation12 + $0x178] sm:$0xff]
        %v4355 = vld [vmem:[#allocation12 + $0x180] sm:$0xff]
        %v4356 = vld [vmem:[#allocation12 + $0x188] sm:$0xff]
        %v4357 = vld [vmem:[#allocation12 + $0x190] sm:$0xff]
        %v4358 = vld [vmem:[#allocation12 + $0x198] sm:$0xff]
        %v4359 = vld [vmem:[#allocation12 + $0x1a0] sm:$0xff]
        %v4360 = vld [vmem:[#allocation12 + $0x1a8] sm:$0xff]
        %v4361 = vld [vmem:[#allocation12 + $0x1b0] sm:$0xff]
        %v4362 = vld [vmem:[#allocation12 + $0x1b8] sm:$0xff]
        %v4363 = vld [vmem:[#allocation12 + $0x1c0] sm:$0xff]
        %v4364 = vld [vmem:[#allocation12 + $0x1c8] sm:$0xff]
        %v4365 = vld [vmem:[#allocation12 + $0x1d0] sm:$0xff]
        %v4366 = vld [vmem:[#allocation12 + $0x1d8] sm:$0xff]
        %v4367 = vld [vmem:[#allocation12 + $0x1e0] sm:$0xff]
        %v4368 = vld [vmem:[#allocation12 + $0x1e8] sm:$0xff]
        %v4369 = vld [vmem:[#allocation12 + $0x1f0] sm:$0xff]
        %v4370 = vld [vmem:[#allocation12 + $0x1f8] sm:$0xff]
        %v4435 = vunpack.c.l.b16 %v4307
        %v4436 = vunpack.c.h.b16 %v4307
        %v4437 = vunpack.c.l.b16 %v4308
        %v4438 = vunpack.c.h.b16 %v4308
        %v4439 = vunpack.c.l.b16 %v4309
        %v4440 = vunpack.c.h.b16 %v4309
        %v4441 = vunpack.c.l.b16 %v4310
        %v4442 = vunpack.c.h.b16 %v4310
        %v4443 = vunpack.c.l.b16 %v4311
        %v4444 = vunpack.c.h.b16 %v4311
        %v4445 = vunpack.c.l.b16 %v4312
        %v4446 = vunpack.c.h.b16 %v4312
        %v4447 = vunpack.c.l.b16 %v4313
        %v4448 = vunpack.c.h.b16 %v4313
        %v4449 = vunpack.c.l.b16 %v4314
        %v4450 = vunpack.c.h.b16 %v4314
        %v4451 = vunpack.c.l.b16 %v4315
        %v4452 = vunpack.c.h.b16 %v4315
        %v4453 = vunpack.c.l.b16 %v4316
        %v4454 = vunpack.c.h.b16 %v4316
        %v4455 = vunpack.c.l.b16 %v4317
        %v4456 = vunpack.c.h.b16 %v4317
        %v4457 = vunpack.c.l.b16 %v4318
        %v4458 = vunpack.c.h.b16 %v4318
        %v4459 = vunpack.c.l.b16 %v4319
        %v4460 = vunpack.c.h.b16 %v4319
        %v4461 = vunpack.c.l.b16 %v4320
        %v4462 = vunpack.c.h.b16 %v4320
        %v4463 = vunpack.c.l.b16 %v4321
        %v4464 = vunpack.c.h.b16 %v4321
        %v4465 = vunpack.c.l.b16 %v4322
        %v4466 = vunpack.c.h.b16 %v4322
        %v4467 = vunpack.c.l.b16 %v4323
        %v4468 = vunpack.c.h.b16 %v4323
        %v4469 = vunpack.c.l.b16 %v4324
        %v4470 = vunpack.c.h.b16 %v4324
        %v4471 = vunpack.c.l.b16 %v4325
        %v4472 = vunpack.c.h.b16 %v4325
        %v4473 = vunpack.c.l.b16 %v4326
        %v4474 = vunpack.c.h.b16 %v4326
        %v4475 = vunpack.c.l.b16 %v4327
        %v4476 = vunpack.c.h.b16 %v4327
        %v4477 = vunpack.c.l.b16 %v4328
        %v4478 = vunpack.c.h.b16 %v4328
        %v4479 = vunpack.c.l.b16 %v4329
        %v4480 = vunpack.c.h.b16 %v4329
        %v4481 = vunpack.c.l.b16 %v4330
        %v4482 = vunpack.c.h.b16 %v4330
        %v4483 = vunpack.c.l.b16 %v4331
        %v4484 = vunpack.c.h.b16 %v4331
        %v4485 = vunpack.c.l.b16 %v4332
        %v4486 = vunpack.c.h.b16 %v4332
        %v4487 = vunpack.c.l.b16 %v4333
        %v4488 = vunpack.c.h.b16 %v4333
        %v4489 = vunpack.c.l.b16 %v4334
        %v4490 = vunpack.c.h.b16 %v4334
        %v4491 = vunpack.c.l.b16 %v4335
        %v4492 = vunpack.c.h.b16 %v4335
        %v4493 = vunpack.c.l.b16 %v4336
        %v4494 = vunpack.c.h.b16 %v4336
        %v4495 = vunpack.c.l.b16 %v4337
        %v4496 = vunpack.c.h.b16 %v4337
        %v4497 = vunpack.c.l.b16 %v4338
        %v4498 = vunpack.c.h.b16 %v4338
        %v4499 = vunpack.c.l.b16 %v4339
        %v4500 = vunpack.c.h.b16 %v4339
        %v4501 = vunpack.c.l.b16 %v4340
        %v4502 = vunpack.c.h.b16 %v4340
        %v4503 = vunpack.c.l.b16 %v4341
        %v4504 = vunpack.c.h.b16 %v4341
        %v4505 = vunpack.c.l.b16 %v4342
        %v4506 = vunpack.c.h.b16 %v4342
        %v4507 = vunpack.c.l.b16 %v4343
        %v4508 = vunpack.c.h.b16 %v4343
        %v4509 = vunpack.c.l.b16 %v4344
        %v4510 = vunpack.c.h.b16 %v4344
        %v4511 = vunpack.c.l.b16 %v4345
        %v4512 = vunpack.c.h.b16 %v4345
        %v4513 = vunpack.c.l.b16 %v4346
        %v4514 = vunpack.c.h.b16 %v4346
        %v4515 = vunpack.c.l.b16 %v4347
        %v4516 = vunpack.c.h.b16 %v4347
        %v4517 = vunpack.c.l.b16 %v4348
        %v4518 = vunpack.c.h.b16 %v4348
        %v4519 = vunpack.c.l.b16 %v4349
        %v4520 = vunpack.c.h.b16 %v4349
        %v4521 = vunpack.c.l.b16 %v4350
        %v4522 = vunpack.c.h.b16 %v4350
        %v4523 = vunpack.c.l.b16 %v4351
        %v4524 = vunpack.c.h.b16 %v4351
        %v4525 = vunpack.c.l.b16 %v4352
        %v4526 = vunpack.c.h.b16 %v4352
        %v4527 = vunpack.c.l.b16 %v4353
        %v4528 = vunpack.c.h.b16 %v4353
        %v4529 = vunpack.c.l.b16 %v4354
        %v4530 = vunpack.c.h.b16 %v4354
        %v4531 = vunpack.c.l.b16 %v4355
        %v4532 = vunpack.c.h.b16 %v4355
        %v4533 = vunpack.c.l.b16 %v4356
        %v4534 = vunpack.c.h.b16 %v4356
        %v4535 = vunpack.c.l.b16 %v4357
        %v4536 = vunpack.c.h.b16 %v4357
        %v4537 = vunpack.c.l.b16 %v4358
        %v4538 = vunpack.c.h.b16 %v4358
        %v4539 = vunpack.c.l.b16 %v4359
        %v4540 = vunpack.c.h.b16 %v4359
        %v4541 = vunpack.c.l.b16 %v4360
        %v4542 = vunpack.c.h.b16 %v4360
        %v4543 = vunpack.c.l.b16 %v4361
        %v4544 = vunpack.c.h.b16 %v4361
        %v4545 = vunpack.c.l.b16 %v4362
        %v4546 = vunpack.c.h.b16 %v4362
        %v4547 = vunpack.c.l.b16 %v4363
        %v4548 = vunpack.c.h.b16 %v4363
        %v4549 = vunpack.c.l.b16 %v4364
        %v4550 = vunpack.c.h.b16 %v4364
        %v4551 = vunpack.c.l.b16 %v4365
        %v4552 = vunpack.c.h.b16 %v4365
        %v4553 = vunpack.c.l.b16 %v4366
        %v4554 = vunpack.c.h.b16 %v4366
        %v4555 = vunpack.c.l.b16 %v4367
        %v4556 = vunpack.c.h.b16 %v4367
        %v4557 = vunpack.c.l.b16 %v4368
        %v4558 = vunpack.c.h.b16 %v4368
        %v4559 = vunpack.c.l.b16 %v4369
        %v4560 = vunpack.c.h.b16 %v4369
        %v4561 = vunpack.c.l.b16 %v4370
        %v4562 = vunpack.c.h.b16 %v4370
        %v4563 = vpack.c.b16 %v4437, %v4435
        %v4564 = vpack.c.b16 %v4438, %v4436
        %v4565 = vpack.c.b16 %v4441, %v4439
        %v4566 = vpack.c.b16 %v4442, %v4440
        %v4567 = vpack.c.b16 %v4445, %v4443
        %v4568 = vpack.c.b16 %v4446, %v4444
        %v4569 = vpack.c.b16 %v4449, %v4447
        %v4570 = vpack.c.b16 %v4450, %v4448
        %v4571 = vpack.c.b16 %v4453, %v4451
        %v4572 = vpack.c.b16 %v4454, %v4452
        %v4573 = vpack.c.b16 %v4457, %v4455
        %v4574 = vpack.c.b16 %v4458, %v4456
        %v4575 = vpack.c.b16 %v4461, %v4459
        %v4576 = vpack.c.b16 %v4462, %v4460
        %v4577 = vpack.c.b16 %v4465, %v4463
        %v4578 = vpack.c.b16 %v4466, %v4464
        %v4579 = vpack.c.b16 %v4469, %v4467
        %v4580 = vpack.c.b16 %v4470, %v4468
        %v4581 = vpack.c.b16 %v4473, %v4471
        %v4582 = vpack.c.b16 %v4474, %v4472
        %v4583 = vpack.c.b16 %v4477, %v4475
        %v4584 = vpack.c.b16 %v4478, %v4476
        %v4585 = vpack.c.b16 %v4481, %v4479
        %v4586 = vpack.c.b16 %v4482, %v4480
        %v4587 = vpack.c.b16 %v4485, %v4483
        %v4588 = vpack.c.b16 %v4486, %v4484
        %v4589 = vpack.c.b16 %v4489, %v4487
        %v4590 = vpack.c.b16 %v4490, %v4488
        %v4591 = vpack.c.b16 %v4493, %v4491
        %v4592 = vpack.c.b16 %v4494, %v4492
        %v4593 = vpack.c.b16 %v4497, %v4495
        %v4594 = vpack.c.b16 %v4498, %v4496
        %v4595 = vpack.c.b16 %v4501, %v4499
        %v4596 = vpack.c.b16 %v4502, %v4500
        %v4597 = vpack.c.b16 %v4505, %v4503
        %v4598 = vpack.c.b16 %v4506, %v4504
        %v4599 = vpack.c.b16 %v4509, %v4507
        %v4600 = vpack.c.b16 %v4510, %v4508
        %v4601 = vpack.c.b16 %v4513, %v4511
        %v4602 = vpack.c.b16 %v4514, %v4512
        %v4603 = vpack.c.b16 %v4517, %v4515
        %v4604 = vpack.c.b16 %v4518, %v4516
        %v4605 = vpack.c.b16 %v4521, %v4519
        %v4606 = vpack.c.b16 %v4522, %v4520
        %v4607 = vpack.c.b16 %v4525, %v4523
        %v4608 = vpack.c.b16 %v4526, %v4524
        %v4609 = vpack.c.b16 %v4529, %v4527
        %v4610 = vpack.c.b16 %v4530, %v4528
        %v4611 = vpack.c.b16 %v4533, %v4531
        %v4612 = vpack.c.b16 %v4534, %v4532
        %v4613 = vpack.c.b16 %v4537, %v4535
        %v4614 = vpack.c.b16 %v4538, %v4536
        %v4615 = vpack.c.b16 %v4541, %v4539
        %v4616 = vpack.c.b16 %v4542, %v4540
        %v4617 = vpack.c.b16 %v4545, %v4543
        %v4618 = vpack.c.b16 %v4546, %v4544
        %v4619 = vpack.c.b16 %v4549, %v4547
        %v4620 = vpack.c.b16 %v4550, %v4548
        %v4621 = vpack.c.b16 %v4553, %v4551
        %v4622 = vpack.c.b16 %v4554, %v4552
        %v4623 = vpack.c.b16 %v4557, %v4555
        %v4624 = vpack.c.b16 %v4558, %v4556
        %v4625 = vpack.c.b16 %v4561, %v4559
        %v4626 = vpack.c.b16 %v4562, %v4560
        %4691 = vmatprep.subr.bf16.mxu0 %v4564
        %4692 = vmatpush1.bf16.msra.mxu0 %v4563
        %4693 = vmatprep.subr.bf16.mxu0 %v4566
        %4694 = vmatpush1.bf16.msra.mxu0 %v4565
        %4695 = vmatprep.subr.bf16.mxu0 %v4568
        %4696 = vmatpush1.bf16.msra.mxu0 %v4567
        %4697 = vmatprep.subr.bf16.mxu0 %v4570
        %4698 = vmatpush1.bf16.msra.mxu0 %v4569
        %4699 = vmatprep.subr.bf16.mxu0 %v4572
        %4700 = vmatpush1.bf16.msra.mxu0 %v4571
        %4701 = vmatprep.subr.bf16.mxu0 %v4574
        %4702 = vmatpush1.bf16.msra.mxu0 %v4573
        %4703 = vmatprep.subr.bf16.mxu0 %v4576
        %4704 = vmatpush1.bf16.msra.mxu0 %v4575
        %4705 = vmatprep.subr.bf16.mxu0 %v4578
        %4706 = vmatpush1.bf16.msra.mxu0 %v4577
        %4707 = vmatprep.subr.bf16.mxu0 %v4580
        %4708 = vmatpush1.bf16.msra.mxu0 %v4579
        %4709 = vmatprep.subr.bf16.mxu0 %v4582
        %4710 = vmatpush1.bf16.msra.mxu0 %v4581
        %4711 = vmatprep.subr.bf16.mxu0 %v4584
        %4712 = vmatpush1.bf16.msra.mxu0 %v4583
        %4713 = vmatprep.subr.bf16.mxu0 %v4586
        %4714 = vmatpush1.bf16.msra.mxu0 %v4585
        %4715 = vmatprep.subr.bf16.mxu0 %v4588
        %4716 = vmatpush1.bf16.msra.mxu0 %v4587
        %4717 = vmatprep.subr.bf16.mxu0 %v4590
        %4718 = vmatpush1.bf16.msra.mxu0 %v4589
        %4719 = vmatprep.subr.bf16.mxu0 %v4592
        %4720 = vmatpush1.bf16.msra.mxu0 %v4591
        %4721 = vmatprep.subr.bf16.mxu0 %v4594
        %4722 = vmatpush1.bf16.msra.mxu0 %v4593
        %4723 = vmatprep.mubr.bf16.mxu0 %v4304
        %4724 = vmatmul.mubr.bf16.gmra.mrb[0].mxu0 %v4303
        %v4725 = vpop.f32.mrb[0].mxu0
        %v4726 = vadd.f32 0.0, %v4725
        %v4727 = vpop.f32.mrb[0].mxu0
        %v4728 = vadd.f32 0.0, %v4727
        %v4729 = vpop.f32.mrb[0].mxu0
        %v4730 = vadd.f32 0.0, %v4729
        %v4731 = vpop.f32.mrb[0].mxu0
        %v4732 = vadd.f32 0.0, %v4731
        %4733 = vdwg.mxu0
        %4734 = vmatprep.subr.bf16.mxu0 %v4596
        %4735 = vmatpush1.bf16.msra.mxu0 %v4595
        %4736 = vmatprep.subr.bf16.mxu0 %v4598
        %4737 = vmatpush1.bf16.msra.mxu0 %v4597
        %4738 = vmatprep.subr.bf16.mxu0 %v4600
        %4739 = vmatpush1.bf16.msra.mxu0 %v4599
        %4740 = vmatprep.subr.bf16.mxu0 %v4602
        %4741 = vmatpush1.bf16.msra.mxu0 %v4601
        %4742 = vmatprep.subr.bf16.mxu0 %v4604
        %4743 = vmatpush1.bf16.msra.mxu0 %v4603
        %4744 = vmatprep.subr.bf16.mxu0 %v4606
        %4745 = vmatpush1.bf16.msra.mxu0 %v4605
        %4746 = vmatprep.subr.bf16.mxu0 %v4608
        %4747 = vmatpush1.bf16.msra.mxu0 %v4607
        %4748 = vmatprep.subr.bf16.mxu0 %v4610
        %4749 = vmatpush1.bf16.msra.mxu0 %v4609
        %4750 = vmatprep.subr.bf16.mxu0 %v4612
        %4751 = vmatpush1.bf16.msra.mxu0 %v4611
        %4752 = vmatprep.subr.bf16.mxu0 %v4614
        %4753 = vmatpush1.bf16.msra.mxu0 %v4613
        %4754 = vmatprep.subr.bf16.mxu0 %v4616
        %4755 = vmatpush1.bf16.msra.mxu0 %v4615
        %4756 = vmatprep.subr.bf16.mxu0 %v4618
        %4757 = vmatpush1.bf16.msra.mxu0 %v4617
        %4758 = vmatprep.subr.bf16.mxu0 %v4620
        %4759 = vmatpush1.bf16.msra.mxu0 %v4619
        %4760 = vmatprep.subr.bf16.mxu0 %v4622
        %4761 = vmatpush1.bf16.msra.mxu0 %v4621
        %4762 = vmatprep.subr.bf16.mxu0 %v4624
        %4763 = vmatpush1.bf16.msra.mxu0 %v4623
        %4764 = vmatprep.subr.bf16.mxu0 %v4626
        %4765 = vmatpush1.bf16.msra.mxu0 %v4625
        %4766 = vmatprep.mubr.bf16.mxu0 %v4306
        %4767 = vmatmul.mubr.bf16.gmra.mrb[0].mxu0 %v4305
        %v4768 = vpop.f32.mrb[0].mxu0
        %v4769 = vadd.f32 %v4726, %v4768
        %v4770 = vpop.f32.mrb[0].mxu0
        %v4771 = vadd.f32 %v4728, %v4770
        %v4772 = vpop.f32.mrb[0].mxu0
        %v4773 = vadd.f32 %v4730, %v4772
        %v4774 = vpop.f32.mrb[0].mxu0
        %v4775 = vadd.f32 %v4732, %v4774
        %4776 = vdwg.mxu0
        %v4777 = vld [vmem:[#allocation13] sm:$0xff]
        %v4778 = vld [vmem:[#allocation13 + $0x8] sm:$0xff]
        %v4779 = vld [vmem:[#allocation13 + $0x10] sm:$0xff]
        %v4780 = vld [vmem:[#allocation13 + $0x18] sm:$0xff]
        %v4781 = vld [vmem:[#allocation13 + $0x20] sm:$0xff]
        %v4782 = vld [vmem:[#allocation13 + $0x28] sm:$0xff]
        %v4783 = vld [vmem:[#allocation13 + $0x30] sm:$0xff]
        %v4784 = vld [vmem:[#allocation13 + $0x38] sm:$0xff]
        %v4785 = vld [vmem:[#allocation13 + $0x40] sm:$0xff]
        %v4786 = vld [vmem:[#allocation13 + $0x48] sm:$0xff]
        %v4787 = vld [vmem:[#allocation13 + $0x50] sm:$0xff]
        %v4788 = vld [vmem:[#allocation13 + $0x58] sm:$0xff]
        %v4789 = vld [vmem:[#allocation13 + $0x60] sm:$0xff]
        %v4790 = vld [vmem:[#allocation13 + $0x68] sm:$0xff]
        %v4791 = vld [vmem:[#allocation13 + $0x70] sm:$0xff]
        %v4792 = vld [vmem:[#allocation13 + $0x78] sm:$0xff]
        %v4793 = vld [vmem:[#allocation13 + $0x80] sm:$0xff]
        %v4794 = vld [vmem:[#allocation13 + $0x88] sm:$0xff]
        %v4795 = vld [vmem:[#allocation13 + $0x90] sm:$0xff]
        %v4796 = vld [vmem:[#allocation13 + $0x98] sm:$0xff]
        %v4797 = vld [vmem:[#allocation13 + $0xa0] sm:$0xff]
        %v4798 = vld [vmem:[#allocation13 + $0xa8] sm:$0xff]
        %v4799 = vld [vmem:[#allocation13 + $0xb0] sm:$0xff]
        %v4800 = vld [vmem:[#allocation13 + $0xb8] sm:$0xff]
        %v4801 = vld [vmem:[#allocation13 + $0xc0] sm:$0xff]
        %v4802 = vld [vmem:[#allocation13 + $0xc8] sm:$0xff]
        %v4803 = vld [vmem:[#allocation13 + $0xd0] sm:$0xff]
        %v4804 = vld [vmem:[#allocation13 + $0xd8] sm:$0xff]
        %v4805 = vld [vmem:[#allocation13 + $0xe0] sm:$0xff]
        %v4806 = vld [vmem:[#allocation13 + $0xe8] sm:$0xff]
        %v4807 = vld [vmem:[#allocation13 + $0xf0] sm:$0xff]
        %v4808 = vld [vmem:[#allocation13 + $0xf8] sm:$0xff]
        %v4809 = vld [vmem:[#allocation13 + $0x100] sm:$0xff]
        %v4810 = vld [vmem:[#allocation13 + $0x108] sm:$0xff]
        %v4811 = vld [vmem:[#allocation13 + $0x110] sm:$0xff]
        %v4812 = vld [vmem:[#allocation13 + $0x118] sm:$0xff]
        %v4813 = vld [vmem:[#allocation13 + $0x120] sm:$0xff]
        %v4814 = vld [vmem:[#allocation13 + $0x128] sm:$0xff]
        %v4815 = vld [vmem:[#allocation13 + $0x130] sm:$0xff]
        %v4816 = vld [vmem:[#allocation13 + $0x138] sm:$0xff]
        %v4817 = vld [vmem:[#allocation13 + $0x140] sm:$0xff]
        %v4818 = vld [vmem:[#allocation13 + $0x148] sm:$0xff]
        %v4819 = vld [vmem:[#allocation13 + $0x150] sm:$0xff]
        %v4820 = vld [vmem:[#allocation13 + $0x158] sm:$0xff]
        %v4821 = vld [vmem:[#allocation13 + $0x160] sm:$0xff]
        %v4822 = vld [vmem:[#allocation13 + $0x168] sm:$0xff]
        %v4823 = vld [vmem:[#allocation13 + $0x170] sm:$0xff]
        %v4824 = vld [vmem:[#allocation13 + $0x178] sm:$0xff]
        %v4825 = vld [vmem:[#allocation13 + $0x180] sm:$0xff]
        %v4826 = vld [vmem:[#allocation13 + $0x188] sm:$0xff]
        %v4827 = vld [vmem:[#allocation13 + $0x190] sm:$0xff]
        %v4828 = vld [vmem:[#allocation13 + $0x198] sm:$0xff]
        %v4829 = vld [vmem:[#allocation13 + $0x1a0] sm:$0xff]
        %v4830 = vld [vmem:[#allocation13 + $0x1a8] sm:$0xff]
        %v4831 = vld [vmem:[#allocation13 + $0x1b0] sm:$0xff]
        %v4832 = vld [vmem:[#allocation13 + $0x1b8] sm:$0xff]
        %v4833 = vld [vmem:[#allocation13 + $0x1c0] sm:$0xff]
        %v4834 = vld [vmem:[#allocation13 + $0x1c8] sm:$0xff]
        %v4835 = vld [vmem:[#allocation13 + $0x1d0] sm:$0xff]
        %v4836 = vld [vmem:[#allocation13 + $0x1d8] sm:$0xff]
        %v4837 = vld [vmem:[#allocation13 + $0x1e0] sm:$0xff]
        %v4838 = vld [vmem:[#allocation13 + $0x1e8] sm:$0xff]
        %v4839 = vld [vmem:[#allocation13 + $0x1f0] sm:$0xff]
        %v4840 = vld [vmem:[#allocation13 + $0x1f8] sm:$0xff]
        %v4905 = vunpack.c.l.b16 %v4777
        %v4906 = vunpack.c.h.b16 %v4777
        %v4907 = vunpack.c.l.b16 %v4778
        %v4908 = vunpack.c.h.b16 %v4778
        %v4909 = vunpack.c.l.b16 %v4779
        %v4910 = vunpack.c.h.b16 %v4779
        %v4911 = vunpack.c.l.b16 %v4780
        %v4912 = vunpack.c.h.b16 %v4780
        %v4913 = vunpack.c.l.b16 %v4781
        %v4914 = vunpack.c.h.b16 %v4781
        %v4915 = vunpack.c.l.b16 %v4782
        %v4916 = vunpack.c.h.b16 %v4782
        %v4917 = vunpack.c.l.b16 %v4783
        %v4918 = vunpack.c.h.b16 %v4783
        %v4919 = vunpack.c.l.b16 %v4784
        %v4920 = vunpack.c.h.b16 %v4784
        %v4921 = vunpack.c.l.b16 %v4785
        %v4922 = vunpack.c.h.b16 %v4785
        %v4923 = vunpack.c.l.b16 %v4786
        %v4924 = vunpack.c.h.b16 %v4786
        %v4925 = vunpack.c.l.b16 %v4787
        %v4926 = vunpack.c.h.b16 %v4787
        %v4927 = vunpack.c.l.b16 %v4788
        %v4928 = vunpack.c.h.b16 %v4788
        %v4929 = vunpack.c.l.b16 %v4789
        %v4930 = vunpack.c.h.b16 %v4789
        %v4931 = vunpack.c.l.b16 %v4790
        %v4932 = vunpack.c.h.b16 %v4790
        %v4933 = vunpack.c.l.b16 %v4791
        %v4934 = vunpack.c.h.b16 %v4791
        %v4935 = vunpack.c.l.b16 %v4792
        %v4936 = vunpack.c.h.b16 %v4792
        %v4937 = vunpack.c.l.b16 %v4793
        %v4938 = vunpack.c.h.b16 %v4793
        %v4939 = vunpack.c.l.b16 %v4794
        %v4940 = vunpack.c.h.b16 %v4794
        %v4941 = vunpack.c.l.b16 %v4795
        %v4942 = vunpack.c.h.b16 %v4795
        %v4943 = vunpack.c.l.b16 %v4796
        %v4944 = vunpack.c.h.b16 %v4796
        %v4945 = vunpack.c.l.b16 %v4797
        %v4946 = vunpack.c.h.b16 %v4797
        %v4947 = vunpack.c.l.b16 %v4798
        %v4948 = vunpack.c.h.b16 %v4798
        %v4949 = vunpack.c.l.b16 %v4799
        %v4950 = vunpack.c.h.b16 %v4799
        %v4951 = vunpack.c.l.b16 %v4800
        %v4952 = vunpack.c.h.b16 %v4800
        %v4953 = vunpack.c.l.b16 %v4801
        %v4954 = vunpack.c.h.b16 %v4801
        %v4955 = vunpack.c.l.b16 %v4802
        %v4956 = vunpack.c.h.b16 %v4802
        %v4957 = vunpack.c.l.b16 %v4803
        %v4958 = vunpack.c.h.b16 %v4803
        %v4959 = vunpack.c.l.b16 %v4804
        %v4960 = vunpack.c.h.b16 %v4804
        %v4961 = vunpack.c.l.b16 %v4805
        %v4962 = vunpack.c.h.b16 %v4805
        %v4963 = vunpack.c.l.b16 %v4806
        %v4964 = vunpack.c.h.b16 %v4806
        %v4965 = vunpack.c.l.b16 %v4807
        %v4966 = vunpack.c.h.b16 %v4807
        %v4967 = vunpack.c.l.b16 %v4808
        %v4968 = vunpack.c.h.b16 %v4808
        %v4969 = vunpack.c.l.b16 %v4809
        %v4970 = vunpack.c.h.b16 %v4809
        %v4971 = vunpack.c.l.b16 %v4810
        %v4972 = vunpack.c.h.b16 %v4810
        %v4973 = vunpack.c.l.b16 %v4811
        %v4974 = vunpack.c.h.b16 %v4811
        %v4975 = vunpack.c.l.b16 %v4812
        %v4976 = vunpack.c.h.b16 %v4812
        %v4977 = vunpack.c.l.b16 %v4813
        %v4978 = vunpack.c.h.b16 %v4813
        %v4979 = vunpack.c.l.b16 %v4814
        %v4980 = vunpack.c.h.b16 %v4814
        %v4981 = vunpack.c.l.b16 %v4815
        %v4982 = vunpack.c.h.b16 %v4815
        %v4983 = vunpack.c.l.b16 %v4816
        %v4984 = vunpack.c.h.b16 %v4816
        %v4985 = vunpack.c.l.b16 %v4817
        %v4986 = vunpack.c.h.b16 %v4817
        %v4987 = vunpack.c.l.b16 %v4818
        %v4988 = vunpack.c.h.b16 %v4818
        %v4989 = vunpack.c.l.b16 %v4819
        %v4990 = vunpack.c.h.b16 %v4819
        %v4991 = vunpack.c.l.b16 %v4820
        %v4992 = vunpack.c.h.b16 %v4820
        %v4993 = vunpack.c.l.b16 %v4821
        %v4994 = vunpack.c.h.b16 %v4821
        %v4995 = vunpack.c.l.b16 %v4822
        %v4996 = vunpack.c.h.b16 %v4822
        %v4997 = vunpack.c.l.b16 %v4823
        %v4998 = vunpack.c.h.b16 %v4823
        %v4999 = vunpack.c.l.b16 %v4824
        %v5000 = vunpack.c.h.b16 %v4824
        %v5001 = vunpack.c.l.b16 %v4825
        %v5002 = vunpack.c.h.b16 %v4825
        %v5003 = vunpack.c.l.b16 %v4826
        %v5004 = vunpack.c.h.b16 %v4826
        %v5005 = vunpack.c.l.b16 %v4827
        %v5006 = vunpack.c.h.b16 %v4827
        %v5007 = vunpack.c.l.b16 %v4828
        %v5008 = vunpack.c.h.b16 %v4828
        %v5009 = vunpack.c.l.b16 %v4829
        %v5010 = vunpack.c.h.b16 %v4829
        %v5011 = vunpack.c.l.b16 %v4830
        %v5012 = vunpack.c.h.b16 %v4830
        %v5013 = vunpack.c.l.b16 %v4831
        %v5014 = vunpack.c.h.b16 %v4831
        %v5015 = vunpack.c.l.b16 %v4832
        %v5016 = vunpack.c.h.b16 %v4832
        %v5017 = vunpack.c.l.b16 %v4833
        %v5018 = vunpack.c.h.b16 %v4833
        %v5019 = vunpack.c.l.b16 %v4834
        %v5020 = vunpack.c.h.b16 %v4834
        %v5021 = vunpack.c.l.b16 %v4835
        %v5022 = vunpack.c.h.b16 %v4835
        %v5023 = vunpack.c.l.b16 %v4836
        %v5024 = vunpack.c.h.b16 %v4836
        %v5025 = vunpack.c.l.b16 %v4837
        %v5026 = vunpack.c.h.b16 %v4837
        %v5027 = vunpack.c.l.b16 %v4838
        %v5028 = vunpack.c.h.b16 %v4838
        %v5029 = vunpack.c.l.b16 %v4839
        %v5030 = vunpack.c.h.b16 %v4839
        %v5031 = vunpack.c.l.b16 %v4840
        %v5032 = vunpack.c.h.b16 %v4840
        %v5033 = vpack.c.b16 %v4907, %v4905
        %v5034 = vpack.c.b16 %v4908, %v4906
        %v5035 = vpack.c.b16 %v4911, %v4909
        %v5036 = vpack.c.b16 %v4912, %v4910
        %v5037 = vpack.c.b16 %v4915, %v4913
        %v5038 = vpack.c.b16 %v4916, %v4914
        %v5039 = vpack.c.b16 %v4919, %v4917
        %v5040 = vpack.c.b16 %v4920, %v4918
        %v5041 = vpack.c.b16 %v4923, %v4921
        %v5042 = vpack.c.b16 %v4924, %v4922
        %v5043 = vpack.c.b16 %v4927, %v4925
        %v5044 = vpack.c.b16 %v4928, %v4926
        %v5045 = vpack.c.b16 %v4931, %v4929
        %v5046 = vpack.c.b16 %v4932, %v4930
        %v5047 = vpack.c.b16 %v4935, %v4933
        %v5048 = vpack.c.b16 %v4936, %v4934
        %v5049 = vpack.c.b16 %v4939, %v4937
        %v5050 = vpack.c.b16 %v4940, %v4938
        %v5051 = vpack.c.b16 %v4943, %v4941
        %v5052 = vpack.c.b16 %v4944, %v4942
        %v5053 = vpack.c.b16 %v4947, %v4945
        %v5054 = vpack.c.b16 %v4948, %v4946
        %v5055 = vpack.c.b16 %v4951, %v4949
        %v5056 = vpack.c.b16 %v4952, %v4950
        %v5057 = vpack.c.b16 %v4955, %v4953
        %v5058 = vpack.c.b16 %v4956, %v4954
        %v5059 = vpack.c.b16 %v4959, %v4957
        %v5060 = vpack.c.b16 %v4960, %v4958
        %v5061 = vpack.c.b16 %v4963, %v4961
        %v5062 = vpack.c.b16 %v4964, %v4962
        %v5063 = vpack.c.b16 %v4967, %v4965
        %v5064 = vpack.c.b16 %v4968, %v4966
        %v5065 = vpack.c.b16 %v4971, %v4969
        %v5066 = vpack.c.b16 %v4972, %v4970
        %v5067 = vpack.c.b16 %v4975, %v4973
        %v5068 = vpack.c.b16 %v4976, %v4974
        %v5069 = vpack.c.b16 %v4979, %v4977
        %v5070 = vpack.c.b16 %v4980, %v4978
        %v5071 = vpack.c.b16 %v4983, %v4981
        %v5072 = vpack.c.b16 %v4984, %v4982
        %v5073 = vpack.c.b16 %v4987, %v4985
        %v5074 = vpack.c.b16 %v4988, %v4986
        %v5075 = vpack.c.b16 %v4991, %v4989
        %v5076 = vpack.c.b16 %v4992, %v4990
        %v5077 = vpack.c.b16 %v4995, %v4993
        %v5078 = vpack.c.b16 %v4996, %v4994
        %v5079 = vpack.c.b16 %v4999, %v4997
        %v5080 = vpack.c.b16 %v5000, %v4998
        %v5081 = vpack.c.b16 %v5003, %v5001
        %v5082 = vpack.c.b16 %v5004, %v5002
        %v5083 = vpack.c.b16 %v5007, %v5005
        %v5084 = vpack.c.b16 %v5008, %v5006
        %v5085 = vpack.c.b16 %v5011, %v5009
        %v5086 = vpack.c.b16 %v5012, %v5010
        %v5087 = vpack.c.b16 %v5015, %v5013
        %v5088 = vpack.c.b16 %v5016, %v5014
        %v5089 = vpack.c.b16 %v5019, %v5017
        %v5090 = vpack.c.b16 %v5020, %v5018
        %v5091 = vpack.c.b16 %v5023, %v5021
        %v5092 = vpack.c.b16 %v5024, %v5022
        %v5093 = vpack.c.b16 %v5027, %v5025
        %v5094 = vpack.c.b16 %v5028, %v5026
        %v5095 = vpack.c.b16 %v5031, %v5029
        %v5096 = vpack.c.b16 %v5032, %v5030
        %5161 = vmatprep.subr.bf16.mxu0 %v5034
        %5162 = vmatpush1.bf16.msra.mxu0 %v5033
        %5163 = vmatprep.subr.bf16.mxu0 %v5036
        %5164 = vmatpush1.bf16.msra.mxu0 %v5035
        %5165 = vmatprep.subr.bf16.mxu0 %v5038
        %5166 = vmatpush1.bf16.msra.mxu0 %v5037
        %5167 = vmatprep.subr.bf16.mxu0 %v5040
        %5168 = vmatpush1.bf16.msra.mxu0 %v5039
        %5169 = vmatprep.subr.bf16.mxu0 %v5042
        %5170 = vmatpush1.bf16.msra.mxu0 %v5041
        %5171 = vmatprep.subr.bf16.mxu0 %v5044
        %5172 = vmatpush1.bf16.msra.mxu0 %v5043
        %5173 = vmatprep.subr.bf16.mxu0 %v5046
        %5174 = vmatpush1.bf16.msra.mxu0 %v5045
        %5175 = vmatprep.subr.bf16.mxu0 %v5048
        %5176 = vmatpush1.bf16.msra.mxu0 %v5047
        %5177 = vmatprep.subr.bf16.mxu0 %v5050
        %5178 = vmatpush1.bf16.msra.mxu0 %v5049
        %5179 = vmatprep.subr.bf16.mxu0 %v5052
        %5180 = vmatpush1.bf16.msra.mxu0 %v5051
        %5181 = vmatprep.subr.bf16.mxu0 %v5054
        %5182 = vmatpush1.bf16.msra.mxu0 %v5053
        %5183 = vmatprep.subr.bf16.mxu0 %v5056
        %5184 = vmatpush1.bf16.msra.mxu0 %v5055
        %5185 = vmatprep.subr.bf16.mxu0 %v5058
        %5186 = vmatpush1.bf16.msra.mxu0 %v5057
        %5187 = vmatprep.subr.bf16.mxu0 %v5060
        %5188 = vmatpush1.bf16.msra.mxu0 %v5059
        %5189 = vmatprep.subr.bf16.mxu0 %v5062
        %5190 = vmatpush1.bf16.msra.mxu0 %v5061
        %5191 = vmatprep.subr.bf16.mxu0 %v5064
        %5192 = vmatpush1.bf16.msra.mxu0 %v5063
        %5193 = vmatprep.mubr.bf16.mxu0 %v4304
        %5194 = vmatmul.mubr.bf16.gmra.mrb[0].mxu0 %v4303
        %v5195 = vpop.f32.mrb[0].mxu0
        %v5196 = vadd.f32 0.0, %v5195
        %v5197 = vpop.f32.mrb[0].mxu0
        %v5198 = vadd.f32 0.0, %v5197
        %v5199 = vpop.f32.mrb[0].mxu0
        %v5200 = vadd.f32 0.0, %v5199
        %v5201 = vpop.f32.mrb[0].mxu0
        %v5202 = vadd.f32 0.0, %v5201
        %5203 = vdwg.mxu0
        %5204 = vmatprep.subr.bf16.mxu0 %v5066
        %5205 = vmatpush1.bf16.msra.mxu0 %v5065
        %5206 = vmatprep.subr.bf16.mxu0 %v5068
        %5207 = vmatpush1.bf16.msra.mxu0 %v5067
        %5208 = vmatprep.subr.bf16.mxu0 %v5070
        %5209 = vmatpush1.bf16.msra.mxu0 %v5069
        %5210 = vmatprep.subr.bf16.mxu0 %v5072
        %5211 = vmatpush1.bf16.msra.mxu0 %v5071
        %5212 = vmatprep.subr.bf16.mxu0 %v5074
        %5213 = vmatpush1.bf16.msra.mxu0 %v5073
        %5214 = vmatprep.subr.bf16.mxu0 %v5076
        %5215 = vmatpush1.bf16.msra.mxu0 %v5075
        %5216 = vmatprep.subr.bf16.mxu0 %v5078
        %5217 = vmatpush1.bf16.msra.mxu0 %v5077
        %5218 = vmatprep.subr.bf16.mxu0 %v5080
        %5219 = vmatpush1.bf16.msra.mxu0 %v5079
        %5220 = vmatprep.subr.bf16.mxu0 %v5082
        %5221 = vmatpush1.bf16.msra.mxu0 %v5081
        %5222 = vmatprep.subr.bf16.mxu0 %v5084
        %5223 = vmatpush1.bf16.msra.mxu0 %v5083
        %5224 = vmatprep.subr.bf16.mxu0 %v5086
        %5225 = vmatpush1.bf16.msra.mxu0 %v5085
        %5226 = vmatprep.subr.bf16.mxu0 %v5088
        %5227 = vmatpush1.bf16.msra.mxu0 %v5087
        %5228 = vmatprep.subr.bf16.mxu0 %v5090
        %5229 = vmatpush1.bf16.msra.mxu0 %v5089
        %5230 = vmatprep.subr.bf16.mxu0 %v5092
        %5231 = vmatpush1.bf16.msra.mxu0 %v5091
        %5232 = vmatprep.subr.bf16.mxu0 %v5094
        %5233 = vmatpush1.bf16.msra.mxu0 %v5093
        %5234 = vmatprep.subr.bf16.mxu0 %v5096
        %5235 = vmatpush1.bf16.msra.mxu0 %v5095
        %5236 = vmatprep.mubr.bf16.mxu0 %v4306
        %5237 = vmatmul.mubr.bf16.gmra.mrb[0].mxu0 %v4305
        %v5238 = vpop.f32.mrb[0].mxu0
        %v5239 = vadd.f32 %v5196, %v5238
        %v5240 = vpop.f32.mrb[0].mxu0
        %v5241 = vadd.f32 %v5198, %v5240
        %v5242 = vpop.f32.mrb[0].mxu0
        %v5243 = vadd.f32 %v5200, %v5242
        %v5244 = vpop.f32.mrb[0].mxu0
        %v5245 = vadd.f32 %v5202, %v5244
        %5246 = vdwg.mxu0
        %v5247 = vmax.f32 %v4769, %v5239
        %v5248 = vmax.f32 %v4771, %v5241
        %v5249 = vmax.f32 %v4773, %v5243
        %v5250 = vmax.f32 %v4775, %v5245
        %v5255 = vcombine.low %v5247, %v5248
        %v5256 = vcombine.high %v5247, %v5248
        %v5258 = vunpack.c.l.s4 1983009808
        %v5259 = vunpack.c.0.s8 %v5258
        %v5260 = vlaneseq
        %v5261 = vshrl.u32 %v5260, 7
        %v5262 = vsub.s32 %v5259, %v5261
        %v5263 = vrot.slane %v5255, %v5262
        %v5265 = vunpack.c.l.s4 1983009808
        %v5266 = vunpack.c.0.s8 %v5265
        %v5267 = vlaneseq
        %v5268 = vshrl.u32 %v5267, 7
        %v5269 = vsub.s32 %v5266, %v5268
        %v5270 = vrot.slane %v5256, %v5269
        %v5271 = vcombine.high %v5263, %v5263
        %v5272 = vcombine.high %v5270, %v5270
        %v5273 = vcombine.low %v5249, %v5250
        %v5274 = vcombine.high %v5249, %v5250
        %v5276 = vunpack.c.l.s4 1983009808
        %v5277 = vunpack.c.0.s8 %v5276
        %v5278 = vlaneseq
        %v5279 = vshrl.u32 %v5278, 7
        %v5280 = vsub.s32 %v5277, %v5279
        %v5281 = vrot.slane %v5273, %v5280
        %v5283 = vunpack.c.l.s4 1983009808
        %v5284 = vunpack.c.0.s8 %v5283
        %v5285 = vlaneseq
        %v5286 = vshrl.u32 %v5285, 7
        %v5287 = vsub.s32 %v5284, %v5286
        %v5288 = vrot.slane %v5274, %v5287
        %v5289 = vcombine.high %v5281, %v5281
        %v5290 = vcombine.high %v5288, %v5288
        %v5292 = vunpack.c.l.s4 1983009808
        %v5293 = vunpack.c.0.s8 %v5292
        %v5294 = vlaneseq
        %v5295 = vshrl.u32 %v5294, 7
        %v5296 = vsub.s32 %v5293, %v5295
        %v5297 = vrot.slane %v5263, %v5296
        %v5298 = vcombine.high %v5297, %v5297
        %v5300 = vunpack.c.l.s4 1983009808
        %v5301 = vunpack.c.0.s8 %v5300
        %v5302 = vlaneseq
        %v5303 = vshrl.u32 %v5302, 7
        %v5304 = vsub.s32 %v5301, %v5303
        %v5305 = vrot.slane %v5271, %v5304
        %v5306 = vcombine.high %v5305, %v5305
        %v5308 = vunpack.c.l.s4 1983009808
        %v5309 = vunpack.c.0.s8 %v5308
        %v5310 = vlaneseq
        %v5311 = vshrl.u32 %v5310, 7
        %v5312 = vsub.s32 %v5309, %v5311
        %v5313 = vrot.slane %v5270, %v5312
        %v5314 = vcombine.high %v5313, %v5313
        %v5316 = vunpack.c.l.s4 1983009808
        %v5317 = vunpack.c.0.s8 %v5316
        %v5318 = vlaneseq
        %v5319 = vshrl.u32 %v5318, 7
        %v5320 = vsub.s32 %v5317, %v5319
        %v5321 = vrot.slane %v5272, %v5320
        %v5322 = vcombine.high %v5321, %v5321
        %v5324 = vunpack.c.l.s4 1983009808
        %v5325 = vunpack.c.0.s8 %v5324
        %v5326 = vlaneseq
        %v5327 = vshrl.u32 %v5326, 7
        %v5328 = vsub.s32 %v5325, %v5327
        %v5329 = vrot.slane %v5281, %v5328
        %v5330 = vcombine.high %v5329, %v5329
        %v5332 = vunpack.c.l.s4 1983009808
        %v5333 = vunpack.c.0.s8 %v5332
        %v5334 = vlaneseq
        %v5335 = vshrl.u32 %v5334, 7
        %v5336 = vsub.s32 %v5333, %v5335
        %v5337 = vrot.slane %v5289, %v5336
        %v5338 = vcombine.high %v5337, %v5337
        %v5340 = vunpack.c.l.s4 1983009808
        %v5341 = vunpack.c.0.s8 %v5340
        %v5342 = vlaneseq
        %v5343 = vshrl.u32 %v5342, 7
        %v5344 = vsub.s32 %v5341, %v5343
        %v5345 = vrot.slane %v5288, %v5344
        %v5346 = vcombine.high %v5345, %v5345
        %v5348 = vunpack.c.l.s4 1983009808
        %v5349 = vunpack.c.0.s8 %v5348
        %v5350 = vlaneseq
        %v5351 = vshrl.u32 %v5350, 7
        %v5352 = vsub.s32 %v5349, %v5351
        %v5353 = vrot.slane %v5290, %v5352
        %v5354 = vcombine.high %v5353, %v5353
        %v5371 = vsel %vm2439, %v5297, -inf
        %v5372 = vrot.slane %v5371, 4
        %v5373 = vmax.f32 %v5371, %v5372
        %v5374 = vrot.slane %v5373, 2
        %v5375 = vmax.f32 %v5373, %v5374
        %v5376 = vrot.slane %v5375, 1
        %v5377 = vmax.f32 %v5375, %v5376
        %v5378 = vsel %vm2439, %v5298, -inf
        %v5379 = vrot.slane %v5378, 4
        %v5380 = vmax.f32 %v5378, %v5379
        %v5381 = vrot.slane %v5380, 2
        %v5382 = vmax.f32 %v5380, %v5381
        %v5383 = vrot.slane %v5382, 1
        %v5384 = vmax.f32 %v5382, %v5383
        %v5385 = vsel %vm2439, %v5305, -inf
        %v5386 = vrot.slane %v5385, 4
        %v5387 = vmax.f32 %v5385, %v5386
        %v5388 = vrot.slane %v5387, 2
        %v5389 = vmax.f32 %v5387, %v5388
        %v5390 = vrot.slane %v5389, 1
        %v5391 = vmax.f32 %v5389, %v5390
        %v5392 = vsel %vm2439, %v5306, -inf
        %v5393 = vrot.slane %v5392, 4
        %v5394 = vmax.f32 %v5392, %v5393
        %v5395 = vrot.slane %v5394, 2
        %v5396 = vmax.f32 %v5394, %v5395
        %v5397 = vrot.slane %v5396, 1
        %v5398 = vmax.f32 %v5396, %v5397
        %v5399 = vsel %vm2439, %v5313, -inf
        %v5400 = vrot.slane %v5399, 4
        %v5401 = vmax.f32 %v5399, %v5400
        %v5402 = vrot.slane %v5401, 2
        %v5403 = vmax.f32 %v5401, %v5402
        %v5404 = vrot.slane %v5403, 1
        %v5405 = vmax.f32 %v5403, %v5404
        %v5406 = vsel %vm2439, %v5314, -inf
        %v5407 = vrot.slane %v5406, 4
        %v5408 = vmax.f32 %v5406, %v5407
        %v5409 = vrot.slane %v5408, 2
        %v5410 = vmax.f32 %v5408, %v5409
        %v5411 = vrot.slane %v5410, 1
        %v5412 = vmax.f32 %v5410, %v5411
        %v5413 = vsel %vm2439, %v5321, -inf
        %v5414 = vrot.slane %v5413, 4
        %v5415 = vmax.f32 %v5413, %v5414
        %v5416 = vrot.slane %v5415, 2
        %v5417 = vmax.f32 %v5415, %v5416
        %v5418 = vrot.slane %v5417, 1
        %v5419 = vmax.f32 %v5417, %v5418
        %v5420 = vsel %vm2439, %v5322, -inf
        %v5421 = vrot.slane %v5420, 4
        %v5422 = vmax.f32 %v5420, %v5421
        %v5423 = vrot.slane %v5422, 2
        %v5424 = vmax.f32 %v5422, %v5423
        %v5425 = vrot.slane %v5424, 1
        %v5426 = vmax.f32 %v5424, %v5425
        %v5427 = vsel %vm2439, %v5329, -inf
        %v5428 = vrot.slane %v5427, 4
        %v5429 = vmax.f32 %v5427, %v5428
        %v5430 = vrot.slane %v5429, 2
        %v5431 = vmax.f32 %v5429, %v5430
        %v5432 = vrot.slane %v5431, 1
        %v5433 = vmax.f32 %v5431, %v5432
        %v5434 = vsel %vm2439, %v5330, -inf
        %v5435 = vrot.slane %v5434, 4
        %v5436 = vmax.f32 %v5434, %v5435
        %v5437 = vrot.slane %v5436, 2
        %v5438 = vmax.f32 %v5436, %v5437
        %v5439 = vrot.slane %v5438, 1
        %v5440 = vmax.f32 %v5438, %v5439
        %v5441 = vsel %vm2439, %v5337, -inf
        %v5442 = vrot.slane %v5441, 4
        %v5443 = vmax.f32 %v5441, %v5442
        %v5444 = vrot.slane %v5443, 2
        %v5445 = vmax.f32 %v5443, %v5444
        %v5446 = vrot.slane %v5445, 1
        %v5447 = vmax.f32 %v5445, %v5446
        %v5448 = vsel %vm2439, %v5338, -inf
        %v5449 = vrot.slane %v5448, 4
        %v5450 = vmax.f32 %v5448, %v5449
        %v5451 = vrot.slane %v5450, 2
        %v5452 = vmax.f32 %v5450, %v5451
        %v5453 = vrot.slane %v5452, 1
        %v5454 = vmax.f32 %v5452, %v5453
        %v5455 = vsel %vm2439, %v5345, -inf
        %v5456 = vrot.slane %v5455, 4
        %v5457 = vmax.f32 %v5455, %v5456
        %v5458 = vrot.slane %v5457, 2
        %v5459 = vmax.f32 %v5457, %v5458
        %v5460 = vrot.slane %v5459, 1
        %v5461 = vmax.f32 %v5459, %v5460
        %v5462 = vsel %vm2439, %v5346, -inf
        %v5463 = vrot.slane %v5462, 4
        %v5464 = vmax.f32 %v5462, %v5463
        %v5465 = vrot.slane %v5464, 2
        %v5466 = vmax.f32 %v5464, %v5465
        %v5467 = vrot.slane %v5466, 1
        %v5468 = vmax.f32 %v5466, %v5467
        %v5469 = vsel %vm2439, %v5353, -inf
        %v5470 = vrot.slane %v5469, 4
        %v5471 = vmax.f32 %v5469, %v5470
        %v5472 = vrot.slane %v5471, 2
        %v5473 = vmax.f32 %v5471, %v5472
        %v5474 = vrot.slane %v5473, 1
        %v5475 = vmax.f32 %v5473, %v5474
        %v5476 = vsel %vm2439, %v5354, -inf
        %v5477 = vrot.slane %v5476, 4
        %v5478 = vmax.f32 %v5476, %v5477
        %v5479 = vrot.slane %v5478, 2
        %v5480 = vmax.f32 %v5478, %v5479
        %v5481 = vrot.slane %v5480, 1
        %v5482 = vmax.f32 %v5480, %v5481
        %v5499 = vsel %vm2774, %v5391, %v5377
        %v5500 = vsel %vm2756, %v5405, %v5499
        %v5501 = vsel %vm2758, %v5419, %v5500
        %v5502 = vsel %vm2760, %v5433, %v5501
        %v5503 = vsel %vm2762, %v5447, %v5502
        %v5504 = vsel %vm2764, %v5461, %v5503
        %v5505 = vsel %vm2766, %v5475, %v5504
        %v5506 = vsel %vm2774, %v5398, %v5384
        %v5507 = vsel %vm2756, %v5412, %v5506
        %v5508 = vsel %vm2758, %v5426, %v5507
        %v5509 = vsel %vm2760, %v5440, %v5508
        %v5510 = vsel %vm2762, %v5454, %v5509
        %v5511 = vsel %vm2764, %v5468, %v5510
        %v5512 = vsel %vm2766, %v5482, %v5511
        %5515 = vst [vmem:[%s445] sm:$0xff] %v5505
        %5516 = vst [vmem:[%s445 + $0x8] sm:$0xff] %v5512
        %p5517 = scmp.lt.s32.totalorder %s25, 1
        %s5518 = scalar_select %p5517, %s25, 1
        %s5519 = smul.addr %s5518, 2
        %s5520 = smul.addr %s5519, 8
        %s5521 = scalar_lea.vmem %s9, %s5520
        // Predicated region
        $region89: #{pose_classifier_forward.2} parent=55 // pred_check
          %p5522 = pneg %p237
        $region90: #{pose_classifier_forward.2} parent=55 // pred_check_branch
          %5524 = sbr.rel (%p5522) target = $region92
        $region91: #{pose_classifier_forward.2} parent=55 // pred_region
          _
        $region92: #{pose_classifier_forward.2} parent=55 // pred_fallthru
          _
      $region56: #{pose_classifier_forward.2} parent=5 // pred_fallthru
        _
      %p5525 = scmp.le.s32.totalorder 2, %s20
      // Predicated region
      $region93: #{pose_classifier_forward.2} parent=5 // pred_check
        %p5526 = pneg %p5525
      $region94: #{pose_classifier_forward.2} parent=5 // pred_check_branch
        %5528 = sbr.rel (%p5526) target = $region96
      $region95: #{pose_classifier_forward.2} parent=5 // pred_region
        %s5529 = ssub.s32 %s20, 2
        // Predicated region
        $region97: #{pose_classifier_forward.2} parent=95 // pred_check
          %p5530 = pneg %p243
        $region98: #{pose_classifier_forward.2} parent=95 // pred_check_branch
          %5532 = sbr.rel (%p5530) target = $region100
        $region99: #{pose_classifier_forward.2} parent=95 // pred_region
          %p5533 = scmp.lt.s32.totalorder %s26, 1
          %s5534 = scalar_select %p5533, %s26, 1
          %s5535 = smul.addr %s5534, 2
          %s5536 = smul.addr %s5535, 8
          %s5537 = scalar_lea.vmem %s9, %s5536
        $region100: #{pose_classifier_forward.2} parent=95 // pred_fallthru
          _
      $region96: #{pose_classifier_forward.2} parent=5 // pred_fallthru
        _
    $region6: #{pose_classifier_forward.2} parent=1 // loop_footer
      %s24 = sadd.s32 1, %s20
    $region7: #{pose_classifier_forward.2} parent=1 // loop_footer_branch
      %19 = sbr.rel target = $region3
    $region8: #{pose_classifier_forward.2} parent=1 // loop_exit
      _
    %5538 = vsyncpa [#allocation3], 1
    %s5539 = scalar_lea.sflag [#allocation3], 1
    %5540 = vsyncpa %s5539, 1
    %5541 = vsyncpa [#allocation5], 1
    %5542 = vsyncpa [#allocation8], 1
    %5543 = vsyncpa [#allocation11], 1
    %5544 = vsyncpa [#allocation14], 1

</llo_original>
